<compile_context>
chip_gen: v6e
topology: v6e:2x2x1
jax: 0.10.0
libtpu: 0.0.40
codegen_flags: <defaults>
</compile_context>

<pallas_src>
import jax
import jax.numpy as jnp
from jax.experimental import pallas as pl
from jax.experimental.pallas import tpu as pltpu

LANES = 128                              # lane width: pad all channel dims to this
K1_PAD = 128                             # conv1 contraction: 5*5*3 = 75 -> 128
K2_PAD = 5 * 5 * LANES                   # conv2 contraction: 5*5*128 = 3200
_VMEM_LIMIT_BYTES = 32 * 1024 * 1024     # explicit scoped-VMEM limit (safe v5e/v6e/v7x)
_TILE_BUDGET_BYTES = 8 * 1024 * 1024     # budget for double-buffered tiles per conv call


# --------------------------------------------------------------------------
# Pallas kernels
# --------------------------------------------------------------------------
def _conv_pool_kernel(pa_ref, pb_ref, pc_ref, pd_ref, w_ref, b_ref, o_ref):
    """Fused conv-as-GEMM + bias + ReLU + 2x2 maxpool.

    pa..pd: (bm, K) bf16 im2col patches, one per position of each 2x2 pool window.
    w: (K, 128) bf16, b: (1, 128) f32.  o: (bm, 128) bf16 pooled activations.
    """
    w = w_ref[...]

    def mm(p_ref):
        return jnp.dot(p_ref[...], w, preferred_element_type=jnp.float32)

    acc = jnp.maximum(jnp.maximum(mm(pa_ref), mm(pb_ref)),
                      jnp.maximum(mm(pc_ref), mm(pd_ref)))
    acc = jnp.maximum(acc + b_ref[...], 0.0)          # f32 epilogue (v5e-safe)
    o_ref[...] = acc.astype(o_ref.dtype)


def _mlp_kernel(x_ref, w1_ref, b1_ref, w2_ref, b2_ref, w3_ref, b3_ref, o_ref):
    """Fused fc1 -> relu -> fc2 -> relu -> fc3; all weights live in VMEM."""
    h = jnp.dot(x_ref[...], w1_ref[...], preferred_element_type=jnp.float32) + b1_ref[...]
    h = jnp.maximum(h, 0.0).astype(jnp.bfloat16)
    h = jnp.dot(h, w2_ref[...], preferred_element_type=jnp.float32) + b2_ref[...]
    h = jnp.maximum(h, 0.0).astype(jnp.bfloat16)
    o_ref[...] = (jnp.dot(h, w3_ref[...], preferred_element_type=jnp.float32)
                  + b3_ref[...]).astype(o_ref.dtype)


# --------------------------------------------------------------------------
# pallas_call wrappers
# --------------------------------------------------------------------------
def _pick_block_m(M, K, N):
    """Largest row tile keeping double-buffered tiles under the VMEM budget."""
    per_row = 4 * (4 * K + N)            # bf16: 4 patch inputs + 1 output, x2 buffers
    cap = (_TILE_BUDGET_BYTES // per_row) // 16 * 16
    cap = max(16, min(512, cap))
    return M if M <= cap else cap        # full-extent block is always layout-legal


def conv_relu_pool(patches, w, b):
    """patches: 4 x (M, K) bf16, w: (K, 128) bf16, b: (1, 128) f32 -> (M, 128) bf16."""
    M, K = patches[0].shape
    _, N = w.shape
    bm = _pick_block_m(M, K, N)
    return pl.pallas_call(
        _conv_pool_kernel,
        out_shape=jax.ShapeDtypeStruct((M, N), jnp.bfloat16),
        grid=(pl.cdiv(M, bm),),
        in_specs=[pl.BlockSpec((bm, K), lambda i: (i, 0)) for _ in range(4)]
                 + [pl.BlockSpec((K, N), lambda i: (0, 0)),
                    pl.BlockSpec((1, N), lambda i: (0, 0))],
        out_specs=pl.BlockSpec((bm, N), lambda i: (i, 0)),
        compiler_params=pltpu.CompilerParams(
            dimension_semantics=("parallel",),
            vmem_limit_bytes=_VMEM_LIMIT_BYTES),
    )(*patches, w, b)


def mlp_fused(x, w1, b1, w2, b2, w3, b3):
    """x: (B, 3200) bf16 -> (B, 128) f32 (first 10 columns are the logits)."""
    B, K = x.shape
    N = w3.shape[1]
    bm = B if B <= 256 else 256
    return pl.pallas_call(
        _mlp_kernel,
        out_shape=jax.ShapeDtypeStruct((B, N), jnp.float32),
        grid=(pl.cdiv(B, bm),),
        in_specs=[pl.BlockSpec((bm, K), lambda i: (i, 0)),
                  pl.BlockSpec(w1.shape, lambda i: (0, 0)),
                  pl.BlockSpec(b1.shape, lambda i: (0, 0)),
                  pl.BlockSpec(w2.shape, lambda i: (0, 0)),
                  pl.BlockSpec(b2.shape, lambda i: (0, 0)),
                  pl.BlockSpec(w3.shape, lambda i: (0, 0)),
                  pl.BlockSpec(b3.shape, lambda i: (0, 0))],
        out_specs=pl.BlockSpec((bm, N), lambda i: (i, 0)),
        compiler_params=pltpu.CompilerParams(
            dimension_semantics=("parallel",),
            vmem_limit_bytes=_VMEM_LIMIT_BYTES),
    )(x, w1, b1, w2, b2, w3, b3)


# --------------------------------------------------------------------------
# Glue: pool-phase im2col (strided slices + one lane-axis concat, no transposes)
# --------------------------------------------------------------------------
def _pool_phase_patches(x, k, k_total):
    """x: (B, H, W, C) bf16 NHWC -> ([4 x (B*OHP*OWP, k_total)], OHP, OWP).

    One patch matrix per 2x2 pool phase; row order (b, oh_pooled, ow_pooled), feature
    order (kh, kw, c), zero-padded on the lane axis up to k_total.
    """
    B, H, W, C = x.shape
    OH, OW = H - k + 1, W - k + 1
    OHP, OWP = OH // 2, OW // 2
    pad = k_total - k * k * C
    tail = jnp.zeros((B, OHP, OWP, pad), x.dtype) if pad else None
    phases = []
    for dy in range(2):
        for dx in range(2):
            pieces = []
            for kh in range(k):
                for kw in range(k):
                    r0, c0 = dy + kh, dx + kw
                    pieces.append(jax.lax.slice(
                        x,
                        (0, r0, c0, 0),
                        (B, r0 + 2 * (OHP - 1) + 1, c0 + 2 * (OWP - 1) + 1, C),
                        (1, 2, 2, 1)))                       # (B, OHP, OWP, C)
            if tail is not None:
                pieces.append(tail)
            phases.append(jnp.concatenate(pieces, axis=-1)
                          .reshape(B * OHP * OWP, k_total))
    return phases, OHP, OWP


# --------------------------------------------------------------------------
# Parameters (PyTorch-layout init) + one-time kernel-ready prep
# --------------------------------------------------------------------------
def _uniform(key, shape, fan_in):
    bound = 1.0 / jnp.sqrt(jnp.float32(fan_in))
    return jax.random.uniform(key, shape, jnp.float32, -bound, bound)


def init_params(key):
    ks = jax.random.split(key, 10)
    p = {}
    p["conv1_w"] = _uniform(ks[0], (6, 3, 5, 5), 3 * 5 * 5)
    p["conv1_b"] = _uniform(ks[1], (6,), 3 * 5 * 5)
    p["conv2_w"] = _uniform(ks[2], (16, 6, 5, 5), 6 * 5 * 5)
    p["conv2_b"] = _uniform(ks[3], (16,), 6 * 5 * 5)
    p["fc1_w"] = _uniform(ks[4], (16 * 5 * 5, 120), 16 * 5 * 5)   # rows in (c, h, w) order
    p["fc1_b"] = _uniform(ks[5], (120,), 16 * 5 * 5)
    p["fc2_w"] = _uniform(ks[6], (120, 84), 120)
    p["fc2_b"] = _uniform(ks[7], (84,), 120)
    p["fc3_w"] = _uniform(ks[8], (84, 10), 84)
    p["fc3_b"] = _uniform(ks[9], (10,), 84)
    return p


def prepare_params(p):
    """One-time conversion to kernel layout: (kh,kw,c)-ordered GEMM weights, channel and
    contraction dims zero-padded to 128 lanes, bf16 weights, f32 biases."""
    bf16 = jnp.bfloat16

    def conv_w(w, ic_pad, k_total):
        OC, IC, k, _ = w.shape
        wt = jnp.transpose(w, (2, 3, 1, 0))                       # (kh, kw, ic, oc)
        wt = jnp.pad(wt, ((0, 0), (0, 0), (0, ic_pad - IC), (0, LANES - OC)))
        wt = wt.reshape(k * k * ic_pad, LANES)
        return jnp.pad(wt, ((0, k_total - wt.shape[0]), (0, 0))).astype(bf16)

    def vec(b):
        return jnp.pad(b, (0, LANES - b.shape[0])).reshape(1, LANES).astype(jnp.float32)

    def fc_w(w):
        return jnp.pad(w, ((0, LANES - w.shape[0]), (0, LANES - w.shape[1]))).astype(bf16)

    # fc1 rows: PyTorch flattens (c, h, w); this pipeline flattens (h, w, c_padded).
    w_fc1 = p["fc1_w"].reshape(16, 5, 5, 120)                     # (c, h, w, out)
    w_fc1 = jnp.transpose(w_fc1, (1, 2, 0, 3))                    # (h, w, c, out)
    w_fc1 = jnp.pad(w_fc1, ((0, 0), (0, 0), (0, LANES - 16), (0, LANES - 120)))
    w_fc1 = w_fc1.reshape(5 * 5 * LANES, LANES).astype(bf16)

    return {
        "conv1_w": conv_w(p["conv1_w"], ic_pad=3, k_total=K1_PAD),
        "conv1_b": vec(p["conv1_b"]),
        "conv2_w": conv_w(p["conv2_w"], ic_pad=LANES, k_total=K2_PAD),
        "conv2_b": vec(p["conv2_b"]),
        "fc1_w": w_fc1, "fc1_b": vec(p["fc1_b"]),
        "fc2_w": fc_w(p["fc2_w"]), "fc2_b": vec(p["fc2_b"]),
        "fc3_w": fc_w(p["fc3_w"]), "fc3_b": vec(p["fc3_b"]),
    }


# --------------------------------------------------------------------------
# Forward pass (mirrors Net.forward): 3 pallas_calls total
# --------------------------------------------------------------------------
@jax.jit
def net_forward(prep, x):
    """x: (B, 3, 32, 32) f32 NCHW (PyTorch layout).  Returns (B, 10) f32 logits."""
    B = x.shape[0]
    x = jnp.transpose(x, (0, 2, 3, 1)).astype(jnp.bfloat16)           # NHWC + bf16, once
    # conv1 + relu + pool: 32 -> 28 -> 14
    p1, oh1, ow1 = _pool_phase_patches(x, 5, K1_PAD)
    y1 = conv_relu_pool(p1, prep["conv1_w"], prep["conv1_b"])         # (B*14*14, 128)
    y1 = y1.reshape(B, oh1, ow1, LANES)
    # conv2 + relu + pool: 14 -> 10 -> 5
    p2, oh2, ow2 = _pool_phase_patches(y1, 5, K2_PAD)
    y2 = conv_relu_pool(p2, prep["conv2_w"], prep["conv2_b"])         # (B*5*5, 128)
    y2 = y2.reshape(B, oh2 * ow2 * LANES)                             # free reshape -> (B, 3200)
    # fused fc1 -> fc2 -> fc3
    out = mlp_fused(y2, prep["fc1_w"], prep["fc1_b"],
                    prep["fc2_w"], prep["fc2_b"],
                    prep["fc3_w"], prep["fc3_b"])                     # (B, 128) f32
    return out[:, :10]


if __name__ == "__main__":
    key = jax.random.PRNGKey(0)
    pkey, xkey = jax.random.split(key)
    params = init_params(pkey)
    prep = prepare_params(params)
    # CIFAR-style input: batch=2, 3 channels, 32x32 (required for the 16*5*5 flatten)
    x = jax.random.normal(xkey, (2, 3, 32, 32), jnp.float32)
    out = net_forward(prep, x)
    jax.block_until_ready(out)
    assert out.shape == (2, 10), out.shape
    assert bool(jnp.all(jnp.isfinite(out)))
    print("KERNEL_OK")
</pallas_src>

<mosaic_0001>
module attributes {stable_mosaic.version = 11 : i64} {
  func.func @_conv_pool_kernel(%arg0: i32, %arg1: memref<392x128xbf16, #tpu.memory_space<vmem>>, %arg2: memref<392x128xbf16, #tpu.memory_space<vmem>>, %arg3: memref<392x128xbf16, #tpu.memory_space<vmem>>, %arg4: memref<392x128xbf16, #tpu.memory_space<vmem>>, %arg5: memref<128x128xbf16, #tpu.memory_space<vmem>>, %arg6: memref<1x128xf32, #tpu.memory_space<vmem>>, %arg7: memref<392x128xbf16, #tpu.memory_space<vmem>>) attributes {dimension_semantics = [#tpu.dimension_semantics<parallel>], iteration_bounds = array<i64: 1>, scalar_prefetch = 0 : i64, scratch_operands = 0 : i64, tpu.core_type = #tpu.core_type<tc>, window_params = [{transform_indices = @transform_0, window_bounds = array<i64: 392, 128>}, {transform_indices = @transform_1, window_bounds = array<i64: 392, 128>}, {transform_indices = @transform_2, window_bounds = array<i64: 392, 128>}, {transform_indices = @transform_3, window_bounds = array<i64: 392, 128>}, {pipeline_mode = #tpu.pipeline_mode<synchronous>, transform_indices = @transform_4, window_bounds = array<i64: 128, 128>}, {pipeline_mode = #tpu.pipeline_mode<synchronous>, transform_indices = @transform_5, window_bounds = array<i64: 1, 128>}, {transform_indices = @transform_6, window_bounds = array<i64: 392, 128>}]} {
    %c0 = arith.constant 0 : index
    %c0_0 = arith.constant 0 : index
    %0 = vector.load %arg5[%c0, %c0_0] : memref<128x128xbf16, #tpu.memory_space<vmem>>, vector<128x128xbf16>
    %c0_1 = arith.constant 0 : index
    %c0_2 = arith.constant 0 : index
    %1 = vector.load %arg1[%c0_1, %c0_2] : memref<392x128xbf16, #tpu.memory_space<vmem>>, vector<392x128xbf16>
    %cst = arith.constant dense<0.000000e+00> : vector<392x128xf32>
    %2 = tpu.matmul %1, %0, %cst {dimension_numbers = #tpu.dot_dimension_numbers<[1], [0], [0], [1], [0, 0, 1, 1], [], []>} : vector<392x128xbf16>, vector<128x128xbf16>, vector<392x128xf32> -> vector<392x128xf32>
    %c0_3 = arith.constant 0 : index
    %c0_4 = arith.constant 0 : index
    %3 = vector.load %arg2[%c0_3, %c0_4] : memref<392x128xbf16, #tpu.memory_space<vmem>>, vector<392x128xbf16>
    %cst_5 = arith.constant dense<0.000000e+00> : vector<392x128xf32>
    %4 = tpu.matmul %3, %0, %cst_5 {dimension_numbers = #tpu.dot_dimension_numbers<[1], [0], [0], [1], [0, 0, 1, 1], [], []>} : vector<392x128xbf16>, vector<128x128xbf16>, vector<392x128xf32> -> vector<392x128xf32>
    %5 = arith.maximumf %2, %4 : vector<392x128xf32>
    %c0_6 = arith.constant 0 : index
    %c0_7 = arith.constant 0 : index
    %6 = vector.load %arg3[%c0_6, %c0_7] : memref<392x128xbf16, #tpu.memory_space<vmem>>, vector<392x128xbf16>
    %cst_8 = arith.constant dense<0.000000e+00> : vector<392x128xf32>
    %7 = tpu.matmul %6, %0, %cst_8 {dimension_numbers = #tpu.dot_dimension_numbers<[1], [0], [0], [1], [0, 0, 1, 1], [], []>} : vector<392x128xbf16>, vector<128x128xbf16>, vector<392x128xf32> -> vector<392x128xf32>
    %c0_9 = arith.constant 0 : index
    %c0_10 = arith.constant 0 : index
    %8 = vector.load %arg4[%c0_9, %c0_10] : memref<392x128xbf16, #tpu.memory_space<vmem>>, vector<392x128xbf16>
    %cst_11 = arith.constant dense<0.000000e+00> : vector<392x128xf32>
    %9 = tpu.matmul %8, %0, %cst_11 {dimension_numbers = #tpu.dot_dimension_numbers<[1], [0], [0], [1], [0, 0, 1, 1], [], []>} : vector<392x128xbf16>, vector<128x128xbf16>, vector<392x128xf32> -> vector<392x128xf32>
    %10 = arith.maximumf %7, %9 : vector<392x128xf32>
    %11 = arith.maximumf %5, %10 : vector<392x128xf32>
    %c0_12 = arith.constant 0 : index
    %c0_13 = arith.constant 0 : index
    %12 = vector.load %arg6[%c0_12, %c0_13] : memref<1x128xf32, #tpu.memory_space<vmem>>, vector<1x128xf32>
    %13 = vector.broadcast %12 : vector<1x128xf32> to vector<392x128xf32>
    %14 = arith.addf %11, %13 : vector<392x128xf32>
    %cst_14 = arith.constant 0.000000e+00 : f32
    %15 = vector.broadcast %cst_14 : f32 to vector<392x128xf32>
    %16 = arith.maximumf %14, %15 : vector<392x128xf32>
    %17 = arith.truncf %16 : vector<392x128xf32> to vector<392x128xbf16>
    %c0_15 = arith.constant 0 : index
    %c0_16 = arith.constant 0 : index
    %18 = vector.load %arg7[%c0_15, %c0_16] : memref<392x128xbf16, #tpu.memory_space<vmem>>, vector<392x128xbf16>
    tpu.vector_store %arg7[%c0_15, %c0_16], %17 {strides = array<i32>} : memref<392x128xbf16, #tpu.memory_space<vmem>>, vector<392x128xbf16>,
    return
  }
  func.func @transform_0(%arg0: i32) -> (i32, i32) {
    %c0_i32 = arith.constant 0 : i32
    %c0_i32_0 = arith.constant 0 : i32
    return %arg0, %c0_i32 : i32, i32
  }
  func.func @transform_1(%arg0: i32) -> (i32, i32) {
    %c0_i32 = arith.constant 0 : i32
    %c0_i32_0 = arith.constant 0 : i32
    return %arg0, %c0_i32 : i32, i32
  }
  func.func @transform_2(%arg0: i32) -> (i32, i32) {
    %c0_i32 = arith.constant 0 : i32
    %c0_i32_0 = arith.constant 0 : i32
    return %arg0, %c0_i32 : i32, i32
  }
  func.func @transform_3(%arg0: i32) -> (i32, i32) {
    %c0_i32 = arith.constant 0 : i32
    %c0_i32_0 = arith.constant 0 : i32
    return %arg0, %c0_i32 : i32, i32
  }
  func.func @transform_4(%arg0: i32) -> (i32, i32) {
    %c0_i32 = arith.constant 0 : i32
    %c0_i32_0 = arith.constant 0 : i32
    %c0_i32_1 = arith.constant 0 : i32
    return %c0_i32, %c0_i32_0 : i32, i32
  }
  func.func @transform_5(%arg0: i32) -> (i32, i32) {
    %c0_i32 = arith.constant 0 : i32
    %c0_i32_0 = arith.constant 0 : i32
    %c0_i32_1 = arith.constant 0 : i32
    return %c0_i32, %c0_i32_0 : i32, i32
  }
  func.func @transform_6(%arg0: i32) -> (i32, i32) {
    %c0_i32 = arith.constant 0 : i32
    %c0_i32_0 = arith.constant 0 : i32
    return %arg0, %c0_i32 : i32, i32
  }
}

module attributes {stable_mosaic.version = 11 : i64} {
  func.func @_conv_pool_kernel(%arg0: i32, %arg1: memref<50x3200xbf16, #tpu.memory_space<vmem>>, %arg2: memref<50x3200xbf16, #tpu.memory_space<vmem>>, %arg3: memref<50x3200xbf16, #tpu.memory_space<vmem>>, %arg4: memref<50x3200xbf16, #tpu.memory_space<vmem>>, %arg5: memref<3200x128xbf16, #tpu.memory_space<vmem>>, %arg6: memref<1x128xf32, #tpu.memory_space<vmem>>, %arg7: memref<50x128xbf16, #tpu.memory_space<vmem>>) attributes {dimension_semantics = [#tpu.dimension_semantics<parallel>], iteration_bounds = array<i64: 1>, scalar_prefetch = 0 : i64, scratch_operands = 0 : i64, tpu.core_type = #tpu.core_type<tc>, window_params = [{transform_indices = @transform_0, window_bounds = array<i64: 50, 3200>}, {transform_indices = @transform_1, window_bounds = array<i64: 50, 3200>}, {transform_indices = @transform_2, window_bounds = array<i64: 50, 3200>}, {transform_indices = @transform_3, window_bounds = array<i64: 50, 3200>}, {pipeline_mode = #tpu.pipeline_mode<synchronous>, transform_indices = @transform_4, window_bounds = array<i64: 3200, 128>}, {pipeline_mode = #tpu.pipeline_mode<synchronous>, transform_indices = @transform_5, window_bounds = array<i64: 1, 128>}, {transform_indices = @transform_6, window_bounds = array<i64: 50, 128>}]} {
    %c0 = arith.constant 0 : index
    %c0_0 = arith.constant 0 : index
    %0 = vector.load %arg5[%c0, %c0_0] : memref<3200x128xbf16, #tpu.memory_space<vmem>>, vector<3200x128xbf16>
    %c0_1 = arith.constant 0 : index
    %c0_2 = arith.constant 0 : index
    %1 = vector.load %arg1[%c0_1, %c0_2] : memref<50x3200xbf16, #tpu.memory_space<vmem>>, vector<50x3200xbf16>
    %cst = arith.constant dense<0.000000e+00> : vector<50x128xf32>
    %2 = tpu.matmul %1, %0, %cst {dimension_numbers = #tpu.dot_dimension_numbers<[1], [0], [0], [1], [0, 0, 1, 1], [], []>} : vector<50x3200xbf16>, vector<3200x128xbf16>, vector<50x128xf32> -> vector<50x128xf32>
    %c0_3 = arith.constant 0 : index
    %c0_4 = arith.constant 0 : index
    %3 = vector.load %arg2[%c0_3, %c0_4] : memref<50x3200xbf16, #tpu.memory_space<vmem>>, vector<50x3200xbf16>
    %cst_5 = arith.constant dense<0.000000e+00> : vector<50x128xf32>
    %4 = tpu.matmul %3, %0, %cst_5 {dimension_numbers = #tpu.dot_dimension_numbers<[1], [0], [0], [1], [0, 0, 1, 1], [], []>} : vector<50x3200xbf16>, vector<3200x128xbf16>, vector<50x128xf32> -> vector<50x128xf32>
    %5 = arith.maximumf %2, %4 : vector<50x128xf32>
    %c0_6 = arith.constant 0 : index
    %c0_7 = arith.constant 0 : index
    %6 = vector.load %arg3[%c0_6, %c0_7] : memref<50x3200xbf16, #tpu.memory_space<vmem>>, vector<50x3200xbf16>
    %cst_8 = arith.constant dense<0.000000e+00> : vector<50x128xf32>
    %7 = tpu.matmul %6, %0, %cst_8 {dimension_numbers = #tpu.dot_dimension_numbers<[1], [0], [0], [1], [0, 0, 1, 1], [], []>} : vector<50x3200xbf16>, vector<3200x128xbf16>, vector<50x128xf32> -> vector<50x128xf32>
    %c0_9 = arith.constant 0 : index
    %c0_10 = arith.constant 0 : index
    %8 = vector.load %arg4[%c0_9, %c0_10] : memref<50x3200xbf16, #tpu.memory_space<vmem>>, vector<50x3200xbf16>
    %cst_11 = arith.constant dense<0.000000e+00> : vector<50x128xf32>
    %9 = tpu.matmul %8, %0, %cst_11 {dimension_numbers = #tpu.dot_dimension_numbers<[1], [0], [0], [1], [0, 0, 1, 1], [], []>} : vector<50x3200xbf16>, vector<3200x128xbf16>, vector<50x128xf32> -> vector<50x128xf32>
    %10 = arith.maximumf %7, %9 : vector<50x128xf32>
    %11 = arith.maximumf %5, %10 : vector<50x128xf32>
    %c0_12 = arith.constant 0 : index
    %c0_13 = arith.constant 0 : index
    %12 = vector.load %arg6[%c0_12, %c0_13] : memref<1x128xf32, #tpu.memory_space<vmem>>, vector<1x128xf32>
    %13 = vector.broadcast %12 : vector<1x128xf32> to vector<50x128xf32>
    %14 = arith.addf %11, %13 : vector<50x128xf32>
    %cst_14 = arith.constant 0.000000e+00 : f32
    %15 = vector.broadcast %cst_14 : f32 to vector<50x128xf32>
    %16 = arith.maximumf %14, %15 : vector<50x128xf32>
    %17 = arith.truncf %16 : vector<50x128xf32> to vector<50x128xbf16>
    %c0_15 = arith.constant 0 : index
    %c0_16 = arith.constant 0 : index
    %18 = vector.load %arg7[%c0_15, %c0_16] : memref<50x128xbf16, #tpu.memory_space<vmem>>, vector<50x128xbf16>
    tpu.vector_store %arg7[%c0_15, %c0_16], %17 {strides = array<i32>} : memref<50x128xbf16, #tpu.memory_space<vmem>>, vector<50x128xbf16>,
    return
  }
  func.func @transform_0(%arg0: i32) -> (i32, i32) {
    %c0_i32 = arith.constant 0 : i32
    %c0_i32_0 = arith.constant 0 : i32
    return %arg0, %c0_i32 : i32, i32
  }
  func.func @transform_1(%arg0: i32) -> (i32, i32) {
    %c0_i32 = arith.constant 0 : i32
    %c0_i32_0 = arith.constant 0 : i32
    return %arg0, %c0_i32 : i32, i32
  }
  func.func @transform_2(%arg0: i32) -> (i32, i32) {
    %c0_i32 = arith.constant 0 : i32
    %c0_i32_0 = arith.constant 0 : i32
    return %arg0, %c0_i32 : i32, i32
  }
  func.func @transform_3(%arg0: i32) -> (i32, i32) {
    %c0_i32 = arith.constant 0 : i32
    %c0_i32_0 = arith.constant 0 : i32
    return %arg0, %c0_i32 : i32, i32
  }
  func.func @transform_4(%arg0: i32) -> (i32, i32) {
    %c0_i32 = arith.constant 0 : i32
    %c0_i32_0 = arith.constant 0 : i32
    %c0_i32_1 = arith.constant 0 : i32
    return %c0_i32, %c0_i32_0 : i32, i32
  }
  func.func @transform_5(%arg0: i32) -> (i32, i32) {
    %c0_i32 = arith.constant 0 : i32
    %c0_i32_0 = arith.constant 0 : i32
    %c0_i32_1 = arith.constant 0 : i32
    return %c0_i32, %c0_i32_0 : i32, i32
  }
  func.func @transform_6(%arg0: i32) -> (i32, i32) {
    %c0_i32 = arith.constant 0 : i32
    %c0_i32_0 = arith.constant 0 : i32
    return %arg0, %c0_i32 : i32, i32
  }
}

module attributes {stable_mosaic.version = 11 : i64} {
  func.func @_mlp_kernel(%arg0: i32, %arg1: memref<2x3200xbf16, #tpu.memory_space<vmem>>, %arg2: memref<3200x128xbf16, #tpu.memory_space<vmem>>, %arg3: memref<1x128xf32, #tpu.memory_space<vmem>>, %arg4: memref<128x128xbf16, #tpu.memory_space<vmem>>, %arg5: memref<1x128xf32, #tpu.memory_space<vmem>>, %arg6: memref<128x128xbf16, #tpu.memory_space<vmem>>, %arg7: memref<1x128xf32, #tpu.memory_space<vmem>>, %arg8: memref<2x128xf32, #tpu.memory_space<vmem>>) attributes {dimension_semantics = [#tpu.dimension_semantics<parallel>], iteration_bounds = array<i64: 1>, scalar_prefetch = 0 : i64, scratch_operands = 0 : i64, tpu.core_type = #tpu.core_type<tc>, window_params = [{transform_indices = @transform_0, window_bounds = array<i64: 2, 3200>}, {pipeline_mode = #tpu.pipeline_mode<synchronous>, transform_indices = @transform_1, window_bounds = array<i64: 3200, 128>}, {pipeline_mode = #tpu.pipeline_mode<synchronous>, transform_indices = @transform_2, window_bounds = array<i64: 1, 128>}, {pipeline_mode = #tpu.pipeline_mode<synchronous>, transform_indices = @transform_3, window_bounds = array<i64: 128, 128>}, {pipeline_mode = #tpu.pipeline_mode<synchronous>, transform_indices = @transform_4, window_bounds = array<i64: 1, 128>}, {pipeline_mode = #tpu.pipeline_mode<synchronous>, transform_indices = @transform_5, window_bounds = array<i64: 128, 128>}, {pipeline_mode = #tpu.pipeline_mode<synchronous>, transform_indices = @transform_6, window_bounds = array<i64: 1, 128>}, {transform_indices = @transform_7, window_bounds = array<i64: 2, 128>}]} {
    %c0 = arith.constant 0 : index
    %c0_0 = arith.constant 0 : index
    %0 = vector.load %arg1[%c0, %c0_0] : memref<2x3200xbf16, #tpu.memory_space<vmem>>, vector<2x3200xbf16>
    %c0_1 = arith.constant 0 : index
    %c0_2 = arith.constant 0 : index
    %1 = vector.load %arg2[%c0_1, %c0_2] : memref<3200x128xbf16, #tpu.memory_space<vmem>>, vector<3200x128xbf16>
    %cst = arith.constant dense<0.000000e+00> : vector<2x128xf32>
    %2 = tpu.matmul %0, %1, %cst {dimension_numbers = #tpu.dot_dimension_numbers<[1], [0], [0], [1], [0, 0, 1, 1], [], []>} : vector<2x3200xbf16>, vector<3200x128xbf16>, vector<2x128xf32> -> vector<2x128xf32>
    %c0_3 = arith.constant 0 : index
    %c0_4 = arith.constant 0 : index
    %3 = vector.load %arg3[%c0_3, %c0_4] : memref<1x128xf32, #tpu.memory_space<vmem>>, vector<1x128xf32>
    %4 = vector.broadcast %3 : vector<1x128xf32> to vector<2x128xf32>
    %5 = arith.addf %2, %4 : vector<2x128xf32>
    %cst_5 = arith.constant 0.000000e+00 : f32
    %6 = vector.broadcast %cst_5 : f32 to vector<2x128xf32>
    %7 = arith.maximumf %5, %6 : vector<2x128xf32>
    %8 = arith.truncf %7 : vector<2x128xf32> to vector<2x128xbf16>
    %c0_6 = arith.constant 0 : index
    %c0_7 = arith.constant 0 : index
    %9 = vector.load %arg4[%c0_6, %c0_7] : memref<128x128xbf16, #tpu.memory_space<vmem>>, vector<128x128xbf16>
    %cst_8 = arith.constant dense<0.000000e+00> : vector<2x128xf32>
    %10 = tpu.matmul %8, %9, %cst_8 {dimension_numbers = #tpu.dot_dimension_numbers<[1], [0], [0], [1], [0, 0, 1, 1], [], []>} : vector<2x128xbf16>, vector<128x128xbf16>, vector<2x128xf32> -> vector<2x128xf32>
    %c0_9 = arith.constant 0 : index
    %c0_10 = arith.constant 0 : index
    %11 = vector.load %arg5[%c0_9, %c0_10] : memref<1x128xf32, #tpu.memory_space<vmem>>, vector<1x128xf32>
    %12 = vector.broadcast %11 : vector<1x128xf32> to vector<2x128xf32>
    %13 = arith.addf %10, %12 : vector<2x128xf32>
    %cst_11 = arith.constant 0.000000e+00 : f32
    %14 = vector.broadcast %cst_11 : f32 to vector<2x128xf32>
    %15 = arith.maximumf %13, %14 : vector<2x128xf32>
    %16 = arith.truncf %15 : vector<2x128xf32> to vector<2x128xbf16>
    %c0_12 = arith.constant 0 : index
    %c0_13 = arith.constant 0 : index
    %17 = vector.load %arg6[%c0_12, %c0_13] : memref<128x128xbf16, #tpu.memory_space<vmem>>, vector<128x128xbf16>
    %cst_14 = arith.constant dense<0.000000e+00> : vector<2x128xf32>
    %18 = tpu.matmul %16, %17, %cst_14 {dimension_numbers = #tpu.dot_dimension_numbers<[1], [0], [0], [1], [0, 0, 1, 1], [], []>} : vector<2x128xbf16>, vector<128x128xbf16>, vector<2x128xf32> -> vector<2x128xf32>
    %c0_15 = arith.constant 0 : index
    %c0_16 = arith.constant 0 : index
    %19 = vector.load %arg7[%c0_15, %c0_16] : memref<1x128xf32, #tpu.memory_space<vmem>>, vector<1x128xf32>
    %20 = vector.broadcast %19 : vector<1x128xf32> to vector<2x128xf32>
    %21 = arith.addf %18, %20 : vector<2x128xf32>
    %c0_17 = arith.constant 0 : index
    %c0_18 = arith.constant 0 : index
    %22 = vector.load %arg8[%c0_17, %c0_18] : memref<2x128xf32, #tpu.memory_space<vmem>>, vector<2x128xf32>
    tpu.vector_store %arg8[%c0_17, %c0_18], %21 {strides = array<i32>} : memref<2x128xf32, #tpu.memory_space<vmem>>, vector<2x128xf32>,
    return
  }
  func.func @transform_0(%arg0: i32) -> (i32, i32) {
    %c0_i32 = arith.constant 0 : i32
    %c0_i32_0 = arith.constant 0 : i32
    return %arg0, %c0_i32 : i32, i32
  }
  func.func @transform_1(%arg0: i32) -> (i32, i32) {
    %c0_i32 = arith.constant 0 : i32
    %c0_i32_0 = arith.constant 0 : i32
    %c0_i32_1 = arith.constant 0 : i32
    return %c0_i32, %c0_i32_0 : i32, i32
  }
  func.func @transform_2(%arg0: i32) -> (i32, i32) {
    %c0_i32 = arith.constant 0 : i32
    %c0_i32_0 = arith.constant 0 : i32
    %c0_i32_1 = arith.constant 0 : i32
    return %c0_i32, %c0_i32_0 : i32, i32
  }
  func.func @transform_3(%arg0: i32) -> (i32, i32) {
    %c0_i32 = arith.constant 0 : i32
    %c0_i32_0 = arith.constant 0 : i32
    %c0_i32_1 = arith.constant 0 : i32
    return %c0_i32, %c0_i32_0 : i32, i32
  }
  func.func @transform_4(%arg0: i32) -> (i32, i32) {
    %c0_i32 = arith.constant 0 : i32
    %c0_i32_0 = arith.constant 0 : i32
    %c0_i32_1 = arith.constant 0 : i32
    return %c0_i32, %c0_i32_0 : i32, i32
  }
  func.func @transform_5(%arg0: i32) -> (i32, i32) {
    %c0_i32 = arith.constant 0 : i32
    %c0_i32_0 = arith.constant 0 : i32
    %c0_i32_1 = arith.constant 0 : i32
    return %c0_i32, %c0_i32_0 : i32, i32
  }
  func.func @transform_6(%arg0: i32) -> (i32, i32) {
    %c0_i32 = arith.constant 0 : i32
    %c0_i32_0 = arith.constant 0 : i32
    %c0_i32_1 = arith.constant 0 : i32
    return %c0_i32, %c0_i32_0 : i32, i32
  }
  func.func @transform_7(%arg0: i32) -> (i32, i32) {
    %c0_i32 = arith.constant 0 : i32
    %c0_i32_0 = arith.constant 0 : i32
    return %arg0, %c0_i32 : i32, i32
  }
}

</mosaic_0001>

<llo_original>
// kernel: net_forward.3
$region0: #{net_forward.3}
  #allocation0 [shape = 'u32[]', space=smem, size = 0x4, offset = 0x4, fixed_abs, tag = 'smem constant byte address 0x4 - core index']
  #allocation1 [shape = 'u32[144,128]{1,0:T(1,128)}', space=vmem, size = 0x12000, scoped, tag = 'internal scratch']
  %s0 = inlined_call_operand.vmem [shape: bf16[392,128], index: 0, kind: input, shape index: {}]
  %s1 = inlined_call_operand.vmem [shape: bf16[392,128], index: 1, kind: input, shape index: {}]
  %s2 = inlined_call_operand.vmem [shape: bf16[392,128], index: 2, kind: input, shape index: {}]
  %s3 = inlined_call_operand.vmem [shape: bf16[392,128], index: 3, kind: input, shape index: {}]
  %s4 = inlined_call_operand.vmem [shape: bf16[128,128], index: 4, kind: input, shape index: {}]
  %s5 = inlined_call_operand.vmem [shape: f32[1,128], index: 5, kind: input, shape index: {}]
  %s6 = inlined_call_operand.vmem [shape: bf16[392,128], index: 6, kind: output, shape index: {}]
  %s7 = sld [smem:[#allocation0]]
  $region34: #{net_forward.3} parent=0
    _
  %s9 = ssub.s32 1, %s7
  %s10 = scalar_select 0, %s9, %s7
  // Predicated region
  $region2: #{net_forward.3} parent=0 // pred_check
    _
  $region3: #{net_forward.3} parent=0 // pred_check_branch
    %12 = sbr.rel (0) target = $region5
  $region4: #{net_forward.3} parent=0 // pred_region
    _
  $region5: #{net_forward.3} parent=0 // pred_fallthru
    _
  // Predicated region
  $region6: #{net_forward.3} parent=0 // pred_check
    _
  $region7: #{net_forward.3} parent=0 // pred_check_branch
    %14 = sbr.rel (0) target = $region9
  $region8: #{net_forward.3} parent=0 // pred_region
    _
  $region9: #{net_forward.3} parent=0 // pred_fallthru
    _
  // Predicated region
  $region10: #{net_forward.3} parent=0 // pred_check
    _
  $region11: #{net_forward.3} parent=0 // pred_check_branch
    %16 = sbr.rel (0) target = $region13
  $region12: #{net_forward.3} parent=0 // pred_region
    _
  $region13: #{net_forward.3} parent=0 // pred_fallthru
    _
  // Predicated region
  $region14: #{net_forward.3} parent=0 // pred_check
    _
  $region15: #{net_forward.3} parent=0 // pred_check_branch
    %18 = sbr.rel (0) target = $region17
  $region16: #{net_forward.3} parent=0 // pred_region
    _
  $region17: #{net_forward.3} parent=0 // pred_fallthru
    _
  // Predicated region
  $region18: #{net_forward.3} parent=0 // pred_check
    _
  $region19: #{net_forward.3} parent=0 // pred_check_branch
    %20 = sbr.rel (0) target = $region21
  $region20: #{net_forward.3} parent=0 // pred_region
    _
  $region21: #{net_forward.3} parent=0 // pred_fallthru
    _
  // Predicated region
  $region22: #{net_forward.3} parent=0 // pred_check
    _
  $region23: #{net_forward.3} parent=0 // pred_check_branch
    %22 = sbr.rel (0) target = $region25
  $region24: #{net_forward.3} parent=0 // pred_region
    _
  $region25: #{net_forward.3} parent=0 // pred_fallthru
    _
  %v24 = vld [vmem:[%s4] sm:$0xf]
  %v25 = vld [vmem:[%s4 + $0x4] sm:$0xf]
  %v26 = vld [vmem:[%s4 + $0x8] sm:$0xf]
  %v27 = vld [vmem:[%s4 + $0xc] sm:$0xf]
  %v28 = vld [vmem:[%s4 + $0x10] sm:$0xf]
  %v29 = vld [vmem:[%s4 + $0x14] sm:$0xf]
  %v30 = vld [vmem:[%s4 + $0x18] sm:$0xf]
  %v31 = vld [vmem:[%s4 + $0x1c] sm:$0xf]
  %v32 = vld [vmem:[%s4 + $0x20] sm:$0xf]
  %v33 = vld [vmem:[%s4 + $0x24] sm:$0xf]
  %v34 = vld [vmem:[%s4 + $0x28] sm:$0xf]
  %v35 = vld [vmem:[%s4 + $0x2c] sm:$0xf]
  %v36 = vld [vmem:[%s4 + $0x30] sm:$0xf]
  %v37 = vld [vmem:[%s4 + $0x34] sm:$0xf]
  %v38 = vld [vmem:[%s4 + $0x38] sm:$0xf]
  %v39 = vld [vmem:[%s4 + $0x3c] sm:$0xf]
  %v40 = vld [vmem:[%s0] sm:$0xf]
  %v41 = vld [vmem:[%s0 + $0x4] sm:$0xf]
  %v42 = vld [vmem:[%s0 + $0x8] sm:$0xf]
  %v43 = vld [vmem:[%s0 + $0xc] sm:$0xf]
  %v44 = vld [vmem:[%s0 + $0x10] sm:$0xf]
  %v45 = vld [vmem:[%s0 + $0x14] sm:$0xf]
  %v46 = vld [vmem:[%s0 + $0x18] sm:$0xf]
  %v47 = vld [vmem:[%s0 + $0x1c] sm:$0xf]
  %v48 = vld [vmem:[%s0 + $0x20] sm:$0xf]
  %v49 = vld [vmem:[%s0 + $0x24] sm:$0xf]
  %v50 = vld [vmem:[%s0 + $0x28] sm:$0xf]
  %v51 = vld [vmem:[%s0 + $0x2c] sm:$0xf]
  %v52 = vld [vmem:[%s0 + $0x30] sm:$0xf]
  %v53 = vld [vmem:[%s0 + $0x34] sm:$0xf]
  %v54 = vld [vmem:[%s0 + $0x38] sm:$0xf]
  %v55 = vld [vmem:[%s0 + $0x3c] sm:$0xf]
  %v56 = vld [vmem:[%s0 + $0x40] sm:$0xf]
  %v57 = vld [vmem:[%s0 + $0x44] sm:$0xf]
  %v58 = vld [vmem:[%s0 + $0x48] sm:$0xf]
  %v59 = vld [vmem:[%s0 + $0x4c] sm:$0xf]
  %v60 = vld [vmem:[%s0 + $0x50] sm:$0xf]
  %v61 = vld [vmem:[%s0 + $0x54] sm:$0xf]
  %v62 = vld [vmem:[%s0 + $0x58] sm:$0xf]
  %v63 = vld [vmem:[%s0 + $0x5c] sm:$0xf]
  %v64 = vld [vmem:[%s0 + $0x60] sm:$0xf]
  %v65 = vld [vmem:[%s0 + $0x64] sm:$0xf]
  %v66 = vld [vmem:[%s0 + $0x68] sm:$0xf]
  %v67 = vld [vmem:[%s0 + $0x6c] sm:$0xf]
  %v68 = vld [vmem:[%s0 + $0x70] sm:$0xf]
  %v69 = vld [vmem:[%s0 + $0x74] sm:$0xf]
  %v70 = vld [vmem:[%s0 + $0x78] sm:$0xf]
  %v71 = vld [vmem:[%s0 + $0x7c] sm:$0xf]
  %v72 = vld [vmem:[%s0 + $0x80] sm:$0xf]
  %v73 = vld [vmem:[%s0 + $0x84] sm:$0xf]
  %v74 = vld [vmem:[%s0 + $0x88] sm:$0xf]
  %v75 = vld [vmem:[%s0 + $0x8c] sm:$0xf]
  %v76 = vld [vmem:[%s0 + $0x90] sm:$0xf]
  %v77 = vld [vmem:[%s0 + $0x94] sm:$0xf]
  %v78 = vld [vmem:[%s0 + $0x98] sm:$0xf]
  %v79 = vld [vmem:[%s0 + $0x9c] sm:$0xf]
  %v80 = vld [vmem:[%s0 + $0xa0] sm:$0xf]
  %v81 = vld [vmem:[%s0 + $0xa4] sm:$0xf]
  %v82 = vld [vmem:[%s0 + $0xa8] sm:$0xf]
  %v83 = vld [vmem:[%s0 + $0xac] sm:$0xf]
  %v84 = vld [vmem:[%s0 + $0xb0] sm:$0xf]
  %v85 = vld [vmem:[%s0 + $0xb4] sm:$0xf]
  %v86 = vld [vmem:[%s0 + $0xb8] sm:$0xf]
  %v87 = vld [vmem:[%s0 + $0xbc] sm:$0xf]
  %v88 = vld [vmem:[%s0 + $0xc0] sm:$0xf]
  %v138 = vunpack.c.l.b16 %v40
  %v139 = vunpack.c.l.b16 %v41
  %v140 = vunpack.c.l.b16 %v42
  %v141 = vunpack.c.l.b16 %v43
  %v142 = vunpack.c.l.b16 %v44
  %v143 = vunpack.c.l.b16 %v45
  %v144 = vunpack.c.l.b16 %v46
  %v145 = vunpack.c.l.b16 %v47
  %v146 = vunpack.c.l.b16 %v48
  %v147 = vunpack.c.l.b16 %v49
  %v148 = vunpack.c.l.b16 %v50
  %v149 = vunpack.c.l.b16 %v51
  %v150 = vunpack.c.l.b16 %v52
  %v151 = vunpack.c.l.b16 %v53
  %v152 = vunpack.c.l.b16 %v54
  %v153 = vunpack.c.l.b16 %v55
  %v154 = vunpack.c.l.b16 %v56
  %v155 = vunpack.c.l.b16 %v57
  %v156 = vunpack.c.l.b16 %v58
  %v157 = vunpack.c.l.b16 %v59
  %v158 = vunpack.c.l.b16 %v60
  %v159 = vunpack.c.l.b16 %v61
  %v160 = vunpack.c.l.b16 %v62
  %v161 = vunpack.c.l.b16 %v63
  %v162 = vunpack.c.l.b16 %v64
  %v163 = vunpack.c.l.b16 %v65
  %v164 = vunpack.c.l.b16 %v66
  %v165 = vunpack.c.l.b16 %v67
  %v166 = vunpack.c.l.b16 %v68
  %v167 = vunpack.c.l.b16 %v69
  %v168 = vunpack.c.l.b16 %v70
  %v169 = vunpack.c.l.b16 %v71
  %v170 = vunpack.c.l.b16 %v72
  %v171 = vunpack.c.l.b16 %v73
  %v172 = vunpack.c.l.b16 %v74
  %v173 = vunpack.c.l.b16 %v75
  %v174 = vunpack.c.l.b16 %v76
  %v175 = vunpack.c.l.b16 %v77
  %v176 = vunpack.c.l.b16 %v78
  %v177 = vunpack.c.l.b16 %v79
  %v178 = vunpack.c.l.b16 %v80
  %v179 = vunpack.c.l.b16 %v81
  %v180 = vunpack.c.l.b16 %v82
  %v181 = vunpack.c.l.b16 %v83
  %v182 = vunpack.c.l.b16 %v84
  %v183 = vunpack.c.l.b16 %v85
  %v184 = vunpack.c.l.b16 %v86
  %v185 = vunpack.c.l.b16 %v87
  %v186 = vunpack.c.l.b16 %v88
  %v187 = vpack.c.b16 %v139, %v138
  %v188 = vpack.c.b16 %v141, %v140
  %v189 = vpack.c.b16 %v143, %v142
  %v190 = vpack.c.b16 %v145, %v144
  %v191 = vpack.c.b16 %v147, %v146
  %v192 = vpack.c.b16 %v149, %v148
  %v193 = vpack.c.b16 %v151, %v150
  %v194 = vpack.c.b16 %v153, %v152
  %v195 = vpack.c.b16 %v155, %v154
  %v196 = vpack.c.b16 %v157, %v156
  %v197 = vpack.c.b16 %v159, %v158
  %v198 = vpack.c.b16 %v161, %v160
  %v199 = vpack.c.b16 %v163, %v162
  %v200 = vpack.c.b16 %v165, %v164
  %v201 = vpack.c.b16 %v167, %v166
  %v202 = vpack.c.b16 %v169, %v168
  %v203 = vpack.c.b16 %v171, %v170
  %v204 = vpack.c.b16 %v173, %v172
  %v205 = vpack.c.b16 %v175, %v174
  %v206 = vpack.c.b16 %v177, %v176
  %v207 = vpack.c.b16 %v179, %v178
  %v208 = vpack.c.b16 %v181, %v180
  %v209 = vpack.c.b16 %v183, %v182
  %v210 = vpack.c.b16 %v185, %v184
  %v211 = vpack.c.b16 %v186, %v186
  %v253 = vunpack.c.l.b16 %v24
  %v254 = vunpack.c.l.b16 %v25
  %v255 = vunpack.c.l.b16 %v26
  %v256 = vunpack.c.l.b16 %v27
  %v257 = vunpack.c.l.b16 %v28
  %v258 = vunpack.c.l.b16 %v29
  %v259 = vunpack.c.l.b16 %v30
  %v260 = vunpack.c.l.b16 %v31
  %v261 = vunpack.c.l.b16 %v32
  %v262 = vunpack.c.l.b16 %v33
  %v263 = vunpack.c.l.b16 %v34
  %v264 = vunpack.c.l.b16 %v35
  %v265 = vunpack.c.l.b16 %v36
  %v266 = vunpack.c.l.b16 %v37
  %v267 = vunpack.c.l.b16 %v38
  %v268 = vunpack.c.l.b16 %v39
  %v269 = vpack.c.b16 %v254, %v253
  %v270 = vpack.c.b16 %v256, %v255
  %v271 = vpack.c.b16 %v258, %v257
  %v272 = vpack.c.b16 %v260, %v259
  %v273 = vpack.c.b16 %v262, %v261
  %v274 = vpack.c.b16 %v264, %v263
  %v275 = vpack.c.b16 %v266, %v265
  %v276 = vpack.c.b16 %v268, %v267
  %285 = vmatprep.subr.bf16.mxu0 0
  %286 = vmatpush1.bf16.msra.mxu0 %v276
  %287 = vmatprep.subr.bf16.mxu0 0
  %288 = vmatpush1.bf16.msra.mxu0 %v275
  %289 = vmatprep.subr.bf16.mxu0 0
  %290 = vmatpush1.bf16.msra.mxu0 %v274
  %291 = vmatprep.subr.bf16.mxu0 0
  %292 = vmatpush1.bf16.msra.mxu0 %v273
  %293 = vmatprep.subr.bf16.mxu0 0
  %294 = vmatpush1.bf16.msra.mxu0 %v272
  %295 = vmatprep.subr.bf16.mxu0 0
  %296 = vmatpush1.bf16.msra.mxu0 %v271
  %297 = vmatprep.subr.bf16.mxu0 0
  %298 = vmatpush1.bf16.msra.mxu0 %v270
  %299 = vmatprep.subr.bf16.mxu0 0
  %300 = vmatpush1.bf16.msra.mxu0 %v269
  %301 = vmatprep.subr.bf16.mxu0 0
  %302 = vmatpush2.bf16.msra.mxu0 0
  %303 = vmatprep.subr.bf16.mxu0 0
  %304 = vmatpush2.bf16.msra.mxu0 0
  %305 = vmatprep.subr.bf16.mxu0 0
  %306 = vmatpush2.bf16.msra.mxu0 0
  %307 = vmatprep.subr.bf16.mxu0 0
  %308 = vmatpush2.bf16.msra.mxu0 0
  %309 = vmatprep.subr.bf16.mxu0 0
  %310 = vmatpush2.bf16.msra.mxu0 0
  %311 = vmatprep.subr.bf16.mxu0 0
  %312 = vmatpush2.bf16.msra.mxu0 0
  %313 = vmatprep.subr.bf16.mxu0 0
  %314 = vmatpush2.bf16.msra.mxu0 0
  %315 = vmatprep.subr.bf16.mxu0 0
  %316 = vmatpush2.bf16.msra.mxu0 0
  %317 = vmatprep.mubr.bf16.mxu0 0
  %318 = vmatmul.mubr.bf16.gmra.mxu0 %v187
  %v319 = vpop.f32.mrf.mxu0
  %v320 = vadd.f32 0.0, %v319
  %v321 = vpop.f32.mrf.mxu0
  %v322 = vpop.f32.mrf.mxu0
  %v323 = vadd.f32 0.0, %v322
  %v324 = vpop.f32.mrf.mxu0
  %325 = vmatprep.mubr.bf16.mxu0 0
  %326 = vmatmul.mubr.bf16.gmra.mxu0 %v188
  %v327 = vpop.f32.mrf.mxu0
  %v328 = vadd.f32 0.0, %v327
  %v329 = vpop.f32.mrf.mxu0
  %v330 = vpop.f32.mrf.mxu0
  %v331 = vadd.f32 0.0, %v330
  %v332 = vpop.f32.mrf.mxu0
  %333 = vmatprep.mubr.bf16.mxu0 0
  %334 = vmatmul.mubr.bf16.gmra.mxu0 %v189
  %v335 = vpop.f32.mrf.mxu0
  %v336 = vadd.f32 0.0, %v335
  %v337 = vpop.f32.mrf.mxu0
  %v338 = vpop.f32.mrf.mxu0
  %v339 = vadd.f32 0.0, %v338
  %v340 = vpop.f32.mrf.mxu0
  %341 = vmatprep.mubr.bf16.mxu0 0
  %342 = vmatmul.mubr.bf16.gmra.mxu0 %v190
  %v343 = vpop.f32.mrf.mxu0
  %v344 = vadd.f32 0.0, %v343
  %v345 = vpop.f32.mrf.mxu0
  %v346 = vpop.f32.mrf.mxu0
  %v347 = vadd.f32 0.0, %v346
  %v348 = vpop.f32.mrf.mxu0
  %349 = vmatprep.mubr.bf16.mxu0 0
  %350 = vmatmul.mubr.bf16.gmra.mxu0 %v191
  %v351 = vpop.f32.mrf.mxu0
  %v352 = vadd.f32 0.0, %v351
  %v353 = vpop.f32.mrf.mxu0
  %v354 = vpop.f32.mrf.mxu0
  %v355 = vadd.f32 0.0, %v354
  %v356 = vpop.f32.mrf.mxu0
  %357 = vmatprep.mubr.bf16.mxu0 0
  %358 = vmatmul.mubr.bf16.gmra.mxu0 %v192
  %v359 = vpop.f32.mrf.mxu0
  %v360 = vadd.f32 0.0, %v359
  %v361 = vpop.f32.mrf.mxu0
  %v362 = vpop.f32.mrf.mxu0
  %v363 = vadd.f32 0.0, %v362
  %v364 = vpop.f32.mrf.mxu0
  %365 = vmatprep.mubr.bf16.mxu0 0
  %366 = vmatmul.mubr.bf16.gmra.mxu0 %v193
  %v367 = vpop.f32.mrf.mxu0
  %v368 = vadd.f32 0.0, %v367
  %v369 = vpop.f32.mrf.mxu0
  %v370 = vpop.f32.mrf.mxu0
  %v371 = vadd.f32 0.0, %v370
  %v372 = vpop.f32.mrf.mxu0
  %373 = vmatprep.mubr.bf16.mxu0 0
  %374 = vmatmul.mubr.bf16.gmra.mxu0 %v194
  %v375 = vpop.f32.mrf.mxu0
  %v376 = vadd.f32 0.0, %v375
  %v377 = vpop.f32.mrf.mxu0
  %v378 = vpop.f32.mrf.mxu0
  %v379 = vadd.f32 0.0, %v378
  %v380 = vpop.f32.mrf.mxu0
  %381 = vmatprep.mubr.bf16.mxu0 0
  %382 = vmatmul.mubr.bf16.gmra.mxu0 %v195
  %v383 = vpop.f32.mrf.mxu0
  %v384 = vadd.f32 0.0, %v383
  %v385 = vpop.f32.mrf.mxu0
  %v386 = vpop.f32.mrf.mxu0
  %v387 = vadd.f32 0.0, %v386
  %v388 = vpop.f32.mrf.mxu0
  %389 = vmatprep.mubr.bf16.mxu0 0
  %390 = vmatmul.mubr.bf16.gmra.mxu0 %v196
  %v391 = vpop.f32.mrf.mxu0
  %v392 = vadd.f32 0.0, %v391
  %v393 = vpop.f32.mrf.mxu0
  %v394 = vpop.f32.mrf.mxu0
  %v395 = vadd.f32 0.0, %v394
  %v396 = vpop.f32.mrf.mxu0
  %397 = vmatprep.mubr.bf16.mxu0 0
  %398 = vmatmul.mubr.bf16.gmra.mxu0 %v197
  %v399 = vpop.f32.mrf.mxu0
  %v400 = vadd.f32 0.0, %v399
  %v401 = vpop.f32.mrf.mxu0
  %v402 = vpop.f32.mrf.mxu0
  %v403 = vadd.f32 0.0, %v402
  %v404 = vpop.f32.mrf.mxu0
  %405 = vmatprep.mubr.bf16.mxu0 0
  %406 = vmatmul.mubr.bf16.gmra.mxu0 %v198
  %v407 = vpop.f32.mrf.mxu0
  %v408 = vadd.f32 0.0, %v407
  %v409 = vpop.f32.mrf.mxu0
  %v410 = vpop.f32.mrf.mxu0
  %v411 = vadd.f32 0.0, %v410
  %v412 = vpop.f32.mrf.mxu0
  %413 = vmatprep.mubr.bf16.mxu0 0
  %414 = vmatmul.mubr.bf16.gmra.mxu0 %v199
  %v415 = vpop.f32.mrf.mxu0
  %v416 = vadd.f32 0.0, %v415
  %v417 = vpop.f32.mrf.mxu0
  %v418 = vpop.f32.mrf.mxu0
  %v419 = vadd.f32 0.0, %v418
  %v420 = vpop.f32.mrf.mxu0
  %421 = vmatprep.mubr.bf16.mxu0 0
  %422 = vmatmul.mubr.bf16.gmra.mxu0 %v200
  %v423 = vpop.f32.mrf.mxu0
  %v424 = vadd.f32 0.0, %v423
  %v425 = vpop.f32.mrf.mxu0
  %v426 = vpop.f32.mrf.mxu0
  %v427 = vadd.f32 0.0, %v426
  %v428 = vpop.f32.mrf.mxu0
  %429 = vmatprep.mubr.bf16.mxu0 0
  %430 = vmatmul.mubr.bf16.gmra.mxu0 %v201
  %v431 = vpop.f32.mrf.mxu0
  %v432 = vadd.f32 0.0, %v431
  %v433 = vpop.f32.mrf.mxu0
  %v434 = vpop.f32.mrf.mxu0
  %v435 = vadd.f32 0.0, %v434
  %v436 = vpop.f32.mrf.mxu0
  %437 = vmatprep.mubr.bf16.mxu0 0
  %438 = vmatmul.mubr.bf16.gmra.mxu0 %v202
  %v439 = vpop.f32.mrf.mxu0
  %v440 = vadd.f32 0.0, %v439
  %v441 = vpop.f32.mrf.mxu0
  %v442 = vpop.f32.mrf.mxu0
  %v443 = vadd.f32 0.0, %v442
  %v444 = vpop.f32.mrf.mxu0
  %445 = vmatprep.mubr.bf16.mxu0 0
  %446 = vmatmul.mubr.bf16.gmra.mxu0 %v203
  %v447 = vpop.f32.mrf.mxu0
  %v448 = vadd.f32 0.0, %v447
  %v449 = vpop.f32.mrf.mxu0
  %v450 = vpop.f32.mrf.mxu0
  %v451 = vadd.f32 0.0, %v450
  %v452 = vpop.f32.mrf.mxu0
  %453 = vmatprep.mubr.bf16.mxu0 0
  %454 = vmatmul.mubr.bf16.gmra.mxu0 %v204
  %v455 = vpop.f32.mrf.mxu0
  %v456 = vadd.f32 0.0, %v455
  %v457 = vpop.f32.mrf.mxu0
  %v458 = vpop.f32.mrf.mxu0
  %v459 = vadd.f32 0.0, %v458
  %v460 = vpop.f32.mrf.mxu0
  %461 = vmatprep.mubr.bf16.mxu0 0
  %462 = vmatmul.mubr.bf16.gmra.mxu0 %v205
  %v463 = vpop.f32.mrf.mxu0
  %v464 = vadd.f32 0.0, %v463
  %v465 = vpop.f32.mrf.mxu0
  %v466 = vpop.f32.mrf.mxu0
  %v467 = vadd.f32 0.0, %v466
  %v468 = vpop.f32.mrf.mxu0
  %469 = vmatprep.mubr.bf16.mxu0 0
  %470 = vmatmul.mubr.bf16.gmra.mxu0 %v206
  %v471 = vpop.f32.mrf.mxu0
  %v472 = vadd.f32 0.0, %v471
  %v473 = vpop.f32.mrf.mxu0
  %v474 = vpop.f32.mrf.mxu0
  %v475 = vadd.f32 0.0, %v474
  %v476 = vpop.f32.mrf.mxu0
  %477 = vmatprep.mubr.bf16.mxu0 0
  %478 = vmatmul.mubr.bf16.gmra.mxu0 %v207
  %v479 = vpop.f32.mrf.mxu0
  %v480 = vadd.f32 0.0, %v479
  %v481 = vpop.f32.mrf.mxu0
  %v482 = vpop.f32.mrf.mxu0
  %v483 = vadd.f32 0.0, %v482
  %v484 = vpop.f32.mrf.mxu0
  %485 = vmatprep.mubr.bf16.mxu0 0
  %486 = vmatmul.mubr.bf16.gmra.mxu0 %v208
  %v487 = vpop.f32.mrf.mxu0
  %v488 = vadd.f32 0.0, %v487
  %v489 = vpop.f32.mrf.mxu0
  %v490 = vpop.f32.mrf.mxu0
  %v491 = vadd.f32 0.0, %v490
  %v492 = vpop.f32.mrf.mxu0
  %493 = vmatprep.mubr.bf16.mxu0 0
  %494 = vmatmul.mubr.bf16.gmra.mxu0 %v209
  %v495 = vpop.f32.mrf.mxu0
  %v496 = vadd.f32 0.0, %v495
  %v497 = vpop.f32.mrf.mxu0
  %v498 = vpop.f32.mrf.mxu0
  %v499 = vadd.f32 0.0, %v498
  %v500 = vpop.f32.mrf.mxu0
  %501 = vmatprep.mubr.bf16.mxu0 0
  %502 = vmatmul.mubr.bf16.gmra.mxu0 %v210
  %v503 = vpop.f32.mrf.mxu0
  %v504 = vadd.f32 0.0, %v503
  %v505 = vpop.f32.mrf.mxu0
  %v506 = vpop.f32.mrf.mxu0
  %v507 = vadd.f32 0.0, %v506
  %v508 = vpop.f32.mrf.mxu0
  %509 = vmatprep.mubr.bf16.mxu0 0
  %510 = vmatmul.mubr.bf16.gmra.mxu0 %v211
  %v511 = vpop.f32.mrf.mxu0
  %v512 = vadd.f32 0.0, %v511
  %v513 = vpop.f32.mrf.mxu0
  %v514 = vpop.f32.mrf.mxu0
  %v515 = vpop.f32.mrf.mxu0
  %516 = vdwg.mxu0
  %v517 = vld [vmem:[%s1] sm:$0xf]
  %v518 = vld [vmem:[%s1 + $0x4] sm:$0xf]
  %v519 = vld [vmem:[%s1 + $0x8] sm:$0xf]
  %v520 = vld [vmem:[%s1 + $0xc] sm:$0xf]
  %v521 = vld [vmem:[%s1 + $0x10] sm:$0xf]
  %v522 = vld [vmem:[%s1 + $0x14] sm:$0xf]
  %v523 = vld [vmem:[%s1 + $0x18] sm:$0xf]
  %v524 = vld [vmem:[%s1 + $0x1c] sm:$0xf]
  %v525 = vld [vmem:[%s1 + $0x20] sm:$0xf]
  %v526 = vld [vmem:[%s1 + $0x24] sm:$0xf]
  %v527 = vld [vmem:[%s1 + $0x28] sm:$0xf]
  %v528 = vld [vmem:[%s1 + $0x2c] sm:$0xf]
  %v529 = vld [vmem:[%s1 + $0x30] sm:$0xf]
  %v530 = vld [vmem:[%s1 + $0x34] sm:$0xf]
  %v531 = vld [vmem:[%s1 + $0x38] sm:$0xf]
  %v532 = vld [vmem:[%s1 + $0x3c] sm:$0xf]
  %v533 = vld [vmem:[%s1 + $0x40] sm:$0xf]
  %v534 = vld [vmem:[%s1 + $0x44] sm:$0xf]
  %v535 = vld [vmem:[%s1 + $0x48] sm:$0xf]
  %v536 = vld [vmem:[%s1 + $0x4c] sm:$0xf]
  %v537 = vld [vmem:[%s1 + $0x50] sm:$0xf]
  %v538 = vld [vmem:[%s1 + $0x54] sm:$0xf]
  %v539 = vld [vmem:[%s1 + $0x58] sm:$0xf]
  %v540 = vld [vmem:[%s1 + $0x5c] sm:$0xf]
  %v541 = vld [vmem:[%s1 + $0x60] sm:$0xf]
  %v542 = vld [vmem:[%s1 + $0x64] sm:$0xf]
  %v543 = vld [vmem:[%s1 + $0x68] sm:$0xf]
  %v544 = vld [vmem:[%s1 + $0x6c] sm:$0xf]
  %v545 = vld [vmem:[%s1 + $0x70] sm:$0xf]
  %v546 = vld [vmem:[%s1 + $0x74] sm:$0xf]
  %v547 = vld [vmem:[%s1 + $0x78] sm:$0xf]
  %v548 = vld [vmem:[%s1 + $0x7c] sm:$0xf]
  %v549 = vld [vmem:[%s1 + $0x80] sm:$0xf]
  %v550 = vld [vmem:[%s1 + $0x84] sm:$0xf]
  %v551 = vld [vmem:[%s1 + $0x88] sm:$0xf]
  %v552 = vld [vmem:[%s1 + $0x8c] sm:$0xf]
  %v553 = vld [vmem:[%s1 + $0x90] sm:$0xf]
  %v554 = vld [vmem:[%s1 + $0x94] sm:$0xf]
  %v555 = vld [vmem:[%s1 + $0x98] sm:$0xf]
  %v556 = vld [vmem:[%s1 + $0x9c] sm:$0xf]
  %v557 = vld [vmem:[%s1 + $0xa0] sm:$0xf]
  %v558 = vld [vmem:[%s1 + $0xa4] sm:$0xf]
  %v559 = vld [vmem:[%s1 + $0xa8] sm:$0xf]
  %v560 = vld [vmem:[%s1 + $0xac] sm:$0xf]
  %v561 = vld [vmem:[%s1 + $0xb0] sm:$0xf]
  %v562 = vld [vmem:[%s1 + $0xb4] sm:$0xf]
  %v563 = vld [vmem:[%s1 + $0xb8] sm:$0xf]
  %v564 = vld [vmem:[%s1 + $0xbc] sm:$0xf]
  %v565 = vld [vmem:[%s1 + $0xc0] sm:$0xf]
  %v615 = vunpack.c.l.b16 %v517
  %v616 = vunpack.c.l.b16 %v518
  %v617 = vunpack.c.l.b16 %v519
  %v618 = vunpack.c.l.b16 %v520
  %v619 = vunpack.c.l.b16 %v521
  %v620 = vunpack.c.l.b16 %v522
  %v621 = vunpack.c.l.b16 %v523
  %v622 = vunpack.c.l.b16 %v524
  %v623 = vunpack.c.l.b16 %v525
  %v624 = vunpack.c.l.b16 %v526
  %v625 = vunpack.c.l.b16 %v527
  %v626 = vunpack.c.l.b16 %v528
  %v627 = vunpack.c.l.b16 %v529
  %v628 = vunpack.c.l.b16 %v530
  %v629 = vunpack.c.l.b16 %v531
  %v630 = vunpack.c.l.b16 %v532
  %v631 = vunpack.c.l.b16 %v533
  %v632 = vunpack.c.l.b16 %v534
  %v633 = vunpack.c.l.b16 %v535
  %v634 = vunpack.c.l.b16 %v536
  %v635 = vunpack.c.l.b16 %v537
  %v636 = vunpack.c.l.b16 %v538
  %v637 = vunpack.c.l.b16 %v539
  %v638 = vunpack.c.l.b16 %v540
  %v639 = vunpack.c.l.b16 %v541
  %v640 = vunpack.c.l.b16 %v542
  %v641 = vunpack.c.l.b16 %v543
  %v642 = vunpack.c.l.b16 %v544
  %v643 = vunpack.c.l.b16 %v545
  %v644 = vunpack.c.l.b16 %v546
  %v645 = vunpack.c.l.b16 %v547
  %v646 = vunpack.c.l.b16 %v548
  %v647 = vunpack.c.l.b16 %v549
  %v648 = vunpack.c.l.b16 %v550
  %v649 = vunpack.c.l.b16 %v551
  %v650 = vunpack.c.l.b16 %v552
  %v651 = vunpack.c.l.b16 %v553
  %v652 = vunpack.c.l.b16 %v554
  %v653 = vunpack.c.l.b16 %v555
  %v654 = vunpack.c.l.b16 %v556
  %v655 = vunpack.c.l.b16 %v557
  %v656 = vunpack.c.l.b16 %v558
  %v657 = vunpack.c.l.b16 %v559
  %v658 = vunpack.c.l.b16 %v560
  %v659 = vunpack.c.l.b16 %v561
  %v660 = vunpack.c.l.b16 %v562
  %v661 = vunpack.c.l.b16 %v563
  %v662 = vunpack.c.l.b16 %v564
  %v663 = vunpack.c.l.b16 %v565
  %v664 = vpack.c.b16 %v616, %v615
  %v665 = vpack.c.b16 %v618, %v617
  %v666 = vpack.c.b16 %v620, %v619
  %v667 = vpack.c.b16 %v622, %v621
  %v668 = vpack.c.b16 %v624, %v623
  %v669 = vpack.c.b16 %v626, %v625
  %v670 = vpack.c.b16 %v628, %v627
  %v671 = vpack.c.b16 %v630, %v629
  %v672 = vpack.c.b16 %v632, %v631
  %v673 = vpack.c.b16 %v634, %v633
  %v674 = vpack.c.b16 %v636, %v635
  %v675 = vpack.c.b16 %v638, %v637
  %v676 = vpack.c.b16 %v640, %v639
  %v677 = vpack.c.b16 %v642, %v641
  %v678 = vpack.c.b16 %v644, %v643
  %v679 = vpack.c.b16 %v646, %v645
  %v680 = vpack.c.b16 %v648, %v647
  %v681 = vpack.c.b16 %v650, %v649
  %v682 = vpack.c.b16 %v652, %v651
  %v683 = vpack.c.b16 %v654, %v653
  %v684 = vpack.c.b16 %v656, %v655
  %v685 = vpack.c.b16 %v658, %v657
  %v686 = vpack.c.b16 %v660, %v659
  %v687 = vpack.c.b16 %v662, %v661
  %v688 = vpack.c.b16 %v663, %v663
  %714 = vmatprep.subr.bf16.mxu0 0
  %715 = vmatpush1.bf16.msra.mxu0 %v276
  %716 = vmatprep.subr.bf16.mxu0 0
  %717 = vmatpush1.bf16.msra.mxu0 %v275
  %718 = vmatprep.subr.bf16.mxu0 0
  %719 = vmatpush1.bf16.msra.mxu0 %v274
  %720 = vmatprep.subr.bf16.mxu0 0
  %721 = vmatpush1.bf16.msra.mxu0 %v273
  %722 = vmatprep.subr.bf16.mxu0 0
  %723 = vmatpush1.bf16.msra.mxu0 %v272
  %724 = vmatprep.subr.bf16.mxu0 0
  %725 = vmatpush1.bf16.msra.mxu0 %v271
  %726 = vmatprep.subr.bf16.mxu0 0
  %727 = vmatpush1.bf16.msra.mxu0 %v270
  %728 = vmatprep.subr.bf16.mxu0 0
  %729 = vmatpush1.bf16.msra.mxu0 %v269
  %730 = vmatprep.subr.bf16.mxu0 0
  %731 = vmatpush2.bf16.msra.mxu0 0
  %732 = vmatprep.subr.bf16.mxu0 0
  %733 = vmatpush2.bf16.msra.mxu0 0
  %734 = vmatprep.subr.bf16.mxu0 0
  %735 = vmatpush2.bf16.msra.mxu0 0
  %736 = vmatprep.subr.bf16.mxu0 0
  %737 = vmatpush2.bf16.msra.mxu0 0
  %738 = vmatprep.subr.bf16.mxu0 0
  %739 = vmatpush2.bf16.msra.mxu0 0
  %740 = vmatprep.subr.bf16.mxu0 0
  %741 = vmatpush2.bf16.msra.mxu0 0
  %742 = vmatprep.subr.bf16.mxu0 0
  %743 = vmatpush2.bf16.msra.mxu0 0
  %744 = vmatprep.subr.bf16.mxu0 0
  %745 = vmatpush2.bf16.msra.mxu0 0
  %746 = vmatprep.mubr.bf16.mxu0 0
  %747 = vmatmul.mubr.bf16.gmra.mxu0 %v664
  %v748 = vpop.f32.mrf.mxu0
  %v749 = vadd.f32 0.0, %v748
  %v750 = vpop.f32.mrf.mxu0
  %v751 = vpop.f32.mrf.mxu0
  %v752 = vadd.f32 0.0, %v751
  %v753 = vpop.f32.mrf.mxu0
  %754 = vmatprep.mubr.bf16.mxu0 0
  %755 = vmatmul.mubr.bf16.gmra.mxu0 %v665
  %v756 = vpop.f32.mrf.mxu0
  %v757 = vadd.f32 0.0, %v756
  %v758 = vpop.f32.mrf.mxu0
  %v759 = vpop.f32.mrf.mxu0
  %v760 = vadd.f32 0.0, %v759
  %v761 = vpop.f32.mrf.mxu0
  %762 = vmatprep.mubr.bf16.mxu0 0
  %763 = vmatmul.mubr.bf16.gmra.mxu0 %v666
  %v764 = vpop.f32.mrf.mxu0
  %v765 = vadd.f32 0.0, %v764
  %v766 = vpop.f32.mrf.mxu0
  %v767 = vpop.f32.mrf.mxu0
  %v768 = vadd.f32 0.0, %v767
  %v769 = vpop.f32.mrf.mxu0
  %770 = vmatprep.mubr.bf16.mxu0 0
  %771 = vmatmul.mubr.bf16.gmra.mxu0 %v667
  %v772 = vpop.f32.mrf.mxu0
  %v773 = vadd.f32 0.0, %v772
  %v774 = vpop.f32.mrf.mxu0
  %v775 = vpop.f32.mrf.mxu0
  %v776 = vadd.f32 0.0, %v775
  %v777 = vpop.f32.mrf.mxu0
  %778 = vmatprep.mubr.bf16.mxu0 0
  %779 = vmatmul.mubr.bf16.gmra.mxu0 %v668
  %v780 = vpop.f32.mrf.mxu0
  %v781 = vadd.f32 0.0, %v780
  %v782 = vpop.f32.mrf.mxu0
  %v783 = vpop.f32.mrf.mxu0
  %v784 = vadd.f32 0.0, %v783
  %v785 = vpop.f32.mrf.mxu0
  %786 = vmatprep.mubr.bf16.mxu0 0
  %787 = vmatmul.mubr.bf16.gmra.mxu0 %v669
  %v788 = vpop.f32.mrf.mxu0
  %v789 = vadd.f32 0.0, %v788
  %v790 = vpop.f32.mrf.mxu0
  %v791 = vpop.f32.mrf.mxu0
  %v792 = vadd.f32 0.0, %v791
  %v793 = vpop.f32.mrf.mxu0
  %794 = vmatprep.mubr.bf16.mxu0 0
  %795 = vmatmul.mubr.bf16.gmra.mxu0 %v670
  %v796 = vpop.f32.mrf.mxu0
  %v797 = vadd.f32 0.0, %v796
  %v798 = vpop.f32.mrf.mxu0
  %v799 = vpop.f32.mrf.mxu0
  %v800 = vadd.f32 0.0, %v799
  %v801 = vpop.f32.mrf.mxu0
  %802 = vmatprep.mubr.bf16.mxu0 0
  %803 = vmatmul.mubr.bf16.gmra.mxu0 %v671
  %v804 = vpop.f32.mrf.mxu0
  %v805 = vadd.f32 0.0, %v804
  %v806 = vpop.f32.mrf.mxu0
  %v807 = vpop.f32.mrf.mxu0
  %v808 = vadd.f32 0.0, %v807
  %v809 = vpop.f32.mrf.mxu0
  %810 = vmatprep.mubr.bf16.mxu0 0
  %811 = vmatmul.mubr.bf16.gmra.mxu0 %v672
  %v812 = vpop.f32.mrf.mxu0
  %v813 = vadd.f32 0.0, %v812
  %v814 = vpop.f32.mrf.mxu0
  %v815 = vpop.f32.mrf.mxu0
  %v816 = vadd.f32 0.0, %v815
  %v817 = vpop.f32.mrf.mxu0
  %818 = vmatprep.mubr.bf16.mxu0 0
  %819 = vmatmul.mubr.bf16.gmra.mxu0 %v673
  %v820 = vpop.f32.mrf.mxu0
  %v821 = vadd.f32 0.0, %v820
  %v822 = vpop.f32.mrf.mxu0
  %v823 = vpop.f32.mrf.mxu0
  %v824 = vadd.f32 0.0, %v823
  %v825 = vpop.f32.mrf.mxu0
  %826 = vmatprep.mubr.bf16.mxu0 0
  %827 = vmatmul.mubr.bf16.gmra.mxu0 %v674
  %v828 = vpop.f32.mrf.mxu0
  %v829 = vadd.f32 0.0, %v828
  %v830 = vpop.f32.mrf.mxu0
  %v831 = vpop.f32.mrf.mxu0
  %v832 = vadd.f32 0.0, %v831
  %v833 = vpop.f32.mrf.mxu0
  %834 = vmatprep.mubr.bf16.mxu0 0
  %835 = vmatmul.mubr.bf16.gmra.mxu0 %v675
  %v836 = vpop.f32.mrf.mxu0
  %v837 = vadd.f32 0.0, %v836
  %v838 = vpop.f32.mrf.mxu0
  %v839 = vpop.f32.mrf.mxu0
  %v840 = vadd.f32 0.0, %v839
  %v841 = vpop.f32.mrf.mxu0
  %842 = vmatprep.mubr.bf16.mxu0 0
  %843 = vmatmul.mubr.bf16.gmra.mxu0 %v676
  %v844 = vpop.f32.mrf.mxu0
  %v845 = vadd.f32 0.0, %v844
  %v846 = vpop.f32.mrf.mxu0
  %v847 = vpop.f32.mrf.mxu0
  %v848 = vadd.f32 0.0, %v847
  %v849 = vpop.f32.mrf.mxu0
  %850 = vmatprep.mubr.bf16.mxu0 0
  %851 = vmatmul.mubr.bf16.gmra.mxu0 %v677
  %v852 = vpop.f32.mrf.mxu0
  %v853 = vadd.f32 0.0, %v852
  %v854 = vpop.f32.mrf.mxu0
  %v855 = vpop.f32.mrf.mxu0
  %v856 = vadd.f32 0.0, %v855
  %v857 = vpop.f32.mrf.mxu0
  %858 = vmatprep.mubr.bf16.mxu0 0
  %859 = vmatmul.mubr.bf16.gmra.mxu0 %v678
  %v860 = vpop.f32.mrf.mxu0
  %v861 = vadd.f32 0.0, %v860
  %v862 = vpop.f32.mrf.mxu0
  %v863 = vpop.f32.mrf.mxu0
  %v864 = vadd.f32 0.0, %v863
  %v865 = vpop.f32.mrf.mxu0
  %866 = vmatprep.mubr.bf16.mxu0 0
  %867 = vmatmul.mubr.bf16.gmra.mxu0 %v679
  %v868 = vpop.f32.mrf.mxu0
  %v869 = vadd.f32 0.0, %v868
  %v870 = vpop.f32.mrf.mxu0
  %v871 = vpop.f32.mrf.mxu0
  %v872 = vadd.f32 0.0, %v871
  %v873 = vpop.f32.mrf.mxu0
  %874 = vmatprep.mubr.bf16.mxu0 0
  %875 = vmatmul.mubr.bf16.gmra.mxu0 %v680
  %v876 = vpop.f32.mrf.mxu0
  %v877 = vadd.f32 0.0, %v876
  %v878 = vpop.f32.mrf.mxu0
  %v879 = vpop.f32.mrf.mxu0
  %v880 = vadd.f32 0.0, %v879
  %v881 = vpop.f32.mrf.mxu0
  %882 = vmatprep.mubr.bf16.mxu0 0
  %883 = vmatmul.mubr.bf16.gmra.mxu0 %v681
  %v884 = vpop.f32.mrf.mxu0
  %v885 = vadd.f32 0.0, %v884
  %v886 = vpop.f32.mrf.mxu0
  %v887 = vpop.f32.mrf.mxu0
  %v888 = vadd.f32 0.0, %v887
  %v889 = vpop.f32.mrf.mxu0
  %890 = vmatprep.mubr.bf16.mxu0 0
  %891 = vmatmul.mubr.bf16.gmra.mxu0 %v682
  %v892 = vpop.f32.mrf.mxu0
  %v893 = vadd.f32 0.0, %v892
  %v894 = vpop.f32.mrf.mxu0
  %v895 = vpop.f32.mrf.mxu0
  %v896 = vadd.f32 0.0, %v895
  %v897 = vpop.f32.mrf.mxu0
  %898 = vmatprep.mubr.bf16.mxu0 0
  %899 = vmatmul.mubr.bf16.gmra.mxu0 %v683
  %v900 = vpop.f32.mrf.mxu0
  %v901 = vadd.f32 0.0, %v900
  %v902 = vpop.f32.mrf.mxu0
  %v903 = vpop.f32.mrf.mxu0
  %v904 = vadd.f32 0.0, %v903
  %v905 = vpop.f32.mrf.mxu0
  %906 = vmatprep.mubr.bf16.mxu0 0
  %907 = vmatmul.mubr.bf16.gmra.mxu0 %v684
  %v908 = vpop.f32.mrf.mxu0
  %v909 = vadd.f32 0.0, %v908
  %v910 = vpop.f32.mrf.mxu0
  %v911 = vpop.f32.mrf.mxu0
  %v912 = vadd.f32 0.0, %v911
  %v913 = vpop.f32.mrf.mxu0
  %914 = vmatprep.mubr.bf16.mxu0 0
  %915 = vmatmul.mubr.bf16.gmra.mxu0 %v685
  %v916 = vpop.f32.mrf.mxu0
  %v917 = vadd.f32 0.0, %v916
  %v918 = vpop.f32.mrf.mxu0
  %v919 = vpop.f32.mrf.mxu0
  %v920 = vadd.f32 0.0, %v919
  %v921 = vpop.f32.mrf.mxu0
  %922 = vmatprep.mubr.bf16.mxu0 0
  %923 = vmatmul.mubr.bf16.gmra.mxu0 %v686
  %v924 = vpop.f32.mrf.mxu0
  %v925 = vadd.f32 0.0, %v924
  %v926 = vpop.f32.mrf.mxu0
  %v927 = vpop.f32.mrf.mxu0
  %v928 = vadd.f32 0.0, %v927
  %v929 = vpop.f32.mrf.mxu0
  %930 = vmatprep.mubr.bf16.mxu0 0
  %931 = vmatmul.mubr.bf16.gmra.mxu0 %v687
  %v932 = vpop.f32.mrf.mxu0
  %v933 = vadd.f32 0.0, %v932
  %v934 = vpop.f32.mrf.mxu0
  %v935 = vpop.f32.mrf.mxu0
  %v936 = vadd.f32 0.0, %v935
  %v937 = vpop.f32.mrf.mxu0
  %938 = vmatprep.mubr.bf16.mxu0 0
  %939 = vmatmul.mubr.bf16.gmra.mxu0 %v688
  %v940 = vpop.f32.mrf.mxu0
  %v941 = vadd.f32 0.0, %v940
  %v942 = vpop.f32.mrf.mxu0
  %v943 = vpop.f32.mrf.mxu0
  %v944 = vpop.f32.mrf.mxu0
  %945 = vdwg.mxu0
  %v946 = vmax.f32 %v320, %v749
  %v947 = vmax.f32 %v323, %v752
  %v948 = vmax.f32 %v328, %v757
  %v949 = vmax.f32 %v331, %v760
  %v950 = vmax.f32 %v336, %v765
  %v951 = vmax.f32 %v339, %v768
  %v952 = vmax.f32 %v344, %v773
  %v953 = vmax.f32 %v347, %v776
  %v954 = vmax.f32 %v352, %v781
  %v955 = vmax.f32 %v355, %v784
  %v956 = vmax.f32 %v360, %v789
  %v957 = vmax.f32 %v363, %v792
  %v958 = vmax.f32 %v368, %v797
  %v959 = vmax.f32 %v371, %v800
  %v960 = vmax.f32 %v376, %v805
  %v961 = vmax.f32 %v379, %v808
  %v962 = vmax.f32 %v384, %v813
  %v963 = vmax.f32 %v387, %v816
  %v964 = vmax.f32 %v392, %v821
  %v965 = vmax.f32 %v395, %v824
  %v966 = vmax.f32 %v400, %v829
  %v967 = vmax.f32 %v403, %v832
  %v968 = vmax.f32 %v408, %v837
  %v969 = vmax.f32 %v411, %v840
  %v970 = vmax.f32 %v416, %v845
  %v971 = vmax.f32 %v419, %v848
  %v972 = vmax.f32 %v424, %v853
  %v973 = vmax.f32 %v427, %v856
  %v974 = vmax.f32 %v432, %v861
  %v975 = vmax.f32 %v435, %v864
  %v976 = vmax.f32 %v440, %v869
  %v977 = vmax.f32 %v443, %v872
  %v978 = vmax.f32 %v448, %v877
  %v979 = vmax.f32 %v451, %v880
  %v980 = vmax.f32 %v456, %v885
  %v981 = vmax.f32 %v459, %v888
  %v982 = vmax.f32 %v464, %v893
  %v983 = vmax.f32 %v467, %v896
  %v984 = vmax.f32 %v472, %v901
  %v985 = vmax.f32 %v475, %v904
  %v986 = vmax.f32 %v480, %v909
  %v987 = vmax.f32 %v483, %v912
  %v988 = vmax.f32 %v488, %v917
  %v989 = vmax.f32 %v491, %v920
  %v990 = vmax.f32 %v496, %v925
  %v991 = vmax.f32 %v499, %v928
  %v992 = vmax.f32 %v504, %v933
  %v993 = vmax.f32 %v507, %v936
  %v994 = vmax.f32 %v512, %v941
  %v995 = vld [vmem:[%s2] sm:$0xf]
  %v996 = vld [vmem:[%s2 + $0x4] sm:$0xf]
  %v997 = vld [vmem:[%s2 + $0x8] sm:$0xf]
  %v998 = vld [vmem:[%s2 + $0xc] sm:$0xf]
  %v999 = vld [vmem:[%s2 + $0x10] sm:$0xf]
  %v1000 = vld [vmem:[%s2 + $0x14] sm:$0xf]
  %v1001 = vld [vmem:[%s2 + $0x18] sm:$0xf]
  %v1002 = vld [vmem:[%s2 + $0x1c] sm:$0xf]
  %v1003 = vld [vmem:[%s2 + $0x20] sm:$0xf]
  %v1004 = vld [vmem:[%s2 + $0x24] sm:$0xf]
  %v1005 = vld [vmem:[%s2 + $0x28] sm:$0xf]
  %v1006 = vld [vmem:[%s2 + $0x2c] sm:$0xf]
  %v1007 = vld [vmem:[%s2 + $0x30] sm:$0xf]
  %v1008 = vld [vmem:[%s2 + $0x34] sm:$0xf]
  %v1009 = vld [vmem:[%s2 + $0x38] sm:$0xf]
  %v1010 = vld [vmem:[%s2 + $0x3c] sm:$0xf]
  %v1011 = vld [vmem:[%s2 + $0x40] sm:$0xf]
  %v1012 = vld [vmem:[%s2 + $0x44] sm:$0xf]
  %v1013 = vld [vmem:[%s2 + $0x48] sm:$0xf]
  %v1014 = vld [vmem:[%s2 + $0x4c] sm:$0xf]
  %v1015 = vld [vmem:[%s2 + $0x50] sm:$0xf]
  %v1016 = vld [vmem:[%s2 + $0x54] sm:$0xf]
  %v1017 = vld [vmem:[%s2 + $0x58] sm:$0xf]
  %v1018 = vld [vmem:[%s2 + $0x5c] sm:$0xf]
  %v1019 = vld [vmem:[%s2 + $0x60] sm:$0xf]
  %v1020 = vld [vmem:[%s2 + $0x64] sm:$0xf]
  %v1021 = vld [vmem:[%s2 + $0x68] sm:$0xf]
  %v1022 = vld [vmem:[%s2 + $0x6c] sm:$0xf]
  %v1023 = vld [vmem:[%s2 + $0x70] sm:$0xf]
  %v1024 = vld [vmem:[%s2 + $0x74] sm:$0xf]
  %v1025 = vld [vmem:[%s2 + $0x78] sm:$0xf]
  %v1026 = vld [vmem:[%s2 + $0x7c] sm:$0xf]
  %v1027 = vld [vmem:[%s2 + $0x80] sm:$0xf]
  %v1028 = vld [vmem:[%s2 + $0x84] sm:$0xf]
  %v1029 = vld [vmem:[%s2 + $0x88] sm:$0xf]
  %v1030 = vld [vmem:[%s2 + $0x8c] sm:$0xf]
  %v1031 = vld [vmem:[%s2 + $0x90] sm:$0xf]
  %v1032 = vld [vmem:[%s2 + $0x94] sm:$0xf]
  %v1033 = vld [vmem:[%s2 + $0x98] sm:$0xf]
  %v1034 = vld [vmem:[%s2 + $0x9c] sm:$0xf]
  %v1035 = vld [vmem:[%s2 + $0xa0] sm:$0xf]
  %v1036 = vld [vmem:[%s2 + $0xa4] sm:$0xf]
  %v1037 = vld [vmem:[%s2 + $0xa8] sm:$0xf]
  %v1038 = vld [vmem:[%s2 + $0xac] sm:$0xf]
  %v1039 = vld [vmem:[%s2 + $0xb0] sm:$0xf]
  %v1040 = vld [vmem:[%s2 + $0xb4] sm:$0xf]
  %v1041 = vld [vmem:[%s2 + $0xb8] sm:$0xf]
  %v1042 = vld [vmem:[%s2 + $0xbc] sm:$0xf]
  %v1043 = vld [vmem:[%s2 + $0xc0] sm:$0xf]
  %v1093 = vunpack.c.l.b16 %v995
  %v1094 = vunpack.c.l.b16 %v996
  %v1095 = vunpack.c.l.b16 %v997
  %v1096 = vunpack.c.l.b16 %v998
  %v1097 = vunpack.c.l.b16 %v999
  %v1098 = vunpack.c.l.b16 %v1000
  %v1099 = vunpack.c.l.b16 %v1001
  %v1100 = vunpack.c.l.b16 %v1002
  %v1101 = vunpack.c.l.b16 %v1003
  %v1102 = vunpack.c.l.b16 %v1004
  %v1103 = vunpack.c.l.b16 %v1005
  %v1104 = vunpack.c.l.b16 %v1006
  %v1105 = vunpack.c.l.b16 %v1007
  %v1106 = vunpack.c.l.b16 %v1008
  %v1107 = vunpack.c.l.b16 %v1009
  %v1108 = vunpack.c.l.b16 %v1010
  %v1109 = vunpack.c.l.b16 %v1011
  %v1110 = vunpack.c.l.b16 %v1012
  %v1111 = vunpack.c.l.b16 %v1013
  %v1112 = vunpack.c.l.b16 %v1014
  %v1113 = vunpack.c.l.b16 %v1015
  %v1114 = vunpack.c.l.b16 %v1016
  %v1115 = vunpack.c.l.b16 %v1017
  %v1116 = vunpack.c.l.b16 %v1018
  %v1117 = vunpack.c.l.b16 %v1019
  %v1118 = vunpack.c.l.b16 %v1020
  %v1119 = vunpack.c.l.b16 %v1021
  %v1120 = vunpack.c.l.b16 %v1022
  %v1121 = vunpack.c.l.b16 %v1023
  %v1122 = vunpack.c.l.b16 %v1024
  %v1123 = vunpack.c.l.b16 %v1025
  %v1124 = vunpack.c.l.b16 %v1026
  %v1125 = vunpack.c.l.b16 %v1027
  %v1126 = vunpack.c.l.b16 %v1028
  %v1127 = vunpack.c.l.b16 %v1029
  %v1128 = vunpack.c.l.b16 %v1030
  %v1129 = vunpack.c.l.b16 %v1031
  %v1130 = vunpack.c.l.b16 %v1032
  %v1131 = vunpack.c.l.b16 %v1033
  %v1132 = vunpack.c.l.b16 %v1034
  %v1133 = vunpack.c.l.b16 %v1035
  %v1134 = vunpack.c.l.b16 %v1036
  %v1135 = vunpack.c.l.b16 %v1037
  %v1136 = vunpack.c.l.b16 %v1038
  %v1137 = vunpack.c.l.b16 %v1039
  %v1138 = vunpack.c.l.b16 %v1040
  %v1139 = vunpack.c.l.b16 %v1041
  %v1140 = vunpack.c.l.b16 %v1042
  %v1141 = vunpack.c.l.b16 %v1043
  %v1142 = vpack.c.b16 %v1094, %v1093
  %v1143 = vpack.c.b16 %v1096, %v1095
  %v1144 = vpack.c.b16 %v1098, %v1097
  %v1145 = vpack.c.b16 %v1100, %v1099
  %v1146 = vpack.c.b16 %v1102, %v1101
  %v1147 = vpack.c.b16 %v1104, %v1103
  %v1148 = vpack.c.b16 %v1106, %v1105
  %v1149 = vpack.c.b16 %v1108, %v1107
  %v1150 = vpack.c.b16 %v1110, %v1109
  %v1151 = vpack.c.b16 %v1112, %v1111
  %v1152 = vpack.c.b16 %v1114, %v1113
  %v1153 = vpack.c.b16 %v1116, %v1115
  %v1154 = vpack.c.b16 %v1118, %v1117
  %v1155 = vpack.c.b16 %v1120, %v1119
  %v1156 = vpack.c.b16 %v1122, %v1121
  %v1157 = vpack.c.b16 %v1124, %v1123
  %v1158 = vpack.c.b16 %v1126, %v1125
  %v1159 = vpack.c.b16 %v1128, %v1127
  %v1160 = vpack.c.b16 %v1130, %v1129
  %v1161 = vpack.c.b16 %v1132, %v1131
  %v1162 = vpack.c.b16 %v1134, %v1133
  %v1163 = vpack.c.b16 %v1136, %v1135
  %v1164 = vpack.c.b16 %v1138, %v1137
  %v1165 = vpack.c.b16 %v1140, %v1139
  %v1166 = vpack.c.b16 %v1141, %v1141
  %1192 = vmatprep.subr.bf16.mxu0 0
  %1193 = vmatpush1.bf16.msra.mxu0 %v276
  %1194 = vmatprep.subr.bf16.mxu0 0
  %1195 = vmatpush1.bf16.msra.mxu0 %v275
  %1196 = vmatprep.subr.bf16.mxu0 0
  %1197 = vmatpush1.bf16.msra.mxu0 %v274
  %1198 = vmatprep.subr.bf16.mxu0 0
  %1199 = vmatpush1.bf16.msra.mxu0 %v273
  %1200 = vmatprep.subr.bf16.mxu0 0
  %1201 = vmatpush1.bf16.msra.mxu0 %v272
  %1202 = vmatprep.subr.bf16.mxu0 0
  %1203 = vmatpush1.bf16.msra.mxu0 %v271
  %1204 = vmatprep.subr.bf16.mxu0 0
  %1205 = vmatpush1.bf16.msra.mxu0 %v270
  %1206 = vmatprep.subr.bf16.mxu0 0
  %1207 = vmatpush1.bf16.msra.mxu0 %v269
  %1208 = vmatprep.subr.bf16.mxu0 0
  %1209 = vmatpush2.bf16.msra.mxu0 0
  %1210 = vmatprep.subr.bf16.mxu0 0
  %1211 = vmatpush2.bf16.msra.mxu0 0
  %1212 = vmatprep.subr.bf16.mxu0 0
  %1213 = vmatpush2.bf16.msra.mxu0 0
  %1214 = vmatprep.subr.bf16.mxu0 0
  %1215 = vmatpush2.bf16.msra.mxu0 0
  %1216 = vmatprep.subr.bf16.mxu0 0
  %1217 = vmatpush2.bf16.msra.mxu0 0
  %1218 = vmatprep.subr.bf16.mxu0 0
  %1219 = vmatpush2.bf16.msra.mxu0 0
  %1220 = vmatprep.subr.bf16.mxu0 0
  %1221 = vmatpush2.bf16.msra.mxu0 0
  %1222 = vmatprep.subr.bf16.mxu0 0
  %1223 = vmatpush2.bf16.msra.mxu0 0
  %1224 = vmatprep.mubr.bf16.mxu0 0
  %1225 = vmatmul.mubr.bf16.gmra.mxu0 %v1142
  %v1226 = vpop.f32.mrf.mxu0
  %v1227 = vadd.f32 0.0, %v1226
  %v1228 = vpop.f32.mrf.mxu0
  %v1229 = vpop.f32.mrf.mxu0
  %v1230 = vadd.f32 0.0, %v1229
  %v1231 = vpop.f32.mrf.mxu0
  %1232 = vmatprep.mubr.bf16.mxu0 0
  %1233 = vmatmul.mubr.bf16.gmra.mxu0 %v1143
  %v1234 = vpop.f32.mrf.mxu0
  %v1235 = vadd.f32 0.0, %v1234
  %v1236 = vpop.f32.mrf.mxu0
  %v1237 = vpop.f32.mrf.mxu0
  %v1238 = vadd.f32 0.0, %v1237
  %v1239 = vpop.f32.mrf.mxu0
  %1240 = vmatprep.mubr.bf16.mxu0 0
  %1241 = vmatmul.mubr.bf16.gmra.mxu0 %v1144
  %v1242 = vpop.f32.mrf.mxu0
  %v1243 = vadd.f32 0.0, %v1242
  %v1244 = vpop.f32.mrf.mxu0
  %v1245 = vpop.f32.mrf.mxu0
  %v1246 = vadd.f32 0.0, %v1245
  %v1247 = vpop.f32.mrf.mxu0
  %1248 = vmatprep.mubr.bf16.mxu0 0
  %1249 = vmatmul.mubr.bf16.gmra.mxu0 %v1145
  %v1250 = vpop.f32.mrf.mxu0
  %v1251 = vadd.f32 0.0, %v1250
  %v1252 = vpop.f32.mrf.mxu0
  %v1253 = vpop.f32.mrf.mxu0
  %v1254 = vadd.f32 0.0, %v1253
  %v1255 = vpop.f32.mrf.mxu0
  %1256 = vmatprep.mubr.bf16.mxu0 0
  %1257 = vmatmul.mubr.bf16.gmra.mxu0 %v1146
  %v1258 = vpop.f32.mrf.mxu0
  %v1259 = vadd.f32 0.0, %v1258
  %v1260 = vpop.f32.mrf.mxu0
  %v1261 = vpop.f32.mrf.mxu0
  %v1262 = vadd.f32 0.0, %v1261
  %v1263 = vpop.f32.mrf.mxu0
  %1264 = vmatprep.mubr.bf16.mxu0 0
  %1265 = vmatmul.mubr.bf16.gmra.mxu0 %v1147
  %v1266 = vpop.f32.mrf.mxu0
  %v1267 = vadd.f32 0.0, %v1266
  %v1268 = vpop.f32.mrf.mxu0
  %v1269 = vpop.f32.mrf.mxu0
  %v1270 = vadd.f32 0.0, %v1269
  %v1271 = vpop.f32.mrf.mxu0
  %1272 = vmatprep.mubr.bf16.mxu0 0
  %1273 = vmatmul.mubr.bf16.gmra.mxu0 %v1148
  %v1274 = vpop.f32.mrf.mxu0
  %v1275 = vadd.f32 0.0, %v1274
  %v1276 = vpop.f32.mrf.mxu0
  %v1277 = vpop.f32.mrf.mxu0
  %v1278 = vadd.f32 0.0, %v1277
  %v1279 = vpop.f32.mrf.mxu0
  %1280 = vmatprep.mubr.bf16.mxu0 0
  %1281 = vmatmul.mubr.bf16.gmra.mxu0 %v1149
  %v1282 = vpop.f32.mrf.mxu0
  %v1283 = vadd.f32 0.0, %v1282
  %v1284 = vpop.f32.mrf.mxu0
  %v1285 = vpop.f32.mrf.mxu0
  %v1286 = vadd.f32 0.0, %v1285
  %v1287 = vpop.f32.mrf.mxu0
  %1288 = vmatprep.mubr.bf16.mxu0 0
  %1289 = vmatmul.mubr.bf16.gmra.mxu0 %v1150
  %v1290 = vpop.f32.mrf.mxu0
  %v1291 = vadd.f32 0.0, %v1290
  %v1292 = vpop.f32.mrf.mxu0
  %v1293 = vpop.f32.mrf.mxu0
  %v1294 = vadd.f32 0.0, %v1293
  %v1295 = vpop.f32.mrf.mxu0
  %1296 = vmatprep.mubr.bf16.mxu0 0
  %1297 = vmatmul.mubr.bf16.gmra.mxu0 %v1151
  %v1298 = vpop.f32.mrf.mxu0
  %v1299 = vadd.f32 0.0, %v1298
  %v1300 = vpop.f32.mrf.mxu0
  %v1301 = vpop.f32.mrf.mxu0
  %v1302 = vadd.f32 0.0, %v1301
  %v1303 = vpop.f32.mrf.mxu0
  %1304 = vmatprep.mubr.bf16.mxu0 0
  %1305 = vmatmul.mubr.bf16.gmra.mxu0 %v1152
  %v1306 = vpop.f32.mrf.mxu0
  %v1307 = vadd.f32 0.0, %v1306
  %v1308 = vpop.f32.mrf.mxu0
  %v1309 = vpop.f32.mrf.mxu0
  %v1310 = vadd.f32 0.0, %v1309
  %v1311 = vpop.f32.mrf.mxu0
  %1312 = vmatprep.mubr.bf16.mxu0 0
  %1313 = vmatmul.mubr.bf16.gmra.mxu0 %v1153
  %v1314 = vpop.f32.mrf.mxu0
  %v1315 = vadd.f32 0.0, %v1314
  %v1316 = vpop.f32.mrf.mxu0
  %v1317 = vpop.f32.mrf.mxu0
  %v1318 = vadd.f32 0.0, %v1317
  %v1319 = vpop.f32.mrf.mxu0
  %1320 = vmatprep.mubr.bf16.mxu0 0
  %1321 = vmatmul.mubr.bf16.gmra.mxu0 %v1154
  %v1322 = vpop.f32.mrf.mxu0
  %v1323 = vadd.f32 0.0, %v1322
  %v1324 = vpop.f32.mrf.mxu0
  %v1325 = vpop.f32.mrf.mxu0
  %v1326 = vadd.f32 0.0, %v1325
  %v1327 = vpop.f32.mrf.mxu0
  %1328 = vmatprep.mubr.bf16.mxu0 0
  %1329 = vmatmul.mubr.bf16.gmra.mxu0 %v1155
  %v1330 = vpop.f32.mrf.mxu0
  %v1331 = vadd.f32 0.0, %v1330
  %v1332 = vpop.f32.mrf.mxu0
  %v1333 = vpop.f32.mrf.mxu0
  %v1334 = vadd.f32 0.0, %v1333
  %v1335 = vpop.f32.mrf.mxu0
  %1336 = vmatprep.mubr.bf16.mxu0 0
  %1337 = vmatmul.mubr.bf16.gmra.mxu0 %v1156
  %v1338 = vpop.f32.mrf.mxu0
  %v1339 = vadd.f32 0.0, %v1338
  %v1340 = vpop.f32.mrf.mxu0
  %v1341 = vpop.f32.mrf.mxu0
  %v1342 = vadd.f32 0.0, %v1341
  %v1343 = vpop.f32.mrf.mxu0
  %1344 = vmatprep.mubr.bf16.mxu0 0
  %1345 = vmatmul.mubr.bf16.gmra.mxu0 %v1157
  %v1346 = vpop.f32.mrf.mxu0
  %v1347 = vadd.f32 0.0, %v1346
  %v1348 = vpop.f32.mrf.mxu0
  %v1349 = vpop.f32.mrf.mxu0
  %v1350 = vadd.f32 0.0, %v1349
  %v1351 = vpop.f32.mrf.mxu0
  %1352 = vmatprep.mubr.bf16.mxu0 0
  %1353 = vmatmul.mubr.bf16.gmra.mxu0 %v1158
  %v1354 = vpop.f32.mrf.mxu0
  %v1355 = vadd.f32 0.0, %v1354
  %v1356 = vpop.f32.mrf.mxu0
  %v1357 = vpop.f32.mrf.mxu0
  %v1358 = vadd.f32 0.0, %v1357
  %v1359 = vpop.f32.mrf.mxu0
  %1360 = vmatprep.mubr.bf16.mxu0 0
  %1361 = vmatmul.mubr.bf16.gmra.mxu0 %v1159
  %v1362 = vpop.f32.mrf.mxu0
  %v1363 = vadd.f32 0.0, %v1362
  %v1364 = vpop.f32.mrf.mxu0
  %v1365 = vpop.f32.mrf.mxu0
  %v1366 = vadd.f32 0.0, %v1365
  %v1367 = vpop.f32.mrf.mxu0
  %1368 = vmatprep.mubr.bf16.mxu0 0
  %1369 = vmatmul.mubr.bf16.gmra.mxu0 %v1160
  %v1370 = vpop.f32.mrf.mxu0
  %v1371 = vadd.f32 0.0, %v1370
  %v1372 = vpop.f32.mrf.mxu0
  %v1373 = vpop.f32.mrf.mxu0
  %v1374 = vadd.f32 0.0, %v1373
  %v1375 = vpop.f32.mrf.mxu0
  %1376 = vmatprep.mubr.bf16.mxu0 0
  %1377 = vmatmul.mubr.bf16.gmra.mxu0 %v1161
  %v1378 = vpop.f32.mrf.mxu0
  %v1379 = vadd.f32 0.0, %v1378
  %v1380 = vpop.f32.mrf.mxu0
  %v1381 = vpop.f32.mrf.mxu0
  %v1382 = vadd.f32 0.0, %v1381
  %v1383 = vpop.f32.mrf.mxu0
  %1384 = vmatprep.mubr.bf16.mxu0 0
  %1385 = vmatmul.mubr.bf16.gmra.mxu0 %v1162
  %v1386 = vpop.f32.mrf.mxu0
  %v1387 = vadd.f32 0.0, %v1386
  %v1388 = vpop.f32.mrf.mxu0
  %v1389 = vpop.f32.mrf.mxu0
  %v1390 = vadd.f32 0.0, %v1389
  %v1391 = vpop.f32.mrf.mxu0
  %1392 = vmatprep.mubr.bf16.mxu0 0
  %1393 = vmatmul.mubr.bf16.gmra.mxu0 %v1163
  %v1394 = vpop.f32.mrf.mxu0
  %v1395 = vadd.f32 0.0, %v1394
  %v1396 = vpop.f32.mrf.mxu0
  %v1397 = vpop.f32.mrf.mxu0
  %v1398 = vadd.f32 0.0, %v1397
  %v1399 = vpop.f32.mrf.mxu0
  %1400 = vmatprep.mubr.bf16.mxu0 0
  %1401 = vmatmul.mubr.bf16.gmra.mxu0 %v1164
  %v1402 = vpop.f32.mrf.mxu0
  %v1403 = vadd.f32 0.0, %v1402
  %v1404 = vpop.f32.mrf.mxu0
  %v1405 = vpop.f32.mrf.mxu0
  %v1406 = vadd.f32 0.0, %v1405
  %v1407 = vpop.f32.mrf.mxu0
  %1408 = vmatprep.mubr.bf16.mxu0 0
  %1409 = vmatmul.mubr.bf16.gmra.mxu0 %v1165
  %v1410 = vpop.f32.mrf.mxu0
  %v1411 = vadd.f32 0.0, %v1410
  %v1412 = vpop.f32.mrf.mxu0
  %v1413 = vpop.f32.mrf.mxu0
  %v1414 = vadd.f32 0.0, %v1413
  %v1415 = vpop.f32.mrf.mxu0
  %1416 = vmatprep.mubr.bf16.mxu0 0
  %1417 = vmatmul.mubr.bf16.gmra.mxu0 %v1166
  %v1418 = vpop.f32.mrf.mxu0
  %v1419 = vadd.f32 0.0, %v1418
  %v1420 = vpop.f32.mrf.mxu0
  %v1421 = vpop.f32.mrf.mxu0
  %v1422 = vpop.f32.mrf.mxu0
  %1423 = vdwg.mxu0
  %v1424 = vld [vmem:[%s3] sm:$0xf]
  %v1425 = vld [vmem:[%s3 + $0x4] sm:$0xf]
  %v1426 = vld [vmem:[%s3 + $0x8] sm:$0xf]
  %v1427 = vld [vmem:[%s3 + $0xc] sm:$0xf]
  %v1428 = vld [vmem:[%s3 + $0x10] sm:$0xf]
  %v1429 = vld [vmem:[%s3 + $0x14] sm:$0xf]
  %v1430 = vld [vmem:[%s3 + $0x18] sm:$0xf]
  %v1431 = vld [vmem:[%s3 + $0x1c] sm:$0xf]
  %v1432 = vld [vmem:[%s3 + $0x20] sm:$0xf]
  %v1433 = vld [vmem:[%s3 + $0x24] sm:$0xf]
  %v1434 = vld [vmem:[%s3 + $0x28] sm:$0xf]
  %v1435 = vld [vmem:[%s3 + $0x2c] sm:$0xf]
  %v1436 = vld [vmem:[%s3 + $0x30] sm:$0xf]
  %v1437 = vld [vmem:[%s3 + $0x34] sm:$0xf]
  %v1438 = vld [vmem:[%s3 + $0x38] sm:$0xf]
  %v1439 = vld [vmem:[%s3 + $0x3c] sm:$0xf]
  %v1440 = vld [vmem:[%s3 + $0x40] sm:$0xf]
  %v1441 = vld [vmem:[%s3 + $0x44] sm:$0xf]
  %v1442 = vld [vmem:[%s3 + $0x48] sm:$0xf]
  %v1443 = vld [vmem:[%s3 + $0x4c] sm:$0xf]
  %v1444 = vld [vmem:[%s3 + $0x50] sm:$0xf]
  %v1445 = vld [vmem:[%s3 + $0x54] sm:$0xf]
  %v1446 = vld [vmem:[%s3 + $0x58] sm:$0xf]
  %v1447 = vld [vmem:[%s3 + $0x5c] sm:$0xf]
  %v1448 = vld [vmem:[%s3 + $0x60] sm:$0xf]
  %v1449 = vld [vmem:[%s3 + $0x64] sm:$0xf]
  %v1450 = vld [vmem:[%s3 + $0x68] sm:$0xf]
  %v1451 = vld [vmem:[%s3 + $0x6c] sm:$0xf]
  %v1452 = vld [vmem:[%s3 + $0x70] sm:$0xf]
  %v1453 = vld [vmem:[%s3 + $0x74] sm:$0xf]
  %v1454 = vld [vmem:[%s3 + $0x78] sm:$0xf]
  %v1455 = vld [vmem:[%s3 + $0x7c] sm:$0xf]
  %v1456 = vld [vmem:[%s3 + $0x80] sm:$0xf]
  %v1457 = vld [vmem:[%s3 + $0x84] sm:$0xf]
  %v1458 = vld [vmem:[%s3 + $0x88] sm:$0xf]
  %v1459 = vld [vmem:[%s3 + $0x8c] sm:$0xf]
  %v1460 = vld [vmem:[%s3 + $0x90] sm:$0xf]
  %v1461 = vld [vmem:[%s3 + $0x94] sm:$0xf]
  %v1462 = vld [vmem:[%s3 + $0x98] sm:$0xf]
  %v1463 = vld [vmem:[%s3 + $0x9c] sm:$0xf]
  %v1464 = vld [vmem:[%s3 + $0xa0] sm:$0xf]
  %v1465 = vld [vmem:[%s3 + $0xa4] sm:$0xf]
  %v1466 = vld [vmem:[%s3 + $0xa8] sm:$0xf]
  %v1467 = vld [vmem:[%s3 + $0xac] sm:$0xf]
  %v1468 = vld [vmem:[%s3 + $0xb0] sm:$0xf]
  %v1469 = vld [vmem:[%s3 + $0xb4] sm:$0xf]
  %v1470 = vld [vmem:[%s3 + $0xb8] sm:$0xf]
  %v1471 = vld [vmem:[%s3 + $0xbc] sm:$0xf]
  %v1472 = vld [vmem:[%s3 + $0xc0] sm:$0xf]
  %v1522 = vunpack.c.l.b16 %v1424
  %v1523 = vunpack.c.l.b16 %v1425
  %v1524 = vunpack.c.l.b16 %v1426
  %v1525 = vunpack.c.l.b16 %v1427
  %v1526 = vunpack.c.l.b16 %v1428
  %v1527 = vunpack.c.l.b16 %v1429
  %v1528 = vunpack.c.l.b16 %v1430
  %v1529 = vunpack.c.l.b16 %v1431
  %v1530 = vunpack.c.l.b16 %v1432
  %v1531 = vunpack.c.l.b16 %v1433
  %v1532 = vunpack.c.l.b16 %v1434
  %v1533 = vunpack.c.l.b16 %v1435
  %v1534 = vunpack.c.l.b16 %v1436
  %v1535 = vunpack.c.l.b16 %v1437
  %v1536 = vunpack.c.l.b16 %v1438
  %v1537 = vunpack.c.l.b16 %v1439
  %v1538 = vunpack.c.l.b16 %v1440
  %v1539 = vunpack.c.l.b16 %v1441
  %v1540 = vunpack.c.l.b16 %v1442
  %v1541 = vunpack.c.l.b16 %v1443
  %v1542 = vunpack.c.l.b16 %v1444
  %v1543 = vunpack.c.l.b16 %v1445
  %v1544 = vunpack.c.l.b16 %v1446
  %v1545 = vunpack.c.l.b16 %v1447
  %v1546 = vunpack.c.l.b16 %v1448
  %v1547 = vunpack.c.l.b16 %v1449
  %v1548 = vunpack.c.l.b16 %v1450
  %v1549 = vunpack.c.l.b16 %v1451
  %v1550 = vunpack.c.l.b16 %v1452
  %v1551 = vunpack.c.l.b16 %v1453
  %v1552 = vunpack.c.l.b16 %v1454
  %v1553 = vunpack.c.l.b16 %v1455
  %v1554 = vunpack.c.l.b16 %v1456
  %v1555 = vunpack.c.l.b16 %v1457
  %v1556 = vunpack.c.l.b16 %v1458
  %v1557 = vunpack.c.l.b16 %v1459
  %v1558 = vunpack.c.l.b16 %v1460
  %v1559 = vunpack.c.l.b16 %v1461
  %v1560 = vunpack.c.l.b16 %v1462
  %v1561 = vunpack.c.l.b16 %v1463
  %v1562 = vunpack.c.l.b16 %v1464
  %v1563 = vunpack.c.l.b16 %v1465
  %v1564 = vunpack.c.l.b16 %v1466
  %v1565 = vunpack.c.l.b16 %v1467
  %v1566 = vunpack.c.l.b16 %v1468
  %v1567 = vunpack.c.l.b16 %v1469
  %v1568 = vunpack.c.l.b16 %v1470
  %v1569 = vunpack.c.l.b16 %v1471
  %v1570 = vunpack.c.l.b16 %v1472
  %v1571 = vpack.c.b16 %v1523, %v1522
  %v1572 = vpack.c.b16 %v1525, %v1524
  %v1573 = vpack.c.b16 %v1527, %v1526
  %v1574 = vpack.c.b16 %v1529, %v1528
  %v1575 = vpack.c.b16 %v1531, %v1530
  %v1576 = vpack.c.b16 %v1533, %v1532
  %v1577 = vpack.c.b16 %v1535, %v1534
  %v1578 = vpack.c.b16 %v1537, %v1536
  %v1579 = vpack.c.b16 %v1539, %v1538
  %v1580 = vpack.c.b16 %v1541, %v1540
  %v1581 = vpack.c.b16 %v1543, %v1542
  %v1582 = vpack.c.b16 %v1545, %v1544
  %v1583 = vpack.c.b16 %v1547, %v1546
  %v1584 = vpack.c.b16 %v1549, %v1548
  %v1585 = vpack.c.b16 %v1551, %v1550
  %v1586 = vpack.c.b16 %v1553, %v1552
  %v1587 = vpack.c.b16 %v1555, %v1554
  %v1588 = vpack.c.b16 %v1557, %v1556
  %v1589 = vpack.c.b16 %v1559, %v1558
  %v1590 = vpack.c.b16 %v1561, %v1560
  %v1591 = vpack.c.b16 %v1563, %v1562
  %v1592 = vpack.c.b16 %v1565, %v1564
  %v1593 = vpack.c.b16 %v1567, %v1566
  %v1594 = vpack.c.b16 %v1569, %v1568
  %v1595 = vpack.c.b16 %v1570, %v1570
  %1621 = vmatprep.subr.bf16.mxu0 0
  %1622 = vmatpush1.bf16.msra.mxu0 %v276
  %1623 = vmatprep.subr.bf16.mxu0 0
  %1624 = vmatpush1.bf16.msra.mxu0 %v275
  %1625 = vmatprep.subr.bf16.mxu0 0
  %1626 = vmatpush1.bf16.msra.mxu0 %v274
  %1627 = vmatprep.subr.bf16.mxu0 0
  %1628 = vmatpush1.bf16.msra.mxu0 %v273
  %1629 = vmatprep.subr.bf16.mxu0 0
  %1630 = vmatpush1.bf16.msra.mxu0 %v272
  %1631 = vmatprep.subr.bf16.mxu0 0
  %1632 = vmatpush1.bf16.msra.mxu0 %v271
  %1633 = vmatprep.subr.bf16.mxu0 0
  %1634 = vmatpush1.bf16.msra.mxu0 %v270
  %1635 = vmatprep.subr.bf16.mxu0 0
  %1636 = vmatpush1.bf16.msra.mxu0 %v269
  %1637 = vmatprep.subr.bf16.mxu0 0
  %1638 = vmatpush2.bf16.msra.mxu0 0
  %1639 = vmatprep.subr.bf16.mxu0 0
  %1640 = vmatpush2.bf16.msra.mxu0 0
  %1641 = vmatprep.subr.bf16.mxu0 0
  %1642 = vmatpush2.bf16.msra.mxu0 0
  %1643 = vmatprep.subr.bf16.mxu0 0
  %1644 = vmatpush2.bf16.msra.mxu0 0
  %1645 = vmatprep.subr.bf16.mxu0 0
  %1646 = vmatpush2.bf16.msra.mxu0 0
  %1647 = vmatprep.subr.bf16.mxu0 0
  %1648 = vmatpush2.bf16.msra.mxu0 0
  %1649 = vmatprep.subr.bf16.mxu0 0
  %1650 = vmatpush2.bf16.msra.mxu0 0
  %1651 = vmatprep.subr.bf16.mxu0 0
  %1652 = vmatpush2.bf16.msra.mxu0 0
  %1653 = vmatprep.mubr.bf16.mxu0 0
  %1654 = vmatmul.mubr.bf16.gmra.mxu0 %v1571
  %v1655 = vpop.f32.mrf.mxu0
  %v1656 = vadd.f32 0.0, %v1655
  %v1657 = vpop.f32.mrf.mxu0
  %v1658 = vpop.f32.mrf.mxu0
  %v1659 = vadd.f32 0.0, %v1658
  %v1660 = vpop.f32.mrf.mxu0
  %1661 = vmatprep.mubr.bf16.mxu0 0
  %1662 = vmatmul.mubr.bf16.gmra.mxu0 %v1572
  %v1663 = vpop.f32.mrf.mxu0
  %v1664 = vadd.f32 0.0, %v1663
  %v1665 = vpop.f32.mrf.mxu0
  %v1666 = vpop.f32.mrf.mxu0
  %v1667 = vadd.f32 0.0, %v1666
  %v1668 = vpop.f32.mrf.mxu0
  %1669 = vmatprep.mubr.bf16.mxu0 0
  %1670 = vmatmul.mubr.bf16.gmra.mxu0 %v1573
  %v1671 = vpop.f32.mrf.mxu0
  %v1672 = vadd.f32 0.0, %v1671
  %v1673 = vpop.f32.mrf.mxu0
  %v1674 = vpop.f32.mrf.mxu0
  %v1675 = vadd.f32 0.0, %v1674
  %v1676 = vpop.f32.mrf.mxu0
  %1677 = vmatprep.mubr.bf16.mxu0 0
  %1678 = vmatmul.mubr.bf16.gmra.mxu0 %v1574
  %v1679 = vpop.f32.mrf.mxu0
  %v1680 = vadd.f32 0.0, %v1679
  %v1681 = vpop.f32.mrf.mxu0
  %v1682 = vpop.f32.mrf.mxu0
  %v1683 = vadd.f32 0.0, %v1682
  %v1684 = vpop.f32.mrf.mxu0
  %1685 = vmatprep.mubr.bf16.mxu0 0
  %1686 = vmatmul.mubr.bf16.gmra.mxu0 %v1575
  %v1687 = vpop.f32.mrf.mxu0
  %v1688 = vadd.f32 0.0, %v1687
  %v1689 = vpop.f32.mrf.mxu0
  %v1690 = vpop.f32.mrf.mxu0
  %v1691 = vadd.f32 0.0, %v1690
  %v1692 = vpop.f32.mrf.mxu0
  %1693 = vmatprep.mubr.bf16.mxu0 0
  %1694 = vmatmul.mubr.bf16.gmra.mxu0 %v1576
  %v1695 = vpop.f32.mrf.mxu0
  %v1696 = vadd.f32 0.0, %v1695
  %v1697 = vpop.f32.mrf.mxu0
  %v1698 = vpop.f32.mrf.mxu0
  %v1699 = vadd.f32 0.0, %v1698
  %v1700 = vpop.f32.mrf.mxu0
  %1701 = vmatprep.mubr.bf16.mxu0 0
  %1702 = vmatmul.mubr.bf16.gmra.mxu0 %v1577
  %v1703 = vpop.f32.mrf.mxu0
  %v1704 = vadd.f32 0.0, %v1703
  %v1705 = vpop.f32.mrf.mxu0
  %v1706 = vpop.f32.mrf.mxu0
  %v1707 = vadd.f32 0.0, %v1706
  %v1708 = vpop.f32.mrf.mxu0
  %1709 = vmatprep.mubr.bf16.mxu0 0
  %1710 = vmatmul.mubr.bf16.gmra.mxu0 %v1578
  %v1711 = vpop.f32.mrf.mxu0
  %v1712 = vadd.f32 0.0, %v1711
  %v1713 = vpop.f32.mrf.mxu0
  %v1714 = vpop.f32.mrf.mxu0
  %v1715 = vadd.f32 0.0, %v1714
  %v1716 = vpop.f32.mrf.mxu0
  %1717 = vmatprep.mubr.bf16.mxu0 0
  %1718 = vmatmul.mubr.bf16.gmra.mxu0 %v1579
  %v1719 = vpop.f32.mrf.mxu0
  %v1720 = vadd.f32 0.0, %v1719
  %v1721 = vpop.f32.mrf.mxu0
  %v1722 = vpop.f32.mrf.mxu0
  %v1723 = vadd.f32 0.0, %v1722
  %v1724 = vpop.f32.mrf.mxu0
  %1725 = vmatprep.mubr.bf16.mxu0 0
  %1726 = vmatmul.mubr.bf16.gmra.mxu0 %v1580
  %v1727 = vpop.f32.mrf.mxu0
  %v1728 = vadd.f32 0.0, %v1727
  %v1729 = vpop.f32.mrf.mxu0
  %v1730 = vpop.f32.mrf.mxu0
  %v1731 = vadd.f32 0.0, %v1730
  %v1732 = vpop.f32.mrf.mxu0
  %1733 = vmatprep.mubr.bf16.mxu0 0
  %1734 = vmatmul.mubr.bf16.gmra.mxu0 %v1581
  %v1735 = vpop.f32.mrf.mxu0
  %v1736 = vadd.f32 0.0, %v1735
  %v1737 = vpop.f32.mrf.mxu0
  %v1738 = vpop.f32.mrf.mxu0
  %v1739 = vadd.f32 0.0, %v1738
  %v1740 = vpop.f32.mrf.mxu0
  %1741 = vmatprep.mubr.bf16.mxu0 0
  %1742 = vmatmul.mubr.bf16.gmra.mxu0 %v1582
  %v1743 = vpop.f32.mrf.mxu0
  %v1744 = vadd.f32 0.0, %v1743
  %v1745 = vpop.f32.mrf.mxu0
  %v1746 = vpop.f32.mrf.mxu0
  %v1747 = vadd.f32 0.0, %v1746
  %v1748 = vpop.f32.mrf.mxu0
  %1749 = vmatprep.mubr.bf16.mxu0 0
  %1750 = vmatmul.mubr.bf16.gmra.mxu0 %v1583
  %v1751 = vpop.f32.mrf.mxu0
  %v1752 = vadd.f32 0.0, %v1751
  %v1753 = vpop.f32.mrf.mxu0
  %v1754 = vpop.f32.mrf.mxu0
  %v1755 = vadd.f32 0.0, %v1754
  %v1756 = vpop.f32.mrf.mxu0
  %1757 = vmatprep.mubr.bf16.mxu0 0
  %1758 = vmatmul.mubr.bf16.gmra.mxu0 %v1584
  %v1759 = vpop.f32.mrf.mxu0
  %v1760 = vadd.f32 0.0, %v1759
  %v1761 = vpop.f32.mrf.mxu0
  %v1762 = vpop.f32.mrf.mxu0
  %v1763 = vadd.f32 0.0, %v1762
  %v1764 = vpop.f32.mrf.mxu0
  %1765 = vmatprep.mubr.bf16.mxu0 0
  %1766 = vmatmul.mubr.bf16.gmra.mxu0 %v1585
  %v1767 = vpop.f32.mrf.mxu0
  %v1768 = vadd.f32 0.0, %v1767
  %v1769 = vpop.f32.mrf.mxu0
  %v1770 = vpop.f32.mrf.mxu0
  %v1771 = vadd.f32 0.0, %v1770
  %v1772 = vpop.f32.mrf.mxu0
  %1773 = vmatprep.mubr.bf16.mxu0 0
  %1774 = vmatmul.mubr.bf16.gmra.mxu0 %v1586
  %v1775 = vpop.f32.mrf.mxu0
  %v1776 = vadd.f32 0.0, %v1775
  %v1777 = vpop.f32.mrf.mxu0
  %v1778 = vpop.f32.mrf.mxu0
  %v1779 = vadd.f32 0.0, %v1778
  %v1780 = vpop.f32.mrf.mxu0
  %1781 = vmatprep.mubr.bf16.mxu0 0
  %1782 = vmatmul.mubr.bf16.gmra.mxu0 %v1587
  %v1783 = vpop.f32.mrf.mxu0
  %v1784 = vadd.f32 0.0, %v1783
  %v1785 = vpop.f32.mrf.mxu0
  %v1786 = vpop.f32.mrf.mxu0
  %v1787 = vadd.f32 0.0, %v1786
  %v1788 = vpop.f32.mrf.mxu0
  %1789 = vmatprep.mubr.bf16.mxu0 0
  %1790 = vmatmul.mubr.bf16.gmra.mxu0 %v1588
  %v1791 = vpop.f32.mrf.mxu0
  %v1792 = vadd.f32 0.0, %v1791
  %v1793 = vpop.f32.mrf.mxu0
  %v1794 = vpop.f32.mrf.mxu0
  %v1795 = vadd.f32 0.0, %v1794
  %v1796 = vpop.f32.mrf.mxu0
  %1797 = vmatprep.mubr.bf16.mxu0 0
  %1798 = vmatmul.mubr.bf16.gmra.mxu0 %v1589
  %v1799 = vpop.f32.mrf.mxu0
  %v1800 = vadd.f32 0.0, %v1799
  %v1801 = vpop.f32.mrf.mxu0
  %v1802 = vpop.f32.mrf.mxu0
  %v1803 = vadd.f32 0.0, %v1802
  %v1804 = vpop.f32.mrf.mxu0
  %1805 = vmatprep.mubr.bf16.mxu0 0
  %1806 = vmatmul.mubr.bf16.gmra.mxu0 %v1590
  %v1807 = vpop.f32.mrf.mxu0
  %v1808 = vadd.f32 0.0, %v1807
  %v1809 = vpop.f32.mrf.mxu0
  %v1810 = vpop.f32.mrf.mxu0
  %v1811 = vadd.f32 0.0, %v1810
  %v1812 = vpop.f32.mrf.mxu0
  %1813 = vmatprep.mubr.bf16.mxu0 0
  %1814 = vmatmul.mubr.bf16.gmra.mxu0 %v1591
  %v1815 = vpop.f32.mrf.mxu0
  %v1816 = vadd.f32 0.0, %v1815
  %v1817 = vpop.f32.mrf.mxu0
  %v1818 = vpop.f32.mrf.mxu0
  %v1819 = vadd.f32 0.0, %v1818
  %v1820 = vpop.f32.mrf.mxu0
  %1821 = vmatprep.mubr.bf16.mxu0 0
  %1822 = vmatmul.mubr.bf16.gmra.mxu0 %v1592
  %v1823 = vpop.f32.mrf.mxu0
  %v1824 = vadd.f32 0.0, %v1823
  %v1825 = vpop.f32.mrf.mxu0
  %v1826 = vpop.f32.mrf.mxu0
  %v1827 = vadd.f32 0.0, %v1826
  %v1828 = vpop.f32.mrf.mxu0
  %1829 = vmatprep.mubr.bf16.mxu0 0
  %1830 = vmatmul.mubr.bf16.gmra.mxu0 %v1593
  %v1831 = vpop.f32.mrf.mxu0
  %v1832 = vadd.f32 0.0, %v1831
  %v1833 = vpop.f32.mrf.mxu0
  %v1834 = vpop.f32.mrf.mxu0
  %v1835 = vadd.f32 0.0, %v1834
  %v1836 = vpop.f32.mrf.mxu0
  %1837 = vmatprep.mubr.bf16.mxu0 0
  %1838 = vmatmul.mubr.bf16.gmra.mxu0 %v1594
  %v1839 = vpop.f32.mrf.mxu0
  %v1840 = vadd.f32 0.0, %v1839
  %v1841 = vpop.f32.mrf.mxu0
  %v1842 = vpop.f32.mrf.mxu0
  %v1843 = vadd.f32 0.0, %v1842
  %v1844 = vpop.f32.mrf.mxu0
  %1845 = vmatprep.mubr.bf16.mxu0 0
  %1846 = vmatmul.mubr.bf16.gmra.mxu0 %v1595
  %v1847 = vpop.f32.mrf.mxu0
  %v1848 = vadd.f32 0.0, %v1847
  %v1849 = vpop.f32.mrf.mxu0
  %v1850 = vpop.f32.mrf.mxu0
  %v1851 = vpop.f32.mrf.mxu0
  %1852 = vdwg.mxu0
  %v1853 = vmax.f32 %v1227, %v1656
  %v1854 = vmax.f32 %v1230, %v1659
  %v1855 = vmax.f32 %v1235, %v1664
  %v1856 = vmax.f32 %v1238, %v1667
  %v1857 = vmax.f32 %v1243, %v1672
  %v1858 = vmax.f32 %v1246, %v1675
  %v1859 = vmax.f32 %v1251, %v1680
  %v1860 = vmax.f32 %v1254, %v1683
  %v1861 = vmax.f32 %v1259, %v1688
  %v1862 = vmax.f32 %v1262, %v1691
  %v1863 = vmax.f32 %v1267, %v1696
  %v1864 = vmax.f32 %v1270, %v1699
  %v1865 = vmax.f32 %v1275, %v1704
  %v1866 = vmax.f32 %v1278, %v1707
  %v1867 = vmax.f32 %v1283, %v1712
  %v1868 = vmax.f32 %v1286, %v1715
  %v1869 = vmax.f32 %v1291, %v1720
  %v1870 = vmax.f32 %v1294, %v1723
  %v1871 = vmax.f32 %v1299, %v1728
  %v1872 = vmax.f32 %v1302, %v1731
  %v1873 = vmax.f32 %v1307, %v1736
  %v1874 = vmax.f32 %v1310, %v1739
  %v1875 = vmax.f32 %v1315, %v1744
  %v1876 = vmax.f32 %v1318, %v1747
  %v1877 = vmax.f32 %v1323, %v1752
  %v1878 = vmax.f32 %v1326, %v1755
  %v1879 = vmax.f32 %v1331, %v1760
  %v1880 = vmax.f32 %v1334, %v1763
  %v1881 = vmax.f32 %v1339, %v1768
  %v1882 = vmax.f32 %v1342, %v1771
  %v1883 = vmax.f32 %v1347, %v1776
  %v1884 = vmax.f32 %v1350, %v1779
  %v1885 = vmax.f32 %v1355, %v1784
  %v1886 = vmax.f32 %v1358, %v1787
  %v1887 = vmax.f32 %v1363, %v1792
  %v1888 = vmax.f32 %v1366, %v1795
  %v1889 = vmax.f32 %v1371, %v1800
  %v1890 = vmax.f32 %v1374, %v1803
  %v1891 = vmax.f32 %v1379, %v1808
  %v1892 = vmax.f32 %v1382, %v1811
  %v1893 = vmax.f32 %v1387, %v1816
  %v1894 = vmax.f32 %v1390, %v1819
  %v1895 = vmax.f32 %v1395, %v1824
  %v1896 = vmax.f32 %v1398, %v1827
  %v1897 = vmax.f32 %v1403, %v1832
  %v1898 = vmax.f32 %v1406, %v1835
  %v1899 = vmax.f32 %v1411, %v1840
  %v1900 = vmax.f32 %v1414, %v1843
  %v1901 = vmax.f32 %v1419, %v1848
  %v1902 = vmax.f32 %v946, %v1853
  %v1903 = vmax.f32 %v947, %v1854
  %v1904 = vmax.f32 %v948, %v1855
  %v1905 = vmax.f32 %v949, %v1856
  %v1906 = vmax.f32 %v950, %v1857
  %v1907 = vmax.f32 %v951, %v1858
  %v1908 = vmax.f32 %v952, %v1859
  %v1909 = vmax.f32 %v953, %v1860
  %v1910 = vmax.f32 %v954, %v1861
  %v1911 = vmax.f32 %v955, %v1862
  %v1912 = vmax.f32 %v956, %v1863
  %v1913 = vmax.f32 %v957, %v1864
  %v1914 = vmax.f32 %v958, %v1865
  %v1915 = vmax.f32 %v959, %v1866
  %v1916 = vmax.f32 %v960, %v1867
  %v1917 = vmax.f32 %v961, %v1868
  %v1918 = vmax.f32 %v962, %v1869
  %v1919 = vmax.f32 %v963, %v1870
  %v1920 = vmax.f32 %v964, %v1871
  %v1921 = vmax.f32 %v965, %v1872
  %v1922 = vmax.f32 %v966, %v1873
  %v1923 = vmax.f32 %v967, %v1874
  %v1924 = vmax.f32 %v968, %v1875
  %v1925 = vmax.f32 %v969, %v1876
  %v1926 = vmax.f32 %v970, %v1877
  %v1927 = vmax.f32 %v971, %v1878
  %v1928 = vmax.f32 %v972, %v1879
  %v1929 = vmax.f32 %v973, %v1880
  %v1930 = vmax.f32 %v974, %v1881
  %v1931 = vmax.f32 %v975, %v1882
  %v1932 = vmax.f32 %v976, %v1883
  %v1933 = vmax.f32 %v977, %v1884
  %v1934 = vmax.f32 %v978, %v1885
  %v1935 = vmax.f32 %v979, %v1886
  %v1936 = vmax.f32 %v980, %v1887
  %v1937 = vmax.f32 %v981, %v1888
  %v1938 = vmax.f32 %v982, %v1889
  %v1939 = vmax.f32 %v983, %v1890
  %v1940 = vmax.f32 %v984, %v1891
  %v1941 = vmax.f32 %v985, %v1892
  %v1942 = vmax.f32 %v986, %v1893
  %v1943 = vmax.f32 %v987, %v1894
  %v1944 = vmax.f32 %v988, %v1895
  %v1945 = vmax.f32 %v989, %v1896
  %v1946 = vmax.f32 %v990, %v1897
  %v1947 = vmax.f32 %v991, %v1898
  %v1948 = vmax.f32 %v992, %v1899
  %v1949 = vmax.f32 %v993, %v1900
  %v1950 = vmax.f32 %v994, %v1901
  %v1951 = vld [vmem:[%s5] sm:$0x1]
  %v1953 = vlaneseq
  %v1954 = vshrl.u32 %v1953, 7
  %v1955 = vsub.s32 0, %v1954
  %v1956 = vrot.slane %v1951, %v1955
  %v1958 = vadd.f32 %v1902, %v1956
  %v1959 = vadd.f32 %v1903, %v1956
  %v1960 = vadd.f32 %v1904, %v1956
  %v1961 = vadd.f32 %v1905, %v1956
  %v1962 = vadd.f32 %v1906, %v1956
  %v1963 = vadd.f32 %v1907, %v1956
  %v1964 = vadd.f32 %v1908, %v1956
  %v1965 = vadd.f32 %v1909, %v1956
  %v1966 = vadd.f32 %v1910, %v1956
  %v1967 = vadd.f32 %v1911, %v1956
  %v1968 = vadd.f32 %v1912, %v1956
  %v1969 = vadd.f32 %v1913, %v1956
  %v1970 = vadd.f32 %v1914, %v1956
  %v1971 = vadd.f32 %v1915, %v1956
  %v1972 = vadd.f32 %v1916, %v1956
  %v1973 = vadd.f32 %v1917, %v1956
  %v1974 = vadd.f32 %v1918, %v1956
  %v1975 = vadd.f32 %v1919, %v1956
  %v1976 = vadd.f32 %v1920, %v1956
  %v1977 = vadd.f32 %v1921, %v1956
  %v1978 = vadd.f32 %v1922, %v1956
  %v1979 = vadd.f32 %v1923, %v1956
  %v1980 = vadd.f32 %v1924, %v1956
  %v1981 = vadd.f32 %v1925, %v1956
  %v1982 = vadd.f32 %v1926, %v1956
  %v1983 = vadd.f32 %v1927, %v1956
  %v1984 = vadd.f32 %v1928, %v1956
  %v1985 = vadd.f32 %v1929, %v1956
  %v1986 = vadd.f32 %v1930, %v1956
  %v1987 = vadd.f32 %v1931, %v1956
  %v1988 = vadd.f32 %v1932, %v1956
  %v1989 = vadd.f32 %v1933, %v1956
  %v1990 = vadd.f32 %v1934, %v1956
  %v1991 = vadd.f32 %v1935, %v1956
  %v1992 = vadd.f32 %v1936, %v1956
  %v1993 = vadd.f32 %v1937, %v1956
  %v1994 = vadd.f32 %v1938, %v1956
  %v1995 = vadd.f32 %v1939, %v1956
  %v1996 = vadd.f32 %v1940, %v1956
  %v1997 = vadd.f32 %v1941, %v1956
  %v1998 = vadd.f32 %v1942, %v1956
  %v1999 = vadd.f32 %v1943, %v1956
  %v2000 = vadd.f32 %v1944, %v1956
  %v2001 = vadd.f32 %v1945, %v1956
  %v2002 = vadd.f32 %v1946, %v1956
  %v2003 = vadd.f32 %v1947, %v1956
  %v2004 = vadd.f32 %v1948, %v1956
  %v2005 = vadd.f32 %v1949, %v1956
  %v2006 = vadd.f32 %v1950, %v1956
  %v2007 = vmax.f32 %v1958, 0.0
  %v2008 = vmax.f32 %v1959, 0.0
  %v2009 = vmax.f32 %v1960, 0.0
  %v2010 = vmax.f32 %v1961, 0.0
  %v2011 = vmax.f32 %v1962, 0.0
  %v2012 = vmax.f32 %v1963, 0.0
  %v2013 = vmax.f32 %v1964, 0.0
  %v2014 = vmax.f32 %v1965, 0.0
  %v2015 = vmax.f32 %v1966, 0.0
  %v2016 = vmax.f32 %v1967, 0.0
  %v2017 = vmax.f32 %v1968, 0.0
  %v2018 = vmax.f32 %v1969, 0.0
  %v2019 = vmax.f32 %v1970, 0.0
  %v2020 = vmax.f32 %v1971, 0.0
  %v2021 = vmax.f32 %v1972, 0.0
  %v2022 = vmax.f32 %v1973, 0.0
  %v2023 = vmax.f32 %v1974, 0.0
  %v2024 = vmax.f32 %v1975, 0.0
  %v2025 = vmax.f32 %v1976, 0.0
  %v2026 = vmax.f32 %v1977, 0.0
  %v2027 = vmax.f32 %v1978, 0.0
  %v2028 = vmax.f32 %v1979, 0.0
  %v2029 = vmax.f32 %v1980, 0.0
  %v2030 = vmax.f32 %v1981, 0.0
  %v2031 = vmax.f32 %v1982, 0.0
  %v2032 = vmax.f32 %v1983, 0.0
  %v2033 = vmax.f32 %v1984, 0.0
  %v2034 = vmax.f32 %v1985, 0.0
  %v2035 = vmax.f32 %v1986, 0.0
  %v2036 = vmax.f32 %v1987, 0.0
  %v2037 = vmax.f32 %v1988, 0.0
  %v2038 = vmax.f32 %v1989, 0.0
  %v2039 = vmax.f32 %v1990, 0.0
  %v2040 = vmax.f32 %v1991, 0.0
  %v2041 = vmax.f32 %v1992, 0.0
  %v2042 = vmax.f32 %v1993, 0.0
  %v2043 = vmax.f32 %v1994, 0.0
  %v2044 = vmax.f32 %v1995, 0.0
  %v2045 = vmax.f32 %v1996, 0.0
  %v2046 = vmax.f32 %v1997, 0.0
  %v2047 = vmax.f32 %v1998, 0.0
  %v2048 = vmax.f32 %v1999, 0.0
  %v2049 = vmax.f32 %v2000, 0.0
  %v2050 = vmax.f32 %v2001, 0.0
  %v2051 = vmax.f32 %v2002, 0.0
  %v2052 = vmax.f32 %v2003, 0.0
  %v2053 = vmax.f32 %v2004, 0.0
  %v2054 = vmax.f32 %v2005, 0.0
  %v2055 = vmax.f32 %v2006, 0.0
  %v2056 = vpack.c.bf16 %v2008, %v2007
  %v2057 = vpack.c.bf16 %v2010, %v2009
  %v2058 = vpack.c.bf16 %v2012, %v2011
  %v2059 = vpack.c.bf16 %v2014, %v2013
  %v2060 = vpack.c.bf16 %v2016, %v2015
  %v2061 = vpack.c.bf16 %v2018, %v2017
  %v2062 = vpack.c.bf16 %v2020, %v2019
  %v2063 = vpack.c.bf16 %v2022, %v2021
  %v2064 = vpack.c.bf16 %v2024, %v2023
  %v2065 = vpack.c.bf16 %v2026, %v2025
  %v2066 = vpack.c.bf16 %v2028, %v2027
  %v2067 = vpack.c.bf16 %v2030, %v2029
  %v2068 = vpack.c.bf16 %v2032, %v2031
  %v2069 = vpack.c.bf16 %v2034, %v2033
  %v2070 = vpack.c.bf16 %v2036, %v2035
  %v2071 = vpack.c.bf16 %v2038, %v2037
  %v2072 = vpack.c.bf16 %v2040, %v2039
  %v2073 = vpack.c.bf16 %v2042, %v2041
  %v2074 = vpack.c.bf16 %v2044, %v2043
  %v2075 = vpack.c.bf16 %v2046, %v2045
  %v2076 = vpack.c.bf16 %v2048, %v2047
  %v2077 = vpack.c.bf16 %v2050, %v2049
  %v2078 = vpack.c.bf16 %v2052, %v2051
  %v2079 = vpack.c.bf16 %v2054, %v2053
  %v2080 = vpack.c.bf16 %v2055, %v2055
  %v2106 = vunpack.c.l.b16 %v2056
  %v2107 = vunpack.c.h.b16 %v2056
  %v2108 = vunpack.c.l.b16 %v2057
  %v2109 = vunpack.c.h.b16 %v2057
  %v2110 = vunpack.c.l.b16 %v2058
  %v2111 = vunpack.c.h.b16 %v2058
  %v2112 = vunpack.c.l.b16 %v2059
  %v2113 = vunpack.c.h.b16 %v2059
  %v2114 = vunpack.c.l.b16 %v2060
  %v2115 = vunpack.c.h.b16 %v2060
  %v2116 = vunpack.c.l.b16 %v2061
  %v2117 = vunpack.c.h.b16 %v2061
  %v2118 = vunpack.c.l.b16 %v2062
  %v2119 = vunpack.c.h.b16 %v2062
  %v2120 = vunpack.c.l.b16 %v2063
  %v2121 = vunpack.c.h.b16 %v2063
  %v2122 = vunpack.c.l.b16 %v2064
  %v2123 = vunpack.c.h.b16 %v2064
  %v2124 = vunpack.c.l.b16 %v2065
  %v2125 = vunpack.c.h.b16 %v2065
  %v2126 = vunpack.c.l.b16 %v2066
  %v2127 = vunpack.c.h.b16 %v2066
  %v2128 = vunpack.c.l.b16 %v2067
  %v2129 = vunpack.c.h.b16 %v2067
  %v2130 = vunpack.c.l.b16 %v2068
  %v2131 = vunpack.c.h.b16 %v2068
  %v2132 = vunpack.c.l.b16 %v2069
  %v2133 = vunpack.c.h.b16 %v2069
  %v2134 = vunpack.c.l.b16 %v2070
  %v2135 = vunpack.c.h.b16 %v2070
  %v2136 = vunpack.c.l.b16 %v2071
  %v2137 = vunpack.c.h.b16 %v2071
  %v2138 = vunpack.c.l.b16 %v2072
  %v2139 = vunpack.c.h.b16 %v2072
  %v2140 = vunpack.c.l.b16 %v2073
  %v2141 = vunpack.c.h.b16 %v2073
  %v2142 = vunpack.c.l.b16 %v2074
  %v2143 = vunpack.c.h.b16 %v2074
  %v2144 = vunpack.c.l.b16 %v2075
  %v2145 = vunpack.c.h.b16 %v2075
  %v2146 = vunpack.c.l.b16 %v2076
  %v2147 = vunpack.c.h.b16 %v2076
  %v2148 = vunpack.c.l.b16 %v2077
  %v2149 = vunpack.c.h.b16 %v2077
  %v2150 = vunpack.c.l.b16 %v2078
  %v2151 = vunpack.c.h.b16 %v2078
  %v2152 = vunpack.c.l.b16 %v2079
  %v2153 = vunpack.c.h.b16 %v2079
  %v2154 = vunpack.c.l.b16 %v2080
  %v2155 = vpack.c.b16 %v2106, %v2106
  %v2156 = vpack.c.b16 %v2107, %v2107
  %v2157 = vpack.c.b16 %v2108, %v2108
  %v2158 = vpack.c.b16 %v2109, %v2109
  %v2159 = vpack.c.b16 %v2110, %v2110
  %v2160 = vpack.c.b16 %v2111, %v2111
  %v2161 = vpack.c.b16 %v2112, %v2112
  %v2162 = vpack.c.b16 %v2113, %v2113
  %v2163 = vpack.c.b16 %v2114, %v2114
  %v2164 = vpack.c.b16 %v2115, %v2115
  %v2165 = vpack.c.b16 %v2116, %v2116
  %v2166 = vpack.c.b16 %v2117, %v2117
  %v2167 = vpack.c.b16 %v2118, %v2118
  %v2168 = vpack.c.b16 %v2119, %v2119
  %v2169 = vpack.c.b16 %v2120, %v2120
  %v2170 = vpack.c.b16 %v2121, %v2121
  %v2171 = vpack.c.b16 %v2122, %v2122
  %v2172 = vpack.c.b16 %v2123, %v2123
  %v2173 = vpack.c.b16 %v2124, %v2124
  %v2174 = vpack.c.b16 %v2125, %v2125
  %v2175 = vpack.c.b16 %v2126, %v2126
  %v2176 = vpack.c.b16 %v2127, %v2127
  %v2177 = vpack.c.b16 %v2128, %v2128
  %v2178 = vpack.c.b16 %v2129, %v2129
  %v2179 = vpack.c.b16 %v2130, %v2130
  %v2180 = vpack.c.b16 %v2131, %v2131
  %v2181 = vpack.c.b16 %v2132, %v2132
  %v2182 = vpack.c.b16 %v2133, %v2133
  %v2183 = vpack.c.b16 %v2134, %v2134
  %v2184 = vpack.c.b16 %v2135, %v2135
  %v2185 = vpack.c.b16 %v2136, %v2136
  %v2186 = vpack.c.b16 %v2137, %v2137
  %v2187 = vpack.c.b16 %v2138, %v2138
  %v2188 = vpack.c.b16 %v2139, %v2139
  %v2189 = vpack.c.b16 %v2140, %v2140
  %v2190 = vpack.c.b16 %v2141, %v2141
  %v2191 = vpack.c.b16 %v2142, %v2142
  %v2192 = vpack.c.b16 %v2143, %v2143
  %v2193 = vpack.c.b16 %v2144, %v2144
  %v2194 = vpack.c.b16 %v2145, %v2145
  %v2195 = vpack.c.b16 %v2146, %v2146
  %v2196 = vpack.c.b16 %v2147, %v2147
  %v2197 = vpack.c.b16 %v2148, %v2148
  %v2198 = vpack.c.b16 %v2149, %v2149
  %v2199 = vpack.c.b16 %v2150, %v2150
  %v2200 = vpack.c.b16 %v2151, %v2151
  %v2201 = vpack.c.b16 %v2152, %v2152
  %v2202 = vpack.c.b16 %v2153, %v2153
  %v2203 = vpack.c.b16 %v2154, %v2154
  %2253 = vst [vmem:[%s6] sm:$0xf] %v2155
  %2254 = vst [vmem:[%s6 + $0x4] sm:$0xf] %v2156
  %2255 = vst [vmem:[%s6 + $0x8] sm:$0xf] %v2157
  %2256 = vst [vmem:[%s6 + $0xc] sm:$0xf] %v2158
  %2257 = vst [vmem:[%s6 + $0x10] sm:$0xf] %v2159
  %2258 = vst [vmem:[%s6 + $0x14] sm:$0xf] %v2160
  %2259 = vst [vmem:[%s6 + $0x18] sm:$0xf] %v2161
  %2260 = vst [vmem:[%s6 + $0x1c] sm:$0xf] %v2162
  %2261 = vst [vmem:[%s6 + $0x20] sm:$0xf] %v2163
  %2262 = vst [vmem:[%s6 + $0x24] sm:$0xf] %v2164
  %2263 = vst [vmem:[%s6 + $0x28] sm:$0xf] %v2165
  %2264 = vst [vmem:[%s6 + $0x2c] sm:$0xf] %v2166
  %2265 = vst [vmem:[%s6 + $0x30] sm:$0xf] %v2167
  %2266 = vst [vmem:[%s6 + $0x34] sm:$0xf] %v2168
  %2267 = vst [vmem:[%s6 + $0x38] sm:$0xf] %v2169
  %2268 = vst [vmem:[%s6 + $0x3c] sm:$0xf] %v2170
  %2269 = vst [vmem:[%s6 + $0x40] sm:$0xf] %v2171
  %2270 = vst [vmem:[%s6 + $0x44] sm:$0xf] %v2172
  %2271 = vst [vmem:[%s6 + $0x48] sm:$0xf] %v2173
  %2272 = vst [vmem:[%s6 + $0x4c] sm:$0xf] %v2174
  %2273 = vst [vmem:[%s6 + $0x50] sm:$0xf] %v2175
  %2274 = vst [vmem:[%s6 + $0x54] sm:$0xf] %v2176
  %2275 = vst [vmem:[%s6 + $0x58] sm:$0xf] %v2177
  %2276 = vst [vmem:[%s6 + $0x5c] sm:$0xf] %v2178
  %2277 = vst [vmem:[%s6 + $0x60] sm:$0xf] %v2179
  %2278 = vst [vmem:[%s6 + $0x64] sm:$0xf] %v2180
  %2279 = vst [vmem:[%s6 + $0x68] sm:$0xf] %v2181
  %2280 = vst [vmem:[%s6 + $0x6c] sm:$0xf] %v2182
  %2281 = vst [vmem:[%s6 + $0x70] sm:$0xf] %v2183
  %2282 = vst [vmem:[%s6 + $0x74] sm:$0xf] %v2184
  %2283 = vst [vmem:[%s6 + $0x78] sm:$0xf] %v2185
  %2284 = vst [vmem:[%s6 + $0x7c] sm:$0xf] %v2186
  %2285 = vst [vmem:[%s6 + $0x80] sm:$0xf] %v2187
  %2286 = vst [vmem:[%s6 + $0x84] sm:$0xf] %v2188
  %2287 = vst [vmem:[%s6 + $0x88] sm:$0xf] %v2189
  %2288 = vst [vmem:[%s6 + $0x8c] sm:$0xf] %v2190
  %2289 = vst [vmem:[%s6 + $0x90] sm:$0xf] %v2191
  %2290 = vst [vmem:[%s6 + $0x94] sm:$0xf] %v2192
  %2291 = vst [vmem:[%s6 + $0x98] sm:$0xf] %v2193
  %2292 = vst [vmem:[%s6 + $0x9c] sm:$0xf] %v2194
  %2293 = vst [vmem:[%s6 + $0xa0] sm:$0xf] %v2195
  %2294 = vst [vmem:[%s6 + $0xa4] sm:$0xf] %v2196
  %2295 = vst [vmem:[%s6 + $0xa8] sm:$0xf] %v2197
  %2296 = vst [vmem:[%s6 + $0xac] sm:$0xf] %v2198
  %2297 = vst [vmem:[%s6 + $0xb0] sm:$0xf] %v2199
  %2298 = vst [vmem:[%s6 + $0xb4] sm:$0xf] %v2200
  %2299 = vst [vmem:[%s6 + $0xb8] sm:$0xf] %v2201
  %2300 = vst [vmem:[%s6 + $0xbc] sm:$0xf] %v2202
  %2301 = vst [vmem:[%s6 + $0xc0] sm:$0xf] %v2203
  // Predicated region
  $region26: #{net_forward.3} parent=0 // pred_check
    _
  $region27: #{net_forward.3} parent=0 // pred_check_branch
    %2303 = sbr.rel (0) target = $region29
  $region28: #{net_forward.3} parent=0 // pred_region
    _
  $region29: #{net_forward.3} parent=0 // pred_fallthru
    _
  // Predicated region
  $region30: #{net_forward.3} parent=0 // pred_check
    _
  $region31: #{net_forward.3} parent=0 // pred_check_branch
    %2305 = sbr.rel (0) target = $region33
  $region32: #{net_forward.3} parent=0 // pred_region
    _
  $region33: #{net_forward.3} parent=0 // pred_fallthru
    _

// kernel: net_forward.5
$region0: #{net_forward.5}
  #allocation0 [shape = 'u32[]', space=smem, size = 0x4, offset = 0x4, fixed_abs, tag = 'smem constant byte address 0x4 - core index']
  #allocation1 [shape = 'u32[144,128]{1,0:T(1,128)}', space=vmem, size = 0x12000, scoped, tag = 'internal scratch']
  %s0 = inlined_call_operand.vmem [shape: bf16[2,3200], index: 0, kind: input, shape index: {}]
  %s1 = inlined_call_operand.vmem [shape: bf16[3200,128], index: 1, kind: input, shape index: {}]
  %s2 = inlined_call_operand.vmem [shape: f32[1,128], index: 2, kind: input, shape index: {}]
  %s3 = inlined_call_operand.vmem [shape: bf16[128,128], index: 3, kind: input, shape index: {}]
  %s4 = inlined_call_operand.vmem [shape: f32[1,128], index: 4, kind: input, shape index: {}]
  %s5 = inlined_call_operand.vmem [shape: bf16[128,128], index: 5, kind: input, shape index: {}]
  %s6 = inlined_call_operand.vmem [shape: f32[1,128], index: 6, kind: input, shape index: {}]
  %s7 = inlined_call_operand.hbm [shape: f32[2,128], index: 7, kind: output, shape index: {}]
  %s8 = sld [smem:[#allocation0]]
  $region38: #{net_forward.5} parent=0
    _
  %s10 = ssub.s32 1, %s8
  %s11 = scalar_select 0, %s10, %s8
  $region1: #{net_forward.5} parent=0
    #allocation2 [shape = 'u8[1024]{0}', space=vmem, size = 0x400, scoped, tag = 'output window, operand 0, single buffered']
    #allocation3 [shape = 's32[1]{0}', space=sflag, size = 0x4, scoped, tag = 'scoped memory for net_forward.5']
    %12 = vsyncpa [#allocation3], 0
    // Predicated region
    $region2: #{net_forward.5} parent=1 // pred_check
      _
    $region3: #{net_forward.5} parent=1 // pred_check_branch
      %14 = sbr.rel (0) target = $region5
    $region4: #{net_forward.5} parent=1 // pred_region
      _
    $region5: #{net_forward.5} parent=1 // pred_fallthru
      _
    // Predicated region
    $region6: #{net_forward.5} parent=1 // pred_check
      _
    $region7: #{net_forward.5} parent=1 // pred_check_branch
      %16 = sbr.rel (0) target = $region9
    $region8: #{net_forward.5} parent=1 // pred_region
      _
    $region9: #{net_forward.5} parent=1 // pred_fallthru
      _
    // Predicated region
    $region10: #{net_forward.5} parent=1 // pred_check
      _
    $region11: #{net_forward.5} parent=1 // pred_check_branch
      %18 = sbr.rel (0) target = $region13
    $region12: #{net_forward.5} parent=1 // pred_region
      _
    $region13: #{net_forward.5} parent=1 // pred_fallthru
      _
    // Predicated region
    $region14: #{net_forward.5} parent=1 // pred_check
      _
    $region15: #{net_forward.5} parent=1 // pred_check_branch
      %20 = sbr.rel (0) target = $region17
    $region16: #{net_forward.5} parent=1 // pred_region
      _
    $region17: #{net_forward.5} parent=1 // pred_fallthru
      _
    // Predicated region
    $region18: #{net_forward.5} parent=1 // pred_check
      _
    $region19: #{net_forward.5} parent=1 // pred_check_branch
      %22 = sbr.rel (0) target = $region21
    $region20: #{net_forward.5} parent=1 // pred_region
      _
    $region21: #{net_forward.5} parent=1 // pred_fallthru
      _
    // Predicated region
    $region22: #{net_forward.5} parent=1 // pred_check
      _
    $region23: #{net_forward.5} parent=1 // pred_check_branch
      %24 = sbr.rel (0) target = $region25
    $region24: #{net_forward.5} parent=1 // pred_region
      _
    $region25: #{net_forward.5} parent=1 // pred_fallthru
      _
    // Predicated region
    $region26: #{net_forward.5} parent=1 // pred_check
      _
    $region27: #{net_forward.5} parent=1 // pred_check_branch
      %26 = sbr.rel (0) target = $region29
    $region28: #{net_forward.5} parent=1 // pred_region
      _
    $region29: #{net_forward.5} parent=1 // pred_fallthru
      _
    %v28 = vld [vmem:[%s0] sm:$0xff]
    %v29 = vld [vmem:[%s0 + $0x8] sm:$0xff]
    %v30 = vld [vmem:[%s0 + $0x10] sm:$0xff]
    %v31 = vld [vmem:[%s0 + $0x18] sm:$0x1]
    %v32 = vld [vmem:[%s1] sm:$0xf]
    %v33 = vld [vmem:[%s1 + $0x4] sm:$0xf]
    %v34 = vld [vmem:[%s1 + $0x8] sm:$0xf]
    %v35 = vld [vmem:[%s1 + $0xc] sm:$0xf]
    %v36 = vld [vmem:[%s1 + $0x10] sm:$0xf]
    %v37 = vld [vmem:[%s1 + $0x14] sm:$0xf]
    %v38 = vld [vmem:[%s1 + $0x18] sm:$0xf]
    %v39 = vld [vmem:[%s1 + $0x1c] sm:$0xf]
    %v40 = vld [vmem:[%s1 + $0x20] sm:$0xf]
    %v41 = vld [vmem:[%s1 + $0x24] sm:$0xf]
    %v42 = vld [vmem:[%s1 + $0x28] sm:$0xf]
    %v43 = vld [vmem:[%s1 + $0x2c] sm:$0xf]
    %v44 = vld [vmem:[%s1 + $0x30] sm:$0xf]
    %v45 = vld [vmem:[%s1 + $0x34] sm:$0xf]
    %v46 = vld [vmem:[%s1 + $0x38] sm:$0xf]
    %v47 = vld [vmem:[%s1 + $0x3c] sm:$0xf]
    %v48 = vld [vmem:[%s1 + $0x40] sm:$0xf]
    %v49 = vld [vmem:[%s1 + $0x44] sm:$0xf]
    %v50 = vld [vmem:[%s1 + $0x48] sm:$0xf]
    %v51 = vld [vmem:[%s1 + $0x4c] sm:$0xf]
    %v52 = vld [vmem:[%s1 + $0x50] sm:$0xf]
    %v53 = vld [vmem:[%s1 + $0x54] sm:$0xf]
    %v54 = vld [vmem:[%s1 + $0x58] sm:$0xf]
    %v55 = vld [vmem:[%s1 + $0x5c] sm:$0xf]
    %v56 = vld [vmem:[%s1 + $0x60] sm:$0xf]
    %v57 = vld [vmem:[%s1 + $0x64] sm:$0xf]
    %v58 = vld [vmem:[%s1 + $0x68] sm:$0xf]
    %v59 = vld [vmem:[%s1 + $0x6c] sm:$0xf]
    %v60 = vld [vmem:[%s1 + $0x70] sm:$0xf]
    %v61 = vld [vmem:[%s1 + $0x74] sm:$0xf]
    %v62 = vld [vmem:[%s1 + $0x78] sm:$0xf]
    %v63 = vld [vmem:[%s1 + $0x7c] sm:$0xf]
    %v64 = vld [vmem:[%s1 + $0x80] sm:$0xf]
    %v65 = vld [vmem:[%s1 + $0x84] sm:$0xf]
    %v66 = vld [vmem:[%s1 + $0x88] sm:$0xf]
    %v67 = vld [vmem:[%s1 + $0x8c] sm:$0xf]
    %v68 = vld [vmem:[%s1 + $0x90] sm:$0xf]
    %v69 = vld [vmem:[%s1 + $0x94] sm:$0xf]
    %v70 = vld [vmem:[%s1 + $0x98] sm:$0xf]
    %v71 = vld [vmem:[%s1 + $0x9c] sm:$0xf]
    %v72 = vld [vmem:[%s1 + $0xa0] sm:$0xf]
    %v73 = vld [vmem:[%s1 + $0xa4] sm:$0xf]
    %v74 = vld [vmem:[%s1 + $0xa8] sm:$0xf]
    %v75 = vld [vmem:[%s1 + $0xac] sm:$0xf]
    %v76 = vld [vmem:[%s1 + $0xb0] sm:$0xf]
    %v77 = vld [vmem:[%s1 + $0xb4] sm:$0xf]
    %v78 = vld [vmem:[%s1 + $0xb8] sm:$0xf]
    %v79 = vld [vmem:[%s1 + $0xbc] sm:$0xf]
    %v80 = vld [vmem:[%s1 + $0xc0] sm:$0xf]
    %v81 = vld [vmem:[%s1 + $0xc4] sm:$0xf]
    %v82 = vld [vmem:[%s1 + $0xc8] sm:$0xf]
    %v83 = vld [vmem:[%s1 + $0xcc] sm:$0xf]
    %v84 = vld [vmem:[%s1 + $0xd0] sm:$0xf]
    %v85 = vld [vmem:[%s1 + $0xd4] sm:$0xf]
    %v86 = vld [vmem:[%s1 + $0xd8] sm:$0xf]
    %v87 = vld [vmem:[%s1 + $0xdc] sm:$0xf]
    %v88 = vld [vmem:[%s1 + $0xe0] sm:$0xf]
    %v89 = vld [vmem:[%s1 + $0xe4] sm:$0xf]
    %v90 = vld [vmem:[%s1 + $0xe8] sm:$0xf]
    %v91 = vld [vmem:[%s1 + $0xec] sm:$0xf]
    %v92 = vld [vmem:[%s1 + $0xf0] sm:$0xf]
    %v93 = vld [vmem:[%s1 + $0xf4] sm:$0xf]
    %v94 = vld [vmem:[%s1 + $0xf8] sm:$0xf]
    %v95 = vld [vmem:[%s1 + $0xfc] sm:$0xf]
    %v96 = vld [vmem:[%s1 + $0x100] sm:$0xf]
    %v97 = vld [vmem:[%s1 + $0x104] sm:$0xf]
    %v98 = vld [vmem:[%s1 + $0x108] sm:$0xf]
    %v99 = vld [vmem:[%s1 + $0x10c] sm:$0xf]
    %v100 = vld [vmem:[%s1 + $0x110] sm:$0xf]
    %v101 = vld [vmem:[%s1 + $0x114] sm:$0xf]
    %v102 = vld [vmem:[%s1 + $0x118] sm:$0xf]
    %v103 = vld [vmem:[%s1 + $0x11c] sm:$0xf]
    %v104 = vld [vmem:[%s1 + $0x120] sm:$0xf]
    %v105 = vld [vmem:[%s1 + $0x124] sm:$0xf]
    %v106 = vld [vmem:[%s1 + $0x128] sm:$0xf]
    %v107 = vld [vmem:[%s1 + $0x12c] sm:$0xf]
    %v108 = vld [vmem:[%s1 + $0x130] sm:$0xf]
    %v109 = vld [vmem:[%s1 + $0x134] sm:$0xf]
    %v110 = vld [vmem:[%s1 + $0x138] sm:$0xf]
    %v111 = vld [vmem:[%s1 + $0x13c] sm:$0xf]
    %v112 = vld [vmem:[%s1 + $0x140] sm:$0xf]
    %v113 = vld [vmem:[%s1 + $0x144] sm:$0xf]
    %v114 = vld [vmem:[%s1 + $0x148] sm:$0xf]
    %v115 = vld [vmem:[%s1 + $0x14c] sm:$0xf]
    %v116 = vld [vmem:[%s1 + $0x150] sm:$0xf]
    %v117 = vld [vmem:[%s1 + $0x154] sm:$0xf]
    %v118 = vld [vmem:[%s1 + $0x158] sm:$0xf]
    %v119 = vld [vmem:[%s1 + $0x15c] sm:$0xf]
    %v120 = vld [vmem:[%s1 + $0x160] sm:$0xf]
    %v121 = vld [vmem:[%s1 + $0x164] sm:$0xf]
    %v122 = vld [vmem:[%s1 + $0x168] sm:$0xf]
    %v123 = vld [vmem:[%s1 + $0x16c] sm:$0xf]
    %v124 = vld [vmem:[%s1 + $0x170] sm:$0xf]
    %v125 = vld [vmem:[%s1 + $0x174] sm:$0xf]
    %v126 = vld [vmem:[%s1 + $0x178] sm:$0xf]
    %v127 = vld [vmem:[%s1 + $0x17c] sm:$0xf]
    %v128 = vld [vmem:[%s1 + $0x180] sm:$0xf]
    %v129 = vld [vmem:[%s1 + $0x184] sm:$0xf]
    %v130 = vld [vmem:[%s1 + $0x188] sm:$0xf]
    %v131 = vld [vmem:[%s1 + $0x18c] sm:$0xf]
    %v132 = vld [vmem:[%s1 + $0x190] sm:$0xf]
    %v133 = vld [vmem:[%s1 + $0x194] sm:$0xf]
    %v134 = vld [vmem:[%s1 + $0x198] sm:$0xf]
    %v135 = vld [vmem:[%s1 + $0x19c] sm:$0xf]
    %v136 = vld [vmem:[%s1 + $0x1a0] sm:$0xf]
    %v137 = vld [vmem:[%s1 + $0x1a4] sm:$0xf]
    %v138 = vld [vmem:[%s1 + $0x1a8] sm:$0xf]
    %v139 = vld [vmem:[%s1 + $0x1ac] sm:$0xf]
    %v140 = vld [vmem:[%s1 + $0x1b0] sm:$0xf]
    %v141 = vld [vmem:[%s1 + $0x1b4] sm:$0xf]
    %v142 = vld [vmem:[%s1 + $0x1b8] sm:$0xf]
    %v143 = vld [vmem:[%s1 + $0x1bc] sm:$0xf]
    %v144 = vld [vmem:[%s1 + $0x1c0] sm:$0xf]
    %v145 = vld [vmem:[%s1 + $0x1c4] sm:$0xf]
    %v146 = vld [vmem:[%s1 + $0x1c8] sm:$0xf]
    %v147 = vld [vmem:[%s1 + $0x1cc] sm:$0xf]
    %v148 = vld [vmem:[%s1 + $0x1d0] sm:$0xf]
    %v149 = vld [vmem:[%s1 + $0x1d4] sm:$0xf]
    %v150 = vld [vmem:[%s1 + $0x1d8] sm:$0xf]
    %v151 = vld [vmem:[%s1 + $0x1dc] sm:$0xf]
    %v152 = vld [vmem:[%s1 + $0x1e0] sm:$0xf]
    %v153 = vld [vmem:[%s1 + $0x1e4] sm:$0xf]
    %v154 = vld [vmem:[%s1 + $0x1e8] sm:$0xf]
    %v155 = vld [vmem:[%s1 + $0x1ec] sm:$0xf]
    %v156 = vld [vmem:[%s1 + $0x1f0] sm:$0xf]
    %v157 = vld [vmem:[%s1 + $0x1f4] sm:$0xf]
    %v158 = vld [vmem:[%s1 + $0x1f8] sm:$0xf]
    %v159 = vld [vmem:[%s1 + $0x1fc] sm:$0xf]
    %v160 = vld [vmem:[%s1 + $0x200] sm:$0xf]
    %v161 = vld [vmem:[%s1 + $0x204] sm:$0xf]
    %v162 = vld [vmem:[%s1 + $0x208] sm:$0xf]
    %v163 = vld [vmem:[%s1 + $0x20c] sm:$0xf]
    %v164 = vld [vmem:[%s1 + $0x210] sm:$0xf]
    %v165 = vld [vmem:[%s1 + $0x214] sm:$0xf]
    %v166 = vld [vmem:[%s1 + $0x218] sm:$0xf]
    %v167 = vld [vmem:[%s1 + $0x21c] sm:$0xf]
    %v168 = vld [vmem:[%s1 + $0x220] sm:$0xf]
    %v169 = vld [vmem:[%s1 + $0x224] sm:$0xf]
    %v170 = vld [vmem:[%s1 + $0x228] sm:$0xf]
    %v171 = vld [vmem:[%s1 + $0x22c] sm:$0xf]
    %v172 = vld [vmem:[%s1 + $0x230] sm:$0xf]
    %v173 = vld [vmem:[%s1 + $0x234] sm:$0xf]
    %v174 = vld [vmem:[%s1 + $0x238] sm:$0xf]
    %v175 = vld [vmem:[%s1 + $0x23c] sm:$0xf]
    %v176 = vld [vmem:[%s1 + $0x240] sm:$0xf]
    %v177 = vld [vmem:[%s1 + $0x244] sm:$0xf]
    %v178 = vld [vmem:[%s1 + $0x248] sm:$0xf]
    %v179 = vld [vmem:[%s1 + $0x24c] sm:$0xf]
    %v180 = vld [vmem:[%s1 + $0x250] sm:$0xf]
    %v181 = vld [vmem:[%s1 + $0x254] sm:$0xf]
    %v182 = vld [vmem:[%s1 + $0x258] sm:$0xf]
    %v183 = vld [vmem:[%s1 + $0x25c] sm:$0xf]
    %v184 = vld [vmem:[%s1 + $0x260] sm:$0xf]
    %v185 = vld [vmem:[%s1 + $0x264] sm:$0xf]
    %v186 = vld [vmem:[%s1 + $0x268] sm:$0xf]
    %v187 = vld [vmem:[%s1 + $0x26c] sm:$0xf]
    %v188 = vld [vmem:[%s1 + $0x270] sm:$0xf]
    %v189 = vld [vmem:[%s1 + $0x274] sm:$0xf]
    %v190 = vld [vmem:[%s1 + $0x278] sm:$0xf]
    %v191 = vld [vmem:[%s1 + $0x27c] sm:$0xf]
    %v192 = vld [vmem:[%s1 + $0x280] sm:$0xf]
    %v193 = vld [vmem:[%s1 + $0x284] sm:$0xf]
    %v194 = vld [vmem:[%s1 + $0x288] sm:$0xf]
    %v195 = vld [vmem:[%s1 + $0x28c] sm:$0xf]
    %v196 = vld [vmem:[%s1 + $0x290] sm:$0xf]
    %v197 = vld [vmem:[%s1 + $0x294] sm:$0xf]
    %v198 = vld [vmem:[%s1 + $0x298] sm:$0xf]
    %v199 = vld [vmem:[%s1 + $0x29c] sm:$0xf]
    %v200 = vld [vmem:[%s1 + $0x2a0] sm:$0xf]
    %v201 = vld [vmem:[%s1 + $0x2a4] sm:$0xf]
    %v202 = vld [vmem:[%s1 + $0x2a8] sm:$0xf]
    %v203 = vld [vmem:[%s1 + $0x2ac] sm:$0xf]
    %v204 = vld [vmem:[%s1 + $0x2b0] sm:$0xf]
    %v205 = vld [vmem:[%s1 + $0x2b4] sm:$0xf]
    %v206 = vld [vmem:[%s1 + $0x2b8] sm:$0xf]
    %v207 = vld [vmem:[%s1 + $0x2bc] sm:$0xf]
    %v208 = vld [vmem:[%s1 + $0x2c0] sm:$0xf]
    %v209 = vld [vmem:[%s1 + $0x2c4] sm:$0xf]
    %v210 = vld [vmem:[%s1 + $0x2c8] sm:$0xf]
    %v211 = vld [vmem:[%s1 + $0x2cc] sm:$0xf]
    %v212 = vld [vmem:[%s1 + $0x2d0] sm:$0xf]
    %v213 = vld [vmem:[%s1 + $0x2d4] sm:$0xf]
    %v214 = vld [vmem:[%s1 + $0x2d8] sm:$0xf]
    %v215 = vld [vmem:[%s1 + $0x2dc] sm:$0xf]
    %v216 = vld [vmem:[%s1 + $0x2e0] sm:$0xf]
    %v217 = vld [vmem:[%s1 + $0x2e4] sm:$0xf]
    %v218 = vld [vmem:[%s1 + $0x2e8] sm:$0xf]
    %v219 = vld [vmem:[%s1 + $0x2ec] sm:$0xf]
    %v220 = vld [vmem:[%s1 + $0x2f0] sm:$0xf]
    %v221 = vld [vmem:[%s1 + $0x2f4] sm:$0xf]
    %v222 = vld [vmem:[%s1 + $0x2f8] sm:$0xf]
    %v223 = vld [vmem:[%s1 + $0x2fc] sm:$0xf]
    %v224 = vld [vmem:[%s1 + $0x300] sm:$0xf]
    %v225 = vld [vmem:[%s1 + $0x304] sm:$0xf]
    %v226 = vld [vmem:[%s1 + $0x308] sm:$0xf]
    %v227 = vld [vmem:[%s1 + $0x30c] sm:$0xf]
    %v228 = vld [vmem:[%s1 + $0x310] sm:$0xf]
    %v229 = vld [vmem:[%s1 + $0x314] sm:$0xf]
    %v230 = vld [vmem:[%s1 + $0x318] sm:$0xf]
    %v231 = vld [vmem:[%s1 + $0x31c] sm:$0xf]
    %v232 = vld [vmem:[%s1 + $0x320] sm:$0xf]
    %v233 = vld [vmem:[%s1 + $0x324] sm:$0xf]
    %v234 = vld [vmem:[%s1 + $0x328] sm:$0xf]
    %v235 = vld [vmem:[%s1 + $0x32c] sm:$0xf]
    %v236 = vld [vmem:[%s1 + $0x330] sm:$0xf]
    %v237 = vld [vmem:[%s1 + $0x334] sm:$0xf]
    %v238 = vld [vmem:[%s1 + $0x338] sm:$0xf]
    %v239 = vld [vmem:[%s1 + $0x33c] sm:$0xf]
    %v240 = vld [vmem:[%s1 + $0x340] sm:$0xf]
    %v241 = vld [vmem:[%s1 + $0x344] sm:$0xf]
    %v242 = vld [vmem:[%s1 + $0x348] sm:$0xf]
    %v243 = vld [vmem:[%s1 + $0x34c] sm:$0xf]
    %v244 = vld [vmem:[%s1 + $0x350] sm:$0xf]
    %v245 = vld [vmem:[%s1 + $0x354] sm:$0xf]
    %v246 = vld [vmem:[%s1 + $0x358] sm:$0xf]
    %v247 = vld [vmem:[%s1 + $0x35c] sm:$0xf]
    %v248 = vld [vmem:[%s1 + $0x360] sm:$0xf]
    %v249 = vld [vmem:[%s1 + $0x364] sm:$0xf]
    %v250 = vld [vmem:[%s1 + $0x368] sm:$0xf]
    %v251 = vld [vmem:[%s1 + $0x36c] sm:$0xf]
    %v252 = vld [vmem:[%s1 + $0x370] sm:$0xf]
    %v253 = vld [vmem:[%s1 + $0x374] sm:$0xf]
    %v254 = vld [vmem:[%s1 + $0x378] sm:$0xf]
    %v255 = vld [vmem:[%s1 + $0x37c] sm:$0xf]
    %v256 = vld [vmem:[%s1 + $0x380] sm:$0xf]
    %v257 = vld [vmem:[%s1 + $0x384] sm:$0xf]
    %v258 = vld [vmem:[%s1 + $0x388] sm:$0xf]
    %v259 = vld [vmem:[%s1 + $0x38c] sm:$0xf]
    %v260 = vld [vmem:[%s1 + $0x390] sm:$0xf]
    %v261 = vld [vmem:[%s1 + $0x394] sm:$0xf]
    %v262 = vld [vmem:[%s1 + $0x398] sm:$0xf]
    %v263 = vld [vmem:[%s1 + $0x39c] sm:$0xf]
    %v264 = vld [vmem:[%s1 + $0x3a0] sm:$0xf]
    %v265 = vld [vmem:[%s1 + $0x3a4] sm:$0xf]
    %v266 = vld [vmem:[%s1 + $0x3a8] sm:$0xf]
    %v267 = vld [vmem:[%s1 + $0x3ac] sm:$0xf]
    %v268 = vld [vmem:[%s1 + $0x3b0] sm:$0xf]
    %v269 = vld [vmem:[%s1 + $0x3b4] sm:$0xf]
    %v270 = vld [vmem:[%s1 + $0x3b8] sm:$0xf]
    %v271 = vld [vmem:[%s1 + $0x3bc] sm:$0xf]
    %v272 = vld [vmem:[%s1 + $0x3c0] sm:$0xf]
    %v273 = vld [vmem:[%s1 + $0x3c4] sm:$0xf]
    %v274 = vld [vmem:[%s1 + $0x3c8] sm:$0xf]
    %v275 = vld [vmem:[%s1 + $0x3cc] sm:$0xf]
    %v276 = vld [vmem:[%s1 + $0x3d0] sm:$0xf]
    %v277 = vld [vmem:[%s1 + $0x3d4] sm:$0xf]
    %v278 = vld [vmem:[%s1 + $0x3d8] sm:$0xf]
    %v279 = vld [vmem:[%s1 + $0x3dc] sm:$0xf]
    %v280 = vld [vmem:[%s1 + $0x3e0] sm:$0xf]
    %v281 = vld [vmem:[%s1 + $0x3e4] sm:$0xf]
    %v282 = vld [vmem:[%s1 + $0x3e8] sm:$0xf]
    %v283 = vld [vmem:[%s1 + $0x3ec] sm:$0xf]
    %v284 = vld [vmem:[%s1 + $0x3f0] sm:$0xf]
    %v285 = vld [vmem:[%s1 + $0x3f4] sm:$0xf]
    %v286 = vld [vmem:[%s1 + $0x3f8] sm:$0xf]
    %v287 = vld [vmem:[%s1 + $0x3fc] sm:$0xf]
    %v288 = vld [vmem:[%s1 + $0x400] sm:$0xf]
    %v289 = vld [vmem:[%s1 + $0x404] sm:$0xf]
    %v290 = vld [vmem:[%s1 + $0x408] sm:$0xf]
    %v291 = vld [vmem:[%s1 + $0x40c] sm:$0xf]
    %v292 = vld [vmem:[%s1 + $0x410] sm:$0xf]
    %v293 = vld [vmem:[%s1 + $0x414] sm:$0xf]
    %v294 = vld [vmem:[%s1 + $0x418] sm:$0xf]
    %v295 = vld [vmem:[%s1 + $0x41c] sm:$0xf]
    %v296 = vld [vmem:[%s1 + $0x420] sm:$0xf]
    %v297 = vld [vmem:[%s1 + $0x424] sm:$0xf]
    %v298 = vld [vmem:[%s1 + $0x428] sm:$0xf]
    %v299 = vld [vmem:[%s1 + $0x42c] sm:$0xf]
    %v300 = vld [vmem:[%s1 + $0x430] sm:$0xf]
    %v301 = vld [vmem:[%s1 + $0x434] sm:$0xf]
    %v302 = vld [vmem:[%s1 + $0x438] sm:$0xf]
    %v303 = vld [vmem:[%s1 + $0x43c] sm:$0xf]
    %v304 = vld [vmem:[%s1 + $0x440] sm:$0xf]
    %v305 = vld [vmem:[%s1 + $0x444] sm:$0xf]
    %v306 = vld [vmem:[%s1 + $0x448] sm:$0xf]
    %v307 = vld [vmem:[%s1 + $0x44c] sm:$0xf]
    %v308 = vld [vmem:[%s1 + $0x450] sm:$0xf]
    %v309 = vld [vmem:[%s1 + $0x454] sm:$0xf]
    %v310 = vld [vmem:[%s1 + $0x458] sm:$0xf]
    %v311 = vld [vmem:[%s1 + $0x45c] sm:$0xf]
    %v312 = vld [vmem:[%s1 + $0x460] sm:$0xf]
    %v313 = vld [vmem:[%s1 + $0x464] sm:$0xf]
    %v314 = vld [vmem:[%s1 + $0x468] sm:$0xf]
    %v315 = vld [vmem:[%s1 + $0x46c] sm:$0xf]
    %v316 = vld [vmem:[%s1 + $0x470] sm:$0xf]
    %v317 = vld [vmem:[%s1 + $0x474] sm:$0xf]
    %v318 = vld [vmem:[%s1 + $0x478] sm:$0xf]
    %v319 = vld [vmem:[%s1 + $0x47c] sm:$0xf]
    %v320 = vld [vmem:[%s1 + $0x480] sm:$0xf]
    %v321 = vld [vmem:[%s1 + $0x484] sm:$0xf]
    %v322 = vld [vmem:[%s1 + $0x488] sm:$0xf]
    %v323 = vld [vmem:[%s1 + $0x48c] sm:$0xf]
    %v324 = vld [vmem:[%s1 + $0x490] sm:$0xf]
    %v325 = vld [vmem:[%s1 + $0x494] sm:$0xf]
    %v326 = vld [vmem:[%s1 + $0x498] sm:$0xf]
    %v327 = vld [vmem:[%s1 + $0x49c] sm:$0xf]
    %v328 = vld [vmem:[%s1 + $0x4a0] sm:$0xf]
    %v329 = vld [vmem:[%s1 + $0x4a4] sm:$0xf]
    %v330 = vld [vmem:[%s1 + $0x4a8] sm:$0xf]
    %v331 = vld [vmem:[%s1 + $0x4ac] sm:$0xf]
    %v332 = vld [vmem:[%s1 + $0x4b0] sm:$0xf]
    %v333 = vld [vmem:[%s1 + $0x4b4] sm:$0xf]
    %v334 = vld [vmem:[%s1 + $0x4b8] sm:$0xf]
    %v335 = vld [vmem:[%s1 + $0x4bc] sm:$0xf]
    %v336 = vld [vmem:[%s1 + $0x4c0] sm:$0xf]
    %v337 = vld [vmem:[%s1 + $0x4c4] sm:$0xf]
    %v338 = vld [vmem:[%s1 + $0x4c8] sm:$0xf]
    %v339 = vld [vmem:[%s1 + $0x4cc] sm:$0xf]
    %v340 = vld [vmem:[%s1 + $0x4d0] sm:$0xf]
    %v341 = vld [vmem:[%s1 + $0x4d4] sm:$0xf]
    %v342 = vld [vmem:[%s1 + $0x4d8] sm:$0xf]
    %v343 = vld [vmem:[%s1 + $0x4dc] sm:$0xf]
    %v344 = vld [vmem:[%s1 + $0x4e0] sm:$0xf]
    %v345 = vld [vmem:[%s1 + $0x4e4] sm:$0xf]
    %v346 = vld [vmem:[%s1 + $0x4e8] sm:$0xf]
    %v347 = vld [vmem:[%s1 + $0x4ec] sm:$0xf]
    %v348 = vld [vmem:[%s1 + $0x4f0] sm:$0xf]
    %v349 = vld [vmem:[%s1 + $0x4f4] sm:$0xf]
    %v350 = vld [vmem:[%s1 + $0x4f8] sm:$0xf]
    %v351 = vld [vmem:[%s1 + $0x4fc] sm:$0xf]
    %v352 = vld [vmem:[%s1 + $0x500] sm:$0xf]
    %v353 = vld [vmem:[%s1 + $0x504] sm:$0xf]
    %v354 = vld [vmem:[%s1 + $0x508] sm:$0xf]
    %v355 = vld [vmem:[%s1 + $0x50c] sm:$0xf]
    %v356 = vld [vmem:[%s1 + $0x510] sm:$0xf]
    %v357 = vld [vmem:[%s1 + $0x514] sm:$0xf]
    %v358 = vld [vmem:[%s1 + $0x518] sm:$0xf]
    %v359 = vld [vmem:[%s1 + $0x51c] sm:$0xf]
    %v360 = vld [vmem:[%s1 + $0x520] sm:$0xf]
    %v361 = vld [vmem:[%s1 + $0x524] sm:$0xf]
    %v362 = vld [vmem:[%s1 + $0x528] sm:$0xf]
    %v363 = vld [vmem:[%s1 + $0x52c] sm:$0xf]
    %v364 = vld [vmem:[%s1 + $0x530] sm:$0xf]
    %v365 = vld [vmem:[%s1 + $0x534] sm:$0xf]
    %v366 = vld [vmem:[%s1 + $0x538] sm:$0xf]
    %v367 = vld [vmem:[%s1 + $0x53c] sm:$0xf]
    %v368 = vld [vmem:[%s1 + $0x540] sm:$0xf]
    %v369 = vld [vmem:[%s1 + $0x544] sm:$0xf]
    %v370 = vld [vmem:[%s1 + $0x548] sm:$0xf]
    %v371 = vld [vmem:[%s1 + $0x54c] sm:$0xf]
    %v372 = vld [vmem:[%s1 + $0x550] sm:$0xf]
    %v373 = vld [vmem:[%s1 + $0x554] sm:$0xf]
    %v374 = vld [vmem:[%s1 + $0x558] sm:$0xf]
    %v375 = vld [vmem:[%s1 + $0x55c] sm:$0xf]
    %v376 = vld [vmem:[%s1 + $0x560] sm:$0xf]
    %v377 = vld [vmem:[%s1 + $0x564] sm:$0xf]
    %v378 = vld [vmem:[%s1 + $0x568] sm:$0xf]
    %v379 = vld [vmem:[%s1 + $0x56c] sm:$0xf]
    %v380 = vld [vmem:[%s1 + $0x570] sm:$0xf]
    %v381 = vld [vmem:[%s1 + $0x574] sm:$0xf]
    %v382 = vld [vmem:[%s1 + $0x578] sm:$0xf]
    %v383 = vld [vmem:[%s1 + $0x57c] sm:$0xf]
    %v384 = vld [vmem:[%s1 + $0x580] sm:$0xf]
    %v385 = vld [vmem:[%s1 + $0x584] sm:$0xf]
    %v386 = vld [vmem:[%s1 + $0x588] sm:$0xf]
    %v387 = vld [vmem:[%s1 + $0x58c] sm:$0xf]
    %v388 = vld [vmem:[%s1 + $0x590] sm:$0xf]
    %v389 = vld [vmem:[%s1 + $0x594] sm:$0xf]
    %v390 = vld [vmem:[%s1 + $0x598] sm:$0xf]
    %v391 = vld [vmem:[%s1 + $0x59c] sm:$0xf]
    %v392 = vld [vmem:[%s1 + $0x5a0] sm:$0xf]
    %v393 = vld [vmem:[%s1 + $0x5a4] sm:$0xf]
    %v394 = vld [vmem:[%s1 + $0x5a8] sm:$0xf]
    %v395 = vld [vmem:[%s1 + $0x5ac] sm:$0xf]
    %v396 = vld [vmem:[%s1 + $0x5b0] sm:$0xf]
    %v397 = vld [vmem:[%s1 + $0x5b4] sm:$0xf]
    %v398 = vld [vmem:[%s1 + $0x5b8] sm:$0xf]
    %v399 = vld [vmem:[%s1 + $0x5bc] sm:$0xf]
    %v400 = vld [vmem:[%s1 + $0x5c0] sm:$0xf]
    %v401 = vld [vmem:[%s1 + $0x5c4] sm:$0xf]
    %v402 = vld [vmem:[%s1 + $0x5c8] sm:$0xf]
    %v403 = vld [vmem:[%s1 + $0x5cc] sm:$0xf]
    %v404 = vld [vmem:[%s1 + $0x5d0] sm:$0xf]
    %v405 = vld [vmem:[%s1 + $0x5d4] sm:$0xf]
    %v406 = vld [vmem:[%s1 + $0x5d8] sm:$0xf]
    %v407 = vld [vmem:[%s1 + $0x5dc] sm:$0xf]
    %v408 = vld [vmem:[%s1 + $0x5e0] sm:$0xf]
    %v409 = vld [vmem:[%s1 + $0x5e4] sm:$0xf]
    %v410 = vld [vmem:[%s1 + $0x5e8] sm:$0xf]
    %v411 = vld [vmem:[%s1 + $0x5ec] sm:$0xf]
    %v412 = vld [vmem:[%s1 + $0x5f0] sm:$0xf]
    %v413 = vld [vmem:[%s1 + $0x5f4] sm:$0xf]
    %v414 = vld [vmem:[%s1 + $0x5f8] sm:$0xf]
    %v415 = vld [vmem:[%s1 + $0x5fc] sm:$0xf]
    %v416 = vld [vmem:[%s1 + $0x600] sm:$0xf]
    %v417 = vld [vmem:[%s1 + $0x604] sm:$0xf]
    %v418 = vld [vmem:[%s1 + $0x608] sm:$0xf]
    %v419 = vld [vmem:[%s1 + $0x60c] sm:$0xf]
    %v420 = vld [vmem:[%s1 + $0x610] sm:$0xf]
    %v421 = vld [vmem:[%s1 + $0x614] sm:$0xf]
    %v422 = vld [vmem:[%s1 + $0x618] sm:$0xf]
    %v423 = vld [vmem:[%s1 + $0x61c] sm:$0xf]
    %v424 = vld [vmem:[%s1 + $0x620] sm:$0xf]
    %v425 = vld [vmem:[%s1 + $0x624] sm:$0xf]
    %v426 = vld [vmem:[%s1 + $0x628] sm:$0xf]
    %v427 = vld [vmem:[%s1 + $0x62c] sm:$0xf]
    %v428 = vld [vmem:[%s1 + $0x630] sm:$0xf]
    %v429 = vld [vmem:[%s1 + $0x634] sm:$0xf]
    %v430 = vld [vmem:[%s1 + $0x638] sm:$0xf]
    %v431 = vld [vmem:[%s1 + $0x63c] sm:$0xf]
    %v432 = vld [vmem:[%s2] sm:$0x1]
    %v434 = vlaneseq
    %v435 = vshrl.u32 %v434, 7
    %v436 = vsub.s32 0, %v435
    %v437 = vrot.slane %v432, %v436
    %v443 = vcombine.high %v28, %v28
    %v445 = vunpack.c.l.s4 1966171168
    %v446 = vunpack.c.0.s8 %v445
    %v447 = vlaneseq
    %v448 = vshrl.u32 %v447, 7
    %v449 = vsub.s32 %v446, %v448
    %v450 = vrot.slane %v28, %v449
    %v452 = vunpack.c.l.s4 1966171168
    %v453 = vunpack.c.0.s8 %v452
    %v454 = vlaneseq
    %v455 = vshrl.u32 %v454, 7
    %v456 = vsub.s32 %v453, %v455
    %v457 = vrot.slane %v443, %v456
    %v458 = vcombine.high %v450, %v450
    %v459 = vcombine.high %v457, %v457
    %v461 = vunpack.c.l.s4 1966171168
    %v462 = vunpack.c.0.s8 %v461
    %v463 = vlaneseq
    %v464 = vshrl.u32 %v463, 7
    %v465 = vsub.s32 %v462, %v464
    %v466 = vrot.slane %v450, %v465
    %v468 = vunpack.c.l.s4 1966171168
    %v469 = vunpack.c.0.s8 %v468
    %v470 = vlaneseq
    %v471 = vshrl.u32 %v470, 7
    %v472 = vsub.s32 %v469, %v471
    %v473 = vrot.slane %v457, %v472
    %v475 = vunpack.c.l.s4 1966171168
    %v476 = vunpack.c.0.s8 %v475
    %v477 = vlaneseq
    %v478 = vshrl.u32 %v477, 7
    %v479 = vsub.s32 %v476, %v478
    %v480 = vrot.slane %v458, %v479
    %v482 = vunpack.c.l.s4 1966171168
    %v483 = vunpack.c.0.s8 %v482
    %v484 = vlaneseq
    %v485 = vshrl.u32 %v484, 7
    %v486 = vsub.s32 %v483, %v485
    %v487 = vrot.slane %v459, %v486
    %v488 = vcombine.high %v466, %v466
    %v489 = vcombine.high %v473, %v473
    %v490 = vcombine.high %v480, %v480
    %v491 = vcombine.high %v487, %v487
    %v492 = vcombine.high %v29, %v29
    %v494 = vunpack.c.l.s4 1966171168
    %v495 = vunpack.c.0.s8 %v494
    %v496 = vlaneseq
    %v497 = vshrl.u32 %v496, 7
    %v498 = vsub.s32 %v495, %v497
    %v499 = vrot.slane %v29, %v498
    %v501 = vunpack.c.l.s4 1966171168
    %v502 = vunpack.c.0.s8 %v501
    %v503 = vlaneseq
    %v504 = vshrl.u32 %v503, 7
    %v505 = vsub.s32 %v502, %v504
    %v506 = vrot.slane %v492, %v505
    %v507 = vcombine.high %v499, %v499
    %v508 = vcombine.high %v506, %v506
    %v510 = vunpack.c.l.s4 1966171168
    %v511 = vunpack.c.0.s8 %v510
    %v512 = vlaneseq
    %v513 = vshrl.u32 %v512, 7
    %v514 = vsub.s32 %v511, %v513
    %v515 = vrot.slane %v499, %v514
    %v517 = vunpack.c.l.s4 1966171168
    %v518 = vunpack.c.0.s8 %v517
    %v519 = vlaneseq
    %v520 = vshrl.u32 %v519, 7
    %v521 = vsub.s32 %v518, %v520
    %v522 = vrot.slane %v506, %v521
    %v524 = vunpack.c.l.s4 1966171168
    %v525 = vunpack.c.0.s8 %v524
    %v526 = vlaneseq
    %v527 = vshrl.u32 %v526, 7
    %v528 = vsub.s32 %v525, %v527
    %v529 = vrot.slane %v507, %v528
    %v531 = vunpack.c.l.s4 1966171168
    %v532 = vunpack.c.0.s8 %v531
    %v533 = vlaneseq
    %v534 = vshrl.u32 %v533, 7
    %v535 = vsub.s32 %v532, %v534
    %v536 = vrot.slane %v508, %v535
    %v537 = vcombine.high %v515, %v515
    %v538 = vcombine.high %v522, %v522
    %v539 = vcombine.high %v529, %v529
    %v540 = vcombine.high %v536, %v536
    %v541 = vcombine.high %v30, %v30
    %v543 = vunpack.c.l.s4 1966171168
    %v544 = vunpack.c.0.s8 %v543
    %v545 = vlaneseq
    %v546 = vshrl.u32 %v545, 7
    %v547 = vsub.s32 %v544, %v546
    %v548 = vrot.slane %v30, %v547
    %v550 = vunpack.c.l.s4 1966171168
    %v551 = vunpack.c.0.s8 %v550
    %v552 = vlaneseq
    %v553 = vshrl.u32 %v552, 7
    %v554 = vsub.s32 %v551, %v553
    %v555 = vrot.slane %v541, %v554
    %v556 = vcombine.high %v548, %v548
    %v557 = vcombine.high %v555, %v555
    %v559 = vunpack.c.l.s4 1966171168
    %v560 = vunpack.c.0.s8 %v559
    %v561 = vlaneseq
    %v562 = vshrl.u32 %v561, 7
    %v563 = vsub.s32 %v560, %v562
    %v564 = vrot.slane %v548, %v563
    %v566 = vunpack.c.l.s4 1966171168
    %v567 = vunpack.c.0.s8 %v566
    %v568 = vlaneseq
    %v569 = vshrl.u32 %v568, 7
    %v570 = vsub.s32 %v567, %v569
    %v571 = vrot.slane %v555, %v570
    %v573 = vunpack.c.l.s4 1966171168
    %v574 = vunpack.c.0.s8 %v573
    %v575 = vlaneseq
    %v576 = vshrl.u32 %v575, 7
    %v577 = vsub.s32 %v574, %v576
    %v578 = vrot.slane %v556, %v577
    %v580 = vunpack.c.l.s4 1966171168
    %v581 = vunpack.c.0.s8 %v580
    %v582 = vlaneseq
    %v583 = vshrl.u32 %v582, 7
    %v584 = vsub.s32 %v581, %v583
    %v585 = vrot.slane %v557, %v584
    %v586 = vcombine.high %v564, %v564
    %v587 = vcombine.high %v571, %v571
    %v588 = vcombine.high %v578, %v578
    %v589 = vcombine.high %v585, %v585
    %v591 = vunpack.c.l.s4 1966171168
    %v592 = vunpack.c.0.s8 %v591
    %v593 = vlaneseq
    %v594 = vshrl.u32 %v593, 7
    %v595 = vsub.s32 %v592, %v594
    %v596 = vrot.slane %v31, %v595
    %v598 = vunpack.c.l.s4 1966171168
    %v599 = vunpack.c.0.s8 %v598
    %v600 = vlaneseq
    %v601 = vshrl.u32 %v600, 7
    %v602 = vsub.s32 %v599, %v601
    %v603 = vrot.slane %v596, %v602
    %v1029 = vunpack.c.l.b16 %v32
    %v1030 = vunpack.c.l.b16 %v33
    %v1031 = vunpack.c.l.b16 %v34
    %v1032 = vunpack.c.l.b16 %v35
    %v1033 = vunpack.c.l.b16 %v36
    %v1034 = vunpack.c.l.b16 %v37
    %v1035 = vunpack.c.l.b16 %v38
    %v1036 = vunpack.c.l.b16 %v39
    %v1037 = vunpack.c.l.b16 %v40
    %v1038 = vunpack.c.l.b16 %v41
    %v1039 = vunpack.c.l.b16 %v42
    %v1040 = vunpack.c.l.b16 %v43
    %v1041 = vunpack.c.l.b16 %v44
    %v1042 = vunpack.c.l.b16 %v45
    %v1043 = vunpack.c.l.b16 %v46
    %v1044 = vunpack.c.l.b16 %v47
    %v1045 = vunpack.c.l.b16 %v48
    %v1046 = vunpack.c.l.b16 %v49
    %v1047 = vunpack.c.l.b16 %v50
    %v1048 = vunpack.c.l.b16 %v51
    %v1049 = vunpack.c.l.b16 %v52
    %v1050 = vunpack.c.l.b16 %v53
    %v1051 = vunpack.c.l.b16 %v54
    %v1052 = vunpack.c.l.b16 %v55
    %v1053 = vunpack.c.l.b16 %v56
    %v1054 = vunpack.c.l.b16 %v57
    %v1055 = vunpack.c.l.b16 %v58
    %v1056 = vunpack.c.l.b16 %v59
    %v1057 = vunpack.c.l.b16 %v60
    %v1058 = vunpack.c.l.b16 %v61
    %v1059 = vunpack.c.l.b16 %v62
    %v1060 = vunpack.c.l.b16 %v63
    %v1061 = vunpack.c.l.b16 %v64
    %v1062 = vunpack.c.l.b16 %v65
    %v1063 = vunpack.c.l.b16 %v66
    %v1064 = vunpack.c.l.b16 %v67
    %v1065 = vunpack.c.l.b16 %v68
    %v1066 = vunpack.c.l.b16 %v69
    %v1067 = vunpack.c.l.b16 %v70
    %v1068 = vunpack.c.l.b16 %v71
    %v1069 = vunpack.c.l.b16 %v72
    %v1070 = vunpack.c.l.b16 %v73
    %v1071 = vunpack.c.l.b16 %v74
    %v1072 = vunpack.c.l.b16 %v75
    %v1073 = vunpack.c.l.b16 %v76
    %v1074 = vunpack.c.l.b16 %v77
    %v1075 = vunpack.c.l.b16 %v78
    %v1076 = vunpack.c.l.b16 %v79
    %v1077 = vunpack.c.l.b16 %v80
    %v1078 = vunpack.c.l.b16 %v81
    %v1079 = vunpack.c.l.b16 %v82
    %v1080 = vunpack.c.l.b16 %v83
    %v1081 = vunpack.c.l.b16 %v84
    %v1082 = vunpack.c.l.b16 %v85
    %v1083 = vunpack.c.l.b16 %v86
    %v1084 = vunpack.c.l.b16 %v87
    %v1085 = vunpack.c.l.b16 %v88
    %v1086 = vunpack.c.l.b16 %v89
    %v1087 = vunpack.c.l.b16 %v90
    %v1088 = vunpack.c.l.b16 %v91
    %v1089 = vunpack.c.l.b16 %v92
    %v1090 = vunpack.c.l.b16 %v93
    %v1091 = vunpack.c.l.b16 %v94
    %v1092 = vunpack.c.l.b16 %v95
    %v1093 = vunpack.c.l.b16 %v96
    %v1094 = vunpack.c.l.b16 %v97
    %v1095 = vunpack.c.l.b16 %v98
    %v1096 = vunpack.c.l.b16 %v99
    %v1097 = vunpack.c.l.b16 %v100
    %v1098 = vunpack.c.l.b16 %v101
    %v1099 = vunpack.c.l.b16 %v102
    %v1100 = vunpack.c.l.b16 %v103
    %v1101 = vunpack.c.l.b16 %v104
    %v1102 = vunpack.c.l.b16 %v105
    %v1103 = vunpack.c.l.b16 %v106
    %v1104 = vunpack.c.l.b16 %v107
    %v1105 = vunpack.c.l.b16 %v108
    %v1106 = vunpack.c.l.b16 %v109
    %v1107 = vunpack.c.l.b16 %v110
    %v1108 = vunpack.c.l.b16 %v111
    %v1109 = vunpack.c.l.b16 %v112
    %v1110 = vunpack.c.l.b16 %v113
    %v1111 = vunpack.c.l.b16 %v114
    %v1112 = vunpack.c.l.b16 %v115
    %v1113 = vunpack.c.l.b16 %v116
    %v1114 = vunpack.c.l.b16 %v117
    %v1115 = vunpack.c.l.b16 %v118
    %v1116 = vunpack.c.l.b16 %v119
    %v1117 = vunpack.c.l.b16 %v120
    %v1118 = vunpack.c.l.b16 %v121
    %v1119 = vunpack.c.l.b16 %v122
    %v1120 = vunpack.c.l.b16 %v123
    %v1121 = vunpack.c.l.b16 %v124
    %v1122 = vunpack.c.l.b16 %v125
    %v1123 = vunpack.c.l.b16 %v126
    %v1124 = vunpack.c.l.b16 %v127
    %v1125 = vunpack.c.l.b16 %v128
    %v1126 = vunpack.c.l.b16 %v129
    %v1127 = vunpack.c.l.b16 %v130
    %v1128 = vunpack.c.l.b16 %v131
    %v1129 = vunpack.c.l.b16 %v132
    %v1130 = vunpack.c.l.b16 %v133
    %v1131 = vunpack.c.l.b16 %v134
    %v1132 = vunpack.c.l.b16 %v135
    %v1133 = vunpack.c.l.b16 %v136
    %v1134 = vunpack.c.l.b16 %v137
    %v1135 = vunpack.c.l.b16 %v138
    %v1136 = vunpack.c.l.b16 %v139
    %v1137 = vunpack.c.l.b16 %v140
    %v1138 = vunpack.c.l.b16 %v141
    %v1139 = vunpack.c.l.b16 %v142
    %v1140 = vunpack.c.l.b16 %v143
    %v1141 = vunpack.c.l.b16 %v144
    %v1142 = vunpack.c.l.b16 %v145
    %v1143 = vunpack.c.l.b16 %v146
    %v1144 = vunpack.c.l.b16 %v147
    %v1145 = vunpack.c.l.b16 %v148
    %v1146 = vunpack.c.l.b16 %v149
    %v1147 = vunpack.c.l.b16 %v150
    %v1148 = vunpack.c.l.b16 %v151
    %v1149 = vunpack.c.l.b16 %v152
    %v1150 = vunpack.c.l.b16 %v153
    %v1151 = vunpack.c.l.b16 %v154
    %v1152 = vunpack.c.l.b16 %v155
    %v1153 = vunpack.c.l.b16 %v156
    %v1154 = vunpack.c.l.b16 %v157
    %v1155 = vunpack.c.l.b16 %v158
    %v1156 = vunpack.c.l.b16 %v159
    %v1157 = vunpack.c.l.b16 %v160
    %v1158 = vunpack.c.l.b16 %v161
    %v1159 = vunpack.c.l.b16 %v162
    %v1160 = vunpack.c.l.b16 %v163
    %v1161 = vunpack.c.l.b16 %v164
    %v1162 = vunpack.c.l.b16 %v165
    %v1163 = vunpack.c.l.b16 %v166
    %v1164 = vunpack.c.l.b16 %v167
    %v1165 = vunpack.c.l.b16 %v168
    %v1166 = vunpack.c.l.b16 %v169
    %v1167 = vunpack.c.l.b16 %v170
    %v1168 = vunpack.c.l.b16 %v171
    %v1169 = vunpack.c.l.b16 %v172
    %v1170 = vunpack.c.l.b16 %v173
    %v1171 = vunpack.c.l.b16 %v174
    %v1172 = vunpack.c.l.b16 %v175
    %v1173 = vunpack.c.l.b16 %v176
    %v1174 = vunpack.c.l.b16 %v177
    %v1175 = vunpack.c.l.b16 %v178
    %v1176 = vunpack.c.l.b16 %v179
    %v1177 = vunpack.c.l.b16 %v180
    %v1178 = vunpack.c.l.b16 %v181
    %v1179 = vunpack.c.l.b16 %v182
    %v1180 = vunpack.c.l.b16 %v183
    %v1181 = vunpack.c.l.b16 %v184
    %v1182 = vunpack.c.l.b16 %v185
    %v1183 = vunpack.c.l.b16 %v186
    %v1184 = vunpack.c.l.b16 %v187
    %v1185 = vunpack.c.l.b16 %v188
    %v1186 = vunpack.c.l.b16 %v189
    %v1187 = vunpack.c.l.b16 %v190
    %v1188 = vunpack.c.l.b16 %v191
    %v1189 = vunpack.c.l.b16 %v192
    %v1190 = vunpack.c.l.b16 %v193
    %v1191 = vunpack.c.l.b16 %v194
    %v1192 = vunpack.c.l.b16 %v195
    %v1193 = vunpack.c.l.b16 %v196
    %v1194 = vunpack.c.l.b16 %v197
    %v1195 = vunpack.c.l.b16 %v198
    %v1196 = vunpack.c.l.b16 %v199
    %v1197 = vunpack.c.l.b16 %v200
    %v1198 = vunpack.c.l.b16 %v201
    %v1199 = vunpack.c.l.b16 %v202
    %v1200 = vunpack.c.l.b16 %v203
    %v1201 = vunpack.c.l.b16 %v204
    %v1202 = vunpack.c.l.b16 %v205
    %v1203 = vunpack.c.l.b16 %v206
    %v1204 = vunpack.c.l.b16 %v207
    %v1205 = vunpack.c.l.b16 %v208
    %v1206 = vunpack.c.l.b16 %v209
    %v1207 = vunpack.c.l.b16 %v210
    %v1208 = vunpack.c.l.b16 %v211
    %v1209 = vunpack.c.l.b16 %v212
    %v1210 = vunpack.c.l.b16 %v213
    %v1211 = vunpack.c.l.b16 %v214
    %v1212 = vunpack.c.l.b16 %v215
    %v1213 = vunpack.c.l.b16 %v216
    %v1214 = vunpack.c.l.b16 %v217
    %v1215 = vunpack.c.l.b16 %v218
    %v1216 = vunpack.c.l.b16 %v219
    %v1217 = vunpack.c.l.b16 %v220
    %v1218 = vunpack.c.l.b16 %v221
    %v1219 = vunpack.c.l.b16 %v222
    %v1220 = vunpack.c.l.b16 %v223
    %v1221 = vunpack.c.l.b16 %v224
    %v1222 = vunpack.c.l.b16 %v225
    %v1223 = vunpack.c.l.b16 %v226
    %v1224 = vunpack.c.l.b16 %v227
    %v1225 = vunpack.c.l.b16 %v228
    %v1226 = vunpack.c.l.b16 %v229
    %v1227 = vunpack.c.l.b16 %v230
    %v1228 = vunpack.c.l.b16 %v231
    %v1229 = vunpack.c.l.b16 %v232
    %v1230 = vunpack.c.l.b16 %v233
    %v1231 = vunpack.c.l.b16 %v234
    %v1232 = vunpack.c.l.b16 %v235
    %v1233 = vunpack.c.l.b16 %v236
    %v1234 = vunpack.c.l.b16 %v237
    %v1235 = vunpack.c.l.b16 %v238
    %v1236 = vunpack.c.l.b16 %v239
    %v1237 = vunpack.c.l.b16 %v240
    %v1238 = vunpack.c.l.b16 %v241
    %v1239 = vunpack.c.l.b16 %v242
    %v1240 = vunpack.c.l.b16 %v243
    %v1241 = vunpack.c.l.b16 %v244
    %v1242 = vunpack.c.l.b16 %v245
    %v1243 = vunpack.c.l.b16 %v246
    %v1244 = vunpack.c.l.b16 %v247
    %v1245 = vunpack.c.l.b16 %v248
    %v1246 = vunpack.c.l.b16 %v249
    %v1247 = vunpack.c.l.b16 %v250
    %v1248 = vunpack.c.l.b16 %v251
    %v1249 = vunpack.c.l.b16 %v252
    %v1250 = vunpack.c.l.b16 %v253
    %v1251 = vunpack.c.l.b16 %v254
    %v1252 = vunpack.c.l.b16 %v255
    %v1253 = vunpack.c.l.b16 %v256
    %v1254 = vunpack.c.l.b16 %v257
    %v1255 = vunpack.c.l.b16 %v258
    %v1256 = vunpack.c.l.b16 %v259
    %v1257 = vunpack.c.l.b16 %v260
    %v1258 = vunpack.c.l.b16 %v261
    %v1259 = vunpack.c.l.b16 %v262
    %v1260 = vunpack.c.l.b16 %v263
    %v1261 = vunpack.c.l.b16 %v264
    %v1262 = vunpack.c.l.b16 %v265
    %v1263 = vunpack.c.l.b16 %v266
    %v1264 = vunpack.c.l.b16 %v267
    %v1265 = vunpack.c.l.b16 %v268
    %v1266 = vunpack.c.l.b16 %v269
    %v1267 = vunpack.c.l.b16 %v270
    %v1268 = vunpack.c.l.b16 %v271
    %v1269 = vunpack.c.l.b16 %v272
    %v1270 = vunpack.c.l.b16 %v273
    %v1271 = vunpack.c.l.b16 %v274
    %v1272 = vunpack.c.l.b16 %v275
    %v1273 = vunpack.c.l.b16 %v276
    %v1274 = vunpack.c.l.b16 %v277
    %v1275 = vunpack.c.l.b16 %v278
    %v1276 = vunpack.c.l.b16 %v279
    %v1277 = vunpack.c.l.b16 %v280
    %v1278 = vunpack.c.l.b16 %v281
    %v1279 = vunpack.c.l.b16 %v282
    %v1280 = vunpack.c.l.b16 %v283
    %v1281 = vunpack.c.l.b16 %v284
    %v1282 = vunpack.c.l.b16 %v285
    %v1283 = vunpack.c.l.b16 %v286
    %v1284 = vunpack.c.l.b16 %v287
    %v1285 = vunpack.c.l.b16 %v288
    %v1286 = vunpack.c.l.b16 %v289
    %v1287 = vunpack.c.l.b16 %v290
    %v1288 = vunpack.c.l.b16 %v291
    %v1289 = vunpack.c.l.b16 %v292
    %v1290 = vunpack.c.l.b16 %v293
    %v1291 = vunpack.c.l.b16 %v294
    %v1292 = vunpack.c.l.b16 %v295
    %v1293 = vunpack.c.l.b16 %v296
    %v1294 = vunpack.c.l.b16 %v297
    %v1295 = vunpack.c.l.b16 %v298
    %v1296 = vunpack.c.l.b16 %v299
    %v1297 = vunpack.c.l.b16 %v300
    %v1298 = vunpack.c.l.b16 %v301
    %v1299 = vunpack.c.l.b16 %v302
    %v1300 = vunpack.c.l.b16 %v303
    %v1301 = vunpack.c.l.b16 %v304
    %v1302 = vunpack.c.l.b16 %v305
    %v1303 = vunpack.c.l.b16 %v306
    %v1304 = vunpack.c.l.b16 %v307
    %v1305 = vunpack.c.l.b16 %v308
    %v1306 = vunpack.c.l.b16 %v309
    %v1307 = vunpack.c.l.b16 %v310
    %v1308 = vunpack.c.l.b16 %v311
    %v1309 = vunpack.c.l.b16 %v312
    %v1310 = vunpack.c.l.b16 %v313
    %v1311 = vunpack.c.l.b16 %v314
    %v1312 = vunpack.c.l.b16 %v315
    %v1313 = vunpack.c.l.b16 %v316
    %v1314 = vunpack.c.l.b16 %v317
    %v1315 = vunpack.c.l.b16 %v318
    %v1316 = vunpack.c.l.b16 %v319
    %v1317 = vunpack.c.l.b16 %v320
    %v1318 = vunpack.c.l.b16 %v321
    %v1319 = vunpack.c.l.b16 %v322
    %v1320 = vunpack.c.l.b16 %v323
    %v1321 = vunpack.c.l.b16 %v324
    %v1322 = vunpack.c.l.b16 %v325
    %v1323 = vunpack.c.l.b16 %v326
    %v1324 = vunpack.c.l.b16 %v327
    %v1325 = vunpack.c.l.b16 %v328
    %v1326 = vunpack.c.l.b16 %v329
    %v1327 = vunpack.c.l.b16 %v330
    %v1328 = vunpack.c.l.b16 %v331
    %v1329 = vunpack.c.l.b16 %v332
    %v1330 = vunpack.c.l.b16 %v333
    %v1331 = vunpack.c.l.b16 %v334
    %v1332 = vunpack.c.l.b16 %v335
    %v1333 = vunpack.c.l.b16 %v336
    %v1334 = vunpack.c.l.b16 %v337
    %v1335 = vunpack.c.l.b16 %v338
    %v1336 = vunpack.c.l.b16 %v339
    %v1337 = vunpack.c.l.b16 %v340
    %v1338 = vunpack.c.l.b16 %v341
    %v1339 = vunpack.c.l.b16 %v342
    %v1340 = vunpack.c.l.b16 %v343
    %v1341 = vunpack.c.l.b16 %v344
    %v1342 = vunpack.c.l.b16 %v345
    %v1343 = vunpack.c.l.b16 %v346
    %v1344 = vunpack.c.l.b16 %v347
    %v1345 = vunpack.c.l.b16 %v348
    %v1346 = vunpack.c.l.b16 %v349
    %v1347 = vunpack.c.l.b16 %v350
    %v1348 = vunpack.c.l.b16 %v351
    %v1349 = vunpack.c.l.b16 %v352
    %v1350 = vunpack.c.l.b16 %v353
    %v1351 = vunpack.c.l.b16 %v354
    %v1352 = vunpack.c.l.b16 %v355
    %v1353 = vunpack.c.l.b16 %v356
    %v1354 = vunpack.c.l.b16 %v357
    %v1355 = vunpack.c.l.b16 %v358
    %v1356 = vunpack.c.l.b16 %v359
    %v1357 = vunpack.c.l.b16 %v360
    %v1358 = vunpack.c.l.b16 %v361
    %v1359 = vunpack.c.l.b16 %v362
    %v1360 = vunpack.c.l.b16 %v363
    %v1361 = vunpack.c.l.b16 %v364
    %v1362 = vunpack.c.l.b16 %v365
    %v1363 = vunpack.c.l.b16 %v366
    %v1364 = vunpack.c.l.b16 %v367
    %v1365 = vunpack.c.l.b16 %v368
    %v1366 = vunpack.c.l.b16 %v369
    %v1367 = vunpack.c.l.b16 %v370
    %v1368 = vunpack.c.l.b16 %v371
    %v1369 = vunpack.c.l.b16 %v372
    %v1370 = vunpack.c.l.b16 %v373
    %v1371 = vunpack.c.l.b16 %v374
    %v1372 = vunpack.c.l.b16 %v375
    %v1373 = vunpack.c.l.b16 %v376
    %v1374 = vunpack.c.l.b16 %v377
    %v1375 = vunpack.c.l.b16 %v378
    %v1376 = vunpack.c.l.b16 %v379
    %v1377 = vunpack.c.l.b16 %v380
    %v1378 = vunpack.c.l.b16 %v381
    %v1379 = vunpack.c.l.b16 %v382
    %v1380 = vunpack.c.l.b16 %v383
    %v1381 = vunpack.c.l.b16 %v384
    %v1382 = vunpack.c.l.b16 %v385
    %v1383 = vunpack.c.l.b16 %v386
    %v1384 = vunpack.c.l.b16 %v387
    %v1385 = vunpack.c.l.b16 %v388
    %v1386 = vunpack.c.l.b16 %v389
    %v1387 = vunpack.c.l.b16 %v390
    %v1388 = vunpack.c.l.b16 %v391
    %v1389 = vunpack.c.l.b16 %v392
    %v1390 = vunpack.c.l.b16 %v393
    %v1391 = vunpack.c.l.b16 %v394
    %v1392 = vunpack.c.l.b16 %v395
    %v1393 = vunpack.c.l.b16 %v396
    %v1394 = vunpack.c.l.b16 %v397
    %v1395 = vunpack.c.l.b16 %v398
    %v1396 = vunpack.c.l.b16 %v399
    %v1397 = vunpack.c.l.b16 %v400
    %v1398 = vunpack.c.l.b16 %v401
    %v1399 = vunpack.c.l.b16 %v402
    %v1400 = vunpack.c.l.b16 %v403
    %v1401 = vunpack.c.l.b16 %v404
    %v1402 = vunpack.c.l.b16 %v405
    %v1403 = vunpack.c.l.b16 %v406
    %v1404 = vunpack.c.l.b16 %v407
    %v1405 = vunpack.c.l.b16 %v408
    %v1406 = vunpack.c.l.b16 %v409
    %v1407 = vunpack.c.l.b16 %v410
    %v1408 = vunpack.c.l.b16 %v411
    %v1409 = vunpack.c.l.b16 %v412
    %v1410 = vunpack.c.l.b16 %v413
    %v1411 = vunpack.c.l.b16 %v414
    %v1412 = vunpack.c.l.b16 %v415
    %v1413 = vunpack.c.l.b16 %v416
    %v1414 = vunpack.c.l.b16 %v417
    %v1415 = vunpack.c.l.b16 %v418
    %v1416 = vunpack.c.l.b16 %v419
    %v1417 = vunpack.c.l.b16 %v420
    %v1418 = vunpack.c.l.b16 %v421
    %v1419 = vunpack.c.l.b16 %v422
    %v1420 = vunpack.c.l.b16 %v423
    %v1421 = vunpack.c.l.b16 %v424
    %v1422 = vunpack.c.l.b16 %v425
    %v1423 = vunpack.c.l.b16 %v426
    %v1424 = vunpack.c.l.b16 %v427
    %v1425 = vunpack.c.l.b16 %v428
    %v1426 = vunpack.c.l.b16 %v429
    %v1427 = vunpack.c.l.b16 %v430
    %v1428 = vunpack.c.l.b16 %v431
    %v1429 = vpack.c.b16 %v1030, %v1029
    %v1430 = vpack.c.b16 %v1032, %v1031
    %v1431 = vpack.c.b16 %v1034, %v1033
    %v1432 = vpack.c.b16 %v1036, %v1035
    %v1433 = vpack.c.b16 %v1038, %v1037
    %v1434 = vpack.c.b16 %v1040, %v1039
    %v1435 = vpack.c.b16 %v1042, %v1041
    %v1436 = vpack.c.b16 %v1044, %v1043
    %v1437 = vpack.c.b16 %v1046, %v1045
    %v1438 = vpack.c.b16 %v1048, %v1047
    %v1439 = vpack.c.b16 %v1050, %v1049
    %v1440 = vpack.c.b16 %v1052, %v1051
    %v1441 = vpack.c.b16 %v1054, %v1053
    %v1442 = vpack.c.b16 %v1056, %v1055
    %v1443 = vpack.c.b16 %v1058, %v1057
    %v1444 = vpack.c.b16 %v1060, %v1059
    %v1445 = vpack.c.b16 %v1062, %v1061
    %v1446 = vpack.c.b16 %v1064, %v1063
    %v1447 = vpack.c.b16 %v1066, %v1065
    %v1448 = vpack.c.b16 %v1068, %v1067
    %v1449 = vpack.c.b16 %v1070, %v1069
    %v1450 = vpack.c.b16 %v1072, %v1071
    %v1451 = vpack.c.b16 %v1074, %v1073
    %v1452 = vpack.c.b16 %v1076, %v1075
    %v1453 = vpack.c.b16 %v1078, %v1077
    %v1454 = vpack.c.b16 %v1080, %v1079
    %v1455 = vpack.c.b16 %v1082, %v1081
    %v1456 = vpack.c.b16 %v1084, %v1083
    %v1457 = vpack.c.b16 %v1086, %v1085
    %v1458 = vpack.c.b16 %v1088, %v1087
    %v1459 = vpack.c.b16 %v1090, %v1089
    %v1460 = vpack.c.b16 %v1092, %v1091
    %v1461 = vpack.c.b16 %v1094, %v1093
    %v1462 = vpack.c.b16 %v1096, %v1095
    %v1463 = vpack.c.b16 %v1098, %v1097
    %v1464 = vpack.c.b16 %v1100, %v1099
    %v1465 = vpack.c.b16 %v1102, %v1101
    %v1466 = vpack.c.b16 %v1104, %v1103
    %v1467 = vpack.c.b16 %v1106, %v1105
    %v1468 = vpack.c.b16 %v1108, %v1107
    %v1469 = vpack.c.b16 %v1110, %v1109
    %v1470 = vpack.c.b16 %v1112, %v1111
    %v1471 = vpack.c.b16 %v1114, %v1113
    %v1472 = vpack.c.b16 %v1116, %v1115
    %v1473 = vpack.c.b16 %v1118, %v1117
    %v1474 = vpack.c.b16 %v1120, %v1119
    %v1475 = vpack.c.b16 %v1122, %v1121
    %v1476 = vpack.c.b16 %v1124, %v1123
    %v1477 = vpack.c.b16 %v1126, %v1125
    %v1478 = vpack.c.b16 %v1128, %v1127
    %v1479 = vpack.c.b16 %v1130, %v1129
    %v1480 = vpack.c.b16 %v1132, %v1131
    %v1481 = vpack.c.b16 %v1134, %v1133
    %v1482 = vpack.c.b16 %v1136, %v1135
    %v1483 = vpack.c.b16 %v1138, %v1137
    %v1484 = vpack.c.b16 %v1140, %v1139
    %v1485 = vpack.c.b16 %v1142, %v1141
    %v1486 = vpack.c.b16 %v1144, %v1143
    %v1487 = vpack.c.b16 %v1146, %v1145
    %v1488 = vpack.c.b16 %v1148, %v1147
    %v1489 = vpack.c.b16 %v1150, %v1149
    %v1490 = vpack.c.b16 %v1152, %v1151
    %v1491 = vpack.c.b16 %v1154, %v1153
    %v1492 = vpack.c.b16 %v1156, %v1155
    %v1493 = vpack.c.b16 %v1158, %v1157
    %v1494 = vpack.c.b16 %v1160, %v1159
    %v1495 = vpack.c.b16 %v1162, %v1161
    %v1496 = vpack.c.b16 %v1164, %v1163
    %v1497 = vpack.c.b16 %v1166, %v1165
    %v1498 = vpack.c.b16 %v1168, %v1167
    %v1499 = vpack.c.b16 %v1170, %v1169
    %v1500 = vpack.c.b16 %v1172, %v1171
    %v1501 = vpack.c.b16 %v1174, %v1173
    %v1502 = vpack.c.b16 %v1176, %v1175
    %v1503 = vpack.c.b16 %v1178, %v1177
    %v1504 = vpack.c.b16 %v1180, %v1179
    %v1505 = vpack.c.b16 %v1182, %v1181
    %v1506 = vpack.c.b16 %v1184, %v1183
    %v1507 = vpack.c.b16 %v1186, %v1185
    %v1508 = vpack.c.b16 %v1188, %v1187
    %v1509 = vpack.c.b16 %v1190, %v1189
    %v1510 = vpack.c.b16 %v1192, %v1191
    %v1511 = vpack.c.b16 %v1194, %v1193
    %v1512 = vpack.c.b16 %v1196, %v1195
    %v1513 = vpack.c.b16 %v1198, %v1197
    %v1514 = vpack.c.b16 %v1200, %v1199
    %v1515 = vpack.c.b16 %v1202, %v1201
    %v1516 = vpack.c.b16 %v1204, %v1203
    %v1517 = vpack.c.b16 %v1206, %v1205
    %v1518 = vpack.c.b16 %v1208, %v1207
    %v1519 = vpack.c.b16 %v1210, %v1209
    %v1520 = vpack.c.b16 %v1212, %v1211
    %v1521 = vpack.c.b16 %v1214, %v1213
    %v1522 = vpack.c.b16 %v1216, %v1215
    %v1523 = vpack.c.b16 %v1218, %v1217
    %v1524 = vpack.c.b16 %v1220, %v1219
    %v1525 = vpack.c.b16 %v1222, %v1221
    %v1526 = vpack.c.b16 %v1224, %v1223
    %v1527 = vpack.c.b16 %v1226, %v1225
    %v1528 = vpack.c.b16 %v1228, %v1227
    %v1529 = vpack.c.b16 %v1230, %v1229
    %v1530 = vpack.c.b16 %v1232, %v1231
    %v1531 = vpack.c.b16 %v1234, %v1233
    %v1532 = vpack.c.b16 %v1236, %v1235
    %v1533 = vpack.c.b16 %v1238, %v1237
    %v1534 = vpack.c.b16 %v1240, %v1239
    %v1535 = vpack.c.b16 %v1242, %v1241
    %v1536 = vpack.c.b16 %v1244, %v1243
    %v1537 = vpack.c.b16 %v1246, %v1245
    %v1538 = vpack.c.b16 %v1248, %v1247
    %v1539 = vpack.c.b16 %v1250, %v1249
    %v1540 = vpack.c.b16 %v1252, %v1251
    %v1541 = vpack.c.b16 %v1254, %v1253
    %v1542 = vpack.c.b16 %v1256, %v1255
    %v1543 = vpack.c.b16 %v1258, %v1257
    %v1544 = vpack.c.b16 %v1260, %v1259
    %v1545 = vpack.c.b16 %v1262, %v1261
    %v1546 = vpack.c.b16 %v1264, %v1263
    %v1547 = vpack.c.b16 %v1266, %v1265
    %v1548 = vpack.c.b16 %v1268, %v1267
    %v1549 = vpack.c.b16 %v1270, %v1269
    %v1550 = vpack.c.b16 %v1272, %v1271
    %v1551 = vpack.c.b16 %v1274, %v1273
    %v1552 = vpack.c.b16 %v1276, %v1275
    %v1553 = vpack.c.b16 %v1278, %v1277
    %v1554 = vpack.c.b16 %v1280, %v1279
    %v1555 = vpack.c.b16 %v1282, %v1281
    %v1556 = vpack.c.b16 %v1284, %v1283
    %v1557 = vpack.c.b16 %v1286, %v1285
    %v1558 = vpack.c.b16 %v1288, %v1287
    %v1559 = vpack.c.b16 %v1290, %v1289
    %v1560 = vpack.c.b16 %v1292, %v1291
    %v1561 = vpack.c.b16 %v1294, %v1293
    %v1562 = vpack.c.b16 %v1296, %v1295
    %v1563 = vpack.c.b16 %v1298, %v1297
    %v1564 = vpack.c.b16 %v1300, %v1299
    %v1565 = vpack.c.b16 %v1302, %v1301
    %v1566 = vpack.c.b16 %v1304, %v1303
    %v1567 = vpack.c.b16 %v1306, %v1305
    %v1568 = vpack.c.b16 %v1308, %v1307
    %v1569 = vpack.c.b16 %v1310, %v1309
    %v1570 = vpack.c.b16 %v1312, %v1311
    %v1571 = vpack.c.b16 %v1314, %v1313
    %v1572 = vpack.c.b16 %v1316, %v1315
    %v1573 = vpack.c.b16 %v1318, %v1317
    %v1574 = vpack.c.b16 %v1320, %v1319
    %v1575 = vpack.c.b16 %v1322, %v1321
    %v1576 = vpack.c.b16 %v1324, %v1323
    %v1577 = vpack.c.b16 %v1326, %v1325
    %v1578 = vpack.c.b16 %v1328, %v1327
    %v1579 = vpack.c.b16 %v1330, %v1329
    %v1580 = vpack.c.b16 %v1332, %v1331
    %v1581 = vpack.c.b16 %v1334, %v1333
    %v1582 = vpack.c.b16 %v1336, %v1335
    %v1583 = vpack.c.b16 %v1338, %v1337
    %v1584 = vpack.c.b16 %v1340, %v1339
    %v1585 = vpack.c.b16 %v1342, %v1341
    %v1586 = vpack.c.b16 %v1344, %v1343
    %v1587 = vpack.c.b16 %v1346, %v1345
    %v1588 = vpack.c.b16 %v1348, %v1347
    %v1589 = vpack.c.b16 %v1350, %v1349
    %v1590 = vpack.c.b16 %v1352, %v1351
    %v1591 = vpack.c.b16 %v1354, %v1353
    %v1592 = vpack.c.b16 %v1356, %v1355
    %v1593 = vpack.c.b16 %v1358, %v1357
    %v1594 = vpack.c.b16 %v1360, %v1359
    %v1595 = vpack.c.b16 %v1362, %v1361
    %v1596 = vpack.c.b16 %v1364, %v1363
    %v1597 = vpack.c.b16 %v1366, %v1365
    %v1598 = vpack.c.b16 %v1368, %v1367
    %v1599 = vpack.c.b16 %v1370, %v1369
    %v1600 = vpack.c.b16 %v1372, %v1371
    %v1601 = vpack.c.b16 %v1374, %v1373
    %v1602 = vpack.c.b16 %v1376, %v1375
    %v1603 = vpack.c.b16 %v1378, %v1377
    %v1604 = vpack.c.b16 %v1380, %v1379
    %v1605 = vpack.c.b16 %v1382, %v1381
    %v1606 = vpack.c.b16 %v1384, %v1383
    %v1607 = vpack.c.b16 %v1386, %v1385
    %v1608 = vpack.c.b16 %v1388, %v1387
    %v1609 = vpack.c.b16 %v1390, %v1389
    %v1610 = vpack.c.b16 %v1392, %v1391
    %v1611 = vpack.c.b16 %v1394, %v1393
    %v1612 = vpack.c.b16 %v1396, %v1395
    %v1613 = vpack.c.b16 %v1398, %v1397
    %v1614 = vpack.c.b16 %v1400, %v1399
    %v1615 = vpack.c.b16 %v1402, %v1401
    %v1616 = vpack.c.b16 %v1404, %v1403
    %v1617 = vpack.c.b16 %v1406, %v1405
    %v1618 = vpack.c.b16 %v1408, %v1407
    %v1619 = vpack.c.b16 %v1410, %v1409
    %v1620 = vpack.c.b16 %v1412, %v1411
    %v1621 = vpack.c.b16 %v1414, %v1413
    %v1622 = vpack.c.b16 %v1416, %v1415
    %v1623 = vpack.c.b16 %v1418, %v1417
    %v1624 = vpack.c.b16 %v1420, %v1419
    %v1625 = vpack.c.b16 %v1422, %v1421
    %v1626 = vpack.c.b16 %v1424, %v1423
    %v1627 = vpack.c.b16 %v1426, %v1425
    %v1628 = vpack.c.b16 %v1428, %v1427
    %1829 = vmatprep.subr.bf16.mxu0 0
    %1830 = vmatpush1.bf16.msra.mxu0 %v1436
    %1831 = vmatprep.subr.bf16.mxu0 0
    %1832 = vmatpush1.bf16.msra.mxu0 %v1435
    %1833 = vmatprep.subr.bf16.mxu0 0
    %1834 = vmatpush1.bf16.msra.mxu0 %v1434
    %1835 = vmatprep.subr.bf16.mxu0 0
    %1836 = vmatpush1.bf16.msra.mxu0 %v1433
    %1837 = vmatprep.subr.bf16.mxu0 0
    %1838 = vmatpush1.bf16.msra.mxu0 %v1432
    %1839 = vmatprep.subr.bf16.mxu0 0
    %1840 = vmatpush1.bf16.msra.mxu0 %v1431
    %1841 = vmatprep.subr.bf16.mxu0 0
    %1842 = vmatpush1.bf16.msra.mxu0 %v1430
    %1843 = vmatprep.subr.bf16.mxu0 0
    %1844 = vmatpush1.bf16.msra.mxu0 %v1429
    %1845 = vmatprep.subr.bf16.mxu0 0
    %1846 = vmatpush2.bf16.msra.mxu0 %v1444
    %1847 = vmatprep.subr.bf16.mxu0 0
    %1848 = vmatpush2.bf16.msra.mxu0 %v1443
    %1849 = vmatprep.subr.bf16.mxu0 0
    %1850 = vmatpush2.bf16.msra.mxu0 %v1442
    %1851 = vmatprep.subr.bf16.mxu0 0
    %1852 = vmatpush2.bf16.msra.mxu0 %v1441
    %1853 = vmatprep.subr.bf16.mxu0 0
    %1854 = vmatpush2.bf16.msra.mxu0 %v1440
    %1855 = vmatprep.subr.bf16.mxu0 0
    %1856 = vmatpush2.bf16.msra.mxu0 %v1439
    %1857 = vmatprep.subr.bf16.mxu0 0
    %1858 = vmatpush2.bf16.msra.mxu0 %v1438
    %1859 = vmatprep.subr.bf16.mxu0 0
    %1860 = vmatpush2.bf16.msra.mxu0 %v1437
    %1861 = vmatprep.mubr.bf16.mxu0 %v480
    %1862 = vmatmul.mubr.bf16.gmra.mxu0 %v466
    %v1863 = vpop.f32.mrf.mxu0
    %v1864 = vadd.f32 %v437, %v1863
    %v1865 = vpop.f32.mrf.mxu0
    %v1866 = vpop.f32.mrf.mxu0
    %v1867 = vpop.f32.mrf.mxu0
    %1868 = vdwg.mxu0
    %1869 = vmatprep.subr.bf16.mxu0 0
    %1870 = vmatpush1.bf16.msra.mxu0 %v1452
    %1871 = vmatprep.subr.bf16.mxu0 0
    %1872 = vmatpush1.bf16.msra.mxu0 %v1451
    %1873 = vmatprep.subr.bf16.mxu0 0
    %1874 = vmatpush1.bf16.msra.mxu0 %v1450
    %1875 = vmatprep.subr.bf16.mxu0 0
    %1876 = vmatpush1.bf16.msra.mxu0 %v1449
    %1877 = vmatprep.subr.bf16.mxu0 0
    %1878 = vmatpush1.bf16.msra.mxu0 %v1448
    %1879 = vmatprep.subr.bf16.mxu0 0
    %1880 = vmatpush1.bf16.msra.mxu0 %v1447
    %1881 = vmatprep.subr.bf16.mxu0 0
    %1882 = vmatpush1.bf16.msra.mxu0 %v1446
    %1883 = vmatprep.subr.bf16.mxu0 0
    %1884 = vmatpush1.bf16.msra.mxu0 %v1445
    %1885 = vmatprep.subr.bf16.mxu0 0
    %1886 = vmatpush2.bf16.msra.mxu0 %v1460
    %1887 = vmatprep.subr.bf16.mxu0 0
    %1888 = vmatpush2.bf16.msra.mxu0 %v1459
    %1889 = vmatprep.subr.bf16.mxu0 0
    %1890 = vmatpush2.bf16.msra.mxu0 %v1458
    %1891 = vmatprep.subr.bf16.mxu0 0
    %1892 = vmatpush2.bf16.msra.mxu0 %v1457
    %1893 = vmatprep.subr.bf16.mxu0 0
    %1894 = vmatpush2.bf16.msra.mxu0 %v1456
    %1895 = vmatprep.subr.bf16.mxu0 0
    %1896 = vmatpush2.bf16.msra.mxu0 %v1455
    %1897 = vmatprep.subr.bf16.mxu0 0
    %1898 = vmatpush2.bf16.msra.mxu0 %v1454
    %1899 = vmatprep.subr.bf16.mxu0 0
    %1900 = vmatpush2.bf16.msra.mxu0 %v1453
    %1901 = vmatprep.mubr.bf16.mxu0 %v490
    %1902 = vmatmul.mubr.bf16.gmra.mxu0 %v488
    %v1903 = vpop.f32.mrf.mxu0
    %v1904 = vadd.f32 %v1864, %v1903
    %v1905 = vpop.f32.mrf.mxu0
    %v1906 = vpop.f32.mrf.mxu0
    %v1907 = vpop.f32.mrf.mxu0
    %1908 = vdwg.mxu0
    %1909 = vmatprep.subr.bf16.mxu0 0
    %1910 = vmatpush1.bf16.msra.mxu0 %v1468
    %1911 = vmatprep.subr.bf16.mxu0 0
    %1912 = vmatpush1.bf16.msra.mxu0 %v1467
    %1913 = vmatprep.subr.bf16.mxu0 0
    %1914 = vmatpush1.bf16.msra.mxu0 %v1466
    %1915 = vmatprep.subr.bf16.mxu0 0
    %1916 = vmatpush1.bf16.msra.mxu0 %v1465
    %1917 = vmatprep.subr.bf16.mxu0 0
    %1918 = vmatpush1.bf16.msra.mxu0 %v1464
    %1919 = vmatprep.subr.bf16.mxu0 0
    %1920 = vmatpush1.bf16.msra.mxu0 %v1463
    %1921 = vmatprep.subr.bf16.mxu0 0
    %1922 = vmatpush1.bf16.msra.mxu0 %v1462
    %1923 = vmatprep.subr.bf16.mxu0 0
    %1924 = vmatpush1.bf16.msra.mxu0 %v1461
    %1925 = vmatprep.subr.bf16.mxu0 0
    %1926 = vmatpush2.bf16.msra.mxu0 %v1476
    %1927 = vmatprep.subr.bf16.mxu0 0
    %1928 = vmatpush2.bf16.msra.mxu0 %v1475
    %1929 = vmatprep.subr.bf16.mxu0 0
    %1930 = vmatpush2.bf16.msra.mxu0 %v1474
    %1931 = vmatprep.subr.bf16.mxu0 0
    %1932 = vmatpush2.bf16.msra.mxu0 %v1473
    %1933 = vmatprep.subr.bf16.mxu0 0
    %1934 = vmatpush2.bf16.msra.mxu0 %v1472
    %1935 = vmatprep.subr.bf16.mxu0 0
    %1936 = vmatpush2.bf16.msra.mxu0 %v1471
    %1937 = vmatprep.subr.bf16.mxu0 0
    %1938 = vmatpush2.bf16.msra.mxu0 %v1470
    %1939 = vmatprep.subr.bf16.mxu0 0
    %1940 = vmatpush2.bf16.msra.mxu0 %v1469
    %1941 = vmatprep.mubr.bf16.mxu0 %v487
    %1942 = vmatmul.mubr.bf16.gmra.mxu0 %v473
    %v1943 = vpop.f32.mrf.mxu0
    %v1944 = vadd.f32 %v1904, %v1943
    %v1945 = vpop.f32.mrf.mxu0
    %v1946 = vpop.f32.mrf.mxu0
    %v1947 = vpop.f32.mrf.mxu0
    %1948 = vdwg.mxu0
    %1949 = vmatprep.subr.bf16.mxu0 0
    %1950 = vmatpush1.bf16.msra.mxu0 %v1484
    %1951 = vmatprep.subr.bf16.mxu0 0
    %1952 = vmatpush1.bf16.msra.mxu0 %v1483
    %1953 = vmatprep.subr.bf16.mxu0 0
    %1954 = vmatpush1.bf16.msra.mxu0 %v1482
    %1955 = vmatprep.subr.bf16.mxu0 0
    %1956 = vmatpush1.bf16.msra.mxu0 %v1481
    %1957 = vmatprep.subr.bf16.mxu0 0
    %1958 = vmatpush1.bf16.msra.mxu0 %v1480
    %1959 = vmatprep.subr.bf16.mxu0 0
    %1960 = vmatpush1.bf16.msra.mxu0 %v1479
    %1961 = vmatprep.subr.bf16.mxu0 0
    %1962 = vmatpush1.bf16.msra.mxu0 %v1478
    %1963 = vmatprep.subr.bf16.mxu0 0
    %1964 = vmatpush1.bf16.msra.mxu0 %v1477
    %1965 = vmatprep.subr.bf16.mxu0 0
    %1966 = vmatpush2.bf16.msra.mxu0 %v1492
    %1967 = vmatprep.subr.bf16.mxu0 0
    %1968 = vmatpush2.bf16.msra.mxu0 %v1491
    %1969 = vmatprep.subr.bf16.mxu0 0
    %1970 = vmatpush2.bf16.msra.mxu0 %v1490
    %1971 = vmatprep.subr.bf16.mxu0 0
    %1972 = vmatpush2.bf16.msra.mxu0 %v1489
    %1973 = vmatprep.subr.bf16.mxu0 0
    %1974 = vmatpush2.bf16.msra.mxu0 %v1488
    %1975 = vmatprep.subr.bf16.mxu0 0
    %1976 = vmatpush2.bf16.msra.mxu0 %v1487
    %1977 = vmatprep.subr.bf16.mxu0 0
    %1978 = vmatpush2.bf16.msra.mxu0 %v1486
    %1979 = vmatprep.subr.bf16.mxu0 0
    %1980 = vmatpush2.bf16.msra.mxu0 %v1485
    %1981 = vmatprep.mubr.bf16.mxu0 %v491
    %1982 = vmatmul.mubr.bf16.gmra.mxu0 %v489
    %v1983 = vpop.f32.mrf.mxu0
    %v1984 = vadd.f32 %v1944, %v1983
    %v1985 = vpop.f32.mrf.mxu0
    %v1986 = vpop.f32.mrf.mxu0
    %v1987 = vpop.f32.mrf.mxu0
    %1988 = vdwg.mxu0
    %1989 = vmatprep.subr.bf16.mxu0 0
    %1990 = vmatpush1.bf16.msra.mxu0 %v1500
    %1991 = vmatprep.subr.bf16.mxu0 0
    %1992 = vmatpush1.bf16.msra.mxu0 %v1499
    %1993 = vmatprep.subr.bf16.mxu0 0
    %1994 = vmatpush1.bf16.msra.mxu0 %v1498
    %1995 = vmatprep.subr.bf16.mxu0 0
    %1996 = vmatpush1.bf16.msra.mxu0 %v1497
    %1997 = vmatprep.subr.bf16.mxu0 0
    %1998 = vmatpush1.bf16.msra.mxu0 %v1496
    %1999 = vmatprep.subr.bf16.mxu0 0
    %2000 = vmatpush1.bf16.msra.mxu0 %v1495
    %2001 = vmatprep.subr.bf16.mxu0 0
    %2002 = vmatpush1.bf16.msra.mxu0 %v1494
    %2003 = vmatprep.subr.bf16.mxu0 0
    %2004 = vmatpush1.bf16.msra.mxu0 %v1493
    %2005 = vmatprep.subr.bf16.mxu0 0
    %2006 = vmatpush2.bf16.msra.mxu0 %v1508
    %2007 = vmatprep.subr.bf16.mxu0 0
    %2008 = vmatpush2.bf16.msra.mxu0 %v1507
    %2009 = vmatprep.subr.bf16.mxu0 0
    %2010 = vmatpush2.bf16.msra.mxu0 %v1506
    %2011 = vmatprep.subr.bf16.mxu0 0
    %2012 = vmatpush2.bf16.msra.mxu0 %v1505
    %2013 = vmatprep.subr.bf16.mxu0 0
    %2014 = vmatpush2.bf16.msra.mxu0 %v1504
    %2015 = vmatprep.subr.bf16.mxu0 0
    %2016 = vmatpush2.bf16.msra.mxu0 %v1503
    %2017 = vmatprep.subr.bf16.mxu0 0
    %2018 = vmatpush2.bf16.msra.mxu0 %v1502
    %2019 = vmatprep.subr.bf16.mxu0 0
    %2020 = vmatpush2.bf16.msra.mxu0 %v1501
    %2021 = vmatprep.mubr.bf16.mxu0 %v529
    %2022 = vmatmul.mubr.bf16.gmra.mxu0 %v515
    %v2023 = vpop.f32.mrf.mxu0
    %v2024 = vadd.f32 %v1984, %v2023
    %v2025 = vpop.f32.mrf.mxu0
    %v2026 = vpop.f32.mrf.mxu0
    %v2027 = vpop.f32.mrf.mxu0
    %2028 = vdwg.mxu0
    %2029 = vmatprep.subr.bf16.mxu0 0
    %2030 = vmatpush1.bf16.msra.mxu0 %v1516
    %2031 = vmatprep.subr.bf16.mxu0 0
    %2032 = vmatpush1.bf16.msra.mxu0 %v1515
    %2033 = vmatprep.subr.bf16.mxu0 0
    %2034 = vmatpush1.bf16.msra.mxu0 %v1514
    %2035 = vmatprep.subr.bf16.mxu0 0
    %2036 = vmatpush1.bf16.msra.mxu0 %v1513
    %2037 = vmatprep.subr.bf16.mxu0 0
    %2038 = vmatpush1.bf16.msra.mxu0 %v1512
    %2039 = vmatprep.subr.bf16.mxu0 0
    %2040 = vmatpush1.bf16.msra.mxu0 %v1511
    %2041 = vmatprep.subr.bf16.mxu0 0
    %2042 = vmatpush1.bf16.msra.mxu0 %v1510
    %2043 = vmatprep.subr.bf16.mxu0 0
    %2044 = vmatpush1.bf16.msra.mxu0 %v1509
    %2045 = vmatprep.subr.bf16.mxu0 0
    %2046 = vmatpush2.bf16.msra.mxu0 %v1524
    %2047 = vmatprep.subr.bf16.mxu0 0
    %2048 = vmatpush2.bf16.msra.mxu0 %v1523
    %2049 = vmatprep.subr.bf16.mxu0 0
    %2050 = vmatpush2.bf16.msra.mxu0 %v1522
    %2051 = vmatprep.subr.bf16.mxu0 0
    %2052 = vmatpush2.bf16.msra.mxu0 %v1521
    %2053 = vmatprep.subr.bf16.mxu0 0
    %2054 = vmatpush2.bf16.msra.mxu0 %v1520
    %2055 = vmatprep.subr.bf16.mxu0 0
    %2056 = vmatpush2.bf16.msra.mxu0 %v1519
    %2057 = vmatprep.subr.bf16.mxu0 0
    %2058 = vmatpush2.bf16.msra.mxu0 %v1518
    %2059 = vmatprep.subr.bf16.mxu0 0
    %2060 = vmatpush2.bf16.msra.mxu0 %v1517
    %2061 = vmatprep.mubr.bf16.mxu0 %v539
    %2062 = vmatmul.mubr.bf16.gmra.mxu0 %v537
    %v2063 = vpop.f32.mrf.mxu0
    %v2064 = vadd.f32 %v2024, %v2063
    %v2065 = vpop.f32.mrf.mxu0
    %v2066 = vpop.f32.mrf.mxu0
    %v2067 = vpop.f32.mrf.mxu0
    %2068 = vdwg.mxu0
    %2069 = vmatprep.subr.bf16.mxu0 0
    %2070 = vmatpush1.bf16.msra.mxu0 %v1532
    %2071 = vmatprep.subr.bf16.mxu0 0
    %2072 = vmatpush1.bf16.msra.mxu0 %v1531
    %2073 = vmatprep.subr.bf16.mxu0 0
    %2074 = vmatpush1.bf16.msra.mxu0 %v1530
    %2075 = vmatprep.subr.bf16.mxu0 0
    %2076 = vmatpush1.bf16.msra.mxu0 %v1529
    %2077 = vmatprep.subr.bf16.mxu0 0
    %2078 = vmatpush1.bf16.msra.mxu0 %v1528
    %2079 = vmatprep.subr.bf16.mxu0 0
    %2080 = vmatpush1.bf16.msra.mxu0 %v1527
    %2081 = vmatprep.subr.bf16.mxu0 0
    %2082 = vmatpush1.bf16.msra.mxu0 %v1526
    %2083 = vmatprep.subr.bf16.mxu0 0
    %2084 = vmatpush1.bf16.msra.mxu0 %v1525
    %2085 = vmatprep.subr.bf16.mxu0 0
    %2086 = vmatpush2.bf16.msra.mxu0 %v1540
    %2087 = vmatprep.subr.bf16.mxu0 0
    %2088 = vmatpush2.bf16.msra.mxu0 %v1539
    %2089 = vmatprep.subr.bf16.mxu0 0
    %2090 = vmatpush2.bf16.msra.mxu0 %v1538
    %2091 = vmatprep.subr.bf16.mxu0 0
    %2092 = vmatpush2.bf16.msra.mxu0 %v1537
    %2093 = vmatprep.subr.bf16.mxu0 0
    %2094 = vmatpush2.bf16.msra.mxu0 %v1536
    %2095 = vmatprep.subr.bf16.mxu0 0
    %2096 = vmatpush2.bf16.msra.mxu0 %v1535
    %2097 = vmatprep.subr.bf16.mxu0 0
    %2098 = vmatpush2.bf16.msra.mxu0 %v1534
    %2099 = vmatprep.subr.bf16.mxu0 0
    %2100 = vmatpush2.bf16.msra.mxu0 %v1533
    %2101 = vmatprep.mubr.bf16.mxu0 %v536
    %2102 = vmatmul.mubr.bf16.gmra.mxu0 %v522
    %v2103 = vpop.f32.mrf.mxu0
    %v2104 = vadd.f32 %v2064, %v2103
    %v2105 = vpop.f32.mrf.mxu0
    %v2106 = vpop.f32.mrf.mxu0
    %v2107 = vpop.f32.mrf.mxu0
    %2108 = vdwg.mxu0
    %2109 = vmatprep.subr.bf16.mxu0 0
    %2110 = vmatpush1.bf16.msra.mxu0 %v1548
    %2111 = vmatprep.subr.bf16.mxu0 0
    %2112 = vmatpush1.bf16.msra.mxu0 %v1547
    %2113 = vmatprep.subr.bf16.mxu0 0
    %2114 = vmatpush1.bf16.msra.mxu0 %v1546
    %2115 = vmatprep.subr.bf16.mxu0 0
    %2116 = vmatpush1.bf16.msra.mxu0 %v1545
    %2117 = vmatprep.subr.bf16.mxu0 0
    %2118 = vmatpush1.bf16.msra.mxu0 %v1544
    %2119 = vmatprep.subr.bf16.mxu0 0
    %2120 = vmatpush1.bf16.msra.mxu0 %v1543
    %2121 = vmatprep.subr.bf16.mxu0 0
    %2122 = vmatpush1.bf16.msra.mxu0 %v1542
    %2123 = vmatprep.subr.bf16.mxu0 0
    %2124 = vmatpush1.bf16.msra.mxu0 %v1541
    %2125 = vmatprep.subr.bf16.mxu0 0
    %2126 = vmatpush2.bf16.msra.mxu0 %v1556
    %2127 = vmatprep.subr.bf16.mxu0 0
    %2128 = vmatpush2.bf16.msra.mxu0 %v1555
    %2129 = vmatprep.subr.bf16.mxu0 0
    %2130 = vmatpush2.bf16.msra.mxu0 %v1554
    %2131 = vmatprep.subr.bf16.mxu0 0
    %2132 = vmatpush2.bf16.msra.mxu0 %v1553
    %2133 = vmatprep.subr.bf16.mxu0 0
    %2134 = vmatpush2.bf16.msra.mxu0 %v1552
    %2135 = vmatprep.subr.bf16.mxu0 0
    %2136 = vmatpush2.bf16.msra.mxu0 %v1551
    %2137 = vmatprep.subr.bf16.mxu0 0
    %2138 = vmatpush2.bf16.msra.mxu0 %v1550
    %2139 = vmatprep.subr.bf16.mxu0 0
    %2140 = vmatpush2.bf16.msra.mxu0 %v1549
    %2141 = vmatprep.mubr.bf16.mxu0 %v540
    %2142 = vmatmul.mubr.bf16.gmra.mxu0 %v538
    %v2143 = vpop.f32.mrf.mxu0
    %v2144 = vadd.f32 %v2104, %v2143
    %v2145 = vpop.f32.mrf.mxu0
    %v2146 = vpop.f32.mrf.mxu0
    %v2147 = vpop.f32.mrf.mxu0
    %2148 = vdwg.mxu0
    %2149 = vmatprep.subr.bf16.mxu0 0
    %2150 = vmatpush1.bf16.msra.mxu0 %v1564
    %2151 = vmatprep.subr.bf16.mxu0 0
    %2152 = vmatpush1.bf16.msra.mxu0 %v1563
    %2153 = vmatprep.subr.bf16.mxu0 0
    %2154 = vmatpush1.bf16.msra.mxu0 %v1562
    %2155 = vmatprep.subr.bf16.mxu0 0
    %2156 = vmatpush1.bf16.msra.mxu0 %v1561
    %2157 = vmatprep.subr.bf16.mxu0 0
    %2158 = vmatpush1.bf16.msra.mxu0 %v1560
    %2159 = vmatprep.subr.bf16.mxu0 0
    %2160 = vmatpush1.bf16.msra.mxu0 %v1559
    %2161 = vmatprep.subr.bf16.mxu0 0
    %2162 = vmatpush1.bf16.msra.mxu0 %v1558
    %2163 = vmatprep.subr.bf16.mxu0 0
    %2164 = vmatpush1.bf16.msra.mxu0 %v1557
    %2165 = vmatprep.subr.bf16.mxu0 0
    %2166 = vmatpush2.bf16.msra.mxu0 %v1572
    %2167 = vmatprep.subr.bf16.mxu0 0
    %2168 = vmatpush2.bf16.msra.mxu0 %v1571
    %2169 = vmatprep.subr.bf16.mxu0 0
    %2170 = vmatpush2.bf16.msra.mxu0 %v1570
    %2171 = vmatprep.subr.bf16.mxu0 0
    %2172 = vmatpush2.bf16.msra.mxu0 %v1569
    %2173 = vmatprep.subr.bf16.mxu0 0
    %2174 = vmatpush2.bf16.msra.mxu0 %v1568
    %2175 = vmatprep.subr.bf16.mxu0 0
    %2176 = vmatpush2.bf16.msra.mxu0 %v1567
    %2177 = vmatprep.subr.bf16.mxu0 0
    %2178 = vmatpush2.bf16.msra.mxu0 %v1566
    %2179 = vmatprep.subr.bf16.mxu0 0
    %2180 = vmatpush2.bf16.msra.mxu0 %v1565
    %2181 = vmatprep.mubr.bf16.mxu0 %v578
    %2182 = vmatmul.mubr.bf16.gmra.mxu0 %v564
    %v2183 = vpop.f32.mrf.mxu0
    %v2184 = vadd.f32 %v2144, %v2183
    %v2185 = vpop.f32.mrf.mxu0
    %v2186 = vpop.f32.mrf.mxu0
    %v2187 = vpop.f32.mrf.mxu0
    %2188 = vdwg.mxu0
    %2189 = vmatprep.subr.bf16.mxu0 0
    %2190 = vmatpush1.bf16.msra.mxu0 %v1580
    %2191 = vmatprep.subr.bf16.mxu0 0
    %2192 = vmatpush1.bf16.msra.mxu0 %v1579
    %2193 = vmatprep.subr.bf16.mxu0 0
    %2194 = vmatpush1.bf16.msra.mxu0 %v1578
    %2195 = vmatprep.subr.bf16.mxu0 0
    %2196 = vmatpush1.bf16.msra.mxu0 %v1577
    %2197 = vmatprep.subr.bf16.mxu0 0
    %2198 = vmatpush1.bf16.msra.mxu0 %v1576
    %2199 = vmatprep.subr.bf16.mxu0 0
    %2200 = vmatpush1.bf16.msra.mxu0 %v1575
    %2201 = vmatprep.subr.bf16.mxu0 0
    %2202 = vmatpush1.bf16.msra.mxu0 %v1574
    %2203 = vmatprep.subr.bf16.mxu0 0
    %2204 = vmatpush1.bf16.msra.mxu0 %v1573
    %2205 = vmatprep.subr.bf16.mxu0 0
    %2206 = vmatpush2.bf16.msra.mxu0 %v1588
    %2207 = vmatprep.subr.bf16.mxu0 0
    %2208 = vmatpush2.bf16.msra.mxu0 %v1587
    %2209 = vmatprep.subr.bf16.mxu0 0
    %2210 = vmatpush2.bf16.msra.mxu0 %v1586
    %2211 = vmatprep.subr.bf16.mxu0 0
    %2212 = vmatpush2.bf16.msra.mxu0 %v1585
    %2213 = vmatprep.subr.bf16.mxu0 0
    %2214 = vmatpush2.bf16.msra.mxu0 %v1584
    %2215 = vmatprep.subr.bf16.mxu0 0
    %2216 = vmatpush2.bf16.msra.mxu0 %v1583
    %2217 = vmatprep.subr.bf16.mxu0 0
    %2218 = vmatpush2.bf16.msra.mxu0 %v1582
    %2219 = vmatprep.subr.bf16.mxu0 0
    %2220 = vmatpush2.bf16.msra.mxu0 %v1581
    %2221 = vmatprep.mubr.bf16.mxu0 %v588
    %2222 = vmatmul.mubr.bf16.gmra.mxu0 %v586
    %v2223 = vpop.f32.mrf.mxu0
    %v2224 = vadd.f32 %v2184, %v2223
    %v2225 = vpop.f32.mrf.mxu0
    %v2226 = vpop.f32.mrf.mxu0
    %v2227 = vpop.f32.mrf.mxu0
    %2228 = vdwg.mxu0
    %2229 = vmatprep.subr.bf16.mxu0 0
    %2230 = vmatpush1.bf16.msra.mxu0 %v1596
    %2231 = vmatprep.subr.bf16.mxu0 0
    %2232 = vmatpush1.bf16.msra.mxu0 %v1595
    %2233 = vmatprep.subr.bf16.mxu0 0
    %2234 = vmatpush1.bf16.msra.mxu0 %v1594
    %2235 = vmatprep.subr.bf16.mxu0 0
    %2236 = vmatpush1.bf16.msra.mxu0 %v1593
    %2237 = vmatprep.subr.bf16.mxu0 0
    %2238 = vmatpush1.bf16.msra.mxu0 %v1592
    %2239 = vmatprep.subr.bf16.mxu0 0
    %2240 = vmatpush1.bf16.msra.mxu0 %v1591
    %2241 = vmatprep.subr.bf16.mxu0 0
    %2242 = vmatpush1.bf16.msra.mxu0 %v1590
    %2243 = vmatprep.subr.bf16.mxu0 0
    %2244 = vmatpush1.bf16.msra.mxu0 %v1589
    %2245 = vmatprep.subr.bf16.mxu0 0
    %2246 = vmatpush2.bf16.msra.mxu0 %v1604
    %2247 = vmatprep.subr.bf16.mxu0 0
    %2248 = vmatpush2.bf16.msra.mxu0 %v1603
    %2249 = vmatprep.subr.bf16.mxu0 0
    %2250 = vmatpush2.bf16.msra.mxu0 %v1602
    %2251 = vmatprep.subr.bf16.mxu0 0
    %2252 = vmatpush2.bf16.msra.mxu0 %v1601
    %2253 = vmatprep.subr.bf16.mxu0 0
    %2254 = vmatpush2.bf16.msra.mxu0 %v1600
    %2255 = vmatprep.subr.bf16.mxu0 0
    %2256 = vmatpush2.bf16.msra.mxu0 %v1599
    %2257 = vmatprep.subr.bf16.mxu0 0
    %2258 = vmatpush2.bf16.msra.mxu0 %v1598
    %2259 = vmatprep.subr.bf16.mxu0 0
    %2260 = vmatpush2.bf16.msra.mxu0 %v1597
    %2261 = vmatprep.mubr.bf16.mxu0 %v585
    %2262 = vmatmul.mubr.bf16.gmra.mxu0 %v571
    %v2263 = vpop.f32.mrf.mxu0
    %v2264 = vadd.f32 %v2224, %v2263
    %v2265 = vpop.f32.mrf.mxu0
    %v2266 = vpop.f32.mrf.mxu0
    %v2267 = vpop.f32.mrf.mxu0
    %2268 = vdwg.mxu0
    %2269 = vmatprep.subr.bf16.mxu0 0
    %2270 = vmatpush1.bf16.msra.mxu0 %v1612
    %2271 = vmatprep.subr.bf16.mxu0 0
    %2272 = vmatpush1.bf16.msra.mxu0 %v1611
    %2273 = vmatprep.subr.bf16.mxu0 0
    %2274 = vmatpush1.bf16.msra.mxu0 %v1610
    %2275 = vmatprep.subr.bf16.mxu0 0
    %2276 = vmatpush1.bf16.msra.mxu0 %v1609
    %2277 = vmatprep.subr.bf16.mxu0 0
    %2278 = vmatpush1.bf16.msra.mxu0 %v1608
    %2279 = vmatprep.subr.bf16.mxu0 0
    %2280 = vmatpush1.bf16.msra.mxu0 %v1607
    %2281 = vmatprep.subr.bf16.mxu0 0
    %2282 = vmatpush1.bf16.msra.mxu0 %v1606
    %2283 = vmatprep.subr.bf16.mxu0 0
    %2284 = vmatpush1.bf16.msra.mxu0 %v1605
    %2285 = vmatprep.subr.bf16.mxu0 0
    %2286 = vmatpush2.bf16.msra.mxu0 %v1620
    %2287 = vmatprep.subr.bf16.mxu0 0
    %2288 = vmatpush2.bf16.msra.mxu0 %v1619
    %2289 = vmatprep.subr.bf16.mxu0 0
    %2290 = vmatpush2.bf16.msra.mxu0 %v1618
    %2291 = vmatprep.subr.bf16.mxu0 0
    %2292 = vmatpush2.bf16.msra.mxu0 %v1617
    %2293 = vmatprep.subr.bf16.mxu0 0
    %2294 = vmatpush2.bf16.msra.mxu0 %v1616
    %2295 = vmatprep.subr.bf16.mxu0 0
    %2296 = vmatpush2.bf16.msra.mxu0 %v1615
    %2297 = vmatprep.subr.bf16.mxu0 0
    %2298 = vmatpush2.bf16.msra.mxu0 %v1614
    %2299 = vmatprep.subr.bf16.mxu0 0
    %2300 = vmatpush2.bf16.msra.mxu0 %v1613
    %2301 = vmatprep.mubr.bf16.mxu0 %v589
    %2302 = vmatmul.mubr.bf16.gmra.mxu0 %v587
    %v2303 = vpop.f32.mrf.mxu0
    %v2304 = vadd.f32 %v2264, %v2303
    %v2305 = vpop.f32.mrf.mxu0
    %v2306 = vpop.f32.mrf.mxu0
    %v2307 = vpop.f32.mrf.mxu0
    %2308 = vdwg.mxu0
    %2309 = vmatprep.subr.bf16.mxu0 0
    %2310 = vmatpush1.bf16.msra.mxu0 %v1628
    %2311 = vmatprep.subr.bf16.mxu0 0
    %2312 = vmatpush1.bf16.msra.mxu0 %v1627
    %2313 = vmatprep.subr.bf16.mxu0 0
    %2314 = vmatpush1.bf16.msra.mxu0 %v1626
    %2315 = vmatprep.subr.bf16.mxu0 0
    %2316 = vmatpush1.bf16.msra.mxu0 %v1625
    %2317 = vmatprep.subr.bf16.mxu0 0
    %2318 = vmatpush1.bf16.msra.mxu0 %v1624
    %2319 = vmatprep.subr.bf16.mxu0 0
    %2320 = vmatpush1.bf16.msra.mxu0 %v1623
    %2321 = vmatprep.subr.bf16.mxu0 0
    %2322 = vmatpush1.bf16.msra.mxu0 %v1622
    %2323 = vmatprep.subr.bf16.mxu0 0
    %2324 = vmatpush1.bf16.msra.mxu0 %v1621
    %2325 = vmatprep.subr.bf16.mxu0 0
    %2326 = vmatpush2.bf16.msra.mxu0 0
    %2327 = vmatprep.subr.bf16.mxu0 0
    %2328 = vmatpush2.bf16.msra.mxu0 0
    %2329 = vmatprep.subr.bf16.mxu0 0
    %2330 = vmatpush2.bf16.msra.mxu0 0
    %2331 = vmatprep.subr.bf16.mxu0 0
    %2332 = vmatpush2.bf16.msra.mxu0 0
    %2333 = vmatprep.subr.bf16.mxu0 0
    %2334 = vmatpush2.bf16.msra.mxu0 0
    %2335 = vmatprep.subr.bf16.mxu0 0
    %2336 = vmatpush2.bf16.msra.mxu0 0
    %2337 = vmatprep.subr.bf16.mxu0 0
    %2338 = vmatpush2.bf16.msra.mxu0 0
    %2339 = vmatprep.subr.bf16.mxu0 0
    %2340 = vmatpush2.bf16.msra.mxu0 0
    %2341 = vmatprep.mubr.bf16.mxu0 0
    %2342 = vmatmul.mubr.bf16.gmra.mxu0 %v603
    %v2343 = vpop.f32.mrf.mxu0
    %v2344 = vadd.f32 %v2304, %v2343
    %v2345 = vpop.f32.mrf.mxu0
    %v2346 = vpop.f32.mrf.mxu0
    %v2347 = vpop.f32.mrf.mxu0
    %2348 = vdwg.mxu0
    %v2349 = vmax.f32 %v2344, 0.0
    %v2350 = vpack.c.bf16 %v2349, %v2349
    %v2351 = vld [vmem:[%s3] sm:$0xf]
    %v2352 = vld [vmem:[%s3 + $0x4] sm:$0xf]
    %v2353 = vld [vmem:[%s3 + $0x8] sm:$0xf]
    %v2354 = vld [vmem:[%s3 + $0xc] sm:$0xf]
    %v2355 = vld [vmem:[%s3 + $0x10] sm:$0xf]
    %v2356 = vld [vmem:[%s3 + $0x14] sm:$0xf]
    %v2357 = vld [vmem:[%s3 + $0x18] sm:$0xf]
    %v2358 = vld [vmem:[%s3 + $0x1c] sm:$0xf]
    %v2359 = vld [vmem:[%s3 + $0x20] sm:$0xf]
    %v2360 = vld [vmem:[%s3 + $0x24] sm:$0xf]
    %v2361 = vld [vmem:[%s3 + $0x28] sm:$0xf]
    %v2362 = vld [vmem:[%s3 + $0x2c] sm:$0xf]
    %v2363 = vld [vmem:[%s3 + $0x30] sm:$0xf]
    %v2364 = vld [vmem:[%s3 + $0x34] sm:$0xf]
    %v2365 = vld [vmem:[%s3 + $0x38] sm:$0xf]
    %v2366 = vld [vmem:[%s3 + $0x3c] sm:$0xf]
    %v2367 = vld [vmem:[%s4] sm:$0x1]
    %v2369 = vlaneseq
    %v2370 = vshrl.u32 %v2369, 7
    %v2371 = vsub.s32 0, %v2370
    %v2372 = vrot.slane %v2367, %v2371
    %v2390 = vunpack.c.l.b16 %v2351
    %v2391 = vunpack.c.l.b16 %v2352
    %v2392 = vunpack.c.l.b16 %v2353
    %v2393 = vunpack.c.l.b16 %v2354
    %v2394 = vunpack.c.l.b16 %v2355
    %v2395 = vunpack.c.l.b16 %v2356
    %v2396 = vunpack.c.l.b16 %v2357
    %v2397 = vunpack.c.l.b16 %v2358
    %v2398 = vunpack.c.l.b16 %v2359
    %v2399 = vunpack.c.l.b16 %v2360
    %v2400 = vunpack.c.l.b16 %v2361
    %v2401 = vunpack.c.l.b16 %v2362
    %v2402 = vunpack.c.l.b16 %v2363
    %v2403 = vunpack.c.l.b16 %v2364
    %v2404 = vunpack.c.l.b16 %v2365
    %v2405 = vunpack.c.l.b16 %v2366
    %v2406 = vpack.c.b16 %v2391, %v2390
    %v2407 = vpack.c.b16 %v2393, %v2392
    %v2408 = vpack.c.b16 %v2395, %v2394
    %v2409 = vpack.c.b16 %v2397, %v2396
    %v2410 = vpack.c.b16 %v2399, %v2398
    %v2411 = vpack.c.b16 %v2401, %v2400
    %v2412 = vpack.c.b16 %v2403, %v2402
    %v2413 = vpack.c.b16 %v2405, %v2404
    %2422 = vmatprep.subr.bf16.mxu0 0
    %2423 = vmatpush1.bf16.msra.mxu0 %v2413
    %2424 = vmatprep.subr.bf16.mxu0 0
    %2425 = vmatpush1.bf16.msra.mxu0 %v2412
    %2426 = vmatprep.subr.bf16.mxu0 0
    %2427 = vmatpush1.bf16.msra.mxu0 %v2411
    %2428 = vmatprep.subr.bf16.mxu0 0
    %2429 = vmatpush1.bf16.msra.mxu0 %v2410
    %2430 = vmatprep.subr.bf16.mxu0 0
    %2431 = vmatpush1.bf16.msra.mxu0 %v2409
    %2432 = vmatprep.subr.bf16.mxu0 0
    %2433 = vmatpush1.bf16.msra.mxu0 %v2408
    %2434 = vmatprep.subr.bf16.mxu0 0
    %2435 = vmatpush1.bf16.msra.mxu0 %v2407
    %2436 = vmatprep.subr.bf16.mxu0 0
    %2437 = vmatpush1.bf16.msra.mxu0 %v2406
    %2438 = vmatprep.subr.bf16.mxu0 0
    %2439 = vmatpush2.bf16.msra.mxu0 0
    %2440 = vmatprep.subr.bf16.mxu0 0
    %2441 = vmatpush2.bf16.msra.mxu0 0
    %2442 = vmatprep.subr.bf16.mxu0 0
    %2443 = vmatpush2.bf16.msra.mxu0 0
    %2444 = vmatprep.subr.bf16.mxu0 0
    %2445 = vmatpush2.bf16.msra.mxu0 0
    %2446 = vmatprep.subr.bf16.mxu0 0
    %2447 = vmatpush2.bf16.msra.mxu0 0
    %2448 = vmatprep.subr.bf16.mxu0 0
    %2449 = vmatpush2.bf16.msra.mxu0 0
    %2450 = vmatprep.subr.bf16.mxu0 0
    %2451 = vmatpush2.bf16.msra.mxu0 0
    %2452 = vmatprep.subr.bf16.mxu0 0
    %2453 = vmatpush2.bf16.msra.mxu0 0
    %2454 = vmatprep.mubr.bf16.mxu0 0
    %2455 = vmatmul.mubr.bf16.gmra.mxu0 %v2350
    %v2456 = vpop.f32.mrf.mxu0
    %v2457 = vadd.f32 %v2372, %v2456
    %v2458 = vpop.f32.mrf.mxu0
    %v2459 = vpop.f32.mrf.mxu0
    %v2460 = vpop.f32.mrf.mxu0
    %2461 = vdwg.mxu0
    %v2462 = vmax.f32 %v2457, 0.0
    %v2463 = vpack.c.bf16 %v2462, %v2462
    %v2464 = vld [vmem:[%s5] sm:$0xf]
    %v2465 = vld [vmem:[%s5 + $0x4] sm:$0xf]
    %v2466 = vld [vmem:[%s5 + $0x8] sm:$0xf]
    %v2467 = vld [vmem:[%s5 + $0xc] sm:$0xf]
    %v2468 = vld [vmem:[%s5 + $0x10] sm:$0xf]
    %v2469 = vld [vmem:[%s5 + $0x14] sm:$0xf]
    %v2470 = vld [vmem:[%s5 + $0x18] sm:$0xf]
    %v2471 = vld [vmem:[%s5 + $0x1c] sm:$0xf]
    %v2472 = vld [vmem:[%s5 + $0x20] sm:$0xf]
    %v2473 = vld [vmem:[%s5 + $0x24] sm:$0xf]
    %v2474 = vld [vmem:[%s5 + $0x28] sm:$0xf]
    %v2475 = vld [vmem:[%s5 + $0x2c] sm:$0xf]
    %v2476 = vld [vmem:[%s5 + $0x30] sm:$0xf]
    %v2477 = vld [vmem:[%s5 + $0x34] sm:$0xf]
    %v2478 = vld [vmem:[%s5 + $0x38] sm:$0xf]
    %v2479 = vld [vmem:[%s5 + $0x3c] sm:$0xf]
    %v2480 = vld [vmem:[%s6] sm:$0x1]
    %v2482 = vlaneseq
    %v2483 = vshrl.u32 %v2482, 7
    %v2484 = vsub.s32 0, %v2483
    %v2485 = vrot.slane %v2480, %v2484
    %v2503 = vunpack.c.l.b16 %v2464
    %v2504 = vunpack.c.l.b16 %v2465
    %v2505 = vunpack.c.l.b16 %v2466
    %v2506 = vunpack.c.l.b16 %v2467
    %v2507 = vunpack.c.l.b16 %v2468
    %v2508 = vunpack.c.l.b16 %v2469
    %v2509 = vunpack.c.l.b16 %v2470
    %v2510 = vunpack.c.l.b16 %v2471
    %v2511 = vunpack.c.l.b16 %v2472
    %v2512 = vunpack.c.l.b16 %v2473
    %v2513 = vunpack.c.l.b16 %v2474
    %v2514 = vunpack.c.l.b16 %v2475
    %v2515 = vunpack.c.l.b16 %v2476
    %v2516 = vunpack.c.l.b16 %v2477
    %v2517 = vunpack.c.l.b16 %v2478
    %v2518 = vunpack.c.l.b16 %v2479
    %v2519 = vpack.c.b16 %v2504, %v2503
    %v2520 = vpack.c.b16 %v2506, %v2505
    %v2521 = vpack.c.b16 %v2508, %v2507
    %v2522 = vpack.c.b16 %v2510, %v2509
    %v2523 = vpack.c.b16 %v2512, %v2511
    %v2524 = vpack.c.b16 %v2514, %v2513
    %v2525 = vpack.c.b16 %v2516, %v2515
    %v2526 = vpack.c.b16 %v2518, %v2517
    %2535 = vmatprep.subr.bf16.mxu0 0
    %2536 = vmatpush1.bf16.msra.mxu0 %v2526
    %2537 = vmatprep.subr.bf16.mxu0 0
    %2538 = vmatpush1.bf16.msra.mxu0 %v2525
    %2539 = vmatprep.subr.bf16.mxu0 0
    %2540 = vmatpush1.bf16.msra.mxu0 %v2524
    %2541 = vmatprep.subr.bf16.mxu0 0
    %2542 = vmatpush1.bf16.msra.mxu0 %v2523
    %2543 = vmatprep.subr.bf16.mxu0 0
    %2544 = vmatpush1.bf16.msra.mxu0 %v2522
    %2545 = vmatprep.subr.bf16.mxu0 0
    %2546 = vmatpush1.bf16.msra.mxu0 %v2521
    %2547 = vmatprep.subr.bf16.mxu0 0
    %2548 = vmatpush1.bf16.msra.mxu0 %v2520
    %2549 = vmatprep.subr.bf16.mxu0 0
    %2550 = vmatpush1.bf16.msra.mxu0 %v2519
    %2551 = vmatprep.subr.bf16.mxu0 0
    %2552 = vmatpush2.bf16.msra.mxu0 0
    %2553 = vmatprep.subr.bf16.mxu0 0
    %2554 = vmatpush2.bf16.msra.mxu0 0
    %2555 = vmatprep.subr.bf16.mxu0 0
    %2556 = vmatpush2.bf16.msra.mxu0 0
    %2557 = vmatprep.subr.bf16.mxu0 0
    %2558 = vmatpush2.bf16.msra.mxu0 0
    %2559 = vmatprep.subr.bf16.mxu0 0
    %2560 = vmatpush2.bf16.msra.mxu0 0
    %2561 = vmatprep.subr.bf16.mxu0 0
    %2562 = vmatpush2.bf16.msra.mxu0 0
    %2563 = vmatprep.subr.bf16.mxu0 0
    %2564 = vmatpush2.bf16.msra.mxu0 0
    %2565 = vmatprep.subr.bf16.mxu0 0
    %2566 = vmatpush2.bf16.msra.mxu0 0
    %2567 = vmatprep.mubr.bf16.mxu0 0
    %2568 = vmatmul.mubr.bf16.gmra.mxu0 %v2463
    %v2569 = vpop.f32.mrf.mxu0
    %v2570 = vadd.f32 %v2485, %v2569
    %v2571 = vpop.f32.mrf.mxu0
    %v2572 = vpop.f32.mrf.mxu0
    %v2573 = vpop.f32.mrf.mxu0
    %2574 = vdwg.mxu0
    %2575 = vst [vmem:[#allocation2] sm:$0x3] %v2570
    // Predicated region
    $region30: #{net_forward.5} parent=1 // pred_check
      _
    $region31: #{net_forward.5} parent=1 // pred_check_branch
      %2577 = sbr.rel (0) target = $region33
    $region32: #{net_forward.5} parent=1 // pred_region
      %s2579 = ssub.s32 32, 32
      %2580 = vsyncadd [#allocation3], %s2579
      %s2582 = sshll.u32 [#allocation2], 4
      %s2583 = int_to_ptr.vmem [resolvable:$true] %s2582
      %2585 = dma.vmem_to_hbm [thread:$0]  %s2583, 32, %s7, [#allocation3]
    $region33: #{net_forward.5} parent=1 // pred_fallthru
      _
    // Predicated region
    $region34: #{net_forward.5} parent=1 // pred_check
      _
    $region35: #{net_forward.5} parent=1 // pred_check_branch
      %2587 = sbr.rel (0) target = $region37
    $region36: #{net_forward.5} parent=1 // pred_region
      %2588 = dma.done [#allocation3], 32
    $region37: #{net_forward.5} parent=1 // pred_fallthru
      _
    %2589 = vsyncpa [#allocation3], 1

// kernel: net_forward.4
$region0: #{net_forward.4}
  #allocation0 [shape = 'u32[]', space=smem, size = 0x4, offset = 0x4, fixed_abs, tag = 'smem constant byte address 0x4 - core index']
  #allocation1 [shape = 'u32[144,128]{1,0:T(1,128)}', space=vmem, size = 0x12000, scoped, tag = 'internal scratch']
  %s0 = inlined_call_operand.vmem [shape: bf16[50,3200], index: 0, kind: input, shape index: {}]
  %s1 = inlined_call_operand.vmem [shape: bf16[50,3200], index: 1, kind: input, shape index: {}]
  %s2 = inlined_call_operand.vmem [shape: bf16[50,3200], index: 2, kind: input, shape index: {}]
  %s3 = inlined_call_operand.vmem [shape: bf16[50,3200], index: 3, kind: input, shape index: {}]
  %s4 = inlined_call_operand.vmem [shape: bf16[3200,128], index: 4, kind: input, shape index: {}]
  %s5 = inlined_call_operand.vmem [shape: f32[1,128], index: 5, kind: input, shape index: {}]
  %s6 = inlined_call_operand.vmem [shape: bf16[50,128], index: 6, kind: output, shape index: {}]
  %s7 = sld [smem:[#allocation0]]
  $region34: #{net_forward.4} parent=0
    _
  %s9 = ssub.s32 1, %s7
  %s10 = scalar_select 0, %s9, %s7
  // Predicated region
  $region2: #{net_forward.4} parent=0 // pred_check
    _
  $region3: #{net_forward.4} parent=0 // pred_check_branch
    %12 = sbr.rel (0) target = $region5
  $region4: #{net_forward.4} parent=0 // pred_region
    _
  $region5: #{net_forward.4} parent=0 // pred_fallthru
    _
  // Predicated region
  $region6: #{net_forward.4} parent=0 // pred_check
    _
  $region7: #{net_forward.4} parent=0 // pred_check_branch
    %14 = sbr.rel (0) target = $region9
  $region8: #{net_forward.4} parent=0 // pred_region
    _
  $region9: #{net_forward.4} parent=0 // pred_fallthru
    _
  // Predicated region
  $region10: #{net_forward.4} parent=0 // pred_check
    _
  $region11: #{net_forward.4} parent=0 // pred_check_branch
    %16 = sbr.rel (0) target = $region13
  $region12: #{net_forward.4} parent=0 // pred_region
    _
  $region13: #{net_forward.4} parent=0 // pred_fallthru
    _
  // Predicated region
  $region14: #{net_forward.4} parent=0 // pred_check
    _
  $region15: #{net_forward.4} parent=0 // pred_check_branch
    %18 = sbr.rel (0) target = $region17
  $region16: #{net_forward.4} parent=0 // pred_region
    _
  $region17: #{net_forward.4} parent=0 // pred_fallthru
    _
  // Predicated region
  $region18: #{net_forward.4} parent=0 // pred_check
    _
  $region19: #{net_forward.4} parent=0 // pred_check_branch
    %20 = sbr.rel (0) target = $region21
  $region20: #{net_forward.4} parent=0 // pred_region
    _
  $region21: #{net_forward.4} parent=0 // pred_fallthru
    _
  // Predicated region
  $region22: #{net_forward.4} parent=0 // pred_check
    _
  $region23: #{net_forward.4} parent=0 // pred_check_branch
    %22 = sbr.rel (0) target = $region25
  $region24: #{net_forward.4} parent=0 // pred_region
    _
  $region25: #{net_forward.4} parent=0 // pred_fallthru
    _
  %v24 = vld [vmem:[%s4] sm:$0xf]
  %v25 = vld [vmem:[%s4 + $0x4] sm:$0xf]
  %v26 = vld [vmem:[%s4 + $0x8] sm:$0xf]
  %v27 = vld [vmem:[%s4 + $0xc] sm:$0xf]
  %v28 = vld [vmem:[%s4 + $0x10] sm:$0xf]
  %v29 = vld [vmem:[%s4 + $0x14] sm:$0xf]
  %v30 = vld [vmem:[%s4 + $0x18] sm:$0xf]
  %v31 = vld [vmem:[%s4 + $0x1c] sm:$0xf]
  %v32 = vld [vmem:[%s4 + $0x20] sm:$0xf]
  %v33 = vld [vmem:[%s4 + $0x24] sm:$0xf]
  %v34 = vld [vmem:[%s4 + $0x28] sm:$0xf]
  %v35 = vld [vmem:[%s4 + $0x2c] sm:$0xf]
  %v36 = vld [vmem:[%s4 + $0x30] sm:$0xf]
  %v37 = vld [vmem:[%s4 + $0x34] sm:$0xf]
  %v38 = vld [vmem:[%s4 + $0x38] sm:$0xf]
  %v39 = vld [vmem:[%s4 + $0x3c] sm:$0xf]
  %v40 = vld [vmem:[%s4 + $0x40] sm:$0xf]
  %v41 = vld [vmem:[%s4 + $0x44] sm:$0xf]
  %v42 = vld [vmem:[%s4 + $0x48] sm:$0xf]
  %v43 = vld [vmem:[%s4 + $0x4c] sm:$0xf]
  %v44 = vld [vmem:[%s4 + $0x50] sm:$0xf]
  %v45 = vld [vmem:[%s4 + $0x54] sm:$0xf]
  %v46 = vld [vmem:[%s4 + $0x58] sm:$0xf]
  %v47 = vld [vmem:[%s4 + $0x5c] sm:$0xf]
  %v48 = vld [vmem:[%s4 + $0x60] sm:$0xf]
  %v49 = vld [vmem:[%s4 + $0x64] sm:$0xf]
  %v50 = vld [vmem:[%s4 + $0x68] sm:$0xf]
  %v51 = vld [vmem:[%s4 + $0x6c] sm:$0xf]
  %v52 = vld [vmem:[%s4 + $0x70] sm:$0xf]
  %v53 = vld [vmem:[%s4 + $0x74] sm:$0xf]
  %v54 = vld [vmem:[%s4 + $0x78] sm:$0xf]
  %v55 = vld [vmem:[%s4 + $0x7c] sm:$0xf]
  %v56 = vld [vmem:[%s4 + $0x80] sm:$0xf]
  %v57 = vld [vmem:[%s4 + $0x84] sm:$0xf]
  %v58 = vld [vmem:[%s4 + $0x88] sm:$0xf]
  %v59 = vld [vmem:[%s4 + $0x8c] sm:$0xf]
  %v60 = vld [vmem:[%s4 + $0x90] sm:$0xf]
  %v61 = vld [vmem:[%s4 + $0x94] sm:$0xf]
  %v62 = vld [vmem:[%s4 + $0x98] sm:$0xf]
  %v63 = vld [vmem:[%s4 + $0x9c] sm:$0xf]
  %v64 = vld [vmem:[%s4 + $0xa0] sm:$0xf]
  %v65 = vld [vmem:[%s4 + $0xa4] sm:$0xf]
  %v66 = vld [vmem:[%s4 + $0xa8] sm:$0xf]
  %v67 = vld [vmem:[%s4 + $0xac] sm:$0xf]
  %v68 = vld [vmem:[%s4 + $0xb0] sm:$0xf]
  %v69 = vld [vmem:[%s4 + $0xb4] sm:$0xf]
  %v70 = vld [vmem:[%s4 + $0xb8] sm:$0xf]
  %v71 = vld [vmem:[%s4 + $0xbc] sm:$0xf]
  %v72 = vld [vmem:[%s4 + $0xc0] sm:$0xf]
  %v73 = vld [vmem:[%s4 + $0xc4] sm:$0xf]
  %v74 = vld [vmem:[%s4 + $0xc8] sm:$0xf]
  %v75 = vld [vmem:[%s4 + $0xcc] sm:$0xf]
  %v76 = vld [vmem:[%s4 + $0xd0] sm:$0xf]
  %v77 = vld [vmem:[%s4 + $0xd4] sm:$0xf]
  %v78 = vld [vmem:[%s4 + $0xd8] sm:$0xf]
  %v79 = vld [vmem:[%s4 + $0xdc] sm:$0xf]
  %v80 = vld [vmem:[%s4 + $0xe0] sm:$0xf]
  %v81 = vld [vmem:[%s4 + $0xe4] sm:$0xf]
  %v82 = vld [vmem:[%s4 + $0xe8] sm:$0xf]
  %v83 = vld [vmem:[%s4 + $0xec] sm:$0xf]
  %v84 = vld [vmem:[%s4 + $0xf0] sm:$0xf]
  %v85 = vld [vmem:[%s4 + $0xf4] sm:$0xf]
  %v86 = vld [vmem:[%s4 + $0xf8] sm:$0xf]
  %v87 = vld [vmem:[%s4 + $0xfc] sm:$0xf]
  %v88 = vld [vmem:[%s4 + $0x100] sm:$0xf]
  %v89 = vld [vmem:[%s4 + $0x104] sm:$0xf]
  %v90 = vld [vmem:[%s4 + $0x108] sm:$0xf]
  %v91 = vld [vmem:[%s4 + $0x10c] sm:$0xf]
  %v92 = vld [vmem:[%s4 + $0x110] sm:$0xf]
  %v93 = vld [vmem:[%s4 + $0x114] sm:$0xf]
  %v94 = vld [vmem:[%s4 + $0x118] sm:$0xf]
  %v95 = vld [vmem:[%s4 + $0x11c] sm:$0xf]
  %v96 = vld [vmem:[%s4 + $0x120] sm:$0xf]
  %v97 = vld [vmem:[%s4 + $0x124] sm:$0xf]
  %v98 = vld [vmem:[%s4 + $0x128] sm:$0xf]
  %v99 = vld [vmem:[%s4 + $0x12c] sm:$0xf]
  %v100 = vld [vmem:[%s4 + $0x130] sm:$0xf]
  %v101 = vld [vmem:[%s4 + $0x134] sm:$0xf]
  %v102 = vld [vmem:[%s4 + $0x138] sm:$0xf]
  %v103 = vld [vmem:[%s4 + $0x13c] sm:$0xf]
  %v104 = vld [vmem:[%s4 + $0x140] sm:$0xf]
  %v105 = vld [vmem:[%s4 + $0x144] sm:$0xf]
  %v106 = vld [vmem:[%s4 + $0x148] sm:$0xf]
  %v107 = vld [vmem:[%s4 + $0x14c] sm:$0xf]
  %v108 = vld [vmem:[%s4 + $0x150] sm:$0xf]
  %v109 = vld [vmem:[%s4 + $0x154] sm:$0xf]
  %v110 = vld [vmem:[%s4 + $0x158] sm:$0xf]
  %v111 = vld [vmem:[%s4 + $0x15c] sm:$0xf]
  %v112 = vld [vmem:[%s4 + $0x160] sm:$0xf]
  %v113 = vld [vmem:[%s4 + $0x164] sm:$0xf]
  %v114 = vld [vmem:[%s4 + $0x168] sm:$0xf]
  %v115 = vld [vmem:[%s4 + $0x16c] sm:$0xf]
  %v116 = vld [vmem:[%s4 + $0x170] sm:$0xf]
  %v117 = vld [vmem:[%s4 + $0x174] sm:$0xf]
  %v118 = vld [vmem:[%s4 + $0x178] sm:$0xf]
  %v119 = vld [vmem:[%s4 + $0x17c] sm:$0xf]
  %v120 = vld [vmem:[%s4 + $0x180] sm:$0xf]
  %v121 = vld [vmem:[%s4 + $0x184] sm:$0xf]
  %v122 = vld [vmem:[%s4 + $0x188] sm:$0xf]
  %v123 = vld [vmem:[%s4 + $0x18c] sm:$0xf]
  %v124 = vld [vmem:[%s4 + $0x190] sm:$0xf]
  %v125 = vld [vmem:[%s4 + $0x194] sm:$0xf]
  %v126 = vld [vmem:[%s4 + $0x198] sm:$0xf]
  %v127 = vld [vmem:[%s4 + $0x19c] sm:$0xf]
  %v128 = vld [vmem:[%s4 + $0x1a0] sm:$0xf]
  %v129 = vld [vmem:[%s4 + $0x1a4] sm:$0xf]
  %v130 = vld [vmem:[%s4 + $0x1a8] sm:$0xf]
  %v131 = vld [vmem:[%s4 + $0x1ac] sm:$0xf]
  %v132 = vld [vmem:[%s4 + $0x1b0] sm:$0xf]
  %v133 = vld [vmem:[%s4 + $0x1b4] sm:$0xf]
  %v134 = vld [vmem:[%s4 + $0x1b8] sm:$0xf]
  %v135 = vld [vmem:[%s4 + $0x1bc] sm:$0xf]
  %v136 = vld [vmem:[%s4 + $0x1c0] sm:$0xf]
  %v137 = vld [vmem:[%s4 + $0x1c4] sm:$0xf]
  %v138 = vld [vmem:[%s4 + $0x1c8] sm:$0xf]
  %v139 = vld [vmem:[%s4 + $0x1cc] sm:$0xf]
  %v140 = vld [vmem:[%s4 + $0x1d0] sm:$0xf]
  %v141 = vld [vmem:[%s4 + $0x1d4] sm:$0xf]
  %v142 = vld [vmem:[%s4 + $0x1d8] sm:$0xf]
  %v143 = vld [vmem:[%s4 + $0x1dc] sm:$0xf]
  %v144 = vld [vmem:[%s4 + $0x1e0] sm:$0xf]
  %v145 = vld [vmem:[%s4 + $0x1e4] sm:$0xf]
  %v146 = vld [vmem:[%s4 + $0x1e8] sm:$0xf]
  %v147 = vld [vmem:[%s4 + $0x1ec] sm:$0xf]
  %v148 = vld [vmem:[%s4 + $0x1f0] sm:$0xf]
  %v149 = vld [vmem:[%s4 + $0x1f4] sm:$0xf]
  %v150 = vld [vmem:[%s4 + $0x1f8] sm:$0xf]
  %v151 = vld [vmem:[%s4 + $0x1fc] sm:$0xf]
  %v152 = vld [vmem:[%s4 + $0x200] sm:$0xf]
  %v153 = vld [vmem:[%s4 + $0x204] sm:$0xf]
  %v154 = vld [vmem:[%s4 + $0x208] sm:$0xf]
  %v155 = vld [vmem:[%s4 + $0x20c] sm:$0xf]
  %v156 = vld [vmem:[%s4 + $0x210] sm:$0xf]
  %v157 = vld [vmem:[%s4 + $0x214] sm:$0xf]
  %v158 = vld [vmem:[%s4 + $0x218] sm:$0xf]
  %v159 = vld [vmem:[%s4 + $0x21c] sm:$0xf]
  %v160 = vld [vmem:[%s4 + $0x220] sm:$0xf]
  %v161 = vld [vmem:[%s4 + $0x224] sm:$0xf]
  %v162 = vld [vmem:[%s4 + $0x228] sm:$0xf]
  %v163 = vld [vmem:[%s4 + $0x22c] sm:$0xf]
  %v164 = vld [vmem:[%s4 + $0x230] sm:$0xf]
  %v165 = vld [vmem:[%s4 + $0x234] sm:$0xf]
  %v166 = vld [vmem:[%s4 + $0x238] sm:$0xf]
  %v167 = vld [vmem:[%s4 + $0x23c] sm:$0xf]
  %v168 = vld [vmem:[%s4 + $0x240] sm:$0xf]
  %v169 = vld [vmem:[%s4 + $0x244] sm:$0xf]
  %v170 = vld [vmem:[%s4 + $0x248] sm:$0xf]
  %v171 = vld [vmem:[%s4 + $0x24c] sm:$0xf]
  %v172 = vld [vmem:[%s4 + $0x250] sm:$0xf]
  %v173 = vld [vmem:[%s4 + $0x254] sm:$0xf]
  %v174 = vld [vmem:[%s4 + $0x258] sm:$0xf]
  %v175 = vld [vmem:[%s4 + $0x25c] sm:$0xf]
  %v176 = vld [vmem:[%s4 + $0x260] sm:$0xf]
  %v177 = vld [vmem:[%s4 + $0x264] sm:$0xf]
  %v178 = vld [vmem:[%s4 + $0x268] sm:$0xf]
  %v179 = vld [vmem:[%s4 + $0x26c] sm:$0xf]
  %v180 = vld [vmem:[%s4 + $0x270] sm:$0xf]
  %v181 = vld [vmem:[%s4 + $0x274] sm:$0xf]
  %v182 = vld [vmem:[%s4 + $0x278] sm:$0xf]
  %v183 = vld [vmem:[%s4 + $0x27c] sm:$0xf]
  %v184 = vld [vmem:[%s4 + $0x280] sm:$0xf]
  %v185 = vld [vmem:[%s4 + $0x284] sm:$0xf]
  %v186 = vld [vmem:[%s4 + $0x288] sm:$0xf]
  %v187 = vld [vmem:[%s4 + $0x28c] sm:$0xf]
  %v188 = vld [vmem:[%s4 + $0x290] sm:$0xf]
  %v189 = vld [vmem:[%s4 + $0x294] sm:$0xf]
  %v190 = vld [vmem:[%s4 + $0x298] sm:$0xf]
  %v191 = vld [vmem:[%s4 + $0x29c] sm:$0xf]
  %v192 = vld [vmem:[%s4 + $0x2a0] sm:$0xf]
  %v193 = vld [vmem:[%s4 + $0x2a4] sm:$0xf]
  %v194 = vld [vmem:[%s4 + $0x2a8] sm:$0xf]
  %v195 = vld [vmem:[%s4 + $0x2ac] sm:$0xf]
  %v196 = vld [vmem:[%s4 + $0x2b0] sm:$0xf]
  %v197 = vld [vmem:[%s4 + $0x2b4] sm:$0xf]
  %v198 = vld [vmem:[%s4 + $0x2b8] sm:$0xf]
  %v199 = vld [vmem:[%s4 + $0x2bc] sm:$0xf]
  %v200 = vld [vmem:[%s4 + $0x2c0] sm:$0xf]
  %v201 = vld [vmem:[%s4 + $0x2c4] sm:$0xf]
  %v202 = vld [vmem:[%s4 + $0x2c8] sm:$0xf]
  %v203 = vld [vmem:[%s4 + $0x2cc] sm:$0xf]
  %v204 = vld [vmem:[%s4 + $0x2d0] sm:$0xf]
  %v205 = vld [vmem:[%s4 + $0x2d4] sm:$0xf]
  %v206 = vld [vmem:[%s4 + $0x2d8] sm:$0xf]
  %v207 = vld [vmem:[%s4 + $0x2dc] sm:$0xf]
  %v208 = vld [vmem:[%s4 + $0x2e0] sm:$0xf]
  %v209 = vld [vmem:[%s4 + $0x2e4] sm:$0xf]
  %v210 = vld [vmem:[%s4 + $0x2e8] sm:$0xf]
  %v211 = vld [vmem:[%s4 + $0x2ec] sm:$0xf]
  %v212 = vld [vmem:[%s4 + $0x2f0] sm:$0xf]
  %v213 = vld [vmem:[%s4 + $0x2f4] sm:$0xf]
  %v214 = vld [vmem:[%s4 + $0x2f8] sm:$0xf]
  %v215 = vld [vmem:[%s4 + $0x2fc] sm:$0xf]
  %v216 = vld [vmem:[%s4 + $0x300] sm:$0xf]
  %v217 = vld [vmem:[%s4 + $0x304] sm:$0xf]
  %v218 = vld [vmem:[%s4 + $0x308] sm:$0xf]
  %v219 = vld [vmem:[%s4 + $0x30c] sm:$0xf]
  %v220 = vld [vmem:[%s4 + $0x310] sm:$0xf]
  %v221 = vld [vmem:[%s4 + $0x314] sm:$0xf]
  %v222 = vld [vmem:[%s4 + $0x318] sm:$0xf]
  %v223 = vld [vmem:[%s4 + $0x31c] sm:$0xf]
  %v224 = vld [vmem:[%s4 + $0x320] sm:$0xf]
  %v225 = vld [vmem:[%s4 + $0x324] sm:$0xf]
  %v226 = vld [vmem:[%s4 + $0x328] sm:$0xf]
  %v227 = vld [vmem:[%s4 + $0x32c] sm:$0xf]
  %v228 = vld [vmem:[%s4 + $0x330] sm:$0xf]
  %v229 = vld [vmem:[%s4 + $0x334] sm:$0xf]
  %v230 = vld [vmem:[%s4 + $0x338] sm:$0xf]
  %v231 = vld [vmem:[%s4 + $0x33c] sm:$0xf]
  %v232 = vld [vmem:[%s4 + $0x340] sm:$0xf]
  %v233 = vld [vmem:[%s4 + $0x344] sm:$0xf]
  %v234 = vld [vmem:[%s4 + $0x348] sm:$0xf]
  %v235 = vld [vmem:[%s4 + $0x34c] sm:$0xf]
  %v236 = vld [vmem:[%s4 + $0x350] sm:$0xf]
  %v237 = vld [vmem:[%s4 + $0x354] sm:$0xf]
  %v238 = vld [vmem:[%s4 + $0x358] sm:$0xf]
  %v239 = vld [vmem:[%s4 + $0x35c] sm:$0xf]
  %v240 = vld [vmem:[%s4 + $0x360] sm:$0xf]
  %v241 = vld [vmem:[%s4 + $0x364] sm:$0xf]
  %v242 = vld [vmem:[%s4 + $0x368] sm:$0xf]
  %v243 = vld [vmem:[%s4 + $0x36c] sm:$0xf]
  %v244 = vld [vmem:[%s4 + $0x370] sm:$0xf]
  %v245 = vld [vmem:[%s4 + $0x374] sm:$0xf]
  %v246 = vld [vmem:[%s4 + $0x378] sm:$0xf]
  %v247 = vld [vmem:[%s4 + $0x37c] sm:$0xf]
  %v248 = vld [vmem:[%s4 + $0x380] sm:$0xf]
  %v249 = vld [vmem:[%s4 + $0x384] sm:$0xf]
  %v250 = vld [vmem:[%s4 + $0x388] sm:$0xf]
  %v251 = vld [vmem:[%s4 + $0x38c] sm:$0xf]
  %v252 = vld [vmem:[%s4 + $0x390] sm:$0xf]
  %v253 = vld [vmem:[%s4 + $0x394] sm:$0xf]
  %v254 = vld [vmem:[%s4 + $0x398] sm:$0xf]
  %v255 = vld [vmem:[%s4 + $0x39c] sm:$0xf]
  %v256 = vld [vmem:[%s4 + $0x3a0] sm:$0xf]
  %v257 = vld [vmem:[%s4 + $0x3a4] sm:$0xf]
  %v258 = vld [vmem:[%s4 + $0x3a8] sm:$0xf]
  %v259 = vld [vmem:[%s4 + $0x3ac] sm:$0xf]
  %v260 = vld [vmem:[%s4 + $0x3b0] sm:$0xf]
  %v261 = vld [vmem:[%s4 + $0x3b4] sm:$0xf]
  %v262 = vld [vmem:[%s4 + $0x3b8] sm:$0xf]
  %v263 = vld [vmem:[%s4 + $0x3bc] sm:$0xf]
  %v264 = vld [vmem:[%s4 + $0x3c0] sm:$0xf]
  %v265 = vld [vmem:[%s4 + $0x3c4] sm:$0xf]
  %v266 = vld [vmem:[%s4 + $0x3c8] sm:$0xf]
  %v267 = vld [vmem:[%s4 + $0x3cc] sm:$0xf]
  %v268 = vld [vmem:[%s4 + $0x3d0] sm:$0xf]
  %v269 = vld [vmem:[%s4 + $0x3d4] sm:$0xf]
  %v270 = vld [vmem:[%s4 + $0x3d8] sm:$0xf]
  %v271 = vld [vmem:[%s4 + $0x3dc] sm:$0xf]
  %v272 = vld [vmem:[%s4 + $0x3e0] sm:$0xf]
  %v273 = vld [vmem:[%s4 + $0x3e4] sm:$0xf]
  %v274 = vld [vmem:[%s4 + $0x3e8] sm:$0xf]
  %v275 = vld [vmem:[%s4 + $0x3ec] sm:$0xf]
  %v276 = vld [vmem:[%s4 + $0x3f0] sm:$0xf]
  %v277 = vld [vmem:[%s4 + $0x3f4] sm:$0xf]
  %v278 = vld [vmem:[%s4 + $0x3f8] sm:$0xf]
  %v279 = vld [vmem:[%s4 + $0x3fc] sm:$0xf]
  %v280 = vld [vmem:[%s4 + $0x400] sm:$0xf]
  %v281 = vld [vmem:[%s4 + $0x404] sm:$0xf]
  %v282 = vld [vmem:[%s4 + $0x408] sm:$0xf]
  %v283 = vld [vmem:[%s4 + $0x40c] sm:$0xf]
  %v284 = vld [vmem:[%s4 + $0x410] sm:$0xf]
  %v285 = vld [vmem:[%s4 + $0x414] sm:$0xf]
  %v286 = vld [vmem:[%s4 + $0x418] sm:$0xf]
  %v287 = vld [vmem:[%s4 + $0x41c] sm:$0xf]
  %v288 = vld [vmem:[%s4 + $0x420] sm:$0xf]
  %v289 = vld [vmem:[%s4 + $0x424] sm:$0xf]
  %v290 = vld [vmem:[%s4 + $0x428] sm:$0xf]
  %v291 = vld [vmem:[%s4 + $0x42c] sm:$0xf]
  %v292 = vld [vmem:[%s4 + $0x430] sm:$0xf]
  %v293 = vld [vmem:[%s4 + $0x434] sm:$0xf]
  %v294 = vld [vmem:[%s4 + $0x438] sm:$0xf]
  %v295 = vld [vmem:[%s4 + $0x43c] sm:$0xf]
  %v296 = vld [vmem:[%s4 + $0x440] sm:$0xf]
  %v297 = vld [vmem:[%s4 + $0x444] sm:$0xf]
  %v298 = vld [vmem:[%s4 + $0x448] sm:$0xf]
  %v299 = vld [vmem:[%s4 + $0x44c] sm:$0xf]
  %v300 = vld [vmem:[%s4 + $0x450] sm:$0xf]
  %v301 = vld [vmem:[%s4 + $0x454] sm:$0xf]
  %v302 = vld [vmem:[%s4 + $0x458] sm:$0xf]
  %v303 = vld [vmem:[%s4 + $0x45c] sm:$0xf]
  %v304 = vld [vmem:[%s4 + $0x460] sm:$0xf]
  %v305 = vld [vmem:[%s4 + $0x464] sm:$0xf]
  %v306 = vld [vmem:[%s4 + $0x468] sm:$0xf]
  %v307 = vld [vmem:[%s4 + $0x46c] sm:$0xf]
  %v308 = vld [vmem:[%s4 + $0x470] sm:$0xf]
  %v309 = vld [vmem:[%s4 + $0x474] sm:$0xf]
  %v310 = vld [vmem:[%s4 + $0x478] sm:$0xf]
  %v311 = vld [vmem:[%s4 + $0x47c] sm:$0xf]
  %v312 = vld [vmem:[%s4 + $0x480] sm:$0xf]
  %v313 = vld [vmem:[%s4 + $0x484] sm:$0xf]
  %v314 = vld [vmem:[%s4 + $0x488] sm:$0xf]
  %v315 = vld [vmem:[%s4 + $0x48c] sm:$0xf]
  %v316 = vld [vmem:[%s4 + $0x490] sm:$0xf]
  %v317 = vld [vmem:[%s4 + $0x494] sm:$0xf]
  %v318 = vld [vmem:[%s4 + $0x498] sm:$0xf]
  %v319 = vld [vmem:[%s4 + $0x49c] sm:$0xf]
  %v320 = vld [vmem:[%s4 + $0x4a0] sm:$0xf]
  %v321 = vld [vmem:[%s4 + $0x4a4] sm:$0xf]
  %v322 = vld [vmem:[%s4 + $0x4a8] sm:$0xf]
  %v323 = vld [vmem:[%s4 + $0x4ac] sm:$0xf]
  %v324 = vld [vmem:[%s4 + $0x4b0] sm:$0xf]
  %v325 = vld [vmem:[%s4 + $0x4b4] sm:$0xf]
  %v326 = vld [vmem:[%s4 + $0x4b8] sm:$0xf]
  %v327 = vld [vmem:[%s4 + $0x4bc] sm:$0xf]
  %v328 = vld [vmem:[%s4 + $0x4c0] sm:$0xf]
  %v329 = vld [vmem:[%s4 + $0x4c4] sm:$0xf]
  %v330 = vld [vmem:[%s4 + $0x4c8] sm:$0xf]
  %v331 = vld [vmem:[%s4 + $0x4cc] sm:$0xf]
  %v332 = vld [vmem:[%s4 + $0x4d0] sm:$0xf]
  %v333 = vld [vmem:[%s4 + $0x4d4] sm:$0xf]
  %v334 = vld [vmem:[%s4 + $0x4d8] sm:$0xf]
  %v335 = vld [vmem:[%s4 + $0x4dc] sm:$0xf]
  %v336 = vld [vmem:[%s4 + $0x4e0] sm:$0xf]
  %v337 = vld [vmem:[%s4 + $0x4e4] sm:$0xf]
  %v338 = vld [vmem:[%s4 + $0x4e8] sm:$0xf]
  %v339 = vld [vmem:[%s4 + $0x4ec] sm:$0xf]
  %v340 = vld [vmem:[%s4 + $0x4f0] sm:$0xf]
  %v341 = vld [vmem:[%s4 + $0x4f4] sm:$0xf]
  %v342 = vld [vmem:[%s4 + $0x4f8] sm:$0xf]
  %v343 = vld [vmem:[%s4 + $0x4fc] sm:$0xf]
  %v344 = vld [vmem:[%s4 + $0x500] sm:$0xf]
  %v345 = vld [vmem:[%s4 + $0x504] sm:$0xf]
  %v346 = vld [vmem:[%s4 + $0x508] sm:$0xf]
  %v347 = vld [vmem:[%s4 + $0x50c] sm:$0xf]
  %v348 = vld [vmem:[%s4 + $0x510] sm:$0xf]
  %v349 = vld [vmem:[%s4 + $0x514] sm:$0xf]
  %v350 = vld [vmem:[%s4 + $0x518] sm:$0xf]
  %v351 = vld [vmem:[%s4 + $0x51c] sm:$0xf]
  %v352 = vld [vmem:[%s4 + $0x520] sm:$0xf]
  %v353 = vld [vmem:[%s4 + $0x524] sm:$0xf]
  %v354 = vld [vmem:[%s4 + $0x528] sm:$0xf]
  %v355 = vld [vmem:[%s4 + $0x52c] sm:$0xf]
  %v356 = vld [vmem:[%s4 + $0x530] sm:$0xf]
  %v357 = vld [vmem:[%s4 + $0x534] sm:$0xf]
  %v358 = vld [vmem:[%s4 + $0x538] sm:$0xf]
  %v359 = vld [vmem:[%s4 + $0x53c] sm:$0xf]
  %v360 = vld [vmem:[%s4 + $0x540] sm:$0xf]
  %v361 = vld [vmem:[%s4 + $0x544] sm:$0xf]
  %v362 = vld [vmem:[%s4 + $0x548] sm:$0xf]
  %v363 = vld [vmem:[%s4 + $0x54c] sm:$0xf]
  %v364 = vld [vmem:[%s4 + $0x550] sm:$0xf]
  %v365 = vld [vmem:[%s4 + $0x554] sm:$0xf]
  %v366 = vld [vmem:[%s4 + $0x558] sm:$0xf]
  %v367 = vld [vmem:[%s4 + $0x55c] sm:$0xf]
  %v368 = vld [vmem:[%s4 + $0x560] sm:$0xf]
  %v369 = vld [vmem:[%s4 + $0x564] sm:$0xf]
  %v370 = vld [vmem:[%s4 + $0x568] sm:$0xf]
  %v371 = vld [vmem:[%s4 + $0x56c] sm:$0xf]
  %v372 = vld [vmem:[%s4 + $0x570] sm:$0xf]
  %v373 = vld [vmem:[%s4 + $0x574] sm:$0xf]
  %v374 = vld [vmem:[%s4 + $0x578] sm:$0xf]
  %v375 = vld [vmem:[%s4 + $0x57c] sm:$0xf]
  %v376 = vld [vmem:[%s4 + $0x580] sm:$0xf]
  %v377 = vld [vmem:[%s4 + $0x584] sm:$0xf]
  %v378 = vld [vmem:[%s4 + $0x588] sm:$0xf]
  %v379 = vld [vmem:[%s4 + $0x58c] sm:$0xf]
  %v380 = vld [vmem:[%s4 + $0x590] sm:$0xf]
  %v381 = vld [vmem:[%s4 + $0x594] sm:$0xf]
  %v382 = vld [vmem:[%s4 + $0x598] sm:$0xf]
  %v383 = vld [vmem:[%s4 + $0x59c] sm:$0xf]
  %v384 = vld [vmem:[%s4 + $0x5a0] sm:$0xf]
  %v385 = vld [vmem:[%s4 + $0x5a4] sm:$0xf]
  %v386 = vld [vmem:[%s4 + $0x5a8] sm:$0xf]
  %v387 = vld [vmem:[%s4 + $0x5ac] sm:$0xf]
  %v388 = vld [vmem:[%s4 + $0x5b0] sm:$0xf]
  %v389 = vld [vmem:[%s4 + $0x5b4] sm:$0xf]
  %v390 = vld [vmem:[%s4 + $0x5b8] sm:$0xf]
  %v391 = vld [vmem:[%s4 + $0x5bc] sm:$0xf]
  %v392 = vld [vmem:[%s4 + $0x5c0] sm:$0xf]
  %v393 = vld [vmem:[%s4 + $0x5c4] sm:$0xf]
  %v394 = vld [vmem:[%s4 + $0x5c8] sm:$0xf]
  %v395 = vld [vmem:[%s4 + $0x5cc] sm:$0xf]
  %v396 = vld [vmem:[%s4 + $0x5d0] sm:$0xf]
  %v397 = vld [vmem:[%s4 + $0x5d4] sm:$0xf]
  %v398 = vld [vmem:[%s4 + $0x5d8] sm:$0xf]
  %v399 = vld [vmem:[%s4 + $0x5dc] sm:$0xf]
  %v400 = vld [vmem:[%s4 + $0x5e0] sm:$0xf]
  %v401 = vld [vmem:[%s4 + $0x5e4] sm:$0xf]
  %v402 = vld [vmem:[%s4 + $0x5e8] sm:$0xf]
  %v403 = vld [vmem:[%s4 + $0x5ec] sm:$0xf]
  %v404 = vld [vmem:[%s4 + $0x5f0] sm:$0xf]
  %v405 = vld [vmem:[%s4 + $0x5f4] sm:$0xf]
  %v406 = vld [vmem:[%s4 + $0x5f8] sm:$0xf]
  %v407 = vld [vmem:[%s4 + $0x5fc] sm:$0xf]
  %v408 = vld [vmem:[%s4 + $0x600] sm:$0xf]
  %v409 = vld [vmem:[%s4 + $0x604] sm:$0xf]
  %v410 = vld [vmem:[%s4 + $0x608] sm:$0xf]
  %v411 = vld [vmem:[%s4 + $0x60c] sm:$0xf]
  %v412 = vld [vmem:[%s4 + $0x610] sm:$0xf]
  %v413 = vld [vmem:[%s4 + $0x614] sm:$0xf]
  %v414 = vld [vmem:[%s4 + $0x618] sm:$0xf]
  %v415 = vld [vmem:[%s4 + $0x61c] sm:$0xf]
  %v416 = vld [vmem:[%s4 + $0x620] sm:$0xf]
  %v417 = vld [vmem:[%s4 + $0x624] sm:$0xf]
  %v418 = vld [vmem:[%s4 + $0x628] sm:$0xf]
  %v419 = vld [vmem:[%s4 + $0x62c] sm:$0xf]
  %v420 = vld [vmem:[%s4 + $0x630] sm:$0xf]
  %v421 = vld [vmem:[%s4 + $0x634] sm:$0xf]
  %v422 = vld [vmem:[%s4 + $0x638] sm:$0xf]
  %v423 = vld [vmem:[%s4 + $0x63c] sm:$0xf]
  %v424 = vld [vmem:[%s0] sm:$0xff]
  %v425 = vld [vmem:[%s0 + $0x8] sm:$0xff]
  %v426 = vld [vmem:[%s0 + $0x10] sm:$0xff]
  %v427 = vld [vmem:[%s0 + $0x18] sm:$0xff]
  %v428 = vld [vmem:[%s0 + $0x20] sm:$0xff]
  %v429 = vld [vmem:[%s0 + $0x28] sm:$0xff]
  %v430 = vld [vmem:[%s0 + $0x30] sm:$0xff]
  %v431 = vld [vmem:[%s0 + $0x38] sm:$0xff]
  %v432 = vld [vmem:[%s0 + $0x40] sm:$0xff]
  %v433 = vld [vmem:[%s0 + $0x48] sm:$0xff]
  %v434 = vld [vmem:[%s0 + $0x50] sm:$0xff]
  %v435 = vld [vmem:[%s0 + $0x58] sm:$0xff]
  %v436 = vld [vmem:[%s0 + $0x60] sm:$0xf]
  %v437 = vld [vmem:[%s0 + $0x64] sm:$0xff]
  %v438 = vld [vmem:[%s0 + $0x6c] sm:$0xff]
  %v439 = vld [vmem:[%s0 + $0x74] sm:$0xff]
  %v440 = vld [vmem:[%s0 + $0x7c] sm:$0xff]
  %v441 = vld [vmem:[%s0 + $0x84] sm:$0xff]
  %v442 = vld [vmem:[%s0 + $0x8c] sm:$0xff]
  %v443 = vld [vmem:[%s0 + $0x94] sm:$0xff]
  %v444 = vld [vmem:[%s0 + $0x9c] sm:$0xff]
  %v445 = vld [vmem:[%s0 + $0xa4] sm:$0xff]
  %v446 = vld [vmem:[%s0 + $0xac] sm:$0xff]
  %v447 = vld [vmem:[%s0 + $0xb4] sm:$0xff]
  %v448 = vld [vmem:[%s0 + $0xbc] sm:$0xff]
  %v449 = vld [vmem:[%s0 + $0xc4] sm:$0xf]
  %v450 = vld [vmem:[%s0 + $0xc8] sm:$0xff]
  %v451 = vld [vmem:[%s0 + $0xd0] sm:$0xff]
  %v452 = vld [vmem:[%s0 + $0xd8] sm:$0xff]
  %v453 = vld [vmem:[%s0 + $0xe0] sm:$0xff]
  %v454 = vld [vmem:[%s0 + $0xe8] sm:$0xff]
  %v455 = vld [vmem:[%s0 + $0xf0] sm:$0xff]
  %v456 = vld [vmem:[%s0 + $0xf8] sm:$0xff]
  %v457 = vld [vmem:[%s0 + $0x100] sm:$0xff]
  %v458 = vld [vmem:[%s0 + $0x108] sm:$0xff]
  %v459 = vld [vmem:[%s0 + $0x110] sm:$0xff]
  %v460 = vld [vmem:[%s0 + $0x118] sm:$0xff]
  %v461 = vld [vmem:[%s0 + $0x120] sm:$0xff]
  %v462 = vld [vmem:[%s0 + $0x128] sm:$0xf]
  %v463 = vld [vmem:[%s0 + $0x12c] sm:$0xff]
  %v464 = vld [vmem:[%s0 + $0x134] sm:$0xff]
  %v465 = vld [vmem:[%s0 + $0x13c] sm:$0xff]
  %v466 = vld [vmem:[%s0 + $0x144] sm:$0xff]
  %v467 = vld [vmem:[%s0 + $0x14c] sm:$0xff]
  %v468 = vld [vmem:[%s0 + $0x154] sm:$0xff]
  %v469 = vld [vmem:[%s0 + $0x15c] sm:$0xff]
  %v470 = vld [vmem:[%s0 + $0x164] sm:$0xff]
  %v471 = vld [vmem:[%s0 + $0x16c] sm:$0xff]
  %v472 = vld [vmem:[%s0 + $0x174] sm:$0xff]
  %v473 = vld [vmem:[%s0 + $0x17c] sm:$0xff]
  %v474 = vld [vmem:[%s0 + $0x184] sm:$0xff]
  %v475 = vld [vmem:[%s0 + $0x18c] sm:$0xf]
  %v476 = vld [vmem:[%s0 + $0x190] sm:$0xff]
  %v477 = vld [vmem:[%s0 + $0x198] sm:$0xff]
  %v478 = vld [vmem:[%s0 + $0x1a0] sm:$0xff]
  %v479 = vld [vmem:[%s0 + $0x1a8] sm:$0xff]
  %v480 = vld [vmem:[%s0 + $0x1b0] sm:$0xff]
  %v481 = vld [vmem:[%s0 + $0x1b8] sm:$0xff]
  %v482 = vld [vmem:[%s0 + $0x1c0] sm:$0xff]
  %v483 = vld [vmem:[%s0 + $0x1c8] sm:$0xff]
  %v484 = vld [vmem:[%s0 + $0x1d0] sm:$0xff]
  %v485 = vld [vmem:[%s0 + $0x1d8] sm:$0xff]
  %v486 = vld [vmem:[%s0 + $0x1e0] sm:$0xff]
  %v487 = vld [vmem:[%s0 + $0x1e8] sm:$0xff]
  %v488 = vld [vmem:[%s0 + $0x1f0] sm:$0xf]
  %v489 = vld [vmem:[%s0 + $0x1f4] sm:$0xff]
  %v490 = vld [vmem:[%s0 + $0x1fc] sm:$0xff]
  %v491 = vld [vmem:[%s0 + $0x204] sm:$0xff]
  %v492 = vld [vmem:[%s0 + $0x20c] sm:$0xff]
  %v493 = vld [vmem:[%s0 + $0x214] sm:$0xff]
  %v494 = vld [vmem:[%s0 + $0x21c] sm:$0xff]
  %v495 = vld [vmem:[%s0 + $0x224] sm:$0xff]
  %v496 = vld [vmem:[%s0 + $0x22c] sm:$0xff]
  %v497 = vld [vmem:[%s0 + $0x234] sm:$0xff]
  %v498 = vld [vmem:[%s0 + $0x23c] sm:$0xff]
  %v499 = vld [vmem:[%s0 + $0x244] sm:$0xff]
  %v500 = vld [vmem:[%s0 + $0x24c] sm:$0xff]
  %v501 = vld [vmem:[%s0 + $0x254] sm:$0xf]
  %v502 = vld [vmem:[%s0 + $0x258] sm:$0x11]
  %v503 = vld [vmem:[%s0 + $0x260] sm:$0x11]
  %v504 = vld [vmem:[%s0 + $0x268] sm:$0x11]
  %v505 = vld [vmem:[%s0 + $0x270] sm:$0x11]
  %v506 = vld [vmem:[%s0 + $0x278] sm:$0x11]
  %v507 = vld [vmem:[%s0 + $0x280] sm:$0x11]
  %v508 = vld [vmem:[%s0 + $0x288] sm:$0x11]
  %v509 = vld [vmem:[%s0 + $0x290] sm:$0x11]
  %v510 = vld [vmem:[%s0 + $0x298] sm:$0x11]
  %v511 = vld [vmem:[%s0 + $0x2a0] sm:$0x11]
  %v512 = vld [vmem:[%s0 + $0x2a8] sm:$0x11]
  %v513 = vld [vmem:[%s0 + $0x2b0] sm:$0x11]
  %v514 = vld [vmem:[%s0 + $0x2b8] sm:$0x1]
  %v606 = vunpack.c.l.b16 %v424
  %v607 = vunpack.c.h.b16 %v424
  %v608 = vunpack.c.l.b16 %v425
  %v609 = vunpack.c.h.b16 %v425
  %v610 = vunpack.c.l.b16 %v426
  %v611 = vunpack.c.h.b16 %v426
  %v612 = vunpack.c.l.b16 %v427
  %v613 = vunpack.c.h.b16 %v427
  %v614 = vunpack.c.l.b16 %v428
  %v615 = vunpack.c.h.b16 %v428
  %v616 = vunpack.c.l.b16 %v429
  %v617 = vunpack.c.h.b16 %v429
  %v618 = vunpack.c.l.b16 %v430
  %v619 = vunpack.c.h.b16 %v430
  %v620 = vunpack.c.l.b16 %v431
  %v621 = vunpack.c.h.b16 %v431
  %v622 = vunpack.c.l.b16 %v432
  %v623 = vunpack.c.h.b16 %v432
  %v624 = vunpack.c.l.b16 %v433
  %v625 = vunpack.c.h.b16 %v433
  %v626 = vunpack.c.l.b16 %v434
  %v627 = vunpack.c.h.b16 %v434
  %v628 = vunpack.c.l.b16 %v435
  %v629 = vunpack.c.h.b16 %v435
  %v630 = vunpack.c.l.b16 %v436
  %v631 = vunpack.c.l.b16 %v437
  %v632 = vunpack.c.h.b16 %v437
  %v633 = vunpack.c.l.b16 %v438
  %v634 = vunpack.c.h.b16 %v438
  %v635 = vunpack.c.l.b16 %v439
  %v636 = vunpack.c.h.b16 %v439
  %v637 = vunpack.c.l.b16 %v440
  %v638 = vunpack.c.h.b16 %v440
  %v639 = vunpack.c.l.b16 %v441
  %v640 = vunpack.c.h.b16 %v441
  %v641 = vunpack.c.l.b16 %v442
  %v642 = vunpack.c.h.b16 %v442
  %v643 = vunpack.c.l.b16 %v443
  %v644 = vunpack.c.h.b16 %v443
  %v645 = vunpack.c.l.b16 %v444
  %v646 = vunpack.c.h.b16 %v444
  %v647 = vunpack.c.l.b16 %v445
  %v648 = vunpack.c.h.b16 %v445
  %v649 = vunpack.c.l.b16 %v446
  %v650 = vunpack.c.h.b16 %v446
  %v651 = vunpack.c.l.b16 %v447
  %v652 = vunpack.c.h.b16 %v447
  %v653 = vunpack.c.l.b16 %v448
  %v654 = vunpack.c.h.b16 %v448
  %v655 = vunpack.c.l.b16 %v449
  %v656 = vunpack.c.l.b16 %v450
  %v657 = vunpack.c.h.b16 %v450
  %v658 = vunpack.c.l.b16 %v451
  %v659 = vunpack.c.h.b16 %v451
  %v660 = vunpack.c.l.b16 %v452
  %v661 = vunpack.c.h.b16 %v452
  %v662 = vunpack.c.l.b16 %v453
  %v663 = vunpack.c.h.b16 %v453
  %v664 = vunpack.c.l.b16 %v454
  %v665 = vunpack.c.h.b16 %v454
  %v666 = vunpack.c.l.b16 %v455
  %v667 = vunpack.c.h.b16 %v455
  %v668 = vunpack.c.l.b16 %v456
  %v669 = vunpack.c.h.b16 %v456
  %v670 = vunpack.c.l.b16 %v457
  %v671 = vunpack.c.h.b16 %v457
  %v672 = vunpack.c.l.b16 %v458
  %v673 = vunpack.c.h.b16 %v458
  %v674 = vunpack.c.l.b16 %v459
  %v675 = vunpack.c.h.b16 %v459
  %v676 = vunpack.c.l.b16 %v460
  %v677 = vunpack.c.h.b16 %v460
  %v678 = vunpack.c.l.b16 %v461
  %v679 = vunpack.c.h.b16 %v461
  %v680 = vunpack.c.l.b16 %v462
  %v681 = vunpack.c.l.b16 %v463
  %v682 = vunpack.c.h.b16 %v463
  %v683 = vunpack.c.l.b16 %v464
  %v684 = vunpack.c.h.b16 %v464
  %v685 = vunpack.c.l.b16 %v465
  %v686 = vunpack.c.h.b16 %v465
  %v687 = vunpack.c.l.b16 %v466
  %v688 = vunpack.c.h.b16 %v466
  %v689 = vunpack.c.l.b16 %v467
  %v690 = vunpack.c.h.b16 %v467
  %v691 = vunpack.c.l.b16 %v468
  %v692 = vunpack.c.h.b16 %v468
  %v693 = vunpack.c.l.b16 %v469
  %v694 = vunpack.c.h.b16 %v469
  %v695 = vunpack.c.l.b16 %v470
  %v696 = vunpack.c.h.b16 %v470
  %v697 = vunpack.c.l.b16 %v471
  %v698 = vunpack.c.h.b16 %v471
  %v699 = vunpack.c.l.b16 %v472
  %v700 = vunpack.c.h.b16 %v472
  %v701 = vunpack.c.l.b16 %v473
  %v702 = vunpack.c.h.b16 %v473
  %v703 = vunpack.c.l.b16 %v474
  %v704 = vunpack.c.h.b16 %v474
  %v705 = vunpack.c.l.b16 %v475
  %v706 = vunpack.c.l.b16 %v476
  %v707 = vunpack.c.h.b16 %v476
  %v708 = vunpack.c.l.b16 %v477
  %v709 = vunpack.c.h.b16 %v477
  %v710 = vunpack.c.l.b16 %v478
  %v711 = vunpack.c.h.b16 %v478
  %v712 = vunpack.c.l.b16 %v479
  %v713 = vunpack.c.h.b16 %v479
  %v714 = vunpack.c.l.b16 %v480
  %v715 = vunpack.c.h.b16 %v480
  %v716 = vunpack.c.l.b16 %v481
  %v717 = vunpack.c.h.b16 %v481
  %v718 = vunpack.c.l.b16 %v482
  %v719 = vunpack.c.h.b16 %v482
  %v720 = vunpack.c.l.b16 %v483
  %v721 = vunpack.c.h.b16 %v483
  %v722 = vunpack.c.l.b16 %v484
  %v723 = vunpack.c.h.b16 %v484
  %v724 = vunpack.c.l.b16 %v485
  %v725 = vunpack.c.h.b16 %v485
  %v726 = vunpack.c.l.b16 %v486
  %v727 = vunpack.c.h.b16 %v486
  %v728 = vunpack.c.l.b16 %v487
  %v729 = vunpack.c.h.b16 %v487
  %v730 = vunpack.c.l.b16 %v488
  %v731 = vunpack.c.l.b16 %v489
  %v732 = vunpack.c.h.b16 %v489
  %v733 = vunpack.c.l.b16 %v490
  %v734 = vunpack.c.h.b16 %v490
  %v735 = vunpack.c.l.b16 %v491
  %v736 = vunpack.c.h.b16 %v491
  %v737 = vunpack.c.l.b16 %v492
  %v738 = vunpack.c.h.b16 %v492
  %v739 = vunpack.c.l.b16 %v493
  %v740 = vunpack.c.h.b16 %v493
  %v741 = vunpack.c.l.b16 %v494
  %v742 = vunpack.c.h.b16 %v494
  %v743 = vunpack.c.l.b16 %v495
  %v744 = vunpack.c.h.b16 %v495
  %v745 = vunpack.c.l.b16 %v496
  %v746 = vunpack.c.h.b16 %v496
  %v747 = vunpack.c.l.b16 %v497
  %v748 = vunpack.c.h.b16 %v497
  %v749 = vunpack.c.l.b16 %v498
  %v750 = vunpack.c.h.b16 %v498
  %v751 = vunpack.c.l.b16 %v499
  %v752 = vunpack.c.h.b16 %v499
  %v753 = vunpack.c.l.b16 %v500
  %v754 = vunpack.c.h.b16 %v500
  %v755 = vunpack.c.l.b16 %v501
  %v756 = vunpack.c.l.b16 %v502
  %v757 = vunpack.c.h.b16 %v502
  %v758 = vunpack.c.l.b16 %v503
  %v759 = vunpack.c.h.b16 %v503
  %v760 = vunpack.c.l.b16 %v504
  %v761 = vunpack.c.h.b16 %v504
  %v762 = vunpack.c.l.b16 %v505
  %v763 = vunpack.c.h.b16 %v505
  %v764 = vunpack.c.l.b16 %v506
  %v765 = vunpack.c.h.b16 %v506
  %v766 = vunpack.c.l.b16 %v507
  %v767 = vunpack.c.h.b16 %v507
  %v768 = vunpack.c.l.b16 %v508
  %v769 = vunpack.c.h.b16 %v508
  %v770 = vunpack.c.l.b16 %v509
  %v771 = vunpack.c.h.b16 %v509
  %v772 = vunpack.c.l.b16 %v510
  %v773 = vunpack.c.h.b16 %v510
  %v774 = vunpack.c.l.b16 %v511
  %v775 = vunpack.c.h.b16 %v511
  %v776 = vunpack.c.l.b16 %v512
  %v777 = vunpack.c.h.b16 %v512
  %v778 = vunpack.c.l.b16 %v513
  %v779 = vunpack.c.h.b16 %v513
  %v780 = vunpack.c.l.b16 %v514
  %v781 = vpack.c.b16 %v631, %v606
  %v782 = vpack.c.b16 %v632, %v607
  %v783 = vpack.c.b16 %v633, %v608
  %v784 = vpack.c.b16 %v634, %v609
  %v785 = vpack.c.b16 %v635, %v610
  %v786 = vpack.c.b16 %v636, %v611
  %v787 = vpack.c.b16 %v637, %v612
  %v788 = vpack.c.b16 %v638, %v613
  %v789 = vpack.c.b16 %v639, %v614
  %v790 = vpack.c.b16 %v640, %v615
  %v791 = vpack.c.b16 %v641, %v616
  %v792 = vpack.c.b16 %v642, %v617
  %v793 = vpack.c.b16 %v643, %v618
  %v794 = vpack.c.b16 %v644, %v619
  %v795 = vpack.c.b16 %v645, %v620
  %v796 = vpack.c.b16 %v646, %v621
  %v797 = vpack.c.b16 %v647, %v622
  %v798 = vpack.c.b16 %v648, %v623
  %v799 = vpack.c.b16 %v649, %v624
  %v800 = vpack.c.b16 %v650, %v625
  %v801 = vpack.c.b16 %v651, %v626
  %v802 = vpack.c.b16 %v652, %v627
  %v803 = vpack.c.b16 %v653, %v628
  %v804 = vpack.c.b16 %v654, %v629
  %v805 = vpack.c.b16 %v655, %v630
  %v806 = vpack.c.b16 %v681, %v656
  %v807 = vpack.c.b16 %v682, %v657
  %v808 = vpack.c.b16 %v683, %v658
  %v809 = vpack.c.b16 %v684, %v659
  %v810 = vpack.c.b16 %v685, %v660
  %v811 = vpack.c.b16 %v686, %v661
  %v812 = vpack.c.b16 %v687, %v662
  %v813 = vpack.c.b16 %v688, %v663
  %v814 = vpack.c.b16 %v689, %v664
  %v815 = vpack.c.b16 %v690, %v665
  %v816 = vpack.c.b16 %v691, %v666
  %v817 = vpack.c.b16 %v692, %v667
  %v818 = vpack.c.b16 %v693, %v668
  %v819 = vpack.c.b16 %v694, %v669
  %v820 = vpack.c.b16 %v695, %v670
  %v821 = vpack.c.b16 %v696, %v671
  %v822 = vpack.c.b16 %v697, %v672
  %v823 = vpack.c.b16 %v698, %v673
  %v824 = vpack.c.b16 %v699, %v674
  %v825 = vpack.c.b16 %v700, %v675
  %v826 = vpack.c.b16 %v701, %v676
  %v827 = vpack.c.b16 %v702, %v677
  %v828 = vpack.c.b16 %v703, %v678
  %v829 = vpack.c.b16 %v704, %v679
  %v830 = vpack.c.b16 %v705, %v680
  %v831 = vpack.c.b16 %v731, %v706
  %v832 = vpack.c.b16 %v732, %v707
  %v833 = vpack.c.b16 %v733, %v708
  %v834 = vpack.c.b16 %v734, %v709
  %v835 = vpack.c.b16 %v735, %v710
  %v836 = vpack.c.b16 %v736, %v711
  %v837 = vpack.c.b16 %v737, %v712
  %v838 = vpack.c.b16 %v738, %v713
  %v839 = vpack.c.b16 %v739, %v714
  %v840 = vpack.c.b16 %v740, %v715
  %v841 = vpack.c.b16 %v741, %v716
  %v842 = vpack.c.b16 %v742, %v717
  %v843 = vpack.c.b16 %v743, %v718
  %v844 = vpack.c.b16 %v744, %v719
  %v845 = vpack.c.b16 %v745, %v720
  %v846 = vpack.c.b16 %v746, %v721
  %v847 = vpack.c.b16 %v747, %v722
  %v848 = vpack.c.b16 %v748, %v723
  %v849 = vpack.c.b16 %v749, %v724
  %v850 = vpack.c.b16 %v750, %v725
  %v851 = vpack.c.b16 %v751, %v726
  %v852 = vpack.c.b16 %v752, %v727
  %v853 = vpack.c.b16 %v753, %v728
  %v854 = vpack.c.b16 %v754, %v729
  %v855 = vpack.c.b16 %v755, %v730
  %v856 = vpack.c.b16 %v756, %v756
  %v857 = vpack.c.b16 %v757, %v757
  %v858 = vpack.c.b16 %v758, %v758
  %v859 = vpack.c.b16 %v759, %v759
  %v860 = vpack.c.b16 %v760, %v760
  %v861 = vpack.c.b16 %v761, %v761
  %v862 = vpack.c.b16 %v762, %v762
  %v863 = vpack.c.b16 %v763, %v763
  %v864 = vpack.c.b16 %v764, %v764
  %v865 = vpack.c.b16 %v765, %v765
  %v866 = vpack.c.b16 %v766, %v766
  %v867 = vpack.c.b16 %v767, %v767
  %v868 = vpack.c.b16 %v768, %v768
  %v869 = vpack.c.b16 %v769, %v769
  %v870 = vpack.c.b16 %v770, %v770
  %v871 = vpack.c.b16 %v771, %v771
  %v872 = vpack.c.b16 %v772, %v772
  %v873 = vpack.c.b16 %v773, %v773
  %v874 = vpack.c.b16 %v774, %v774
  %v875 = vpack.c.b16 %v775, %v775
  %v876 = vpack.c.b16 %v776, %v776
  %v877 = vpack.c.b16 %v777, %v777
  %v878 = vpack.c.b16 %v778, %v778
  %v879 = vpack.c.b16 %v779, %v779
  %v880 = vpack.c.b16 %v780, %v780
  %v1381 = vunpack.c.l.b16 %v24
  %v1382 = vunpack.c.l.b16 %v25
  %v1383 = vunpack.c.l.b16 %v26
  %v1384 = vunpack.c.l.b16 %v27
  %v1385 = vunpack.c.l.b16 %v28
  %v1386 = vunpack.c.l.b16 %v29
  %v1387 = vunpack.c.l.b16 %v30
  %v1388 = vunpack.c.l.b16 %v31
  %v1389 = vunpack.c.l.b16 %v32
  %v1390 = vunpack.c.l.b16 %v33
  %v1391 = vunpack.c.l.b16 %v34
  %v1392 = vunpack.c.l.b16 %v35
  %v1393 = vunpack.c.l.b16 %v36
  %v1394 = vunpack.c.l.b16 %v37
  %v1395 = vunpack.c.l.b16 %v38
  %v1396 = vunpack.c.l.b16 %v39
  %v1397 = vunpack.c.l.b16 %v40
  %v1398 = vunpack.c.l.b16 %v41
  %v1399 = vunpack.c.l.b16 %v42
  %v1400 = vunpack.c.l.b16 %v43
  %v1401 = vunpack.c.l.b16 %v44
  %v1402 = vunpack.c.l.b16 %v45
  %v1403 = vunpack.c.l.b16 %v46
  %v1404 = vunpack.c.l.b16 %v47
  %v1405 = vunpack.c.l.b16 %v48
  %v1406 = vunpack.c.l.b16 %v49
  %v1407 = vunpack.c.l.b16 %v50
  %v1408 = vunpack.c.l.b16 %v51
  %v1409 = vunpack.c.l.b16 %v52
  %v1410 = vunpack.c.l.b16 %v53
  %v1411 = vunpack.c.l.b16 %v54
  %v1412 = vunpack.c.l.b16 %v55
  %v1413 = vunpack.c.l.b16 %v56
  %v1414 = vunpack.c.l.b16 %v57
  %v1415 = vunpack.c.l.b16 %v58
  %v1416 = vunpack.c.l.b16 %v59
  %v1417 = vunpack.c.l.b16 %v60
  %v1418 = vunpack.c.l.b16 %v61
  %v1419 = vunpack.c.l.b16 %v62
  %v1420 = vunpack.c.l.b16 %v63
  %v1421 = vunpack.c.l.b16 %v64
  %v1422 = vunpack.c.l.b16 %v65
  %v1423 = vunpack.c.l.b16 %v66
  %v1424 = vunpack.c.l.b16 %v67
  %v1425 = vunpack.c.l.b16 %v68
  %v1426 = vunpack.c.l.b16 %v69
  %v1427 = vunpack.c.l.b16 %v70
  %v1428 = vunpack.c.l.b16 %v71
  %v1429 = vunpack.c.l.b16 %v72
  %v1430 = vunpack.c.l.b16 %v73
  %v1431 = vunpack.c.l.b16 %v74
  %v1432 = vunpack.c.l.b16 %v75
  %v1433 = vunpack.c.l.b16 %v76
  %v1434 = vunpack.c.l.b16 %v77
  %v1435 = vunpack.c.l.b16 %v78
  %v1436 = vunpack.c.l.b16 %v79
  %v1437 = vunpack.c.l.b16 %v80
  %v1438 = vunpack.c.l.b16 %v81
  %v1439 = vunpack.c.l.b16 %v82
  %v1440 = vunpack.c.l.b16 %v83
  %v1441 = vunpack.c.l.b16 %v84
  %v1442 = vunpack.c.l.b16 %v85
  %v1443 = vunpack.c.l.b16 %v86
  %v1444 = vunpack.c.l.b16 %v87
  %v1445 = vunpack.c.l.b16 %v88
  %v1446 = vunpack.c.l.b16 %v89
  %v1447 = vunpack.c.l.b16 %v90
  %v1448 = vunpack.c.l.b16 %v91
  %v1449 = vunpack.c.l.b16 %v92
  %v1450 = vunpack.c.l.b16 %v93
  %v1451 = vunpack.c.l.b16 %v94
  %v1452 = vunpack.c.l.b16 %v95
  %v1453 = vunpack.c.l.b16 %v96
  %v1454 = vunpack.c.l.b16 %v97
  %v1455 = vunpack.c.l.b16 %v98
  %v1456 = vunpack.c.l.b16 %v99
  %v1457 = vunpack.c.l.b16 %v100
  %v1458 = vunpack.c.l.b16 %v101
  %v1459 = vunpack.c.l.b16 %v102
  %v1460 = vunpack.c.l.b16 %v103
  %v1461 = vunpack.c.l.b16 %v104
  %v1462 = vunpack.c.l.b16 %v105
  %v1463 = vunpack.c.l.b16 %v106
  %v1464 = vunpack.c.l.b16 %v107
  %v1465 = vunpack.c.l.b16 %v108
  %v1466 = vunpack.c.l.b16 %v109
  %v1467 = vunpack.c.l.b16 %v110
  %v1468 = vunpack.c.l.b16 %v111
  %v1469 = vunpack.c.l.b16 %v112
  %v1470 = vunpack.c.l.b16 %v113
  %v1471 = vunpack.c.l.b16 %v114
  %v1472 = vunpack.c.l.b16 %v115
  %v1473 = vunpack.c.l.b16 %v116
  %v1474 = vunpack.c.l.b16 %v117
  %v1475 = vunpack.c.l.b16 %v118
  %v1476 = vunpack.c.l.b16 %v119
  %v1477 = vunpack.c.l.b16 %v120
  %v1478 = vunpack.c.l.b16 %v121
  %v1479 = vunpack.c.l.b16 %v122
  %v1480 = vunpack.c.l.b16 %v123
  %v1481 = vunpack.c.l.b16 %v124
  %v1482 = vunpack.c.l.b16 %v125
  %v1483 = vunpack.c.l.b16 %v126
  %v1484 = vunpack.c.l.b16 %v127
  %v1485 = vunpack.c.l.b16 %v128
  %v1486 = vunpack.c.l.b16 %v129
  %v1487 = vunpack.c.l.b16 %v130
  %v1488 = vunpack.c.l.b16 %v131
  %v1489 = vunpack.c.l.b16 %v132
  %v1490 = vunpack.c.l.b16 %v133
  %v1491 = vunpack.c.l.b16 %v134
  %v1492 = vunpack.c.l.b16 %v135
  %v1493 = vunpack.c.l.b16 %v136
  %v1494 = vunpack.c.l.b16 %v137
  %v1495 = vunpack.c.l.b16 %v138
  %v1496 = vunpack.c.l.b16 %v139
  %v1497 = vunpack.c.l.b16 %v140
  %v1498 = vunpack.c.l.b16 %v141
  %v1499 = vunpack.c.l.b16 %v142
  %v1500 = vunpack.c.l.b16 %v143
  %v1501 = vunpack.c.l.b16 %v144
  %v1502 = vunpack.c.l.b16 %v145
  %v1503 = vunpack.c.l.b16 %v146
  %v1504 = vunpack.c.l.b16 %v147
  %v1505 = vunpack.c.l.b16 %v148
  %v1506 = vunpack.c.l.b16 %v149
  %v1507 = vunpack.c.l.b16 %v150
  %v1508 = vunpack.c.l.b16 %v151
  %v1509 = vunpack.c.l.b16 %v152
  %v1510 = vunpack.c.l.b16 %v153
  %v1511 = vunpack.c.l.b16 %v154
  %v1512 = vunpack.c.l.b16 %v155
  %v1513 = vunpack.c.l.b16 %v156
  %v1514 = vunpack.c.l.b16 %v157
  %v1515 = vunpack.c.l.b16 %v158
  %v1516 = vunpack.c.l.b16 %v159
  %v1517 = vunpack.c.l.b16 %v160
  %v1518 = vunpack.c.l.b16 %v161
  %v1519 = vunpack.c.l.b16 %v162
  %v1520 = vunpack.c.l.b16 %v163
  %v1521 = vunpack.c.l.b16 %v164
  %v1522 = vunpack.c.l.b16 %v165
  %v1523 = vunpack.c.l.b16 %v166
  %v1524 = vunpack.c.l.b16 %v167
  %v1525 = vunpack.c.l.b16 %v168
  %v1526 = vunpack.c.l.b16 %v169
  %v1527 = vunpack.c.l.b16 %v170
  %v1528 = vunpack.c.l.b16 %v171
  %v1529 = vunpack.c.l.b16 %v172
  %v1530 = vunpack.c.l.b16 %v173
  %v1531 = vunpack.c.l.b16 %v174
  %v1532 = vunpack.c.l.b16 %v175
  %v1533 = vunpack.c.l.b16 %v176
  %v1534 = vunpack.c.l.b16 %v177
  %v1535 = vunpack.c.l.b16 %v178
  %v1536 = vunpack.c.l.b16 %v179
  %v1537 = vunpack.c.l.b16 %v180
  %v1538 = vunpack.c.l.b16 %v181
  %v1539 = vunpack.c.l.b16 %v182
  %v1540 = vunpack.c.l.b16 %v183
  %v1541 = vunpack.c.l.b16 %v184
  %v1542 = vunpack.c.l.b16 %v185
  %v1543 = vunpack.c.l.b16 %v186
  %v1544 = vunpack.c.l.b16 %v187
  %v1545 = vunpack.c.l.b16 %v188
  %v1546 = vunpack.c.l.b16 %v189
  %v1547 = vunpack.c.l.b16 %v190
  %v1548 = vunpack.c.l.b16 %v191
  %v1549 = vunpack.c.l.b16 %v192
  %v1550 = vunpack.c.l.b16 %v193
  %v1551 = vunpack.c.l.b16 %v194
  %v1552 = vunpack.c.l.b16 %v195
  %v1553 = vunpack.c.l.b16 %v196
  %v1554 = vunpack.c.l.b16 %v197
  %v1555 = vunpack.c.l.b16 %v198
  %v1556 = vunpack.c.l.b16 %v199
  %v1557 = vunpack.c.l.b16 %v200
  %v1558 = vunpack.c.l.b16 %v201
  %v1559 = vunpack.c.l.b16 %v202
  %v1560 = vunpack.c.l.b16 %v203
  %v1561 = vunpack.c.l.b16 %v204
  %v1562 = vunpack.c.l.b16 %v205
  %v1563 = vunpack.c.l.b16 %v206
  %v1564 = vunpack.c.l.b16 %v207
  %v1565 = vunpack.c.l.b16 %v208
  %v1566 = vunpack.c.l.b16 %v209
  %v1567 = vunpack.c.l.b16 %v210
  %v1568 = vunpack.c.l.b16 %v211
  %v1569 = vunpack.c.l.b16 %v212
  %v1570 = vunpack.c.l.b16 %v213
  %v1571 = vunpack.c.l.b16 %v214
  %v1572 = vunpack.c.l.b16 %v215
  %v1573 = vunpack.c.l.b16 %v216
  %v1574 = vunpack.c.l.b16 %v217
  %v1575 = vunpack.c.l.b16 %v218
  %v1576 = vunpack.c.l.b16 %v219
  %v1577 = vunpack.c.l.b16 %v220
  %v1578 = vunpack.c.l.b16 %v221
  %v1579 = vunpack.c.l.b16 %v222
  %v1580 = vunpack.c.l.b16 %v223
  %v1581 = vunpack.c.l.b16 %v224
  %v1582 = vunpack.c.l.b16 %v225
  %v1583 = vunpack.c.l.b16 %v226
  %v1584 = vunpack.c.l.b16 %v227
  %v1585 = vunpack.c.l.b16 %v228
  %v1586 = vunpack.c.l.b16 %v229
  %v1587 = vunpack.c.l.b16 %v230
  %v1588 = vunpack.c.l.b16 %v231
  %v1589 = vunpack.c.l.b16 %v232
  %v1590 = vunpack.c.l.b16 %v233
  %v1591 = vunpack.c.l.b16 %v234
  %v1592 = vunpack.c.l.b16 %v235
  %v1593 = vunpack.c.l.b16 %v236
  %v1594 = vunpack.c.l.b16 %v237
  %v1595 = vunpack.c.l.b16 %v238
  %v1596 = vunpack.c.l.b16 %v239
  %v1597 = vunpack.c.l.b16 %v240
  %v1598 = vunpack.c.l.b16 %v241
  %v1599 = vunpack.c.l.b16 %v242
  %v1600 = vunpack.c.l.b16 %v243
  %v1601 = vunpack.c.l.b16 %v244
  %v1602 = vunpack.c.l.b16 %v245
  %v1603 = vunpack.c.l.b16 %v246
  %v1604 = vunpack.c.l.b16 %v247
  %v1605 = vunpack.c.l.b16 %v248
  %v1606 = vunpack.c.l.b16 %v249
  %v1607 = vunpack.c.l.b16 %v250
  %v1608 = vunpack.c.l.b16 %v251
  %v1609 = vunpack.c.l.b16 %v252
  %v1610 = vunpack.c.l.b16 %v253
  %v1611 = vunpack.c.l.b16 %v254
  %v1612 = vunpack.c.l.b16 %v255
  %v1613 = vunpack.c.l.b16 %v256
  %v1614 = vunpack.c.l.b16 %v257
  %v1615 = vunpack.c.l.b16 %v258
  %v1616 = vunpack.c.l.b16 %v259
  %v1617 = vunpack.c.l.b16 %v260
  %v1618 = vunpack.c.l.b16 %v261
  %v1619 = vunpack.c.l.b16 %v262
  %v1620 = vunpack.c.l.b16 %v263
  %v1621 = vunpack.c.l.b16 %v264
  %v1622 = vunpack.c.l.b16 %v265
  %v1623 = vunpack.c.l.b16 %v266
  %v1624 = vunpack.c.l.b16 %v267
  %v1625 = vunpack.c.l.b16 %v268
  %v1626 = vunpack.c.l.b16 %v269
  %v1627 = vunpack.c.l.b16 %v270
  %v1628 = vunpack.c.l.b16 %v271
  %v1629 = vunpack.c.l.b16 %v272
  %v1630 = vunpack.c.l.b16 %v273
  %v1631 = vunpack.c.l.b16 %v274
  %v1632 = vunpack.c.l.b16 %v275
  %v1633 = vunpack.c.l.b16 %v276
  %v1634 = vunpack.c.l.b16 %v277
  %v1635 = vunpack.c.l.b16 %v278
  %v1636 = vunpack.c.l.b16 %v279
  %v1637 = vunpack.c.l.b16 %v280
  %v1638 = vunpack.c.l.b16 %v281
  %v1639 = vunpack.c.l.b16 %v282
  %v1640 = vunpack.c.l.b16 %v283
  %v1641 = vunpack.c.l.b16 %v284
  %v1642 = vunpack.c.l.b16 %v285
  %v1643 = vunpack.c.l.b16 %v286
  %v1644 = vunpack.c.l.b16 %v287
  %v1645 = vunpack.c.l.b16 %v288
  %v1646 = vunpack.c.l.b16 %v289
  %v1647 = vunpack.c.l.b16 %v290
  %v1648 = vunpack.c.l.b16 %v291
  %v1649 = vunpack.c.l.b16 %v292
  %v1650 = vunpack.c.l.b16 %v293
  %v1651 = vunpack.c.l.b16 %v294
  %v1652 = vunpack.c.l.b16 %v295
  %v1653 = vunpack.c.l.b16 %v296
  %v1654 = vunpack.c.l.b16 %v297
  %v1655 = vunpack.c.l.b16 %v298
  %v1656 = vunpack.c.l.b16 %v299
  %v1657 = vunpack.c.l.b16 %v300
  %v1658 = vunpack.c.l.b16 %v301
  %v1659 = vunpack.c.l.b16 %v302
  %v1660 = vunpack.c.l.b16 %v303
  %v1661 = vunpack.c.l.b16 %v304
  %v1662 = vunpack.c.l.b16 %v305
  %v1663 = vunpack.c.l.b16 %v306
  %v1664 = vunpack.c.l.b16 %v307
  %v1665 = vunpack.c.l.b16 %v308
  %v1666 = vunpack.c.l.b16 %v309
  %v1667 = vunpack.c.l.b16 %v310
  %v1668 = vunpack.c.l.b16 %v311
  %v1669 = vunpack.c.l.b16 %v312
  %v1670 = vunpack.c.l.b16 %v313
  %v1671 = vunpack.c.l.b16 %v314
  %v1672 = vunpack.c.l.b16 %v315
  %v1673 = vunpack.c.l.b16 %v316
  %v1674 = vunpack.c.l.b16 %v317
  %v1675 = vunpack.c.l.b16 %v318
  %v1676 = vunpack.c.l.b16 %v319
  %v1677 = vunpack.c.l.b16 %v320
  %v1678 = vunpack.c.l.b16 %v321
  %v1679 = vunpack.c.l.b16 %v322
  %v1680 = vunpack.c.l.b16 %v323
  %v1681 = vunpack.c.l.b16 %v324
  %v1682 = vunpack.c.l.b16 %v325
  %v1683 = vunpack.c.l.b16 %v326
  %v1684 = vunpack.c.l.b16 %v327
  %v1685 = vunpack.c.l.b16 %v328
  %v1686 = vunpack.c.l.b16 %v329
  %v1687 = vunpack.c.l.b16 %v330
  %v1688 = vunpack.c.l.b16 %v331
  %v1689 = vunpack.c.l.b16 %v332
  %v1690 = vunpack.c.l.b16 %v333
  %v1691 = vunpack.c.l.b16 %v334
  %v1692 = vunpack.c.l.b16 %v335
  %v1693 = vunpack.c.l.b16 %v336
  %v1694 = vunpack.c.l.b16 %v337
  %v1695 = vunpack.c.l.b16 %v338
  %v1696 = vunpack.c.l.b16 %v339
  %v1697 = vunpack.c.l.b16 %v340
  %v1698 = vunpack.c.l.b16 %v341
  %v1699 = vunpack.c.l.b16 %v342
  %v1700 = vunpack.c.l.b16 %v343
  %v1701 = vunpack.c.l.b16 %v344
  %v1702 = vunpack.c.l.b16 %v345
  %v1703 = vunpack.c.l.b16 %v346
  %v1704 = vunpack.c.l.b16 %v347
  %v1705 = vunpack.c.l.b16 %v348
  %v1706 = vunpack.c.l.b16 %v349
  %v1707 = vunpack.c.l.b16 %v350
  %v1708 = vunpack.c.l.b16 %v351
  %v1709 = vunpack.c.l.b16 %v352
  %v1710 = vunpack.c.l.b16 %v353
  %v1711 = vunpack.c.l.b16 %v354
  %v1712 = vunpack.c.l.b16 %v355
  %v1713 = vunpack.c.l.b16 %v356
  %v1714 = vunpack.c.l.b16 %v357
  %v1715 = vunpack.c.l.b16 %v358
  %v1716 = vunpack.c.l.b16 %v359
  %v1717 = vunpack.c.l.b16 %v360
  %v1718 = vunpack.c.l.b16 %v361
  %v1719 = vunpack.c.l.b16 %v362
  %v1720 = vunpack.c.l.b16 %v363
  %v1721 = vunpack.c.l.b16 %v364
  %v1722 = vunpack.c.l.b16 %v365
  %v1723 = vunpack.c.l.b16 %v366
  %v1724 = vunpack.c.l.b16 %v367
  %v1725 = vunpack.c.l.b16 %v368
  %v1726 = vunpack.c.l.b16 %v369
  %v1727 = vunpack.c.l.b16 %v370
  %v1728 = vunpack.c.l.b16 %v371
  %v1729 = vunpack.c.l.b16 %v372
  %v1730 = vunpack.c.l.b16 %v373
  %v1731 = vunpack.c.l.b16 %v374
  %v1732 = vunpack.c.l.b16 %v375
  %v1733 = vunpack.c.l.b16 %v376
  %v1734 = vunpack.c.l.b16 %v377
  %v1735 = vunpack.c.l.b16 %v378
  %v1736 = vunpack.c.l.b16 %v379
  %v1737 = vunpack.c.l.b16 %v380
  %v1738 = vunpack.c.l.b16 %v381
  %v1739 = vunpack.c.l.b16 %v382
  %v1740 = vunpack.c.l.b16 %v383
  %v1741 = vunpack.c.l.b16 %v384
  %v1742 = vunpack.c.l.b16 %v385
  %v1743 = vunpack.c.l.b16 %v386
  %v1744 = vunpack.c.l.b16 %v387
  %v1745 = vunpack.c.l.b16 %v388
  %v1746 = vunpack.c.l.b16 %v389
  %v1747 = vunpack.c.l.b16 %v390
  %v1748 = vunpack.c.l.b16 %v391
  %v1749 = vunpack.c.l.b16 %v392
  %v1750 = vunpack.c.l.b16 %v393
  %v1751 = vunpack.c.l.b16 %v394
  %v1752 = vunpack.c.l.b16 %v395
  %v1753 = vunpack.c.l.b16 %v396
  %v1754 = vunpack.c.l.b16 %v397
  %v1755 = vunpack.c.l.b16 %v398
  %v1756 = vunpack.c.l.b16 %v399
  %v1757 = vunpack.c.l.b16 %v400
  %v1758 = vunpack.c.l.b16 %v401
  %v1759 = vunpack.c.l.b16 %v402
  %v1760 = vunpack.c.l.b16 %v403
  %v1761 = vunpack.c.l.b16 %v404
  %v1762 = vunpack.c.l.b16 %v405
  %v1763 = vunpack.c.l.b16 %v406
  %v1764 = vunpack.c.l.b16 %v407
  %v1765 = vunpack.c.l.b16 %v408
  %v1766 = vunpack.c.l.b16 %v409
  %v1767 = vunpack.c.l.b16 %v410
  %v1768 = vunpack.c.l.b16 %v411
  %v1769 = vunpack.c.l.b16 %v412
  %v1770 = vunpack.c.l.b16 %v413
  %v1771 = vunpack.c.l.b16 %v414
  %v1772 = vunpack.c.l.b16 %v415
  %v1773 = vunpack.c.l.b16 %v416
  %v1774 = vunpack.c.l.b16 %v417
  %v1775 = vunpack.c.l.b16 %v418
  %v1776 = vunpack.c.l.b16 %v419
  %v1777 = vunpack.c.l.b16 %v420
  %v1778 = vunpack.c.l.b16 %v421
  %v1779 = vunpack.c.l.b16 %v422
  %v1780 = vunpack.c.l.b16 %v423
  %v1781 = vpack.c.b16 %v1382, %v1381
  %v1782 = vpack.c.b16 %v1384, %v1383
  %v1783 = vpack.c.b16 %v1386, %v1385
  %v1784 = vpack.c.b16 %v1388, %v1387
  %v1785 = vpack.c.b16 %v1390, %v1389
  %v1786 = vpack.c.b16 %v1392, %v1391
  %v1787 = vpack.c.b16 %v1394, %v1393
  %v1788 = vpack.c.b16 %v1396, %v1395
  %v1789 = vpack.c.b16 %v1398, %v1397
  %v1790 = vpack.c.b16 %v1400, %v1399
  %v1791 = vpack.c.b16 %v1402, %v1401
  %v1792 = vpack.c.b16 %v1404, %v1403
  %v1793 = vpack.c.b16 %v1406, %v1405
  %v1794 = vpack.c.b16 %v1408, %v1407
  %v1795 = vpack.c.b16 %v1410, %v1409
  %v1796 = vpack.c.b16 %v1412, %v1411
  %v1797 = vpack.c.b16 %v1414, %v1413
  %v1798 = vpack.c.b16 %v1416, %v1415
  %v1799 = vpack.c.b16 %v1418, %v1417
  %v1800 = vpack.c.b16 %v1420, %v1419
  %v1801 = vpack.c.b16 %v1422, %v1421
  %v1802 = vpack.c.b16 %v1424, %v1423
  %v1803 = vpack.c.b16 %v1426, %v1425
  %v1804 = vpack.c.b16 %v1428, %v1427
  %v1805 = vpack.c.b16 %v1430, %v1429
  %v1806 = vpack.c.b16 %v1432, %v1431
  %v1807 = vpack.c.b16 %v1434, %v1433
  %v1808 = vpack.c.b16 %v1436, %v1435
  %v1809 = vpack.c.b16 %v1438, %v1437
  %v1810 = vpack.c.b16 %v1440, %v1439
  %v1811 = vpack.c.b16 %v1442, %v1441
  %v1812 = vpack.c.b16 %v1444, %v1443
  %v1813 = vpack.c.b16 %v1446, %v1445
  %v1814 = vpack.c.b16 %v1448, %v1447
  %v1815 = vpack.c.b16 %v1450, %v1449
  %v1816 = vpack.c.b16 %v1452, %v1451
  %v1817 = vpack.c.b16 %v1454, %v1453
  %v1818 = vpack.c.b16 %v1456, %v1455
  %v1819 = vpack.c.b16 %v1458, %v1457
  %v1820 = vpack.c.b16 %v1460, %v1459
  %v1821 = vpack.c.b16 %v1462, %v1461
  %v1822 = vpack.c.b16 %v1464, %v1463
  %v1823 = vpack.c.b16 %v1466, %v1465
  %v1824 = vpack.c.b16 %v1468, %v1467
  %v1825 = vpack.c.b16 %v1470, %v1469
  %v1826 = vpack.c.b16 %v1472, %v1471
  %v1827 = vpack.c.b16 %v1474, %v1473
  %v1828 = vpack.c.b16 %v1476, %v1475
  %v1829 = vpack.c.b16 %v1478, %v1477
  %v1830 = vpack.c.b16 %v1480, %v1479
  %v1831 = vpack.c.b16 %v1482, %v1481
  %v1832 = vpack.c.b16 %v1484, %v1483
  %v1833 = vpack.c.b16 %v1486, %v1485
  %v1834 = vpack.c.b16 %v1488, %v1487
  %v1835 = vpack.c.b16 %v1490, %v1489
  %v1836 = vpack.c.b16 %v1492, %v1491
  %v1837 = vpack.c.b16 %v1494, %v1493
  %v1838 = vpack.c.b16 %v1496, %v1495
  %v1839 = vpack.c.b16 %v1498, %v1497
  %v1840 = vpack.c.b16 %v1500, %v1499
  %v1841 = vpack.c.b16 %v1502, %v1501
  %v1842 = vpack.c.b16 %v1504, %v1503
  %v1843 = vpack.c.b16 %v1506, %v1505
  %v1844 = vpack.c.b16 %v1508, %v1507
  %v1845 = vpack.c.b16 %v1510, %v1509
  %v1846 = vpack.c.b16 %v1512, %v1511
  %v1847 = vpack.c.b16 %v1514, %v1513
  %v1848 = vpack.c.b16 %v1516, %v1515
  %v1849 = vpack.c.b16 %v1518, %v1517
  %v1850 = vpack.c.b16 %v1520, %v1519
  %v1851 = vpack.c.b16 %v1522, %v1521
  %v1852 = vpack.c.b16 %v1524, %v1523
  %v1853 = vpack.c.b16 %v1526, %v1525
  %v1854 = vpack.c.b16 %v1528, %v1527
  %v1855 = vpack.c.b16 %v1530, %v1529
  %v1856 = vpack.c.b16 %v1532, %v1531
  %v1857 = vpack.c.b16 %v1534, %v1533
  %v1858 = vpack.c.b16 %v1536, %v1535
  %v1859 = vpack.c.b16 %v1538, %v1537
  %v1860 = vpack.c.b16 %v1540, %v1539
  %v1861 = vpack.c.b16 %v1542, %v1541
  %v1862 = vpack.c.b16 %v1544, %v1543
  %v1863 = vpack.c.b16 %v1546, %v1545
  %v1864 = vpack.c.b16 %v1548, %v1547
  %v1865 = vpack.c.b16 %v1550, %v1549
  %v1866 = vpack.c.b16 %v1552, %v1551
  %v1867 = vpack.c.b16 %v1554, %v1553
  %v1868 = vpack.c.b16 %v1556, %v1555
  %v1869 = vpack.c.b16 %v1558, %v1557
  %v1870 = vpack.c.b16 %v1560, %v1559
  %v1871 = vpack.c.b16 %v1562, %v1561
  %v1872 = vpack.c.b16 %v1564, %v1563
  %v1873 = vpack.c.b16 %v1566, %v1565
  %v1874 = vpack.c.b16 %v1568, %v1567
  %v1875 = vpack.c.b16 %v1570, %v1569
  %v1876 = vpack.c.b16 %v1572, %v1571
  %v1877 = vpack.c.b16 %v1574, %v1573
  %v1878 = vpack.c.b16 %v1576, %v1575
  %v1879 = vpack.c.b16 %v1578, %v1577
  %v1880 = vpack.c.b16 %v1580, %v1579
  %v1881 = vpack.c.b16 %v1582, %v1581
  %v1882 = vpack.c.b16 %v1584, %v1583
  %v1883 = vpack.c.b16 %v1586, %v1585
  %v1884 = vpack.c.b16 %v1588, %v1587
  %v1885 = vpack.c.b16 %v1590, %v1589
  %v1886 = vpack.c.b16 %v1592, %v1591
  %v1887 = vpack.c.b16 %v1594, %v1593
  %v1888 = vpack.c.b16 %v1596, %v1595
  %v1889 = vpack.c.b16 %v1598, %v1597
  %v1890 = vpack.c.b16 %v1600, %v1599
  %v1891 = vpack.c.b16 %v1602, %v1601
  %v1892 = vpack.c.b16 %v1604, %v1603
  %v1893 = vpack.c.b16 %v1606, %v1605
  %v1894 = vpack.c.b16 %v1608, %v1607
  %v1895 = vpack.c.b16 %v1610, %v1609
  %v1896 = vpack.c.b16 %v1612, %v1611
  %v1897 = vpack.c.b16 %v1614, %v1613
  %v1898 = vpack.c.b16 %v1616, %v1615
  %v1899 = vpack.c.b16 %v1618, %v1617
  %v1900 = vpack.c.b16 %v1620, %v1619
  %v1901 = vpack.c.b16 %v1622, %v1621
  %v1902 = vpack.c.b16 %v1624, %v1623
  %v1903 = vpack.c.b16 %v1626, %v1625
  %v1904 = vpack.c.b16 %v1628, %v1627
  %v1905 = vpack.c.b16 %v1630, %v1629
  %v1906 = vpack.c.b16 %v1632, %v1631
  %v1907 = vpack.c.b16 %v1634, %v1633
  %v1908 = vpack.c.b16 %v1636, %v1635
  %v1909 = vpack.c.b16 %v1638, %v1637
  %v1910 = vpack.c.b16 %v1640, %v1639
  %v1911 = vpack.c.b16 %v1642, %v1641
  %v1912 = vpack.c.b16 %v1644, %v1643
  %v1913 = vpack.c.b16 %v1646, %v1645
  %v1914 = vpack.c.b16 %v1648, %v1647
  %v1915 = vpack.c.b16 %v1650, %v1649
  %v1916 = vpack.c.b16 %v1652, %v1651
  %v1917 = vpack.c.b16 %v1654, %v1653
  %v1918 = vpack.c.b16 %v1656, %v1655
  %v1919 = vpack.c.b16 %v1658, %v1657
  %v1920 = vpack.c.b16 %v1660, %v1659
  %v1921 = vpack.c.b16 %v1662, %v1661
  %v1922 = vpack.c.b16 %v1664, %v1663
  %v1923 = vpack.c.b16 %v1666, %v1665
  %v1924 = vpack.c.b16 %v1668, %v1667
  %v1925 = vpack.c.b16 %v1670, %v1669
  %v1926 = vpack.c.b16 %v1672, %v1671
  %v1927 = vpack.c.b16 %v1674, %v1673
  %v1928 = vpack.c.b16 %v1676, %v1675
  %v1929 = vpack.c.b16 %v1678, %v1677
  %v1930 = vpack.c.b16 %v1680, %v1679
  %v1931 = vpack.c.b16 %v1682, %v1681
  %v1932 = vpack.c.b16 %v1684, %v1683
  %v1933 = vpack.c.b16 %v1686, %v1685
  %v1934 = vpack.c.b16 %v1688, %v1687
  %v1935 = vpack.c.b16 %v1690, %v1689
  %v1936 = vpack.c.b16 %v1692, %v1691
  %v1937 = vpack.c.b16 %v1694, %v1693
  %v1938 = vpack.c.b16 %v1696, %v1695
  %v1939 = vpack.c.b16 %v1698, %v1697
  %v1940 = vpack.c.b16 %v1700, %v1699
  %v1941 = vpack.c.b16 %v1702, %v1701
  %v1942 = vpack.c.b16 %v1704, %v1703
  %v1943 = vpack.c.b16 %v1706, %v1705
  %v1944 = vpack.c.b16 %v1708, %v1707
  %v1945 = vpack.c.b16 %v1710, %v1709
  %v1946 = vpack.c.b16 %v1712, %v1711
  %v1947 = vpack.c.b16 %v1714, %v1713
  %v1948 = vpack.c.b16 %v1716, %v1715
  %v1949 = vpack.c.b16 %v1718, %v1717
  %v1950 = vpack.c.b16 %v1720, %v1719
  %v1951 = vpack.c.b16 %v1722, %v1721
  %v1952 = vpack.c.b16 %v1724, %v1723
  %v1953 = vpack.c.b16 %v1726, %v1725
  %v1954 = vpack.c.b16 %v1728, %v1727
  %v1955 = vpack.c.b16 %v1730, %v1729
  %v1956 = vpack.c.b16 %v1732, %v1731
  %v1957 = vpack.c.b16 %v1734, %v1733
  %v1958 = vpack.c.b16 %v1736, %v1735
  %v1959 = vpack.c.b16 %v1738, %v1737
  %v1960 = vpack.c.b16 %v1740, %v1739
  %v1961 = vpack.c.b16 %v1742, %v1741
  %v1962 = vpack.c.b16 %v1744, %v1743
  %v1963 = vpack.c.b16 %v1746, %v1745
  %v1964 = vpack.c.b16 %v1748, %v1747
  %v1965 = vpack.c.b16 %v1750, %v1749
  %v1966 = vpack.c.b16 %v1752, %v1751
  %v1967 = vpack.c.b16 %v1754, %v1753
  %v1968 = vpack.c.b16 %v1756, %v1755
  %v1969 = vpack.c.b16 %v1758, %v1757
  %v1970 = vpack.c.b16 %v1760, %v1759
  %v1971 = vpack.c.b16 %v1762, %v1761
  %v1972 = vpack.c.b16 %v1764, %v1763
  %v1973 = vpack.c.b16 %v1766, %v1765
  %v1974 = vpack.c.b16 %v1768, %v1767
  %v1975 = vpack.c.b16 %v1770, %v1769
  %v1976 = vpack.c.b16 %v1772, %v1771
  %v1977 = vpack.c.b16 %v1774, %v1773
  %v1978 = vpack.c.b16 %v1776, %v1775
  %v1979 = vpack.c.b16 %v1778, %v1777
  %v1980 = vpack.c.b16 %v1780, %v1779
  %2181 = vmatprep.subr.bf16.mxu0 0
  %2182 = vmatpush1.bf16.msra.mxu0 %v1788
  %2183 = vmatprep.subr.bf16.mxu0 0
  %2184 = vmatpush1.bf16.msra.mxu0 %v1787
  %2185 = vmatprep.subr.bf16.mxu0 0
  %2186 = vmatpush1.bf16.msra.mxu0 %v1786
  %2187 = vmatprep.subr.bf16.mxu0 0
  %2188 = vmatpush1.bf16.msra.mxu0 %v1785
  %2189 = vmatprep.subr.bf16.mxu0 0
  %2190 = vmatpush1.bf16.msra.mxu0 %v1784
  %2191 = vmatprep.subr.bf16.mxu0 0
  %2192 = vmatpush1.bf16.msra.mxu0 %v1783
  %2193 = vmatprep.subr.bf16.mxu0 0
  %2194 = vmatpush1.bf16.msra.mxu0 %v1782
  %2195 = vmatprep.subr.bf16.mxu0 0
  %2196 = vmatpush1.bf16.msra.mxu0 %v1781
  %2197 = vmatprep.subr.bf16.mxu0 0
  %2198 = vmatpush2.bf16.msra.mxu0 %v1796
  %2199 = vmatprep.subr.bf16.mxu0 0
  %2200 = vmatpush2.bf16.msra.mxu0 %v1795
  %2201 = vmatprep.subr.bf16.mxu0 0
  %2202 = vmatpush2.bf16.msra.mxu0 %v1794
  %2203 = vmatprep.subr.bf16.mxu0 0
  %2204 = vmatpush2.bf16.msra.mxu0 %v1793
  %2205 = vmatprep.subr.bf16.mxu0 0
  %2206 = vmatpush2.bf16.msra.mxu0 %v1792
  %2207 = vmatprep.subr.bf16.mxu0 0
  %2208 = vmatpush2.bf16.msra.mxu0 %v1791
  %2209 = vmatprep.subr.bf16.mxu0 0
  %2210 = vmatpush2.bf16.msra.mxu0 %v1790
  %2211 = vmatprep.subr.bf16.mxu0 0
  %2212 = vmatpush2.bf16.msra.mxu0 %v1789
  %2213 = vmatprep.mubr.bf16.mxu0 %v782
  %2214 = vmatmul.mubr.bf16.gmra.mxu0 %v781
  %v2215 = vpop.f32.mrf.mxu0
  %v2216 = vadd.f32 0.0, %v2215
  %v2217 = vpop.f32.mrf.mxu0
  %v2218 = vpop.f32.mrf.mxu0
  %v2219 = vadd.f32 0.0, %v2218
  %v2220 = vpop.f32.mrf.mxu0
  %2221 = vmatprep.mubr.bf16.mxu0 %v807
  %2222 = vmatmul.mubr.bf16.gmra.mxu0 %v806
  %v2223 = vpop.f32.mrf.mxu0
  %v2224 = vadd.f32 0.0, %v2223
  %v2225 = vpop.f32.mrf.mxu0
  %v2226 = vpop.f32.mrf.mxu0
  %v2227 = vadd.f32 0.0, %v2226
  %v2228 = vpop.f32.mrf.mxu0
  %2229 = vmatprep.mubr.bf16.mxu0 %v832
  %2230 = vmatmul.mubr.bf16.gmra.mxu0 %v831
  %v2231 = vpop.f32.mrf.mxu0
  %v2232 = vadd.f32 0.0, %v2231
  %v2233 = vpop.f32.mrf.mxu0
  %v2234 = vpop.f32.mrf.mxu0
  %v2235 = vadd.f32 0.0, %v2234
  %v2236 = vpop.f32.mrf.mxu0
  %2237 = vmatprep.mubr.bf16.mxu0 %v857
  %2238 = vmatmul.mubr.bf16.gmra.mxu0 %v856
  %v2239 = vpop.f32.mrf.mxu0
  %v2240 = vadd.f32 0.0, %v2239
  %v2241 = vpop.f32.mrf.mxu0
  %v2242 = vpop.f32.mrf.mxu0
  %v2243 = vpop.f32.mrf.mxu0
  %2244 = vdwg.mxu0
  %2245 = vmatprep.subr.bf16.mxu0 0
  %2246 = vmatpush1.bf16.msra.mxu0 %v1804
  %2247 = vmatprep.subr.bf16.mxu0 0
  %2248 = vmatpush1.bf16.msra.mxu0 %v1803
  %2249 = vmatprep.subr.bf16.mxu0 0
  %2250 = vmatpush1.bf16.msra.mxu0 %v1802
  %2251 = vmatprep.subr.bf16.mxu0 0
  %2252 = vmatpush1.bf16.msra.mxu0 %v1801
  %2253 = vmatprep.subr.bf16.mxu0 0
  %2254 = vmatpush1.bf16.msra.mxu0 %v1800
  %2255 = vmatprep.subr.bf16.mxu0 0
  %2256 = vmatpush1.bf16.msra.mxu0 %v1799
  %2257 = vmatprep.subr.bf16.mxu0 0
  %2258 = vmatpush1.bf16.msra.mxu0 %v1798
  %2259 = vmatprep.subr.bf16.mxu0 0
  %2260 = vmatpush1.bf16.msra.mxu0 %v1797
  %2261 = vmatprep.subr.bf16.mxu0 0
  %2262 = vmatpush2.bf16.msra.mxu0 %v1812
  %2263 = vmatprep.subr.bf16.mxu0 0
  %2264 = vmatpush2.bf16.msra.mxu0 %v1811
  %2265 = vmatprep.subr.bf16.mxu0 0
  %2266 = vmatpush2.bf16.msra.mxu0 %v1810
  %2267 = vmatprep.subr.bf16.mxu0 0
  %2268 = vmatpush2.bf16.msra.mxu0 %v1809
  %2269 = vmatprep.subr.bf16.mxu0 0
  %2270 = vmatpush2.bf16.msra.mxu0 %v1808
  %2271 = vmatprep.subr.bf16.mxu0 0
  %2272 = vmatpush2.bf16.msra.mxu0 %v1807
  %2273 = vmatprep.subr.bf16.mxu0 0
  %2274 = vmatpush2.bf16.msra.mxu0 %v1806
  %2275 = vmatprep.subr.bf16.mxu0 0
  %2276 = vmatpush2.bf16.msra.mxu0 %v1805
  %2277 = vmatprep.mubr.bf16.mxu0 %v784
  %2278 = vmatmul.mubr.bf16.gmra.mxu0 %v783
  %v2279 = vpop.f32.mrf.mxu0
  %v2280 = vadd.f32 %v2216, %v2279
  %v2281 = vpop.f32.mrf.mxu0
  %v2282 = vpop.f32.mrf.mxu0
  %v2283 = vadd.f32 %v2219, %v2282
  %v2284 = vpop.f32.mrf.mxu0
  %2285 = vmatprep.mubr.bf16.mxu0 %v809
  %2286 = vmatmul.mubr.bf16.gmra.mxu0 %v808
  %v2287 = vpop.f32.mrf.mxu0
  %v2288 = vadd.f32 %v2224, %v2287
  %v2289 = vpop.f32.mrf.mxu0
  %v2290 = vpop.f32.mrf.mxu0
  %v2291 = vadd.f32 %v2227, %v2290
  %v2292 = vpop.f32.mrf.mxu0
  %2293 = vmatprep.mubr.bf16.mxu0 %v834
  %2294 = vmatmul.mubr.bf16.gmra.mxu0 %v833
  %v2295 = vpop.f32.mrf.mxu0
  %v2296 = vadd.f32 %v2232, %v2295
  %v2297 = vpop.f32.mrf.mxu0
  %v2298 = vpop.f32.mrf.mxu0
  %v2299 = vadd.f32 %v2235, %v2298
  %v2300 = vpop.f32.mrf.mxu0
  %2301 = vmatprep.mubr.bf16.mxu0 %v859
  %2302 = vmatmul.mubr.bf16.gmra.mxu0 %v858
  %v2303 = vpop.f32.mrf.mxu0
  %v2304 = vadd.f32 %v2240, %v2303
  %v2305 = vpop.f32.mrf.mxu0
  %v2306 = vpop.f32.mrf.mxu0
  %v2307 = vpop.f32.mrf.mxu0
  %2308 = vdwg.mxu0
  %2309 = vmatprep.subr.bf16.mxu0 0
  %2310 = vmatpush1.bf16.msra.mxu0 %v1820
  %2311 = vmatprep.subr.bf16.mxu0 0
  %2312 = vmatpush1.bf16.msra.mxu0 %v1819
  %2313 = vmatprep.subr.bf16.mxu0 0
  %2314 = vmatpush1.bf16.msra.mxu0 %v1818
  %2315 = vmatprep.subr.bf16.mxu0 0
  %2316 = vmatpush1.bf16.msra.mxu0 %v1817
  %2317 = vmatprep.subr.bf16.mxu0 0
  %2318 = vmatpush1.bf16.msra.mxu0 %v1816
  %2319 = vmatprep.subr.bf16.mxu0 0
  %2320 = vmatpush1.bf16.msra.mxu0 %v1815
  %2321 = vmatprep.subr.bf16.mxu0 0
  %2322 = vmatpush1.bf16.msra.mxu0 %v1814
  %2323 = vmatprep.subr.bf16.mxu0 0
  %2324 = vmatpush1.bf16.msra.mxu0 %v1813
  %2325 = vmatprep.subr.bf16.mxu0 0
  %2326 = vmatpush2.bf16.msra.mxu0 %v1828
  %2327 = vmatprep.subr.bf16.mxu0 0
  %2328 = vmatpush2.bf16.msra.mxu0 %v1827
  %2329 = vmatprep.subr.bf16.mxu0 0
  %2330 = vmatpush2.bf16.msra.mxu0 %v1826
  %2331 = vmatprep.subr.bf16.mxu0 0
  %2332 = vmatpush2.bf16.msra.mxu0 %v1825
  %2333 = vmatprep.subr.bf16.mxu0 0
  %2334 = vmatpush2.bf16.msra.mxu0 %v1824
  %2335 = vmatprep.subr.bf16.mxu0 0
  %2336 = vmatpush2.bf16.msra.mxu0 %v1823
  %2337 = vmatprep.subr.bf16.mxu0 0
  %2338 = vmatpush2.bf16.msra.mxu0 %v1822
  %2339 = vmatprep.subr.bf16.mxu0 0
  %2340 = vmatpush2.bf16.msra.mxu0 %v1821
  %2341 = vmatprep.mubr.bf16.mxu0 %v786
  %2342 = vmatmul.mubr.bf16.gmra.mxu0 %v785
  %v2343 = vpop.f32.mrf.mxu0
  %v2344 = vadd.f32 %v2280, %v2343
  %v2345 = vpop.f32.mrf.mxu0
  %v2346 = vpop.f32.mrf.mxu0
  %v2347 = vadd.f32 %v2283, %v2346
  %v2348 = vpop.f32.mrf.mxu0
  %2349 = vmatprep.mubr.bf16.mxu0 %v811
  %2350 = vmatmul.mubr.bf16.gmra.mxu0 %v810
  %v2351 = vpop.f32.mrf.mxu0
  %v2352 = vadd.f32 %v2288, %v2351
  %v2353 = vpop.f32.mrf.mxu0
  %v2354 = vpop.f32.mrf.mxu0
  %v2355 = vadd.f32 %v2291, %v2354
  %v2356 = vpop.f32.mrf.mxu0
  %2357 = vmatprep.mubr.bf16.mxu0 %v836
  %2358 = vmatmul.mubr.bf16.gmra.mxu0 %v835
  %v2359 = vpop.f32.mrf.mxu0
  %v2360 = vadd.f32 %v2296, %v2359
  %v2361 = vpop.f32.mrf.mxu0
  %v2362 = vpop.f32.mrf.mxu0
  %v2363 = vadd.f32 %v2299, %v2362
  %v2364 = vpop.f32.mrf.mxu0
  %2365 = vmatprep.mubr.bf16.mxu0 %v861
  %2366 = vmatmul.mubr.bf16.gmra.mxu0 %v860
  %v2367 = vpop.f32.mrf.mxu0
  %v2368 = vadd.f32 %v2304, %v2367
  %v2369 = vpop.f32.mrf.mxu0
  %v2370 = vpop.f32.mrf.mxu0
  %v2371 = vpop.f32.mrf.mxu0
  %2372 = vdwg.mxu0
  %2373 = vmatprep.subr.bf16.mxu0 0
  %2374 = vmatpush1.bf16.msra.mxu0 %v1836
  %2375 = vmatprep.subr.bf16.mxu0 0
  %2376 = vmatpush1.bf16.msra.mxu0 %v1835
  %2377 = vmatprep.subr.bf16.mxu0 0
  %2378 = vmatpush1.bf16.msra.mxu0 %v1834
  %2379 = vmatprep.subr.bf16.mxu0 0
  %2380 = vmatpush1.bf16.msra.mxu0 %v1833
  %2381 = vmatprep.subr.bf16.mxu0 0
  %2382 = vmatpush1.bf16.msra.mxu0 %v1832
  %2383 = vmatprep.subr.bf16.mxu0 0
  %2384 = vmatpush1.bf16.msra.mxu0 %v1831
  %2385 = vmatprep.subr.bf16.mxu0 0
  %2386 = vmatpush1.bf16.msra.mxu0 %v1830
  %2387 = vmatprep.subr.bf16.mxu0 0
  %2388 = vmatpush1.bf16.msra.mxu0 %v1829
  %2389 = vmatprep.subr.bf16.mxu0 0
  %2390 = vmatpush2.bf16.msra.mxu0 %v1844
  %2391 = vmatprep.subr.bf16.mxu0 0
  %2392 = vmatpush2.bf16.msra.mxu0 %v1843
  %2393 = vmatprep.subr.bf16.mxu0 0
  %2394 = vmatpush2.bf16.msra.mxu0 %v1842
  %2395 = vmatprep.subr.bf16.mxu0 0
  %2396 = vmatpush2.bf16.msra.mxu0 %v1841
  %2397 = vmatprep.subr.bf16.mxu0 0
  %2398 = vmatpush2.bf16.msra.mxu0 %v1840
  %2399 = vmatprep.subr.bf16.mxu0 0
  %2400 = vmatpush2.bf16.msra.mxu0 %v1839
  %2401 = vmatprep.subr.bf16.mxu0 0
  %2402 = vmatpush2.bf16.msra.mxu0 %v1838
  %2403 = vmatprep.subr.bf16.mxu0 0
  %2404 = vmatpush2.bf16.msra.mxu0 %v1837
  %2405 = vmatprep.mubr.bf16.mxu0 %v788
  %2406 = vmatmul.mubr.bf16.gmra.mxu0 %v787
  %v2407 = vpop.f32.mrf.mxu0
  %v2408 = vadd.f32 %v2344, %v2407
  %v2409 = vpop.f32.mrf.mxu0
  %v2410 = vpop.f32.mrf.mxu0
  %v2411 = vadd.f32 %v2347, %v2410
  %v2412 = vpop.f32.mrf.mxu0
  %2413 = vmatprep.mubr.bf16.mxu0 %v813
  %2414 = vmatmul.mubr.bf16.gmra.mxu0 %v812
  %v2415 = vpop.f32.mrf.mxu0
  %v2416 = vadd.f32 %v2352, %v2415
  %v2417 = vpop.f32.mrf.mxu0
  %v2418 = vpop.f32.mrf.mxu0
  %v2419 = vadd.f32 %v2355, %v2418
  %v2420 = vpop.f32.mrf.mxu0
  %2421 = vmatprep.mubr.bf16.mxu0 %v838
  %2422 = vmatmul.mubr.bf16.gmra.mxu0 %v837
  %v2423 = vpop.f32.mrf.mxu0
  %v2424 = vadd.f32 %v2360, %v2423
  %v2425 = vpop.f32.mrf.mxu0
  %v2426 = vpop.f32.mrf.mxu0
  %v2427 = vadd.f32 %v2363, %v2426
  %v2428 = vpop.f32.mrf.mxu0
  %2429 = vmatprep.mubr.bf16.mxu0 %v863
  %2430 = vmatmul.mubr.bf16.gmra.mxu0 %v862
  %v2431 = vpop.f32.mrf.mxu0
  %v2432 = vadd.f32 %v2368, %v2431
  %v2433 = vpop.f32.mrf.mxu0
  %v2434 = vpop.f32.mrf.mxu0
  %v2435 = vpop.f32.mrf.mxu0
  %2436 = vdwg.mxu0
  %2437 = vmatprep.subr.bf16.mxu0 0
  %2438 = vmatpush1.bf16.msra.mxu0 %v1852
  %2439 = vmatprep.subr.bf16.mxu0 0
  %2440 = vmatpush1.bf16.msra.mxu0 %v1851
  %2441 = vmatprep.subr.bf16.mxu0 0
  %2442 = vmatpush1.bf16.msra.mxu0 %v1850
  %2443 = vmatprep.subr.bf16.mxu0 0
  %2444 = vmatpush1.bf16.msra.mxu0 %v1849
  %2445 = vmatprep.subr.bf16.mxu0 0
  %2446 = vmatpush1.bf16.msra.mxu0 %v1848
  %2447 = vmatprep.subr.bf16.mxu0 0
  %2448 = vmatpush1.bf16.msra.mxu0 %v1847
  %2449 = vmatprep.subr.bf16.mxu0 0
  %2450 = vmatpush1.bf16.msra.mxu0 %v1846
  %2451 = vmatprep.subr.bf16.mxu0 0
  %2452 = vmatpush1.bf16.msra.mxu0 %v1845
  %2453 = vmatprep.subr.bf16.mxu0 0
  %2454 = vmatpush2.bf16.msra.mxu0 %v1860
  %2455 = vmatprep.subr.bf16.mxu0 0
  %2456 = vmatpush2.bf16.msra.mxu0 %v1859
  %2457 = vmatprep.subr.bf16.mxu0 0
  %2458 = vmatpush2.bf16.msra.mxu0 %v1858
  %2459 = vmatprep.subr.bf16.mxu0 0
  %2460 = vmatpush2.bf16.msra.mxu0 %v1857
  %2461 = vmatprep.subr.bf16.mxu0 0
  %2462 = vmatpush2.bf16.msra.mxu0 %v1856
  %2463 = vmatprep.subr.bf16.mxu0 0
  %2464 = vmatpush2.bf16.msra.mxu0 %v1855
  %2465 = vmatprep.subr.bf16.mxu0 0
  %2466 = vmatpush2.bf16.msra.mxu0 %v1854
  %2467 = vmatprep.subr.bf16.mxu0 0
  %2468 = vmatpush2.bf16.msra.mxu0 %v1853
  %2469 = vmatprep.mubr.bf16.mxu0 %v790
  %2470 = vmatmul.mubr.bf16.gmra.mxu0 %v789
  %v2471 = vpop.f32.mrf.mxu0
  %v2472 = vadd.f32 %v2408, %v2471
  %v2473 = vpop.f32.mrf.mxu0
  %v2474 = vpop.f32.mrf.mxu0
  %v2475 = vadd.f32 %v2411, %v2474
  %v2476 = vpop.f32.mrf.mxu0
  %2477 = vmatprep.mubr.bf16.mxu0 %v815
  %2478 = vmatmul.mubr.bf16.gmra.mxu0 %v814
  %v2479 = vpop.f32.mrf.mxu0
  %v2480 = vadd.f32 %v2416, %v2479
  %v2481 = vpop.f32.mrf.mxu0
  %v2482 = vpop.f32.mrf.mxu0
  %v2483 = vadd.f32 %v2419, %v2482
  %v2484 = vpop.f32.mrf.mxu0
  %2485 = vmatprep.mubr.bf16.mxu0 %v840
  %2486 = vmatmul.mubr.bf16.gmra.mxu0 %v839
  %v2487 = vpop.f32.mrf.mxu0
  %v2488 = vadd.f32 %v2424, %v2487
  %v2489 = vpop.f32.mrf.mxu0
  %v2490 = vpop.f32.mrf.mxu0
  %v2491 = vadd.f32 %v2427, %v2490
  %v2492 = vpop.f32.mrf.mxu0
  %2493 = vmatprep.mubr.bf16.mxu0 %v865
  %2494 = vmatmul.mubr.bf16.gmra.mxu0 %v864
  %v2495 = vpop.f32.mrf.mxu0
  %v2496 = vadd.f32 %v2432, %v2495
  %v2497 = vpop.f32.mrf.mxu0
  %v2498 = vpop.f32.mrf.mxu0
  %v2499 = vpop.f32.mrf.mxu0
  %2500 = vdwg.mxu0
  %2501 = vmatprep.subr.bf16.mxu0 0
  %2502 = vmatpush1.bf16.msra.mxu0 %v1868
  %2503 = vmatprep.subr.bf16.mxu0 0
  %2504 = vmatpush1.bf16.msra.mxu0 %v1867
  %2505 = vmatprep.subr.bf16.mxu0 0
  %2506 = vmatpush1.bf16.msra.mxu0 %v1866
  %2507 = vmatprep.subr.bf16.mxu0 0
  %2508 = vmatpush1.bf16.msra.mxu0 %v1865
  %2509 = vmatprep.subr.bf16.mxu0 0
  %2510 = vmatpush1.bf16.msra.mxu0 %v1864
  %2511 = vmatprep.subr.bf16.mxu0 0
  %2512 = vmatpush1.bf16.msra.mxu0 %v1863
  %2513 = vmatprep.subr.bf16.mxu0 0
  %2514 = vmatpush1.bf16.msra.mxu0 %v1862
  %2515 = vmatprep.subr.bf16.mxu0 0
  %2516 = vmatpush1.bf16.msra.mxu0 %v1861
  %2517 = vmatprep.subr.bf16.mxu0 0
  %2518 = vmatpush2.bf16.msra.mxu0 %v1876
  %2519 = vmatprep.subr.bf16.mxu0 0
  %2520 = vmatpush2.bf16.msra.mxu0 %v1875
  %2521 = vmatprep.subr.bf16.mxu0 0
  %2522 = vmatpush2.bf16.msra.mxu0 %v1874
  %2523 = vmatprep.subr.bf16.mxu0 0
  %2524 = vmatpush2.bf16.msra.mxu0 %v1873
  %2525 = vmatprep.subr.bf16.mxu0 0
  %2526 = vmatpush2.bf16.msra.mxu0 %v1872
  %2527 = vmatprep.subr.bf16.mxu0 0
  %2528 = vmatpush2.bf16.msra.mxu0 %v1871
  %2529 = vmatprep.subr.bf16.mxu0 0
  %2530 = vmatpush2.bf16.msra.mxu0 %v1870
  %2531 = vmatprep.subr.bf16.mxu0 0
  %2532 = vmatpush2.bf16.msra.mxu0 %v1869
  %2533 = vmatprep.mubr.bf16.mxu0 %v792
  %2534 = vmatmul.mubr.bf16.gmra.mxu0 %v791
  %v2535 = vpop.f32.mrf.mxu0
  %v2536 = vadd.f32 %v2472, %v2535
  %v2537 = vpop.f32.mrf.mxu0
  %v2538 = vpop.f32.mrf.mxu0
  %v2539 = vadd.f32 %v2475, %v2538
  %v2540 = vpop.f32.mrf.mxu0
  %2541 = vmatprep.mubr.bf16.mxu0 %v817
  %2542 = vmatmul.mubr.bf16.gmra.mxu0 %v816
  %v2543 = vpop.f32.mrf.mxu0
  %v2544 = vadd.f32 %v2480, %v2543
  %v2545 = vpop.f32.mrf.mxu0
  %v2546 = vpop.f32.mrf.mxu0
  %v2547 = vadd.f32 %v2483, %v2546
  %v2548 = vpop.f32.mrf.mxu0
  %2549 = vmatprep.mubr.bf16.mxu0 %v842
  %2550 = vmatmul.mubr.bf16.gmra.mxu0 %v841
  %v2551 = vpop.f32.mrf.mxu0
  %v2552 = vadd.f32 %v2488, %v2551
  %v2553 = vpop.f32.mrf.mxu0
  %v2554 = vpop.f32.mrf.mxu0
  %v2555 = vadd.f32 %v2491, %v2554
  %v2556 = vpop.f32.mrf.mxu0
  %2557 = vmatprep.mubr.bf16.mxu0 %v867
  %2558 = vmatmul.mubr.bf16.gmra.mxu0 %v866
  %v2559 = vpop.f32.mrf.mxu0
  %v2560 = vadd.f32 %v2496, %v2559
  %v2561 = vpop.f32.mrf.mxu0
  %v2562 = vpop.f32.mrf.mxu0
  %v2563 = vpop.f32.mrf.mxu0
  %2564 = vdwg.mxu0
  %2565 = vmatprep.subr.bf16.mxu0 0
  %2566 = vmatpush1.bf16.msra.mxu0 %v1884
  %2567 = vmatprep.subr.bf16.mxu0 0
  %2568 = vmatpush1.bf16.msra.mxu0 %v1883
  %2569 = vmatprep.subr.bf16.mxu0 0
  %2570 = vmatpush1.bf16.msra.mxu0 %v1882
  %2571 = vmatprep.subr.bf16.mxu0 0
  %2572 = vmatpush1.bf16.msra.mxu0 %v1881
  %2573 = vmatprep.subr.bf16.mxu0 0
  %2574 = vmatpush1.bf16.msra.mxu0 %v1880
  %2575 = vmatprep.subr.bf16.mxu0 0
  %2576 = vmatpush1.bf16.msra.mxu0 %v1879
  %2577 = vmatprep.subr.bf16.mxu0 0
  %2578 = vmatpush1.bf16.msra.mxu0 %v1878
  %2579 = vmatprep.subr.bf16.mxu0 0
  %2580 = vmatpush1.bf16.msra.mxu0 %v1877
  %2581 = vmatprep.subr.bf16.mxu0 0
  %2582 = vmatpush2.bf16.msra.mxu0 %v1892
  %2583 = vmatprep.subr.bf16.mxu0 0
  %2584 = vmatpush2.bf16.msra.mxu0 %v1891
  %2585 = vmatprep.subr.bf16.mxu0 0
  %2586 = vmatpush2.bf16.msra.mxu0 %v1890
  %2587 = vmatprep.subr.bf16.mxu0 0
  %2588 = vmatpush2.bf16.msra.mxu0 %v1889
  %2589 = vmatprep.subr.bf16.mxu0 0
  %2590 = vmatpush2.bf16.msra.mxu0 %v1888
  %2591 = vmatprep.subr.bf16.mxu0 0
  %2592 = vmatpush2.bf16.msra.mxu0 %v1887
  %2593 = vmatprep.subr.bf16.mxu0 0
  %2594 = vmatpush2.bf16.msra.mxu0 %v1886
  %2595 = vmatprep.subr.bf16.mxu0 0
  %2596 = vmatpush2.bf16.msra.mxu0 %v1885
  %2597 = vmatprep.mubr.bf16.mxu0 %v794
  %2598 = vmatmul.mubr.bf16.gmra.mxu0 %v793
  %v2599 = vpop.f32.mrf.mxu0
  %v2600 = vadd.f32 %v2536, %v2599
  %v2601 = vpop.f32.mrf.mxu0
  %v2602 = vpop.f32.mrf.mxu0
  %v2603 = vadd.f32 %v2539, %v2602
  %v2604 = vpop.f32.mrf.mxu0
  %2605 = vmatprep.mubr.bf16.mxu0 %v819
  %2606 = vmatmul.mubr.bf16.gmra.mxu0 %v818
  %v2607 = vpop.f32.mrf.mxu0
  %v2608 = vadd.f32 %v2544, %v2607
  %v2609 = vpop.f32.mrf.mxu0
  %v2610 = vpop.f32.mrf.mxu0
  %v2611 = vadd.f32 %v2547, %v2610
  %v2612 = vpop.f32.mrf.mxu0
  %2613 = vmatprep.mubr.bf16.mxu0 %v844
  %2614 = vmatmul.mubr.bf16.gmra.mxu0 %v843
  %v2615 = vpop.f32.mrf.mxu0
  %v2616 = vadd.f32 %v2552, %v2615
  %v2617 = vpop.f32.mrf.mxu0
  %v2618 = vpop.f32.mrf.mxu0
  %v2619 = vadd.f32 %v2555, %v2618
  %v2620 = vpop.f32.mrf.mxu0
  %2621 = vmatprep.mubr.bf16.mxu0 %v869
  %2622 = vmatmul.mubr.bf16.gmra.mxu0 %v868
  %v2623 = vpop.f32.mrf.mxu0
  %v2624 = vadd.f32 %v2560, %v2623
  %v2625 = vpop.f32.mrf.mxu0
  %v2626 = vpop.f32.mrf.mxu0
  %v2627 = vpop.f32.mrf.mxu0
  %2628 = vdwg.mxu0
  %2629 = vmatprep.subr.bf16.mxu0 0
  %2630 = vmatpush1.bf16.msra.mxu0 %v1900
  %2631 = vmatprep.subr.bf16.mxu0 0
  %2632 = vmatpush1.bf16.msra.mxu0 %v1899
  %2633 = vmatprep.subr.bf16.mxu0 0
  %2634 = vmatpush1.bf16.msra.mxu0 %v1898
  %2635 = vmatprep.subr.bf16.mxu0 0
  %2636 = vmatpush1.bf16.msra.mxu0 %v1897
  %2637 = vmatprep.subr.bf16.mxu0 0
  %2638 = vmatpush1.bf16.msra.mxu0 %v1896
  %2639 = vmatprep.subr.bf16.mxu0 0
  %2640 = vmatpush1.bf16.msra.mxu0 %v1895
  %2641 = vmatprep.subr.bf16.mxu0 0
  %2642 = vmatpush1.bf16.msra.mxu0 %v1894
  %2643 = vmatprep.subr.bf16.mxu0 0
  %2644 = vmatpush1.bf16.msra.mxu0 %v1893
  %2645 = vmatprep.subr.bf16.mxu0 0
  %2646 = vmatpush2.bf16.msra.mxu0 %v1908
  %2647 = vmatprep.subr.bf16.mxu0 0
  %2648 = vmatpush2.bf16.msra.mxu0 %v1907
  %2649 = vmatprep.subr.bf16.mxu0 0
  %2650 = vmatpush2.bf16.msra.mxu0 %v1906
  %2651 = vmatprep.subr.bf16.mxu0 0
  %2652 = vmatpush2.bf16.msra.mxu0 %v1905
  %2653 = vmatprep.subr.bf16.mxu0 0
  %2654 = vmatpush2.bf16.msra.mxu0 %v1904
  %2655 = vmatprep.subr.bf16.mxu0 0
  %2656 = vmatpush2.bf16.msra.mxu0 %v1903
  %2657 = vmatprep.subr.bf16.mxu0 0
  %2658 = vmatpush2.bf16.msra.mxu0 %v1902
  %2659 = vmatprep.subr.bf16.mxu0 0
  %2660 = vmatpush2.bf16.msra.mxu0 %v1901
  %2661 = vmatprep.mubr.bf16.mxu0 %v796
  %2662 = vmatmul.mubr.bf16.gmra.mxu0 %v795
  %v2663 = vpop.f32.mrf.mxu0
  %v2664 = vadd.f32 %v2600, %v2663
  %v2665 = vpop.f32.mrf.mxu0
  %v2666 = vpop.f32.mrf.mxu0
  %v2667 = vadd.f32 %v2603, %v2666
  %v2668 = vpop.f32.mrf.mxu0
  %2669 = vmatprep.mubr.bf16.mxu0 %v821
  %2670 = vmatmul.mubr.bf16.gmra.mxu0 %v820
  %v2671 = vpop.f32.mrf.mxu0
  %v2672 = vadd.f32 %v2608, %v2671
  %v2673 = vpop.f32.mrf.mxu0
  %v2674 = vpop.f32.mrf.mxu0
  %v2675 = vadd.f32 %v2611, %v2674
  %v2676 = vpop.f32.mrf.mxu0
  %2677 = vmatprep.mubr.bf16.mxu0 %v846
  %2678 = vmatmul.mubr.bf16.gmra.mxu0 %v845
  %v2679 = vpop.f32.mrf.mxu0
  %v2680 = vadd.f32 %v2616, %v2679
  %v2681 = vpop.f32.mrf.mxu0
  %v2682 = vpop.f32.mrf.mxu0
  %v2683 = vadd.f32 %v2619, %v2682
  %v2684 = vpop.f32.mrf.mxu0
  %2685 = vmatprep.mubr.bf16.mxu0 %v871
  %2686 = vmatmul.mubr.bf16.gmra.mxu0 %v870
  %v2687 = vpop.f32.mrf.mxu0
  %v2688 = vadd.f32 %v2624, %v2687
  %v2689 = vpop.f32.mrf.mxu0
  %v2690 = vpop.f32.mrf.mxu0
  %v2691 = vpop.f32.mrf.mxu0
  %2692 = vdwg.mxu0
  %2693 = vmatprep.subr.bf16.mxu0 0
  %2694 = vmatpush1.bf16.msra.mxu0 %v1916
  %2695 = vmatprep.subr.bf16.mxu0 0
  %2696 = vmatpush1.bf16.msra.mxu0 %v1915
  %2697 = vmatprep.subr.bf16.mxu0 0
  %2698 = vmatpush1.bf16.msra.mxu0 %v1914
  %2699 = vmatprep.subr.bf16.mxu0 0
  %2700 = vmatpush1.bf16.msra.mxu0 %v1913
  %2701 = vmatprep.subr.bf16.mxu0 0
  %2702 = vmatpush1.bf16.msra.mxu0 %v1912
  %2703 = vmatprep.subr.bf16.mxu0 0
  %2704 = vmatpush1.bf16.msra.mxu0 %v1911
  %2705 = vmatprep.subr.bf16.mxu0 0
  %2706 = vmatpush1.bf16.msra.mxu0 %v1910
  %2707 = vmatprep.subr.bf16.mxu0 0
  %2708 = vmatpush1.bf16.msra.mxu0 %v1909
  %2709 = vmatprep.subr.bf16.mxu0 0
  %2710 = vmatpush2.bf16.msra.mxu0 %v1924
  %2711 = vmatprep.subr.bf16.mxu0 0
  %2712 = vmatpush2.bf16.msra.mxu0 %v1923
  %2713 = vmatprep.subr.bf16.mxu0 0
  %2714 = vmatpush2.bf16.msra.mxu0 %v1922
  %2715 = vmatprep.subr.bf16.mxu0 0
  %2716 = vmatpush2.bf16.msra.mxu0 %v1921
  %2717 = vmatprep.subr.bf16.mxu0 0
  %2718 = vmatpush2.bf16.msra.mxu0 %v1920
  %2719 = vmatprep.subr.bf16.mxu0 0
  %2720 = vmatpush2.bf16.msra.mxu0 %v1919
  %2721 = vmatprep.subr.bf16.mxu0 0
  %2722 = vmatpush2.bf16.msra.mxu0 %v1918
  %2723 = vmatprep.subr.bf16.mxu0 0
  %2724 = vmatpush2.bf16.msra.mxu0 %v1917
  %2725 = vmatprep.mubr.bf16.mxu0 %v798
  %2726 = vmatmul.mubr.bf16.gmra.mxu0 %v797
  %v2727 = vpop.f32.mrf.mxu0
  %v2728 = vadd.f32 %v2664, %v2727
  %v2729 = vpop.f32.mrf.mxu0
  %v2730 = vpop.f32.mrf.mxu0
  %v2731 = vadd.f32 %v2667, %v2730
  %v2732 = vpop.f32.mrf.mxu0
  %2733 = vmatprep.mubr.bf16.mxu0 %v823
  %2734 = vmatmul.mubr.bf16.gmra.mxu0 %v822
  %v2735 = vpop.f32.mrf.mxu0
  %v2736 = vadd.f32 %v2672, %v2735
  %v2737 = vpop.f32.mrf.mxu0
  %v2738 = vpop.f32.mrf.mxu0
  %v2739 = vadd.f32 %v2675, %v2738
  %v2740 = vpop.f32.mrf.mxu0
  %2741 = vmatprep.mubr.bf16.mxu0 %v848
  %2742 = vmatmul.mubr.bf16.gmra.mxu0 %v847
  %v2743 = vpop.f32.mrf.mxu0
  %v2744 = vadd.f32 %v2680, %v2743
  %v2745 = vpop.f32.mrf.mxu0
  %v2746 = vpop.f32.mrf.mxu0
  %v2747 = vadd.f32 %v2683, %v2746
  %v2748 = vpop.f32.mrf.mxu0
  %2749 = vmatprep.mubr.bf16.mxu0 %v873
  %2750 = vmatmul.mubr.bf16.gmra.mxu0 %v872
  %v2751 = vpop.f32.mrf.mxu0
  %v2752 = vadd.f32 %v2688, %v2751
  %v2753 = vpop.f32.mrf.mxu0
  %v2754 = vpop.f32.mrf.mxu0
  %v2755 = vpop.f32.mrf.mxu0
  %2756 = vdwg.mxu0
  %2757 = vmatprep.subr.bf16.mxu0 0
  %2758 = vmatpush1.bf16.msra.mxu0 %v1932
  %2759 = vmatprep.subr.bf16.mxu0 0
  %2760 = vmatpush1.bf16.msra.mxu0 %v1931
  %2761 = vmatprep.subr.bf16.mxu0 0
  %2762 = vmatpush1.bf16.msra.mxu0 %v1930
  %2763 = vmatprep.subr.bf16.mxu0 0
  %2764 = vmatpush1.bf16.msra.mxu0 %v1929
  %2765 = vmatprep.subr.bf16.mxu0 0
  %2766 = vmatpush1.bf16.msra.mxu0 %v1928
  %2767 = vmatprep.subr.bf16.mxu0 0
  %2768 = vmatpush1.bf16.msra.mxu0 %v1927
  %2769 = vmatprep.subr.bf16.mxu0 0
  %2770 = vmatpush1.bf16.msra.mxu0 %v1926
  %2771 = vmatprep.subr.bf16.mxu0 0
  %2772 = vmatpush1.bf16.msra.mxu0 %v1925
  %2773 = vmatprep.subr.bf16.mxu0 0
  %2774 = vmatpush2.bf16.msra.mxu0 %v1940
  %2775 = vmatprep.subr.bf16.mxu0 0
  %2776 = vmatpush2.bf16.msra.mxu0 %v1939
  %2777 = vmatprep.subr.bf16.mxu0 0
  %2778 = vmatpush2.bf16.msra.mxu0 %v1938
  %2779 = vmatprep.subr.bf16.mxu0 0
  %2780 = vmatpush2.bf16.msra.mxu0 %v1937
  %2781 = vmatprep.subr.bf16.mxu0 0
  %2782 = vmatpush2.bf16.msra.mxu0 %v1936
  %2783 = vmatprep.subr.bf16.mxu0 0
  %2784 = vmatpush2.bf16.msra.mxu0 %v1935
  %2785 = vmatprep.subr.bf16.mxu0 0
  %2786 = vmatpush2.bf16.msra.mxu0 %v1934
  %2787 = vmatprep.subr.bf16.mxu0 0
  %2788 = vmatpush2.bf16.msra.mxu0 %v1933
  %2789 = vmatprep.mubr.bf16.mxu0 %v800
  %2790 = vmatmul.mubr.bf16.gmra.mxu0 %v799
  %v2791 = vpop.f32.mrf.mxu0
  %v2792 = vadd.f32 %v2728, %v2791
  %v2793 = vpop.f32.mrf.mxu0
  %v2794 = vpop.f32.mrf.mxu0
  %v2795 = vadd.f32 %v2731, %v2794
  %v2796 = vpop.f32.mrf.mxu0
  %2797 = vmatprep.mubr.bf16.mxu0 %v825
  %2798 = vmatmul.mubr.bf16.gmra.mxu0 %v824
  %v2799 = vpop.f32.mrf.mxu0
  %v2800 = vadd.f32 %v2736, %v2799
  %v2801 = vpop.f32.mrf.mxu0
  %v2802 = vpop.f32.mrf.mxu0
  %v2803 = vadd.f32 %v2739, %v2802
  %v2804 = vpop.f32.mrf.mxu0
  %2805 = vmatprep.mubr.bf16.mxu0 %v850
  %2806 = vmatmul.mubr.bf16.gmra.mxu0 %v849
  %v2807 = vpop.f32.mrf.mxu0
  %v2808 = vadd.f32 %v2744, %v2807
  %v2809 = vpop.f32.mrf.mxu0
  %v2810 = vpop.f32.mrf.mxu0
  %v2811 = vadd.f32 %v2747, %v2810
  %v2812 = vpop.f32.mrf.mxu0
  %2813 = vmatprep.mubr.bf16.mxu0 %v875
  %2814 = vmatmul.mubr.bf16.gmra.mxu0 %v874
  %v2815 = vpop.f32.mrf.mxu0
  %v2816 = vadd.f32 %v2752, %v2815
  %v2817 = vpop.f32.mrf.mxu0
  %v2818 = vpop.f32.mrf.mxu0
  %v2819 = vpop.f32.mrf.mxu0
  %2820 = vdwg.mxu0
  %2821 = vmatprep.subr.bf16.mxu0 0
  %2822 = vmatpush1.bf16.msra.mxu0 %v1948
  %2823 = vmatprep.subr.bf16.mxu0 0
  %2824 = vmatpush1.bf16.msra.mxu0 %v1947
  %2825 = vmatprep.subr.bf16.mxu0 0
  %2826 = vmatpush1.bf16.msra.mxu0 %v1946
  %2827 = vmatprep.subr.bf16.mxu0 0
  %2828 = vmatpush1.bf16.msra.mxu0 %v1945
  %2829 = vmatprep.subr.bf16.mxu0 0
  %2830 = vmatpush1.bf16.msra.mxu0 %v1944
  %2831 = vmatprep.subr.bf16.mxu0 0
  %2832 = vmatpush1.bf16.msra.mxu0 %v1943
  %2833 = vmatprep.subr.bf16.mxu0 0
  %2834 = vmatpush1.bf16.msra.mxu0 %v1942
  %2835 = vmatprep.subr.bf16.mxu0 0
  %2836 = vmatpush1.bf16.msra.mxu0 %v1941
  %2837 = vmatprep.subr.bf16.mxu0 0
  %2838 = vmatpush2.bf16.msra.mxu0 %v1956
  %2839 = vmatprep.subr.bf16.mxu0 0
  %2840 = vmatpush2.bf16.msra.mxu0 %v1955
  %2841 = vmatprep.subr.bf16.mxu0 0
  %2842 = vmatpush2.bf16.msra.mxu0 %v1954
  %2843 = vmatprep.subr.bf16.mxu0 0
  %2844 = vmatpush2.bf16.msra.mxu0 %v1953
  %2845 = vmatprep.subr.bf16.mxu0 0
  %2846 = vmatpush2.bf16.msra.mxu0 %v1952
  %2847 = vmatprep.subr.bf16.mxu0 0
  %2848 = vmatpush2.bf16.msra.mxu0 %v1951
  %2849 = vmatprep.subr.bf16.mxu0 0
  %2850 = vmatpush2.bf16.msra.mxu0 %v1950
  %2851 = vmatprep.subr.bf16.mxu0 0
  %2852 = vmatpush2.bf16.msra.mxu0 %v1949
  %2853 = vmatprep.mubr.bf16.mxu0 %v802
  %2854 = vmatmul.mubr.bf16.gmra.mxu0 %v801
  %v2855 = vpop.f32.mrf.mxu0
  %v2856 = vadd.f32 %v2792, %v2855
  %v2857 = vpop.f32.mrf.mxu0
  %v2858 = vpop.f32.mrf.mxu0
  %v2859 = vadd.f32 %v2795, %v2858
  %v2860 = vpop.f32.mrf.mxu0
  %2861 = vmatprep.mubr.bf16.mxu0 %v827
  %2862 = vmatmul.mubr.bf16.gmra.mxu0 %v826
  %v2863 = vpop.f32.mrf.mxu0
  %v2864 = vadd.f32 %v2800, %v2863
  %v2865 = vpop.f32.mrf.mxu0
  %v2866 = vpop.f32.mrf.mxu0
  %v2867 = vadd.f32 %v2803, %v2866
  %v2868 = vpop.f32.mrf.mxu0
  %2869 = vmatprep.mubr.bf16.mxu0 %v852
  %2870 = vmatmul.mubr.bf16.gmra.mxu0 %v851
  %v2871 = vpop.f32.mrf.mxu0
  %v2872 = vadd.f32 %v2808, %v2871
  %v2873 = vpop.f32.mrf.mxu0
  %v2874 = vpop.f32.mrf.mxu0
  %v2875 = vadd.f32 %v2811, %v2874
  %v2876 = vpop.f32.mrf.mxu0
  %2877 = vmatprep.mubr.bf16.mxu0 %v877
  %2878 = vmatmul.mubr.bf16.gmra.mxu0 %v876
  %v2879 = vpop.f32.mrf.mxu0
  %v2880 = vadd.f32 %v2816, %v2879
  %v2881 = vpop.f32.mrf.mxu0
  %v2882 = vpop.f32.mrf.mxu0
  %v2883 = vpop.f32.mrf.mxu0
  %2884 = vdwg.mxu0
  %2885 = vmatprep.subr.bf16.mxu0 0
  %2886 = vmatpush1.bf16.msra.mxu0 %v1964
  %2887 = vmatprep.subr.bf16.mxu0 0
  %2888 = vmatpush1.bf16.msra.mxu0 %v1963
  %2889 = vmatprep.subr.bf16.mxu0 0
  %2890 = vmatpush1.bf16.msra.mxu0 %v1962
  %2891 = vmatprep.subr.bf16.mxu0 0
  %2892 = vmatpush1.bf16.msra.mxu0 %v1961
  %2893 = vmatprep.subr.bf16.mxu0 0
  %2894 = vmatpush1.bf16.msra.mxu0 %v1960
  %2895 = vmatprep.subr.bf16.mxu0 0
  %2896 = vmatpush1.bf16.msra.mxu0 %v1959
  %2897 = vmatprep.subr.bf16.mxu0 0
  %2898 = vmatpush1.bf16.msra.mxu0 %v1958
  %2899 = vmatprep.subr.bf16.mxu0 0
  %2900 = vmatpush1.bf16.msra.mxu0 %v1957
  %2901 = vmatprep.subr.bf16.mxu0 0
  %2902 = vmatpush2.bf16.msra.mxu0 %v1972
  %2903 = vmatprep.subr.bf16.mxu0 0
  %2904 = vmatpush2.bf16.msra.mxu0 %v1971
  %2905 = vmatprep.subr.bf16.mxu0 0
  %2906 = vmatpush2.bf16.msra.mxu0 %v1970
  %2907 = vmatprep.subr.bf16.mxu0 0
  %2908 = vmatpush2.bf16.msra.mxu0 %v1969
  %2909 = vmatprep.subr.bf16.mxu0 0
  %2910 = vmatpush2.bf16.msra.mxu0 %v1968
  %2911 = vmatprep.subr.bf16.mxu0 0
  %2912 = vmatpush2.bf16.msra.mxu0 %v1967
  %2913 = vmatprep.subr.bf16.mxu0 0
  %2914 = vmatpush2.bf16.msra.mxu0 %v1966
  %2915 = vmatprep.subr.bf16.mxu0 0
  %2916 = vmatpush2.bf16.msra.mxu0 %v1965
  %2917 = vmatprep.mubr.bf16.mxu0 %v804
  %2918 = vmatmul.mubr.bf16.gmra.mxu0 %v803
  %v2919 = vpop.f32.mrf.mxu0
  %v2920 = vadd.f32 %v2856, %v2919
  %v2921 = vpop.f32.mrf.mxu0
  %v2922 = vpop.f32.mrf.mxu0
  %v2923 = vadd.f32 %v2859, %v2922
  %v2924 = vpop.f32.mrf.mxu0
  %2925 = vmatprep.mubr.bf16.mxu0 %v829
  %2926 = vmatmul.mubr.bf16.gmra.mxu0 %v828
  %v2927 = vpop.f32.mrf.mxu0
  %v2928 = vadd.f32 %v2864, %v2927
  %v2929 = vpop.f32.mrf.mxu0
  %v2930 = vpop.f32.mrf.mxu0
  %v2931 = vadd.f32 %v2867, %v2930
  %v2932 = vpop.f32.mrf.mxu0
  %2933 = vmatprep.mubr.bf16.mxu0 %v854
  %2934 = vmatmul.mubr.bf16.gmra.mxu0 %v853
  %v2935 = vpop.f32.mrf.mxu0
  %v2936 = vadd.f32 %v2872, %v2935
  %v2937 = vpop.f32.mrf.mxu0
  %v2938 = vpop.f32.mrf.mxu0
  %v2939 = vadd.f32 %v2875, %v2938
  %v2940 = vpop.f32.mrf.mxu0
  %2941 = vmatprep.mubr.bf16.mxu0 %v879
  %2942 = vmatmul.mubr.bf16.gmra.mxu0 %v878
  %v2943 = vpop.f32.mrf.mxu0
  %v2944 = vadd.f32 %v2880, %v2943
  %v2945 = vpop.f32.mrf.mxu0
  %v2946 = vpop.f32.mrf.mxu0
  %v2947 = vpop.f32.mrf.mxu0
  %2948 = vdwg.mxu0
  %2949 = vmatprep.subr.bf16.mxu0 0
  %2950 = vmatpush1.bf16.msra.mxu0 %v1980
  %2951 = vmatprep.subr.bf16.mxu0 0
  %2952 = vmatpush1.bf16.msra.mxu0 %v1979
  %2953 = vmatprep.subr.bf16.mxu0 0
  %2954 = vmatpush1.bf16.msra.mxu0 %v1978
  %2955 = vmatprep.subr.bf16.mxu0 0
  %2956 = vmatpush1.bf16.msra.mxu0 %v1977
  %2957 = vmatprep.subr.bf16.mxu0 0
  %2958 = vmatpush1.bf16.msra.mxu0 %v1976
  %2959 = vmatprep.subr.bf16.mxu0 0
  %2960 = vmatpush1.bf16.msra.mxu0 %v1975
  %2961 = vmatprep.subr.bf16.mxu0 0
  %2962 = vmatpush1.bf16.msra.mxu0 %v1974
  %2963 = vmatprep.subr.bf16.mxu0 0
  %2964 = vmatpush1.bf16.msra.mxu0 %v1973
  %2965 = vmatprep.subr.bf16.mxu0 0
  %2966 = vmatpush2.bf16.msra.mxu0 0
  %2967 = vmatprep.subr.bf16.mxu0 0
  %2968 = vmatpush2.bf16.msra.mxu0 0
  %2969 = vmatprep.subr.bf16.mxu0 0
  %2970 = vmatpush2.bf16.msra.mxu0 0
  %2971 = vmatprep.subr.bf16.mxu0 0
  %2972 = vmatpush2.bf16.msra.mxu0 0
  %2973 = vmatprep.subr.bf16.mxu0 0
  %2974 = vmatpush2.bf16.msra.mxu0 0
  %2975 = vmatprep.subr.bf16.mxu0 0
  %2976 = vmatpush2.bf16.msra.mxu0 0
  %2977 = vmatprep.subr.bf16.mxu0 0
  %2978 = vmatpush2.bf16.msra.mxu0 0
  %2979 = vmatprep.subr.bf16.mxu0 0
  %2980 = vmatpush2.bf16.msra.mxu0 0
  %2981 = vmatprep.mubr.bf16.mxu0 0
  %2982 = vmatmul.mubr.bf16.gmra.mxu0 %v805
  %v2983 = vpop.f32.mrf.mxu0
  %v2984 = vadd.f32 %v2920, %v2983
  %v2985 = vpop.f32.mrf.mxu0
  %v2986 = vpop.f32.mrf.mxu0
  %v2987 = vadd.f32 %v2923, %v2986
  %v2988 = vpop.f32.mrf.mxu0
  %2989 = vmatprep.mubr.bf16.mxu0 0
  %2990 = vmatmul.mubr.bf16.gmra.mxu0 %v830
  %v2991 = vpop.f32.mrf.mxu0
  %v2992 = vadd.f32 %v2928, %v2991
  %v2993 = vpop.f32.mrf.mxu0
  %v2994 = vpop.f32.mrf.mxu0
  %v2995 = vadd.f32 %v2931, %v2994
  %v2996 = vpop.f32.mrf.mxu0
  %2997 = vmatprep.mubr.bf16.mxu0 0
  %2998 = vmatmul.mubr.bf16.gmra.mxu0 %v855
  %v2999 = vpop.f32.mrf.mxu0
  %v3000 = vadd.f32 %v2936, %v2999
  %v3001 = vpop.f32.mrf.mxu0
  %v3002 = vpop.f32.mrf.mxu0
  %v3003 = vadd.f32 %v2939, %v3002
  %v3004 = vpop.f32.mrf.mxu0
  %3005 = vmatprep.mubr.bf16.mxu0 0
  %3006 = vmatmul.mubr.bf16.gmra.mxu0 %v880
  %v3007 = vpop.f32.mrf.mxu0
  %v3008 = vadd.f32 %v2944, %v3007
  %v3009 = vpop.f32.mrf.mxu0
  %v3010 = vpop.f32.mrf.mxu0
  %v3011 = vpop.f32.mrf.mxu0
  %3012 = vdwg.mxu0
  %v3013 = vld [vmem:[%s1] sm:$0xff]
  %v3014 = vld [vmem:[%s1 + $0x8] sm:$0xff]
  %v3015 = vld [vmem:[%s1 + $0x10] sm:$0xff]
  %v3016 = vld [vmem:[%s1 + $0x18] sm:$0xff]
  %v3017 = vld [vmem:[%s1 + $0x20] sm:$0xff]
  %v3018 = vld [vmem:[%s1 + $0x28] sm:$0xff]
  %v3019 = vld [vmem:[%s1 + $0x30] sm:$0xff]
  %v3020 = vld [vmem:[%s1 + $0x38] sm:$0xff]
  %v3021 = vld [vmem:[%s1 + $0x40] sm:$0xff]
  %v3022 = vld [vmem:[%s1 + $0x48] sm:$0xff]
  %v3023 = vld [vmem:[%s1 + $0x50] sm:$0xff]
  %v3024 = vld [vmem:[%s1 + $0x58] sm:$0xff]
  %v3025 = vld [vmem:[%s1 + $0x60] sm:$0xf]
  %v3026 = vld [vmem:[%s1 + $0x64] sm:$0xff]
  %v3027 = vld [vmem:[%s1 + $0x6c] sm:$0xff]
  %v3028 = vld [vmem:[%s1 + $0x74] sm:$0xff]
  %v3029 = vld [vmem:[%s1 + $0x7c] sm:$0xff]
  %v3030 = vld [vmem:[%s1 + $0x84] sm:$0xff]
  %v3031 = vld [vmem:[%s1 + $0x8c] sm:$0xff]
  %v3032 = vld [vmem:[%s1 + $0x94] sm:$0xff]
  %v3033 = vld [vmem:[%s1 + $0x9c] sm:$0xff]
  %v3034 = vld [vmem:[%s1 + $0xa4] sm:$0xff]
  %v3035 = vld [vmem:[%s1 + $0xac] sm:$0xff]
  %v3036 = vld [vmem:[%s1 + $0xb4] sm:$0xff]
  %v3037 = vld [vmem:[%s1 + $0xbc] sm:$0xff]
  %v3038 = vld [vmem:[%s1 + $0xc4] sm:$0xf]
  %v3039 = vld [vmem:[%s1 + $0xc8] sm:$0xff]
  %v3040 = vld [vmem:[%s1 + $0xd0] sm:$0xff]
  %v3041 = vld [vmem:[%s1 + $0xd8] sm:$0xff]
  %v3042 = vld [vmem:[%s1 + $0xe0] sm:$0xff]
  %v3043 = vld [vmem:[%s1 + $0xe8] sm:$0xff]
  %v3044 = vld [vmem:[%s1 + $0xf0] sm:$0xff]
  %v3045 = vld [vmem:[%s1 + $0xf8] sm:$0xff]
  %v3046 = vld [vmem:[%s1 + $0x100] sm:$0xff]
  %v3047 = vld [vmem:[%s1 + $0x108] sm:$0xff]
  %v3048 = vld [vmem:[%s1 + $0x110] sm:$0xff]
  %v3049 = vld [vmem:[%s1 + $0x118] sm:$0xff]
  %v3050 = vld [vmem:[%s1 + $0x120] sm:$0xff]
  %v3051 = vld [vmem:[%s1 + $0x128] sm:$0xf]
  %v3052 = vld [vmem:[%s1 + $0x12c] sm:$0xff]
  %v3053 = vld [vmem:[%s1 + $0x134] sm:$0xff]
  %v3054 = vld [vmem:[%s1 + $0x13c] sm:$0xff]
  %v3055 = vld [vmem:[%s1 + $0x144] sm:$0xff]
  %v3056 = vld [vmem:[%s1 + $0x14c] sm:$0xff]
  %v3057 = vld [vmem:[%s1 + $0x154] sm:$0xff]
  %v3058 = vld [vmem:[%s1 + $0x15c] sm:$0xff]
  %v3059 = vld [vmem:[%s1 + $0x164] sm:$0xff]
  %v3060 = vld [vmem:[%s1 + $0x16c] sm:$0xff]
  %v3061 = vld [vmem:[%s1 + $0x174] sm:$0xff]
  %v3062 = vld [vmem:[%s1 + $0x17c] sm:$0xff]
  %v3063 = vld [vmem:[%s1 + $0x184] sm:$0xff]
  %v3064 = vld [vmem:[%s1 + $0x18c] sm:$0xf]
  %v3065 = vld [vmem:[%s1 + $0x190] sm:$0xff]
  %v3066 = vld [vmem:[%s1 + $0x198] sm:$0xff]
  %v3067 = vld [vmem:[%s1 + $0x1a0] sm:$0xff]
  %v3068 = vld [vmem:[%s1 + $0x1a8] sm:$0xff]
  %v3069 = vld [vmem:[%s1 + $0x1b0] sm:$0xff]
  %v3070 = vld [vmem:[%s1 + $0x1b8] sm:$0xff]
  %v3071 = vld [vmem:[%s1 + $0x1c0] sm:$0xff]
  %v3072 = vld [vmem:[%s1 + $0x1c8] sm:$0xff]
  %v3073 = vld [vmem:[%s1 + $0x1d0] sm:$0xff]
  %v3074 = vld [vmem:[%s1 + $0x1d8] sm:$0xff]
  %v3075 = vld [vmem:[%s1 + $0x1e0] sm:$0xff]
  %v3076 = vld [vmem:[%s1 + $0x1e8] sm:$0xff]
  %v3077 = vld [vmem:[%s1 + $0x1f0] sm:$0xf]
  %v3078 = vld [vmem:[%s1 + $0x1f4] sm:$0xff]
  %v3079 = vld [vmem:[%s1 + $0x1fc] sm:$0xff]
  %v3080 = vld [vmem:[%s1 + $0x204] sm:$0xff]
  %v3081 = vld [vmem:[%s1 + $0x20c] sm:$0xff]
  %v3082 = vld [vmem:[%s1 + $0x214] sm:$0xff]
  %v3083 = vld [vmem:[%s1 + $0x21c] sm:$0xff]
  %v3084 = vld [vmem:[%s1 + $0x224] sm:$0xff]
  %v3085 = vld [vmem:[%s1 + $0x22c] sm:$0xff]
  %v3086 = vld [vmem:[%s1 + $0x234] sm:$0xff]
  %v3087 = vld [vmem:[%s1 + $0x23c] sm:$0xff]
  %v3088 = vld [vmem:[%s1 + $0x244] sm:$0xff]
  %v3089 = vld [vmem:[%s1 + $0x24c] sm:$0xff]
  %v3090 = vld [vmem:[%s1 + $0x254] sm:$0xf]
  %v3091 = vld [vmem:[%s1 + $0x258] sm:$0x11]
  %v3092 = vld [vmem:[%s1 + $0x260] sm:$0x11]
  %v3093 = vld [vmem:[%s1 + $0x268] sm:$0x11]
  %v3094 = vld [vmem:[%s1 + $0x270] sm:$0x11]
  %v3095 = vld [vmem:[%s1 + $0x278] sm:$0x11]
  %v3096 = vld [vmem:[%s1 + $0x280] sm:$0x11]
  %v3097 = vld [vmem:[%s1 + $0x288] sm:$0x11]
  %v3098 = vld [vmem:[%s1 + $0x290] sm:$0x11]
  %v3099 = vld [vmem:[%s1 + $0x298] sm:$0x11]
  %v3100 = vld [vmem:[%s1 + $0x2a0] sm:$0x11]
  %v3101 = vld [vmem:[%s1 + $0x2a8] sm:$0x11]
  %v3102 = vld [vmem:[%s1 + $0x2b0] sm:$0x11]
  %v3103 = vld [vmem:[%s1 + $0x2b8] sm:$0x1]
  %v3195 = vunpack.c.l.b16 %v3013
  %v3196 = vunpack.c.h.b16 %v3013
  %v3197 = vunpack.c.l.b16 %v3014
  %v3198 = vunpack.c.h.b16 %v3014
  %v3199 = vunpack.c.l.b16 %v3015
  %v3200 = vunpack.c.h.b16 %v3015
  %v3201 = vunpack.c.l.b16 %v3016
  %v3202 = vunpack.c.h.b16 %v3016
  %v3203 = vunpack.c.l.b16 %v3017
  %v3204 = vunpack.c.h.b16 %v3017
  %v3205 = vunpack.c.l.b16 %v3018
  %v3206 = vunpack.c.h.b16 %v3018
  %v3207 = vunpack.c.l.b16 %v3019
  %v3208 = vunpack.c.h.b16 %v3019
  %v3209 = vunpack.c.l.b16 %v3020
  %v3210 = vunpack.c.h.b16 %v3020
  %v3211 = vunpack.c.l.b16 %v3021
  %v3212 = vunpack.c.h.b16 %v3021
  %v3213 = vunpack.c.l.b16 %v3022
  %v3214 = vunpack.c.h.b16 %v3022
  %v3215 = vunpack.c.l.b16 %v3023
  %v3216 = vunpack.c.h.b16 %v3023
  %v3217 = vunpack.c.l.b16 %v3024
  %v3218 = vunpack.c.h.b16 %v3024
  %v3219 = vunpack.c.l.b16 %v3025
  %v3220 = vunpack.c.l.b16 %v3026
  %v3221 = vunpack.c.h.b16 %v3026
  %v3222 = vunpack.c.l.b16 %v3027
  %v3223 = vunpack.c.h.b16 %v3027
  %v3224 = vunpack.c.l.b16 %v3028
  %v3225 = vunpack.c.h.b16 %v3028
  %v3226 = vunpack.c.l.b16 %v3029
  %v3227 = vunpack.c.h.b16 %v3029
  %v3228 = vunpack.c.l.b16 %v3030
  %v3229 = vunpack.c.h.b16 %v3030
  %v3230 = vunpack.c.l.b16 %v3031
  %v3231 = vunpack.c.h.b16 %v3031
  %v3232 = vunpack.c.l.b16 %v3032
  %v3233 = vunpack.c.h.b16 %v3032
  %v3234 = vunpack.c.l.b16 %v3033
  %v3235 = vunpack.c.h.b16 %v3033
  %v3236 = vunpack.c.l.b16 %v3034
  %v3237 = vunpack.c.h.b16 %v3034
  %v3238 = vunpack.c.l.b16 %v3035
  %v3239 = vunpack.c.h.b16 %v3035
  %v3240 = vunpack.c.l.b16 %v3036
  %v3241 = vunpack.c.h.b16 %v3036
  %v3242 = vunpack.c.l.b16 %v3037
  %v3243 = vunpack.c.h.b16 %v3037
  %v3244 = vunpack.c.l.b16 %v3038
  %v3245 = vunpack.c.l.b16 %v3039
  %v3246 = vunpack.c.h.b16 %v3039
  %v3247 = vunpack.c.l.b16 %v3040
  %v3248 = vunpack.c.h.b16 %v3040
  %v3249 = vunpack.c.l.b16 %v3041
  %v3250 = vunpack.c.h.b16 %v3041
  %v3251 = vunpack.c.l.b16 %v3042
  %v3252 = vunpack.c.h.b16 %v3042
  %v3253 = vunpack.c.l.b16 %v3043
  %v3254 = vunpack.c.h.b16 %v3043
  %v3255 = vunpack.c.l.b16 %v3044
  %v3256 = vunpack.c.h.b16 %v3044
  %v3257 = vunpack.c.l.b16 %v3045
  %v3258 = vunpack.c.h.b16 %v3045
  %v3259 = vunpack.c.l.b16 %v3046
  %v3260 = vunpack.c.h.b16 %v3046
  %v3261 = vunpack.c.l.b16 %v3047
  %v3262 = vunpack.c.h.b16 %v3047
  %v3263 = vunpack.c.l.b16 %v3048
  %v3264 = vunpack.c.h.b16 %v3048
  %v3265 = vunpack.c.l.b16 %v3049
  %v3266 = vunpack.c.h.b16 %v3049
  %v3267 = vunpack.c.l.b16 %v3050
  %v3268 = vunpack.c.h.b16 %v3050
  %v3269 = vunpack.c.l.b16 %v3051
  %v3270 = vunpack.c.l.b16 %v3052
  %v3271 = vunpack.c.h.b16 %v3052
  %v3272 = vunpack.c.l.b16 %v3053
  %v3273 = vunpack.c.h.b16 %v3053
  %v3274 = vunpack.c.l.b16 %v3054
  %v3275 = vunpack.c.h.b16 %v3054
  %v3276 = vunpack.c.l.b16 %v3055
  %v3277 = vunpack.c.h.b16 %v3055
  %v3278 = vunpack.c.l.b16 %v3056
  %v3279 = vunpack.c.h.b16 %v3056
  %v3280 = vunpack.c.l.b16 %v3057
  %v3281 = vunpack.c.h.b16 %v3057
  %v3282 = vunpack.c.l.b16 %v3058
  %v3283 = vunpack.c.h.b16 %v3058
  %v3284 = vunpack.c.l.b16 %v3059
  %v3285 = vunpack.c.h.b16 %v3059
  %v3286 = vunpack.c.l.b16 %v3060
  %v3287 = vunpack.c.h.b16 %v3060
  %v3288 = vunpack.c.l.b16 %v3061
  %v3289 = vunpack.c.h.b16 %v3061
  %v3290 = vunpack.c.l.b16 %v3062
  %v3291 = vunpack.c.h.b16 %v3062
  %v3292 = vunpack.c.l.b16 %v3063
  %v3293 = vunpack.c.h.b16 %v3063
  %v3294 = vunpack.c.l.b16 %v3064
  %v3295 = vunpack.c.l.b16 %v3065
  %v3296 = vunpack.c.h.b16 %v3065
  %v3297 = vunpack.c.l.b16 %v3066
  %v3298 = vunpack.c.h.b16 %v3066
  %v3299 = vunpack.c.l.b16 %v3067
  %v3300 = vunpack.c.h.b16 %v3067
  %v3301 = vunpack.c.l.b16 %v3068
  %v3302 = vunpack.c.h.b16 %v3068
  %v3303 = vunpack.c.l.b16 %v3069
  %v3304 = vunpack.c.h.b16 %v3069
  %v3305 = vunpack.c.l.b16 %v3070
  %v3306 = vunpack.c.h.b16 %v3070
  %v3307 = vunpack.c.l.b16 %v3071
  %v3308 = vunpack.c.h.b16 %v3071
  %v3309 = vunpack.c.l.b16 %v3072
  %v3310 = vunpack.c.h.b16 %v3072
  %v3311 = vunpack.c.l.b16 %v3073
  %v3312 = vunpack.c.h.b16 %v3073
  %v3313 = vunpack.c.l.b16 %v3074
  %v3314 = vunpack.c.h.b16 %v3074
  %v3315 = vunpack.c.l.b16 %v3075
  %v3316 = vunpack.c.h.b16 %v3075
  %v3317 = vunpack.c.l.b16 %v3076
  %v3318 = vunpack.c.h.b16 %v3076
  %v3319 = vunpack.c.l.b16 %v3077
  %v3320 = vunpack.c.l.b16 %v3078
  %v3321 = vunpack.c.h.b16 %v3078
  %v3322 = vunpack.c.l.b16 %v3079
  %v3323 = vunpack.c.h.b16 %v3079
  %v3324 = vunpack.c.l.b16 %v3080
  %v3325 = vunpack.c.h.b16 %v3080
  %v3326 = vunpack.c.l.b16 %v3081
  %v3327 = vunpack.c.h.b16 %v3081
  %v3328 = vunpack.c.l.b16 %v3082
  %v3329 = vunpack.c.h.b16 %v3082
  %v3330 = vunpack.c.l.b16 %v3083
  %v3331 = vunpack.c.h.b16 %v3083
  %v3332 = vunpack.c.l.b16 %v3084
  %v3333 = vunpack.c.h.b16 %v3084
  %v3334 = vunpack.c.l.b16 %v3085
  %v3335 = vunpack.c.h.b16 %v3085
  %v3336 = vunpack.c.l.b16 %v3086
  %v3337 = vunpack.c.h.b16 %v3086
  %v3338 = vunpack.c.l.b16 %v3087
  %v3339 = vunpack.c.h.b16 %v3087
  %v3340 = vunpack.c.l.b16 %v3088
  %v3341 = vunpack.c.h.b16 %v3088
  %v3342 = vunpack.c.l.b16 %v3089
  %v3343 = vunpack.c.h.b16 %v3089
  %v3344 = vunpack.c.l.b16 %v3090
  %v3345 = vunpack.c.l.b16 %v3091
  %v3346 = vunpack.c.h.b16 %v3091
  %v3347 = vunpack.c.l.b16 %v3092
  %v3348 = vunpack.c.h.b16 %v3092
  %v3349 = vunpack.c.l.b16 %v3093
  %v3350 = vunpack.c.h.b16 %v3093
  %v3351 = vunpack.c.l.b16 %v3094
  %v3352 = vunpack.c.h.b16 %v3094
  %v3353 = vunpack.c.l.b16 %v3095
  %v3354 = vunpack.c.h.b16 %v3095
  %v3355 = vunpack.c.l.b16 %v3096
  %v3356 = vunpack.c.h.b16 %v3096
  %v3357 = vunpack.c.l.b16 %v3097
  %v3358 = vunpack.c.h.b16 %v3097
  %v3359 = vunpack.c.l.b16 %v3098
  %v3360 = vunpack.c.h.b16 %v3098
  %v3361 = vunpack.c.l.b16 %v3099
  %v3362 = vunpack.c.h.b16 %v3099
  %v3363 = vunpack.c.l.b16 %v3100
  %v3364 = vunpack.c.h.b16 %v3100
  %v3365 = vunpack.c.l.b16 %v3101
  %v3366 = vunpack.c.h.b16 %v3101
  %v3367 = vunpack.c.l.b16 %v3102
  %v3368 = vunpack.c.h.b16 %v3102
  %v3369 = vunpack.c.l.b16 %v3103
  %v3370 = vpack.c.b16 %v3220, %v3195
  %v3371 = vpack.c.b16 %v3221, %v3196
  %v3372 = vpack.c.b16 %v3222, %v3197
  %v3373 = vpack.c.b16 %v3223, %v3198
  %v3374 = vpack.c.b16 %v3224, %v3199
  %v3375 = vpack.c.b16 %v3225, %v3200
  %v3376 = vpack.c.b16 %v3226, %v3201
  %v3377 = vpack.c.b16 %v3227, %v3202
  %v3378 = vpack.c.b16 %v3228, %v3203
  %v3379 = vpack.c.b16 %v3229, %v3204
  %v3380 = vpack.c.b16 %v3230, %v3205
  %v3381 = vpack.c.b16 %v3231, %v3206
  %v3382 = vpack.c.b16 %v3232, %v3207
  %v3383 = vpack.c.b16 %v3233, %v3208
  %v3384 = vpack.c.b16 %v3234, %v3209
  %v3385 = vpack.c.b16 %v3235, %v3210
  %v3386 = vpack.c.b16 %v3236, %v3211
  %v3387 = vpack.c.b16 %v3237, %v3212
  %v3388 = vpack.c.b16 %v3238, %v3213
  %v3389 = vpack.c.b16 %v3239, %v3214
  %v3390 = vpack.c.b16 %v3240, %v3215
  %v3391 = vpack.c.b16 %v3241, %v3216
  %v3392 = vpack.c.b16 %v3242, %v3217
  %v3393 = vpack.c.b16 %v3243, %v3218
  %v3394 = vpack.c.b16 %v3244, %v3219
  %v3395 = vpack.c.b16 %v3270, %v3245
  %v3396 = vpack.c.b16 %v3271, %v3246
  %v3397 = vpack.c.b16 %v3272, %v3247
  %v3398 = vpack.c.b16 %v3273, %v3248
  %v3399 = vpack.c.b16 %v3274, %v3249
  %v3400 = vpack.c.b16 %v3275, %v3250
  %v3401 = vpack.c.b16 %v3276, %v3251
  %v3402 = vpack.c.b16 %v3277, %v3252
  %v3403 = vpack.c.b16 %v3278, %v3253
  %v3404 = vpack.c.b16 %v3279, %v3254
  %v3405 = vpack.c.b16 %v3280, %v3255
  %v3406 = vpack.c.b16 %v3281, %v3256
  %v3407 = vpack.c.b16 %v3282, %v3257
  %v3408 = vpack.c.b16 %v3283, %v3258
  %v3409 = vpack.c.b16 %v3284, %v3259
  %v3410 = vpack.c.b16 %v3285, %v3260
  %v3411 = vpack.c.b16 %v3286, %v3261
  %v3412 = vpack.c.b16 %v3287, %v3262
  %v3413 = vpack.c.b16 %v3288, %v3263
  %v3414 = vpack.c.b16 %v3289, %v3264
  %v3415 = vpack.c.b16 %v3290, %v3265
  %v3416 = vpack.c.b16 %v3291, %v3266
  %v3417 = vpack.c.b16 %v3292, %v3267
  %v3418 = vpack.c.b16 %v3293, %v3268
  %v3419 = vpack.c.b16 %v3294, %v3269
  %v3420 = vpack.c.b16 %v3320, %v3295
  %v3421 = vpack.c.b16 %v3321, %v3296
  %v3422 = vpack.c.b16 %v3322, %v3297
  %v3423 = vpack.c.b16 %v3323, %v3298
  %v3424 = vpack.c.b16 %v3324, %v3299
  %v3425 = vpack.c.b16 %v3325, %v3300
  %v3426 = vpack.c.b16 %v3326, %v3301
  %v3427 = vpack.c.b16 %v3327, %v3302
  %v3428 = vpack.c.b16 %v3328, %v3303
  %v3429 = vpack.c.b16 %v3329, %v3304
  %v3430 = vpack.c.b16 %v3330, %v3305
  %v3431 = vpack.c.b16 %v3331, %v3306
  %v3432 = vpack.c.b16 %v3332, %v3307
  %v3433 = vpack.c.b16 %v3333, %v3308
  %v3434 = vpack.c.b16 %v3334, %v3309
  %v3435 = vpack.c.b16 %v3335, %v3310
  %v3436 = vpack.c.b16 %v3336, %v3311
  %v3437 = vpack.c.b16 %v3337, %v3312
  %v3438 = vpack.c.b16 %v3338, %v3313
  %v3439 = vpack.c.b16 %v3339, %v3314
  %v3440 = vpack.c.b16 %v3340, %v3315
  %v3441 = vpack.c.b16 %v3341, %v3316
  %v3442 = vpack.c.b16 %v3342, %v3317
  %v3443 = vpack.c.b16 %v3343, %v3318
  %v3444 = vpack.c.b16 %v3344, %v3319
  %v3445 = vpack.c.b16 %v3345, %v3345
  %v3446 = vpack.c.b16 %v3346, %v3346
  %v3447 = vpack.c.b16 %v3347, %v3347
  %v3448 = vpack.c.b16 %v3348, %v3348
  %v3449 = vpack.c.b16 %v3349, %v3349
  %v3450 = vpack.c.b16 %v3350, %v3350
  %v3451 = vpack.c.b16 %v3351, %v3351
  %v3452 = vpack.c.b16 %v3352, %v3352
  %v3453 = vpack.c.b16 %v3353, %v3353
  %v3454 = vpack.c.b16 %v3354, %v3354
  %v3455 = vpack.c.b16 %v3355, %v3355
  %v3456 = vpack.c.b16 %v3356, %v3356
  %v3457 = vpack.c.b16 %v3357, %v3357
  %v3458 = vpack.c.b16 %v3358, %v3358
  %v3459 = vpack.c.b16 %v3359, %v3359
  %v3460 = vpack.c.b16 %v3360, %v3360
  %v3461 = vpack.c.b16 %v3361, %v3361
  %v3462 = vpack.c.b16 %v3362, %v3362
  %v3463 = vpack.c.b16 %v3363, %v3363
  %v3464 = vpack.c.b16 %v3364, %v3364
  %v3465 = vpack.c.b16 %v3365, %v3365
  %v3466 = vpack.c.b16 %v3366, %v3366
  %v3467 = vpack.c.b16 %v3367, %v3367
  %v3468 = vpack.c.b16 %v3368, %v3368
  %v3469 = vpack.c.b16 %v3369, %v3369
  %3570 = vmatprep.subr.bf16.mxu0 0
  %3571 = vmatpush1.bf16.msra.mxu0 %v1788
  %3572 = vmatprep.subr.bf16.mxu0 0
  %3573 = vmatpush1.bf16.msra.mxu0 %v1787
  %3574 = vmatprep.subr.bf16.mxu0 0
  %3575 = vmatpush1.bf16.msra.mxu0 %v1786
  %3576 = vmatprep.subr.bf16.mxu0 0
  %3577 = vmatpush1.bf16.msra.mxu0 %v1785
  %3578 = vmatprep.subr.bf16.mxu0 0
  %3579 = vmatpush1.bf16.msra.mxu0 %v1784
  %3580 = vmatprep.subr.bf16.mxu0 0
  %3581 = vmatpush1.bf16.msra.mxu0 %v1783
  %3582 = vmatprep.subr.bf16.mxu0 0
  %3583 = vmatpush1.bf16.msra.mxu0 %v1782
  %3584 = vmatprep.subr.bf16.mxu0 0
  %3585 = vmatpush1.bf16.msra.mxu0 %v1781
  %3586 = vmatprep.subr.bf16.mxu0 0
  %3587 = vmatpush2.bf16.msra.mxu0 %v1796
  %3588 = vmatprep.subr.bf16.mxu0 0
  %3589 = vmatpush2.bf16.msra.mxu0 %v1795
  %3590 = vmatprep.subr.bf16.mxu0 0
  %3591 = vmatpush2.bf16.msra.mxu0 %v1794
  %3592 = vmatprep.subr.bf16.mxu0 0
  %3593 = vmatpush2.bf16.msra.mxu0 %v1793
  %3594 = vmatprep.subr.bf16.mxu0 0
  %3595 = vmatpush2.bf16.msra.mxu0 %v1792
  %3596 = vmatprep.subr.bf16.mxu0 0
  %3597 = vmatpush2.bf16.msra.mxu0 %v1791
  %3598 = vmatprep.subr.bf16.mxu0 0
  %3599 = vmatpush2.bf16.msra.mxu0 %v1790
  %3600 = vmatprep.subr.bf16.mxu0 0
  %3601 = vmatpush2.bf16.msra.mxu0 %v1789
  %3602 = vmatprep.mubr.bf16.mxu0 %v3371
  %3603 = vmatmul.mubr.bf16.gmra.mxu0 %v3370
  %v3604 = vpop.f32.mrf.mxu0
  %v3605 = vadd.f32 0.0, %v3604
  %v3606 = vpop.f32.mrf.mxu0
  %v3607 = vpop.f32.mrf.mxu0
  %v3608 = vadd.f32 0.0, %v3607
  %v3609 = vpop.f32.mrf.mxu0
  %3610 = vmatprep.mubr.bf16.mxu0 %v3396
  %3611 = vmatmul.mubr.bf16.gmra.mxu0 %v3395
  %v3612 = vpop.f32.mrf.mxu0
  %v3613 = vadd.f32 0.0, %v3612
  %v3614 = vpop.f32.mrf.mxu0
  %v3615 = vpop.f32.mrf.mxu0
  %v3616 = vadd.f32 0.0, %v3615
  %v3617 = vpop.f32.mrf.mxu0
  %3618 = vmatprep.mubr.bf16.mxu0 %v3421
  %3619 = vmatmul.mubr.bf16.gmra.mxu0 %v3420
  %v3620 = vpop.f32.mrf.mxu0
  %v3621 = vadd.f32 0.0, %v3620
  %v3622 = vpop.f32.mrf.mxu0
  %v3623 = vpop.f32.mrf.mxu0
  %v3624 = vadd.f32 0.0, %v3623
  %v3625 = vpop.f32.mrf.mxu0
  %3626 = vmatprep.mubr.bf16.mxu0 %v3446
  %3627 = vmatmul.mubr.bf16.gmra.mxu0 %v3445
  %v3628 = vpop.f32.mrf.mxu0
  %v3629 = vadd.f32 0.0, %v3628
  %v3630 = vpop.f32.mrf.mxu0
  %v3631 = vpop.f32.mrf.mxu0
  %v3632 = vpop.f32.mrf.mxu0
  %3633 = vdwg.mxu0
  %3634 = vmatprep.subr.bf16.mxu0 0
  %3635 = vmatpush1.bf16.msra.mxu0 %v1804
  %3636 = vmatprep.subr.bf16.mxu0 0
  %3637 = vmatpush1.bf16.msra.mxu0 %v1803
  %3638 = vmatprep.subr.bf16.mxu0 0
  %3639 = vmatpush1.bf16.msra.mxu0 %v1802
  %3640 = vmatprep.subr.bf16.mxu0 0
  %3641 = vmatpush1.bf16.msra.mxu0 %v1801
  %3642 = vmatprep.subr.bf16.mxu0 0
  %3643 = vmatpush1.bf16.msra.mxu0 %v1800
  %3644 = vmatprep.subr.bf16.mxu0 0
  %3645 = vmatpush1.bf16.msra.mxu0 %v1799
  %3646 = vmatprep.subr.bf16.mxu0 0
  %3647 = vmatpush1.bf16.msra.mxu0 %v1798
  %3648 = vmatprep.subr.bf16.mxu0 0
  %3649 = vmatpush1.bf16.msra.mxu0 %v1797
  %3650 = vmatprep.subr.bf16.mxu0 0
  %3651 = vmatpush2.bf16.msra.mxu0 %v1812
  %3652 = vmatprep.subr.bf16.mxu0 0
  %3653 = vmatpush2.bf16.msra.mxu0 %v1811
  %3654 = vmatprep.subr.bf16.mxu0 0
  %3655 = vmatpush2.bf16.msra.mxu0 %v1810
  %3656 = vmatprep.subr.bf16.mxu0 0
  %3657 = vmatpush2.bf16.msra.mxu0 %v1809
  %3658 = vmatprep.subr.bf16.mxu0 0
  %3659 = vmatpush2.bf16.msra.mxu0 %v1808
  %3660 = vmatprep.subr.bf16.mxu0 0
  %3661 = vmatpush2.bf16.msra.mxu0 %v1807
  %3662 = vmatprep.subr.bf16.mxu0 0
  %3663 = vmatpush2.bf16.msra.mxu0 %v1806
  %3664 = vmatprep.subr.bf16.mxu0 0
  %3665 = vmatpush2.bf16.msra.mxu0 %v1805
  %3666 = vmatprep.mubr.bf16.mxu0 %v3373
  %3667 = vmatmul.mubr.bf16.gmra.mxu0 %v3372
  %v3668 = vpop.f32.mrf.mxu0
  %v3669 = vadd.f32 %v3605, %v3668
  %v3670 = vpop.f32.mrf.mxu0
  %v3671 = vpop.f32.mrf.mxu0
  %v3672 = vadd.f32 %v3608, %v3671
  %v3673 = vpop.f32.mrf.mxu0
  %3674 = vmatprep.mubr.bf16.mxu0 %v3398
  %3675 = vmatmul.mubr.bf16.gmra.mxu0 %v3397
  %v3676 = vpop.f32.mrf.mxu0
  %v3677 = vadd.f32 %v3613, %v3676
  %v3678 = vpop.f32.mrf.mxu0
  %v3679 = vpop.f32.mrf.mxu0
  %v3680 = vadd.f32 %v3616, %v3679
  %v3681 = vpop.f32.mrf.mxu0
  %3682 = vmatprep.mubr.bf16.mxu0 %v3423
  %3683 = vmatmul.mubr.bf16.gmra.mxu0 %v3422
  %v3684 = vpop.f32.mrf.mxu0
  %v3685 = vadd.f32 %v3621, %v3684
  %v3686 = vpop.f32.mrf.mxu0
  %v3687 = vpop.f32.mrf.mxu0
  %v3688 = vadd.f32 %v3624, %v3687
  %v3689 = vpop.f32.mrf.mxu0
  %3690 = vmatprep.mubr.bf16.mxu0 %v3448
  %3691 = vmatmul.mubr.bf16.gmra.mxu0 %v3447
  %v3692 = vpop.f32.mrf.mxu0
  %v3693 = vadd.f32 %v3629, %v3692
  %v3694 = vpop.f32.mrf.mxu0
  %v3695 = vpop.f32.mrf.mxu0
  %v3696 = vpop.f32.mrf.mxu0
  %3697 = vdwg.mxu0
  %3698 = vmatprep.subr.bf16.mxu0 0
  %3699 = vmatpush1.bf16.msra.mxu0 %v1820
  %3700 = vmatprep.subr.bf16.mxu0 0
  %3701 = vmatpush1.bf16.msra.mxu0 %v1819
  %3702 = vmatprep.subr.bf16.mxu0 0
  %3703 = vmatpush1.bf16.msra.mxu0 %v1818
  %3704 = vmatprep.subr.bf16.mxu0 0
  %3705 = vmatpush1.bf16.msra.mxu0 %v1817
  %3706 = vmatprep.subr.bf16.mxu0 0
  %3707 = vmatpush1.bf16.msra.mxu0 %v1816
  %3708 = vmatprep.subr.bf16.mxu0 0
  %3709 = vmatpush1.bf16.msra.mxu0 %v1815
  %3710 = vmatprep.subr.bf16.mxu0 0
  %3711 = vmatpush1.bf16.msra.mxu0 %v1814
  %3712 = vmatprep.subr.bf16.mxu0 0
  %3713 = vmatpush1.bf16.msra.mxu0 %v1813
  %3714 = vmatprep.subr.bf16.mxu0 0
  %3715 = vmatpush2.bf16.msra.mxu0 %v1828
  %3716 = vmatprep.subr.bf16.mxu0 0
  %3717 = vmatpush2.bf16.msra.mxu0 %v1827
  %3718 = vmatprep.subr.bf16.mxu0 0
  %3719 = vmatpush2.bf16.msra.mxu0 %v1826
  %3720 = vmatprep.subr.bf16.mxu0 0
  %3721 = vmatpush2.bf16.msra.mxu0 %v1825
  %3722 = vmatprep.subr.bf16.mxu0 0
  %3723 = vmatpush2.bf16.msra.mxu0 %v1824
  %3724 = vmatprep.subr.bf16.mxu0 0
  %3725 = vmatpush2.bf16.msra.mxu0 %v1823
  %3726 = vmatprep.subr.bf16.mxu0 0
  %3727 = vmatpush2.bf16.msra.mxu0 %v1822
  %3728 = vmatprep.subr.bf16.mxu0 0
  %3729 = vmatpush2.bf16.msra.mxu0 %v1821
  %3730 = vmatprep.mubr.bf16.mxu0 %v3375
  %3731 = vmatmul.mubr.bf16.gmra.mxu0 %v3374
  %v3732 = vpop.f32.mrf.mxu0
  %v3733 = vadd.f32 %v3669, %v3732
  %v3734 = vpop.f32.mrf.mxu0
  %v3735 = vpop.f32.mrf.mxu0
  %v3736 = vadd.f32 %v3672, %v3735
  %v3737 = vpop.f32.mrf.mxu0
  %3738 = vmatprep.mubr.bf16.mxu0 %v3400
  %3739 = vmatmul.mubr.bf16.gmra.mxu0 %v3399
  %v3740 = vpop.f32.mrf.mxu0
  %v3741 = vadd.f32 %v3677, %v3740
  %v3742 = vpop.f32.mrf.mxu0
  %v3743 = vpop.f32.mrf.mxu0
  %v3744 = vadd.f32 %v3680, %v3743
  %v3745 = vpop.f32.mrf.mxu0
  %3746 = vmatprep.mubr.bf16.mxu0 %v3425
  %3747 = vmatmul.mubr.bf16.gmra.mxu0 %v3424
  %v3748 = vpop.f32.mrf.mxu0
  %v3749 = vadd.f32 %v3685, %v3748
  %v3750 = vpop.f32.mrf.mxu0
  %v3751 = vpop.f32.mrf.mxu0
  %v3752 = vadd.f32 %v3688, %v3751
  %v3753 = vpop.f32.mrf.mxu0
  %3754 = vmatprep.mubr.bf16.mxu0 %v3450
  %3755 = vmatmul.mubr.bf16.gmra.mxu0 %v3449
  %v3756 = vpop.f32.mrf.mxu0
  %v3757 = vadd.f32 %v3693, %v3756
  %v3758 = vpop.f32.mrf.mxu0
  %v3759 = vpop.f32.mrf.mxu0
  %v3760 = vpop.f32.mrf.mxu0
  %3761 = vdwg.mxu0
  %3762 = vmatprep.subr.bf16.mxu0 0
  %3763 = vmatpush1.bf16.msra.mxu0 %v1836
  %3764 = vmatprep.subr.bf16.mxu0 0
  %3765 = vmatpush1.bf16.msra.mxu0 %v1835
  %3766 = vmatprep.subr.bf16.mxu0 0
  %3767 = vmatpush1.bf16.msra.mxu0 %v1834
  %3768 = vmatprep.subr.bf16.mxu0 0
  %3769 = vmatpush1.bf16.msra.mxu0 %v1833
  %3770 = vmatprep.subr.bf16.mxu0 0
  %3771 = vmatpush1.bf16.msra.mxu0 %v1832
  %3772 = vmatprep.subr.bf16.mxu0 0
  %3773 = vmatpush1.bf16.msra.mxu0 %v1831
  %3774 = vmatprep.subr.bf16.mxu0 0
  %3775 = vmatpush1.bf16.msra.mxu0 %v1830
  %3776 = vmatprep.subr.bf16.mxu0 0
  %3777 = vmatpush1.bf16.msra.mxu0 %v1829
  %3778 = vmatprep.subr.bf16.mxu0 0
  %3779 = vmatpush2.bf16.msra.mxu0 %v1844
  %3780 = vmatprep.subr.bf16.mxu0 0
  %3781 = vmatpush2.bf16.msra.mxu0 %v1843
  %3782 = vmatprep.subr.bf16.mxu0 0
  %3783 = vmatpush2.bf16.msra.mxu0 %v1842
  %3784 = vmatprep.subr.bf16.mxu0 0
  %3785 = vmatpush2.bf16.msra.mxu0 %v1841
  %3786 = vmatprep.subr.bf16.mxu0 0
  %3787 = vmatpush2.bf16.msra.mxu0 %v1840
  %3788 = vmatprep.subr.bf16.mxu0 0
  %3789 = vmatpush2.bf16.msra.mxu0 %v1839
  %3790 = vmatprep.subr.bf16.mxu0 0
  %3791 = vmatpush2.bf16.msra.mxu0 %v1838
  %3792 = vmatprep.subr.bf16.mxu0 0
  %3793 = vmatpush2.bf16.msra.mxu0 %v1837
  %3794 = vmatprep.mubr.bf16.mxu0 %v3377
  %3795 = vmatmul.mubr.bf16.gmra.mxu0 %v3376
  %v3796 = vpop.f32.mrf.mxu0
  %v3797 = vadd.f32 %v3733, %v3796
  %v3798 = vpop.f32.mrf.mxu0
  %v3799 = vpop.f32.mrf.mxu0
  %v3800 = vadd.f32 %v3736, %v3799
  %v3801 = vpop.f32.mrf.mxu0
  %3802 = vmatprep.mubr.bf16.mxu0 %v3402
  %3803 = vmatmul.mubr.bf16.gmra.mxu0 %v3401
  %v3804 = vpop.f32.mrf.mxu0
  %v3805 = vadd.f32 %v3741, %v3804
  %v3806 = vpop.f32.mrf.mxu0
  %v3807 = vpop.f32.mrf.mxu0
  %v3808 = vadd.f32 %v3744, %v3807
  %v3809 = vpop.f32.mrf.mxu0
  %3810 = vmatprep.mubr.bf16.mxu0 %v3427
  %3811 = vmatmul.mubr.bf16.gmra.mxu0 %v3426
  %v3812 = vpop.f32.mrf.mxu0
  %v3813 = vadd.f32 %v3749, %v3812
  %v3814 = vpop.f32.mrf.mxu0
  %v3815 = vpop.f32.mrf.mxu0
  %v3816 = vadd.f32 %v3752, %v3815
  %v3817 = vpop.f32.mrf.mxu0
  %3818 = vmatprep.mubr.bf16.mxu0 %v3452
  %3819 = vmatmul.mubr.bf16.gmra.mxu0 %v3451
  %v3820 = vpop.f32.mrf.mxu0
  %v3821 = vadd.f32 %v3757, %v3820
  %v3822 = vpop.f32.mrf.mxu0
  %v3823 = vpop.f32.mrf.mxu0
  %v3824 = vpop.f32.mrf.mxu0
  %3825 = vdwg.mxu0
  %3826 = vmatprep.subr.bf16.mxu0 0
  %3827 = vmatpush1.bf16.msra.mxu0 %v1852
  %3828 = vmatprep.subr.bf16.mxu0 0
  %3829 = vmatpush1.bf16.msra.mxu0 %v1851
  %3830 = vmatprep.subr.bf16.mxu0 0
  %3831 = vmatpush1.bf16.msra.mxu0 %v1850
  %3832 = vmatprep.subr.bf16.mxu0 0
  %3833 = vmatpush1.bf16.msra.mxu0 %v1849
  %3834 = vmatprep.subr.bf16.mxu0 0
  %3835 = vmatpush1.bf16.msra.mxu0 %v1848
  %3836 = vmatprep.subr.bf16.mxu0 0
  %3837 = vmatpush1.bf16.msra.mxu0 %v1847
  %3838 = vmatprep.subr.bf16.mxu0 0
  %3839 = vmatpush1.bf16.msra.mxu0 %v1846
  %3840 = vmatprep.subr.bf16.mxu0 0
  %3841 = vmatpush1.bf16.msra.mxu0 %v1845
  %3842 = vmatprep.subr.bf16.mxu0 0
  %3843 = vmatpush2.bf16.msra.mxu0 %v1860
  %3844 = vmatprep.subr.bf16.mxu0 0
  %3845 = vmatpush2.bf16.msra.mxu0 %v1859
  %3846 = vmatprep.subr.bf16.mxu0 0
  %3847 = vmatpush2.bf16.msra.mxu0 %v1858
  %3848 = vmatprep.subr.bf16.mxu0 0
  %3849 = vmatpush2.bf16.msra.mxu0 %v1857
  %3850 = vmatprep.subr.bf16.mxu0 0
  %3851 = vmatpush2.bf16.msra.mxu0 %v1856
  %3852 = vmatprep.subr.bf16.mxu0 0
  %3853 = vmatpush2.bf16.msra.mxu0 %v1855
  %3854 = vmatprep.subr.bf16.mxu0 0
  %3855 = vmatpush2.bf16.msra.mxu0 %v1854
  %3856 = vmatprep.subr.bf16.mxu0 0
  %3857 = vmatpush2.bf16.msra.mxu0 %v1853
  %3858 = vmatprep.mubr.bf16.mxu0 %v3379
  %3859 = vmatmul.mubr.bf16.gmra.mxu0 %v3378
  %v3860 = vpop.f32.mrf.mxu0
  %v3861 = vadd.f32 %v3797, %v3860
  %v3862 = vpop.f32.mrf.mxu0
  %v3863 = vpop.f32.mrf.mxu0
  %v3864 = vadd.f32 %v3800, %v3863
  %v3865 = vpop.f32.mrf.mxu0
  %3866 = vmatprep.mubr.bf16.mxu0 %v3404
  %3867 = vmatmul.mubr.bf16.gmra.mxu0 %v3403
  %v3868 = vpop.f32.mrf.mxu0
  %v3869 = vadd.f32 %v3805, %v3868
  %v3870 = vpop.f32.mrf.mxu0
  %v3871 = vpop.f32.mrf.mxu0
  %v3872 = vadd.f32 %v3808, %v3871
  %v3873 = vpop.f32.mrf.mxu0
  %3874 = vmatprep.mubr.bf16.mxu0 %v3429
  %3875 = vmatmul.mubr.bf16.gmra.mxu0 %v3428
  %v3876 = vpop.f32.mrf.mxu0
  %v3877 = vadd.f32 %v3813, %v3876
  %v3878 = vpop.f32.mrf.mxu0
  %v3879 = vpop.f32.mrf.mxu0
  %v3880 = vadd.f32 %v3816, %v3879
  %v3881 = vpop.f32.mrf.mxu0
  %3882 = vmatprep.mubr.bf16.mxu0 %v3454
  %3883 = vmatmul.mubr.bf16.gmra.mxu0 %v3453
  %v3884 = vpop.f32.mrf.mxu0
  %v3885 = vadd.f32 %v3821, %v3884
  %v3886 = vpop.f32.mrf.mxu0
  %v3887 = vpop.f32.mrf.mxu0
  %v3888 = vpop.f32.mrf.mxu0
  %3889 = vdwg.mxu0
  %3890 = vmatprep.subr.bf16.mxu0 0
  %3891 = vmatpush1.bf16.msra.mxu0 %v1868
  %3892 = vmatprep.subr.bf16.mxu0 0
  %3893 = vmatpush1.bf16.msra.mxu0 %v1867
  %3894 = vmatprep.subr.bf16.mxu0 0
  %3895 = vmatpush1.bf16.msra.mxu0 %v1866
  %3896 = vmatprep.subr.bf16.mxu0 0
  %3897 = vmatpush1.bf16.msra.mxu0 %v1865
  %3898 = vmatprep.subr.bf16.mxu0 0
  %3899 = vmatpush1.bf16.msra.mxu0 %v1864
  %3900 = vmatprep.subr.bf16.mxu0 0
  %3901 = vmatpush1.bf16.msra.mxu0 %v1863
  %3902 = vmatprep.subr.bf16.mxu0 0
  %3903 = vmatpush1.bf16.msra.mxu0 %v1862
  %3904 = vmatprep.subr.bf16.mxu0 0
  %3905 = vmatpush1.bf16.msra.mxu0 %v1861
  %3906 = vmatprep.subr.bf16.mxu0 0
  %3907 = vmatpush2.bf16.msra.mxu0 %v1876
  %3908 = vmatprep.subr.bf16.mxu0 0
  %3909 = vmatpush2.bf16.msra.mxu0 %v1875
  %3910 = vmatprep.subr.bf16.mxu0 0
  %3911 = vmatpush2.bf16.msra.mxu0 %v1874
  %3912 = vmatprep.subr.bf16.mxu0 0
  %3913 = vmatpush2.bf16.msra.mxu0 %v1873
  %3914 = vmatprep.subr.bf16.mxu0 0
  %3915 = vmatpush2.bf16.msra.mxu0 %v1872
  %3916 = vmatprep.subr.bf16.mxu0 0
  %3917 = vmatpush2.bf16.msra.mxu0 %v1871
  %3918 = vmatprep.subr.bf16.mxu0 0
  %3919 = vmatpush2.bf16.msra.mxu0 %v1870
  %3920 = vmatprep.subr.bf16.mxu0 0
  %3921 = vmatpush2.bf16.msra.mxu0 %v1869
  %3922 = vmatprep.mubr.bf16.mxu0 %v3381
  %3923 = vmatmul.mubr.bf16.gmra.mxu0 %v3380
  %v3924 = vpop.f32.mrf.mxu0
  %v3925 = vadd.f32 %v3861, %v3924
  %v3926 = vpop.f32.mrf.mxu0
  %v3927 = vpop.f32.mrf.mxu0
  %v3928 = vadd.f32 %v3864, %v3927
  %v3929 = vpop.f32.mrf.mxu0
  %3930 = vmatprep.mubr.bf16.mxu0 %v3406
  %3931 = vmatmul.mubr.bf16.gmra.mxu0 %v3405
  %v3932 = vpop.f32.mrf.mxu0
  %v3933 = vadd.f32 %v3869, %v3932
  %v3934 = vpop.f32.mrf.mxu0
  %v3935 = vpop.f32.mrf.mxu0
  %v3936 = vadd.f32 %v3872, %v3935
  %v3937 = vpop.f32.mrf.mxu0
  %3938 = vmatprep.mubr.bf16.mxu0 %v3431
  %3939 = vmatmul.mubr.bf16.gmra.mxu0 %v3430
  %v3940 = vpop.f32.mrf.mxu0
  %v3941 = vadd.f32 %v3877, %v3940
  %v3942 = vpop.f32.mrf.mxu0
  %v3943 = vpop.f32.mrf.mxu0
  %v3944 = vadd.f32 %v3880, %v3943
  %v3945 = vpop.f32.mrf.mxu0
  %3946 = vmatprep.mubr.bf16.mxu0 %v3456
  %3947 = vmatmul.mubr.bf16.gmra.mxu0 %v3455
  %v3948 = vpop.f32.mrf.mxu0
  %v3949 = vadd.f32 %v3885, %v3948
  %v3950 = vpop.f32.mrf.mxu0
  %v3951 = vpop.f32.mrf.mxu0
  %v3952 = vpop.f32.mrf.mxu0
  %3953 = vdwg.mxu0
  %3954 = vmatprep.subr.bf16.mxu0 0
  %3955 = vmatpush1.bf16.msra.mxu0 %v1884
  %3956 = vmatprep.subr.bf16.mxu0 0
  %3957 = vmatpush1.bf16.msra.mxu0 %v1883
  %3958 = vmatprep.subr.bf16.mxu0 0
  %3959 = vmatpush1.bf16.msra.mxu0 %v1882
  %3960 = vmatprep.subr.bf16.mxu0 0
  %3961 = vmatpush1.bf16.msra.mxu0 %v1881
  %3962 = vmatprep.subr.bf16.mxu0 0
  %3963 = vmatpush1.bf16.msra.mxu0 %v1880
  %3964 = vmatprep.subr.bf16.mxu0 0
  %3965 = vmatpush1.bf16.msra.mxu0 %v1879
  %3966 = vmatprep.subr.bf16.mxu0 0
  %3967 = vmatpush1.bf16.msra.mxu0 %v1878
  %3968 = vmatprep.subr.bf16.mxu0 0
  %3969 = vmatpush1.bf16.msra.mxu0 %v1877
  %3970 = vmatprep.subr.bf16.mxu0 0
  %3971 = vmatpush2.bf16.msra.mxu0 %v1892
  %3972 = vmatprep.subr.bf16.mxu0 0
  %3973 = vmatpush2.bf16.msra.mxu0 %v1891
  %3974 = vmatprep.subr.bf16.mxu0 0
  %3975 = vmatpush2.bf16.msra.mxu0 %v1890
  %3976 = vmatprep.subr.bf16.mxu0 0
  %3977 = vmatpush2.bf16.msra.mxu0 %v1889
  %3978 = vmatprep.subr.bf16.mxu0 0
  %3979 = vmatpush2.bf16.msra.mxu0 %v1888
  %3980 = vmatprep.subr.bf16.mxu0 0
  %3981 = vmatpush2.bf16.msra.mxu0 %v1887
  %3982 = vmatprep.subr.bf16.mxu0 0
  %3983 = vmatpush2.bf16.msra.mxu0 %v1886
  %3984 = vmatprep.subr.bf16.mxu0 0
  %3985 = vmatpush2.bf16.msra.mxu0 %v1885
  %3986 = vmatprep.mubr.bf16.mxu0 %v3383
  %3987 = vmatmul.mubr.bf16.gmra.mxu0 %v3382
  %v3988 = vpop.f32.mrf.mxu0
  %v3989 = vadd.f32 %v3925, %v3988
  %v3990 = vpop.f32.mrf.mxu0
  %v3991 = vpop.f32.mrf.mxu0
  %v3992 = vadd.f32 %v3928, %v3991
  %v3993 = vpop.f32.mrf.mxu0
  %3994 = vmatprep.mubr.bf16.mxu0 %v3408
  %3995 = vmatmul.mubr.bf16.gmra.mxu0 %v3407
  %v3996 = vpop.f32.mrf.mxu0
  %v3997 = vadd.f32 %v3933, %v3996
  %v3998 = vpop.f32.mrf.mxu0
  %v3999 = vpop.f32.mrf.mxu0
  %v4000 = vadd.f32 %v3936, %v3999
  %v4001 = vpop.f32.mrf.mxu0
  %4002 = vmatprep.mubr.bf16.mxu0 %v3433
  %4003 = vmatmul.mubr.bf16.gmra.mxu0 %v3432
  %v4004 = vpop.f32.mrf.mxu0
  %v4005 = vadd.f32 %v3941, %v4004
  %v4006 = vpop.f32.mrf.mxu0
  %v4007 = vpop.f32.mrf.mxu0
  %v4008 = vadd.f32 %v3944, %v4007
  %v4009 = vpop.f32.mrf.mxu0
  %4010 = vmatprep.mubr.bf16.mxu0 %v3458
  %4011 = vmatmul.mubr.bf16.gmra.mxu0 %v3457
  %v4012 = vpop.f32.mrf.mxu0
  %v4013 = vadd.f32 %v3949, %v4012
  %v4014 = vpop.f32.mrf.mxu0
  %v4015 = vpop.f32.mrf.mxu0
  %v4016 = vpop.f32.mrf.mxu0
  %4017 = vdwg.mxu0
  %4018 = vmatprep.subr.bf16.mxu0 0
  %4019 = vmatpush1.bf16.msra.mxu0 %v1900
  %4020 = vmatprep.subr.bf16.mxu0 0
  %4021 = vmatpush1.bf16.msra.mxu0 %v1899
  %4022 = vmatprep.subr.bf16.mxu0 0
  %4023 = vmatpush1.bf16.msra.mxu0 %v1898
  %4024 = vmatprep.subr.bf16.mxu0 0
  %4025 = vmatpush1.bf16.msra.mxu0 %v1897
  %4026 = vmatprep.subr.bf16.mxu0 0
  %4027 = vmatpush1.bf16.msra.mxu0 %v1896
  %4028 = vmatprep.subr.bf16.mxu0 0
  %4029 = vmatpush1.bf16.msra.mxu0 %v1895
  %4030 = vmatprep.subr.bf16.mxu0 0
  %4031 = vmatpush1.bf16.msra.mxu0 %v1894
  %4032 = vmatprep.subr.bf16.mxu0 0
  %4033 = vmatpush1.bf16.msra.mxu0 %v1893
  %4034 = vmatprep.subr.bf16.mxu0 0
  %4035 = vmatpush2.bf16.msra.mxu0 %v1908
  %4036 = vmatprep.subr.bf16.mxu0 0
  %4037 = vmatpush2.bf16.msra.mxu0 %v1907
  %4038 = vmatprep.subr.bf16.mxu0 0
  %4039 = vmatpush2.bf16.msra.mxu0 %v1906
  %4040 = vmatprep.subr.bf16.mxu0 0
  %4041 = vmatpush2.bf16.msra.mxu0 %v1905
  %4042 = vmatprep.subr.bf16.mxu0 0
  %4043 = vmatpush2.bf16.msra.mxu0 %v1904
  %4044 = vmatprep.subr.bf16.mxu0 0
  %4045 = vmatpush2.bf16.msra.mxu0 %v1903
  %4046 = vmatprep.subr.bf16.mxu0 0
  %4047 = vmatpush2.bf16.msra.mxu0 %v1902
  %4048 = vmatprep.subr.bf16.mxu0 0
  %4049 = vmatpush2.bf16.msra.mxu0 %v1901
  %4050 = vmatprep.mubr.bf16.mxu0 %v3385
  %4051 = vmatmul.mubr.bf16.gmra.mxu0 %v3384
  %v4052 = vpop.f32.mrf.mxu0
  %v4053 = vadd.f32 %v3989, %v4052
  %v4054 = vpop.f32.mrf.mxu0
  %v4055 = vpop.f32.mrf.mxu0
  %v4056 = vadd.f32 %v3992, %v4055
  %v4057 = vpop.f32.mrf.mxu0
  %4058 = vmatprep.mubr.bf16.mxu0 %v3410
  %4059 = vmatmul.mubr.bf16.gmra.mxu0 %v3409
  %v4060 = vpop.f32.mrf.mxu0
  %v4061 = vadd.f32 %v3997, %v4060
  %v4062 = vpop.f32.mrf.mxu0
  %v4063 = vpop.f32.mrf.mxu0
  %v4064 = vadd.f32 %v4000, %v4063
  %v4065 = vpop.f32.mrf.mxu0
  %4066 = vmatprep.mubr.bf16.mxu0 %v3435
  %4067 = vmatmul.mubr.bf16.gmra.mxu0 %v3434
  %v4068 = vpop.f32.mrf.mxu0
  %v4069 = vadd.f32 %v4005, %v4068
  %v4070 = vpop.f32.mrf.mxu0
  %v4071 = vpop.f32.mrf.mxu0
  %v4072 = vadd.f32 %v4008, %v4071
  %v4073 = vpop.f32.mrf.mxu0
  %4074 = vmatprep.mubr.bf16.mxu0 %v3460
  %4075 = vmatmul.mubr.bf16.gmra.mxu0 %v3459
  %v4076 = vpop.f32.mrf.mxu0
  %v4077 = vadd.f32 %v4013, %v4076
  %v4078 = vpop.f32.mrf.mxu0
  %v4079 = vpop.f32.mrf.mxu0
  %v4080 = vpop.f32.mrf.mxu0
  %4081 = vdwg.mxu0
  %4082 = vmatprep.subr.bf16.mxu0 0
  %4083 = vmatpush1.bf16.msra.mxu0 %v1916
  %4084 = vmatprep.subr.bf16.mxu0 0
  %4085 = vmatpush1.bf16.msra.mxu0 %v1915
  %4086 = vmatprep.subr.bf16.mxu0 0
  %4087 = vmatpush1.bf16.msra.mxu0 %v1914
  %4088 = vmatprep.subr.bf16.mxu0 0
  %4089 = vmatpush1.bf16.msra.mxu0 %v1913
  %4090 = vmatprep.subr.bf16.mxu0 0
  %4091 = vmatpush1.bf16.msra.mxu0 %v1912
  %4092 = vmatprep.subr.bf16.mxu0 0
  %4093 = vmatpush1.bf16.msra.mxu0 %v1911
  %4094 = vmatprep.subr.bf16.mxu0 0
  %4095 = vmatpush1.bf16.msra.mxu0 %v1910
  %4096 = vmatprep.subr.bf16.mxu0 0
  %4097 = vmatpush1.bf16.msra.mxu0 %v1909
  %4098 = vmatprep.subr.bf16.mxu0 0
  %4099 = vmatpush2.bf16.msra.mxu0 %v1924
  %4100 = vmatprep.subr.bf16.mxu0 0
  %4101 = vmatpush2.bf16.msra.mxu0 %v1923
  %4102 = vmatprep.subr.bf16.mxu0 0
  %4103 = vmatpush2.bf16.msra.mxu0 %v1922
  %4104 = vmatprep.subr.bf16.mxu0 0
  %4105 = vmatpush2.bf16.msra.mxu0 %v1921
  %4106 = vmatprep.subr.bf16.mxu0 0
  %4107 = vmatpush2.bf16.msra.mxu0 %v1920
  %4108 = vmatprep.subr.bf16.mxu0 0
  %4109 = vmatpush2.bf16.msra.mxu0 %v1919
  %4110 = vmatprep.subr.bf16.mxu0 0
  %4111 = vmatpush2.bf16.msra.mxu0 %v1918
  %4112 = vmatprep.subr.bf16.mxu0 0
  %4113 = vmatpush2.bf16.msra.mxu0 %v1917
  %4114 = vmatprep.mubr.bf16.mxu0 %v3387
  %4115 = vmatmul.mubr.bf16.gmra.mxu0 %v3386
  %v4116 = vpop.f32.mrf.mxu0
  %v4117 = vadd.f32 %v4053, %v4116
  %v4118 = vpop.f32.mrf.mxu0
  %v4119 = vpop.f32.mrf.mxu0
  %v4120 = vadd.f32 %v4056, %v4119
  %v4121 = vpop.f32.mrf.mxu0
  %4122 = vmatprep.mubr.bf16.mxu0 %v3412
  %4123 = vmatmul.mubr.bf16.gmra.mxu0 %v3411
  %v4124 = vpop.f32.mrf.mxu0
  %v4125 = vadd.f32 %v4061, %v4124
  %v4126 = vpop.f32.mrf.mxu0
  %v4127 = vpop.f32.mrf.mxu0
  %v4128 = vadd.f32 %v4064, %v4127
  %v4129 = vpop.f32.mrf.mxu0
  %4130 = vmatprep.mubr.bf16.mxu0 %v3437
  %4131 = vmatmul.mubr.bf16.gmra.mxu0 %v3436
  %v4132 = vpop.f32.mrf.mxu0
  %v4133 = vadd.f32 %v4069, %v4132
  %v4134 = vpop.f32.mrf.mxu0
  %v4135 = vpop.f32.mrf.mxu0
  %v4136 = vadd.f32 %v4072, %v4135
  %v4137 = vpop.f32.mrf.mxu0
  %4138 = vmatprep.mubr.bf16.mxu0 %v3462
  %4139 = vmatmul.mubr.bf16.gmra.mxu0 %v3461
  %v4140 = vpop.f32.mrf.mxu0
  %v4141 = vadd.f32 %v4077, %v4140
  %v4142 = vpop.f32.mrf.mxu0
  %v4143 = vpop.f32.mrf.mxu0
  %v4144 = vpop.f32.mrf.mxu0
  %4145 = vdwg.mxu0
  %4146 = vmatprep.subr.bf16.mxu0 0
  %4147 = vmatpush1.bf16.msra.mxu0 %v1932
  %4148 = vmatprep.subr.bf16.mxu0 0
  %4149 = vmatpush1.bf16.msra.mxu0 %v1931
  %4150 = vmatprep.subr.bf16.mxu0 0
  %4151 = vmatpush1.bf16.msra.mxu0 %v1930
  %4152 = vmatprep.subr.bf16.mxu0 0
  %4153 = vmatpush1.bf16.msra.mxu0 %v1929
  %4154 = vmatprep.subr.bf16.mxu0 0
  %4155 = vmatpush1.bf16.msra.mxu0 %v1928
  %4156 = vmatprep.subr.bf16.mxu0 0
  %4157 = vmatpush1.bf16.msra.mxu0 %v1927
  %4158 = vmatprep.subr.bf16.mxu0 0
  %4159 = vmatpush1.bf16.msra.mxu0 %v1926
  %4160 = vmatprep.subr.bf16.mxu0 0
  %4161 = vmatpush1.bf16.msra.mxu0 %v1925
  %4162 = vmatprep.subr.bf16.mxu0 0
  %4163 = vmatpush2.bf16.msra.mxu0 %v1940
  %4164 = vmatprep.subr.bf16.mxu0 0
  %4165 = vmatpush2.bf16.msra.mxu0 %v1939
  %4166 = vmatprep.subr.bf16.mxu0 0
  %4167 = vmatpush2.bf16.msra.mxu0 %v1938
  %4168 = vmatprep.subr.bf16.mxu0 0
  %4169 = vmatpush2.bf16.msra.mxu0 %v1937
  %4170 = vmatprep.subr.bf16.mxu0 0
  %4171 = vmatpush2.bf16.msra.mxu0 %v1936
  %4172 = vmatprep.subr.bf16.mxu0 0
  %4173 = vmatpush2.bf16.msra.mxu0 %v1935
  %4174 = vmatprep.subr.bf16.mxu0 0
  %4175 = vmatpush2.bf16.msra.mxu0 %v1934
  %4176 = vmatprep.subr.bf16.mxu0 0
  %4177 = vmatpush2.bf16.msra.mxu0 %v1933
  %4178 = vmatprep.mubr.bf16.mxu0 %v3389
  %4179 = vmatmul.mubr.bf16.gmra.mxu0 %v3388
  %v4180 = vpop.f32.mrf.mxu0
  %v4181 = vadd.f32 %v4117, %v4180
  %v4182 = vpop.f32.mrf.mxu0
  %v4183 = vpop.f32.mrf.mxu0
  %v4184 = vadd.f32 %v4120, %v4183
  %v4185 = vpop.f32.mrf.mxu0
  %4186 = vmatprep.mubr.bf16.mxu0 %v3414
  %4187 = vmatmul.mubr.bf16.gmra.mxu0 %v3413
  %v4188 = vpop.f32.mrf.mxu0
  %v4189 = vadd.f32 %v4125, %v4188
  %v4190 = vpop.f32.mrf.mxu0
  %v4191 = vpop.f32.mrf.mxu0
  %v4192 = vadd.f32 %v4128, %v4191
  %v4193 = vpop.f32.mrf.mxu0
  %4194 = vmatprep.mubr.bf16.mxu0 %v3439
  %4195 = vmatmul.mubr.bf16.gmra.mxu0 %v3438
  %v4196 = vpop.f32.mrf.mxu0
  %v4197 = vadd.f32 %v4133, %v4196
  %v4198 = vpop.f32.mrf.mxu0
  %v4199 = vpop.f32.mrf.mxu0
  %v4200 = vadd.f32 %v4136, %v4199
  %v4201 = vpop.f32.mrf.mxu0
  %4202 = vmatprep.mubr.bf16.mxu0 %v3464
  %4203 = vmatmul.mubr.bf16.gmra.mxu0 %v3463
  %v4204 = vpop.f32.mrf.mxu0
  %v4205 = vadd.f32 %v4141, %v4204
  %v4206 = vpop.f32.mrf.mxu0
  %v4207 = vpop.f32.mrf.mxu0
  %v4208 = vpop.f32.mrf.mxu0
  %4209 = vdwg.mxu0
  %4210 = vmatprep.subr.bf16.mxu0 0
  %4211 = vmatpush1.bf16.msra.mxu0 %v1948
  %4212 = vmatprep.subr.bf16.mxu0 0
  %4213 = vmatpush1.bf16.msra.mxu0 %v1947
  %4214 = vmatprep.subr.bf16.mxu0 0
  %4215 = vmatpush1.bf16.msra.mxu0 %v1946
  %4216 = vmatprep.subr.bf16.mxu0 0
  %4217 = vmatpush1.bf16.msra.mxu0 %v1945
  %4218 = vmatprep.subr.bf16.mxu0 0
  %4219 = vmatpush1.bf16.msra.mxu0 %v1944
  %4220 = vmatprep.subr.bf16.mxu0 0
  %4221 = vmatpush1.bf16.msra.mxu0 %v1943
  %4222 = vmatprep.subr.bf16.mxu0 0
  %4223 = vmatpush1.bf16.msra.mxu0 %v1942
  %4224 = vmatprep.subr.bf16.mxu0 0
  %4225 = vmatpush1.bf16.msra.mxu0 %v1941
  %4226 = vmatprep.subr.bf16.mxu0 0
  %4227 = vmatpush2.bf16.msra.mxu0 %v1956
  %4228 = vmatprep.subr.bf16.mxu0 0
  %4229 = vmatpush2.bf16.msra.mxu0 %v1955
  %4230 = vmatprep.subr.bf16.mxu0 0
  %4231 = vmatpush2.bf16.msra.mxu0 %v1954
  %4232 = vmatprep.subr.bf16.mxu0 0
  %4233 = vmatpush2.bf16.msra.mxu0 %v1953
  %4234 = vmatprep.subr.bf16.mxu0 0
  %4235 = vmatpush2.bf16.msra.mxu0 %v1952
  %4236 = vmatprep.subr.bf16.mxu0 0
  %4237 = vmatpush2.bf16.msra.mxu0 %v1951
  %4238 = vmatprep.subr.bf16.mxu0 0
  %4239 = vmatpush2.bf16.msra.mxu0 %v1950
  %4240 = vmatprep.subr.bf16.mxu0 0
  %4241 = vmatpush2.bf16.msra.mxu0 %v1949
  %4242 = vmatprep.mubr.bf16.mxu0 %v3391
  %4243 = vmatmul.mubr.bf16.gmra.mxu0 %v3390
  %v4244 = vpop.f32.mrf.mxu0
  %v4245 = vadd.f32 %v4181, %v4244
  %v4246 = vpop.f32.mrf.mxu0
  %v4247 = vpop.f32.mrf.mxu0
  %v4248 = vadd.f32 %v4184, %v4247
  %v4249 = vpop.f32.mrf.mxu0
  %4250 = vmatprep.mubr.bf16.mxu0 %v3416
  %4251 = vmatmul.mubr.bf16.gmra.mxu0 %v3415
  %v4252 = vpop.f32.mrf.mxu0
  %v4253 = vadd.f32 %v4189, %v4252
  %v4254 = vpop.f32.mrf.mxu0
  %v4255 = vpop.f32.mrf.mxu0
  %v4256 = vadd.f32 %v4192, %v4255
  %v4257 = vpop.f32.mrf.mxu0
  %4258 = vmatprep.mubr.bf16.mxu0 %v3441
  %4259 = vmatmul.mubr.bf16.gmra.mxu0 %v3440
  %v4260 = vpop.f32.mrf.mxu0
  %v4261 = vadd.f32 %v4197, %v4260
  %v4262 = vpop.f32.mrf.mxu0
  %v4263 = vpop.f32.mrf.mxu0
  %v4264 = vadd.f32 %v4200, %v4263
  %v4265 = vpop.f32.mrf.mxu0
  %4266 = vmatprep.mubr.bf16.mxu0 %v3466
  %4267 = vmatmul.mubr.bf16.gmra.mxu0 %v3465
  %v4268 = vpop.f32.mrf.mxu0
  %v4269 = vadd.f32 %v4205, %v4268
  %v4270 = vpop.f32.mrf.mxu0
  %v4271 = vpop.f32.mrf.mxu0
  %v4272 = vpop.f32.mrf.mxu0
  %4273 = vdwg.mxu0
  %4274 = vmatprep.subr.bf16.mxu0 0
  %4275 = vmatpush1.bf16.msra.mxu0 %v1964
  %4276 = vmatprep.subr.bf16.mxu0 0
  %4277 = vmatpush1.bf16.msra.mxu0 %v1963
  %4278 = vmatprep.subr.bf16.mxu0 0
  %4279 = vmatpush1.bf16.msra.mxu0 %v1962
  %4280 = vmatprep.subr.bf16.mxu0 0
  %4281 = vmatpush1.bf16.msra.mxu0 %v1961
  %4282 = vmatprep.subr.bf16.mxu0 0
  %4283 = vmatpush1.bf16.msra.mxu0 %v1960
  %4284 = vmatprep.subr.bf16.mxu0 0
  %4285 = vmatpush1.bf16.msra.mxu0 %v1959
  %4286 = vmatprep.subr.bf16.mxu0 0
  %4287 = vmatpush1.bf16.msra.mxu0 %v1958
  %4288 = vmatprep.subr.bf16.mxu0 0
  %4289 = vmatpush1.bf16.msra.mxu0 %v1957
  %4290 = vmatprep.subr.bf16.mxu0 0
  %4291 = vmatpush2.bf16.msra.mxu0 %v1972
  %4292 = vmatprep.subr.bf16.mxu0 0
  %4293 = vmatpush2.bf16.msra.mxu0 %v1971
  %4294 = vmatprep.subr.bf16.mxu0 0
  %4295 = vmatpush2.bf16.msra.mxu0 %v1970
  %4296 = vmatprep.subr.bf16.mxu0 0
  %4297 = vmatpush2.bf16.msra.mxu0 %v1969
  %4298 = vmatprep.subr.bf16.mxu0 0
  %4299 = vmatpush2.bf16.msra.mxu0 %v1968
  %4300 = vmatprep.subr.bf16.mxu0 0
  %4301 = vmatpush2.bf16.msra.mxu0 %v1967
  %4302 = vmatprep.subr.bf16.mxu0 0
  %4303 = vmatpush2.bf16.msra.mxu0 %v1966
  %4304 = vmatprep.subr.bf16.mxu0 0
  %4305 = vmatpush2.bf16.msra.mxu0 %v1965
  %4306 = vmatprep.mubr.bf16.mxu0 %v3393
  %4307 = vmatmul.mubr.bf16.gmra.mxu0 %v3392
  %v4308 = vpop.f32.mrf.mxu0
  %v4309 = vadd.f32 %v4245, %v4308
  %v4310 = vpop.f32.mrf.mxu0
  %v4311 = vpop.f32.mrf.mxu0
  %v4312 = vadd.f32 %v4248, %v4311
  %v4313 = vpop.f32.mrf.mxu0
  %4314 = vmatprep.mubr.bf16.mxu0 %v3418
  %4315 = vmatmul.mubr.bf16.gmra.mxu0 %v3417
  %v4316 = vpop.f32.mrf.mxu0
  %v4317 = vadd.f32 %v4253, %v4316
  %v4318 = vpop.f32.mrf.mxu0
  %v4319 = vpop.f32.mrf.mxu0
  %v4320 = vadd.f32 %v4256, %v4319
  %v4321 = vpop.f32.mrf.mxu0
  %4322 = vmatprep.mubr.bf16.mxu0 %v3443
  %4323 = vmatmul.mubr.bf16.gmra.mxu0 %v3442
  %v4324 = vpop.f32.mrf.mxu0
  %v4325 = vadd.f32 %v4261, %v4324
  %v4326 = vpop.f32.mrf.mxu0
  %v4327 = vpop.f32.mrf.mxu0
  %v4328 = vadd.f32 %v4264, %v4327
  %v4329 = vpop.f32.mrf.mxu0
  %4330 = vmatprep.mubr.bf16.mxu0 %v3468
  %4331 = vmatmul.mubr.bf16.gmra.mxu0 %v3467
  %v4332 = vpop.f32.mrf.mxu0
  %v4333 = vadd.f32 %v4269, %v4332
  %v4334 = vpop.f32.mrf.mxu0
  %v4335 = vpop.f32.mrf.mxu0
  %v4336 = vpop.f32.mrf.mxu0
  %4337 = vdwg.mxu0
  %4338 = vmatprep.subr.bf16.mxu0 0
  %4339 = vmatpush1.bf16.msra.mxu0 %v1980
  %4340 = vmatprep.subr.bf16.mxu0 0
  %4341 = vmatpush1.bf16.msra.mxu0 %v1979
  %4342 = vmatprep.subr.bf16.mxu0 0
  %4343 = vmatpush1.bf16.msra.mxu0 %v1978
  %4344 = vmatprep.subr.bf16.mxu0 0
  %4345 = vmatpush1.bf16.msra.mxu0 %v1977
  %4346 = vmatprep.subr.bf16.mxu0 0
  %4347 = vmatpush1.bf16.msra.mxu0 %v1976
  %4348 = vmatprep.subr.bf16.mxu0 0
  %4349 = vmatpush1.bf16.msra.mxu0 %v1975
  %4350 = vmatprep.subr.bf16.mxu0 0
  %4351 = vmatpush1.bf16.msra.mxu0 %v1974
  %4352 = vmatprep.subr.bf16.mxu0 0
  %4353 = vmatpush1.bf16.msra.mxu0 %v1973
  %4354 = vmatprep.subr.bf16.mxu0 0
  %4355 = vmatpush2.bf16.msra.mxu0 0
  %4356 = vmatprep.subr.bf16.mxu0 0
  %4357 = vmatpush2.bf16.msra.mxu0 0
  %4358 = vmatprep.subr.bf16.mxu0 0
  %4359 = vmatpush2.bf16.msra.mxu0 0
  %4360 = vmatprep.subr.bf16.mxu0 0
  %4361 = vmatpush2.bf16.msra.mxu0 0
  %4362 = vmatprep.subr.bf16.mxu0 0
  %4363 = vmatpush2.bf16.msra.mxu0 0
  %4364 = vmatprep.subr.bf16.mxu0 0
  %4365 = vmatpush2.bf16.msra.mxu0 0
  %4366 = vmatprep.subr.bf16.mxu0 0
  %4367 = vmatpush2.bf16.msra.mxu0 0
  %4368 = vmatprep.subr.bf16.mxu0 0
  %4369 = vmatpush2.bf16.msra.mxu0 0
  %4370 = vmatprep.mubr.bf16.mxu0 0
  %4371 = vmatmul.mubr.bf16.gmra.mxu0 %v3394
  %v4372 = vpop.f32.mrf.mxu0
  %v4373 = vadd.f32 %v4309, %v4372
  %v4374 = vpop.f32.mrf.mxu0
  %v4375 = vpop.f32.mrf.mxu0
  %v4376 = vadd.f32 %v4312, %v4375
  %v4377 = vpop.f32.mrf.mxu0
  %4378 = vmatprep.mubr.bf16.mxu0 0
  %4379 = vmatmul.mubr.bf16.gmra.mxu0 %v3419
  %v4380 = vpop.f32.mrf.mxu0
  %v4381 = vadd.f32 %v4317, %v4380
  %v4382 = vpop.f32.mrf.mxu0
  %v4383 = vpop.f32.mrf.mxu0
  %v4384 = vadd.f32 %v4320, %v4383
  %v4385 = vpop.f32.mrf.mxu0
  %4386 = vmatprep.mubr.bf16.mxu0 0
  %4387 = vmatmul.mubr.bf16.gmra.mxu0 %v3444
  %v4388 = vpop.f32.mrf.mxu0
  %v4389 = vadd.f32 %v4325, %v4388
  %v4390 = vpop.f32.mrf.mxu0
  %v4391 = vpop.f32.mrf.mxu0
  %v4392 = vadd.f32 %v4328, %v4391
  %v4393 = vpop.f32.mrf.mxu0
  %4394 = vmatprep.mubr.bf16.mxu0 0
  %4395 = vmatmul.mubr.bf16.gmra.mxu0 %v3469
  %v4396 = vpop.f32.mrf.mxu0
  %v4397 = vadd.f32 %v4333, %v4396
  %v4398 = vpop.f32.mrf.mxu0
  %v4399 = vpop.f32.mrf.mxu0
  %v4400 = vpop.f32.mrf.mxu0
  %4401 = vdwg.mxu0
  %v4402 = vmax.f32 %v2984, %v4373
  %v4403 = vmax.f32 %v2987, %v4376
  %v4404 = vmax.f32 %v2992, %v4381
  %v4405 = vmax.f32 %v2995, %v4384
  %v4406 = vmax.f32 %v3000, %v4389
  %v4407 = vmax.f32 %v3003, %v4392
  %v4408 = vmax.f32 %v3008, %v4397
  %v4409 = vld [vmem:[%s2] sm:$0xff]
  %v4410 = vld [vmem:[%s2 + $0x8] sm:$0xff]
  %v4411 = vld [vmem:[%s2 + $0x10] sm:$0xff]
  %v4412 = vld [vmem:[%s2 + $0x18] sm:$0xff]
  %v4413 = vld [vmem:[%s2 + $0x20] sm:$0xff]
  %v4414 = vld [vmem:[%s2 + $0x28] sm:$0xff]
  %v4415 = vld [vmem:[%s2 + $0x30] sm:$0xff]
  %v4416 = vld [vmem:[%s2 + $0x38] sm:$0xff]
  %v4417 = vld [vmem:[%s2 + $0x40] sm:$0xff]
  %v4418 = vld [vmem:[%s2 + $0x48] sm:$0xff]
  %v4419 = vld [vmem:[%s2 + $0x50] sm:$0xff]
  %v4420 = vld [vmem:[%s2 + $0x58] sm:$0xff]
  %v4421 = vld [vmem:[%s2 + $0x60] sm:$0xf]
  %v4422 = vld [vmem:[%s2 + $0x64] sm:$0xff]
  %v4423 = vld [vmem:[%s2 + $0x6c] sm:$0xff]
  %v4424 = vld [vmem:[%s2 + $0x74] sm:$0xff]
  %v4425 = vld [vmem:[%s2 + $0x7c] sm:$0xff]
  %v4426 = vld [vmem:[%s2 + $0x84] sm:$0xff]
  %v4427 = vld [vmem:[%s2 + $0x8c] sm:$0xff]
  %v4428 = vld [vmem:[%s2 + $0x94] sm:$0xff]
  %v4429 = vld [vmem:[%s2 + $0x9c] sm:$0xff]
  %v4430 = vld [vmem:[%s2 + $0xa4] sm:$0xff]
  %v4431 = vld [vmem:[%s2 + $0xac] sm:$0xff]
  %v4432 = vld [vmem:[%s2 + $0xb4] sm:$0xff]
  %v4433 = vld [vmem:[%s2 + $0xbc] sm:$0xff]
  %v4434 = vld [vmem:[%s2 + $0xc4] sm:$0xf]
  %v4435 = vld [vmem:[%s2 + $0xc8] sm:$0xff]
  %v4436 = vld [vmem:[%s2 + $0xd0] sm:$0xff]
  %v4437 = vld [vmem:[%s2 + $0xd8] sm:$0xff]
  %v4438 = vld [vmem:[%s2 + $0xe0] sm:$0xff]
  %v4439 = vld [vmem:[%s2 + $0xe8] sm:$0xff]
  %v4440 = vld [vmem:[%s2 + $0xf0] sm:$0xff]
  %v4441 = vld [vmem:[%s2 + $0xf8] sm:$0xff]
  %v4442 = vld [vmem:[%s2 + $0x100] sm:$0xff]
  %v4443 = vld [vmem:[%s2 + $0x108] sm:$0xff]
  %v4444 = vld [vmem:[%s2 + $0x110] sm:$0xff]
  %v4445 = vld [vmem:[%s2 + $0x118] sm:$0xff]
  %v4446 = vld [vmem:[%s2 + $0x120] sm:$0xff]
  %v4447 = vld [vmem:[%s2 + $0x128] sm:$0xf]
  %v4448 = vld [vmem:[%s2 + $0x12c] sm:$0xff]
  %v4449 = vld [vmem:[%s2 + $0x134] sm:$0xff]
  %v4450 = vld [vmem:[%s2 + $0x13c] sm:$0xff]
  %v4451 = vld [vmem:[%s2 + $0x144] sm:$0xff]
  %v4452 = vld [vmem:[%s2 + $0x14c] sm:$0xff]
  %v4453 = vld [vmem:[%s2 + $0x154] sm:$0xff]
  %v4454 = vld [vmem:[%s2 + $0x15c] sm:$0xff]
  %v4455 = vld [vmem:[%s2 + $0x164] sm:$0xff]
  %v4456 = vld [vmem:[%s2 + $0x16c] sm:$0xff]
  %v4457 = vld [vmem:[%s2 + $0x174] sm:$0xff]
  %v4458 = vld [vmem:[%s2 + $0x17c] sm:$0xff]
  %v4459 = vld [vmem:[%s2 + $0x184] sm:$0xff]
  %v4460 = vld [vmem:[%s2 + $0x18c] sm:$0xf]
  %v4461 = vld [vmem:[%s2 + $0x190] sm:$0xff]
  %v4462 = vld [vmem:[%s2 + $0x198] sm:$0xff]
  %v4463 = vld [vmem:[%s2 + $0x1a0] sm:$0xff]
  %v4464 = vld [vmem:[%s2 + $0x1a8] sm:$0xff]
  %v4465 = vld [vmem:[%s2 + $0x1b0] sm:$0xff]
  %v4466 = vld [vmem:[%s2 + $0x1b8] sm:$0xff]
  %v4467 = vld [vmem:[%s2 + $0x1c0] sm:$0xff]
  %v4468 = vld [vmem:[%s2 + $0x1c8] sm:$0xff]
  %v4469 = vld [vmem:[%s2 + $0x1d0] sm:$0xff]
  %v4470 = vld [vmem:[%s2 + $0x1d8] sm:$0xff]
  %v4471 = vld [vmem:[%s2 + $0x1e0] sm:$0xff]
  %v4472 = vld [vmem:[%s2 + $0x1e8] sm:$0xff]
  %v4473 = vld [vmem:[%s2 + $0x1f0] sm:$0xf]
  %v4474 = vld [vmem:[%s2 + $0x1f4] sm:$0xff]
  %v4475 = vld [vmem:[%s2 + $0x1fc] sm:$0xff]
  %v4476 = vld [vmem:[%s2 + $0x204] sm:$0xff]
  %v4477 = vld [vmem:[%s2 + $0x20c] sm:$0xff]
  %v4478 = vld [vmem:[%s2 + $0x214] sm:$0xff]
  %v4479 = vld [vmem:[%s2 + $0x21c] sm:$0xff]
  %v4480 = vld [vmem:[%s2 + $0x224] sm:$0xff]
  %v4481 = vld [vmem:[%s2 + $0x22c] sm:$0xff]
  %v4482 = vld [vmem:[%s2 + $0x234] sm:$0xff]
  %v4483 = vld [vmem:[%s2 + $0x23c] sm:$0xff]
  %v4484 = vld [vmem:[%s2 + $0x244] sm:$0xff]
  %v4485 = vld [vmem:[%s2 + $0x24c] sm:$0xff]
  %v4486 = vld [vmem:[%s2 + $0x254] sm:$0xf]
  %v4487 = vld [vmem:[%s2 + $0x258] sm:$0x11]
  %v4488 = vld [vmem:[%s2 + $0x260] sm:$0x11]
  %v4489 = vld [vmem:[%s2 + $0x268] sm:$0x11]
  %v4490 = vld [vmem:[%s2 + $0x270] sm:$0x11]
  %v4491 = vld [vmem:[%s2 + $0x278] sm:$0x11]
  %v4492 = vld [vmem:[%s2 + $0x280] sm:$0x11]
  %v4493 = vld [vmem:[%s2 + $0x288] sm:$0x11]
  %v4494 = vld [vmem:[%s2 + $0x290] sm:$0x11]
  %v4495 = vld [vmem:[%s2 + $0x298] sm:$0x11]
  %v4496 = vld [vmem:[%s2 + $0x2a0] sm:$0x11]
  %v4497 = vld [vmem:[%s2 + $0x2a8] sm:$0x11]
  %v4498 = vld [vmem:[%s2 + $0x2b0] sm:$0x11]
  %v4499 = vld [vmem:[%s2 + $0x2b8] sm:$0x1]
  %v4591 = vunpack.c.l.b16 %v4409
  %v4592 = vunpack.c.h.b16 %v4409
  %v4593 = vunpack.c.l.b16 %v4410
  %v4594 = vunpack.c.h.b16 %v4410
  %v4595 = vunpack.c.l.b16 %v4411
  %v4596 = vunpack.c.h.b16 %v4411
  %v4597 = vunpack.c.l.b16 %v4412
  %v4598 = vunpack.c.h.b16 %v4412
  %v4599 = vunpack.c.l.b16 %v4413
  %v4600 = vunpack.c.h.b16 %v4413
  %v4601 = vunpack.c.l.b16 %v4414
  %v4602 = vunpack.c.h.b16 %v4414
  %v4603 = vunpack.c.l.b16 %v4415
  %v4604 = vunpack.c.h.b16 %v4415
  %v4605 = vunpack.c.l.b16 %v4416
  %v4606 = vunpack.c.h.b16 %v4416
  %v4607 = vunpack.c.l.b16 %v4417
  %v4608 = vunpack.c.h.b16 %v4417
  %v4609 = vunpack.c.l.b16 %v4418
  %v4610 = vunpack.c.h.b16 %v4418
  %v4611 = vunpack.c.l.b16 %v4419
  %v4612 = vunpack.c.h.b16 %v4419
  %v4613 = vunpack.c.l.b16 %v4420
  %v4614 = vunpack.c.h.b16 %v4420
  %v4615 = vunpack.c.l.b16 %v4421
  %v4616 = vunpack.c.l.b16 %v4422
  %v4617 = vunpack.c.h.b16 %v4422
  %v4618 = vunpack.c.l.b16 %v4423
  %v4619 = vunpack.c.h.b16 %v4423
  %v4620 = vunpack.c.l.b16 %v4424
  %v4621 = vunpack.c.h.b16 %v4424
  %v4622 = vunpack.c.l.b16 %v4425
  %v4623 = vunpack.c.h.b16 %v4425
  %v4624 = vunpack.c.l.b16 %v4426
  %v4625 = vunpack.c.h.b16 %v4426
  %v4626 = vunpack.c.l.b16 %v4427
  %v4627 = vunpack.c.h.b16 %v4427
  %v4628 = vunpack.c.l.b16 %v4428
  %v4629 = vunpack.c.h.b16 %v4428
  %v4630 = vunpack.c.l.b16 %v4429
  %v4631 = vunpack.c.h.b16 %v4429
  %v4632 = vunpack.c.l.b16 %v4430
  %v4633 = vunpack.c.h.b16 %v4430
  %v4634 = vunpack.c.l.b16 %v4431
  %v4635 = vunpack.c.h.b16 %v4431
  %v4636 = vunpack.c.l.b16 %v4432
  %v4637 = vunpack.c.h.b16 %v4432
  %v4638 = vunpack.c.l.b16 %v4433
  %v4639 = vunpack.c.h.b16 %v4433
  %v4640 = vunpack.c.l.b16 %v4434
  %v4641 = vunpack.c.l.b16 %v4435
  %v4642 = vunpack.c.h.b16 %v4435
  %v4643 = vunpack.c.l.b16 %v4436
  %v4644 = vunpack.c.h.b16 %v4436
  %v4645 = vunpack.c.l.b16 %v4437
  %v4646 = vunpack.c.h.b16 %v4437
  %v4647 = vunpack.c.l.b16 %v4438
  %v4648 = vunpack.c.h.b16 %v4438
  %v4649 = vunpack.c.l.b16 %v4439
  %v4650 = vunpack.c.h.b16 %v4439
  %v4651 = vunpack.c.l.b16 %v4440
  %v4652 = vunpack.c.h.b16 %v4440
  %v4653 = vunpack.c.l.b16 %v4441
  %v4654 = vunpack.c.h.b16 %v4441
  %v4655 = vunpack.c.l.b16 %v4442
  %v4656 = vunpack.c.h.b16 %v4442
  %v4657 = vunpack.c.l.b16 %v4443
  %v4658 = vunpack.c.h.b16 %v4443
  %v4659 = vunpack.c.l.b16 %v4444
  %v4660 = vunpack.c.h.b16 %v4444
  %v4661 = vunpack.c.l.b16 %v4445
  %v4662 = vunpack.c.h.b16 %v4445
  %v4663 = vunpack.c.l.b16 %v4446
  %v4664 = vunpack.c.h.b16 %v4446
  %v4665 = vunpack.c.l.b16 %v4447
  %v4666 = vunpack.c.l.b16 %v4448
  %v4667 = vunpack.c.h.b16 %v4448
  %v4668 = vunpack.c.l.b16 %v4449
  %v4669 = vunpack.c.h.b16 %v4449
  %v4670 = vunpack.c.l.b16 %v4450
  %v4671 = vunpack.c.h.b16 %v4450
  %v4672 = vunpack.c.l.b16 %v4451
  %v4673 = vunpack.c.h.b16 %v4451
  %v4674 = vunpack.c.l.b16 %v4452
  %v4675 = vunpack.c.h.b16 %v4452
  %v4676 = vunpack.c.l.b16 %v4453
  %v4677 = vunpack.c.h.b16 %v4453
  %v4678 = vunpack.c.l.b16 %v4454
  %v4679 = vunpack.c.h.b16 %v4454
  %v4680 = vunpack.c.l.b16 %v4455
  %v4681 = vunpack.c.h.b16 %v4455
  %v4682 = vunpack.c.l.b16 %v4456
  %v4683 = vunpack.c.h.b16 %v4456
  %v4684 = vunpack.c.l.b16 %v4457
  %v4685 = vunpack.c.h.b16 %v4457
  %v4686 = vunpack.c.l.b16 %v4458
  %v4687 = vunpack.c.h.b16 %v4458
  %v4688 = vunpack.c.l.b16 %v4459
  %v4689 = vunpack.c.h.b16 %v4459
  %v4690 = vunpack.c.l.b16 %v4460
  %v4691 = vunpack.c.l.b16 %v4461
  %v4692 = vunpack.c.h.b16 %v4461
  %v4693 = vunpack.c.l.b16 %v4462
  %v4694 = vunpack.c.h.b16 %v4462
  %v4695 = vunpack.c.l.b16 %v4463
  %v4696 = vunpack.c.h.b16 %v4463
  %v4697 = vunpack.c.l.b16 %v4464
  %v4698 = vunpack.c.h.b16 %v4464
  %v4699 = vunpack.c.l.b16 %v4465
  %v4700 = vunpack.c.h.b16 %v4465
  %v4701 = vunpack.c.l.b16 %v4466
  %v4702 = vunpack.c.h.b16 %v4466
  %v4703 = vunpack.c.l.b16 %v4467
  %v4704 = vunpack.c.h.b16 %v4467
  %v4705 = vunpack.c.l.b16 %v4468
  %v4706 = vunpack.c.h.b16 %v4468
  %v4707 = vunpack.c.l.b16 %v4469
  %v4708 = vunpack.c.h.b16 %v4469
  %v4709 = vunpack.c.l.b16 %v4470
  %v4710 = vunpack.c.h.b16 %v4470
  %v4711 = vunpack.c.l.b16 %v4471
  %v4712 = vunpack.c.h.b16 %v4471
  %v4713 = vunpack.c.l.b16 %v4472
  %v4714 = vunpack.c.h.b16 %v4472
  %v4715 = vunpack.c.l.b16 %v4473
  %v4716 = vunpack.c.l.b16 %v4474
  %v4717 = vunpack.c.h.b16 %v4474
  %v4718 = vunpack.c.l.b16 %v4475
  %v4719 = vunpack.c.h.b16 %v4475
  %v4720 = vunpack.c.l.b16 %v4476
  %v4721 = vunpack.c.h.b16 %v4476
  %v4722 = vunpack.c.l.b16 %v4477
  %v4723 = vunpack.c.h.b16 %v4477
  %v4724 = vunpack.c.l.b16 %v4478
  %v4725 = vunpack.c.h.b16 %v4478
  %v4726 = vunpack.c.l.b16 %v4479
  %v4727 = vunpack.c.h.b16 %v4479
  %v4728 = vunpack.c.l.b16 %v4480
  %v4729 = vunpack.c.h.b16 %v4480
  %v4730 = vunpack.c.l.b16 %v4481
  %v4731 = vunpack.c.h.b16 %v4481
  %v4732 = vunpack.c.l.b16 %v4482
  %v4733 = vunpack.c.h.b16 %v4482
  %v4734 = vunpack.c.l.b16 %v4483
  %v4735 = vunpack.c.h.b16 %v4483
  %v4736 = vunpack.c.l.b16 %v4484
  %v4737 = vunpack.c.h.b16 %v4484
  %v4738 = vunpack.c.l.b16 %v4485
  %v4739 = vunpack.c.h.b16 %v4485
  %v4740 = vunpack.c.l.b16 %v4486
  %v4741 = vunpack.c.l.b16 %v4487
  %v4742 = vunpack.c.h.b16 %v4487
  %v4743 = vunpack.c.l.b16 %v4488
  %v4744 = vunpack.c.h.b16 %v4488
  %v4745 = vunpack.c.l.b16 %v4489
  %v4746 = vunpack.c.h.b16 %v4489
  %v4747 = vunpack.c.l.b16 %v4490
  %v4748 = vunpack.c.h.b16 %v4490
  %v4749 = vunpack.c.l.b16 %v4491
  %v4750 = vunpack.c.h.b16 %v4491
  %v4751 = vunpack.c.l.b16 %v4492
  %v4752 = vunpack.c.h.b16 %v4492
  %v4753 = vunpack.c.l.b16 %v4493
  %v4754 = vunpack.c.h.b16 %v4493
  %v4755 = vunpack.c.l.b16 %v4494
  %v4756 = vunpack.c.h.b16 %v4494
  %v4757 = vunpack.c.l.b16 %v4495
  %v4758 = vunpack.c.h.b16 %v4495
  %v4759 = vunpack.c.l.b16 %v4496
  %v4760 = vunpack.c.h.b16 %v4496
  %v4761 = vunpack.c.l.b16 %v4497
  %v4762 = vunpack.c.h.b16 %v4497
  %v4763 = vunpack.c.l.b16 %v4498
  %v4764 = vunpack.c.h.b16 %v4498
  %v4765 = vunpack.c.l.b16 %v4499
  %v4766 = vpack.c.b16 %v4616, %v4591
  %v4767 = vpack.c.b16 %v4617, %v4592
  %v4768 = vpack.c.b16 %v4618, %v4593
  %v4769 = vpack.c.b16 %v4619, %v4594
  %v4770 = vpack.c.b16 %v4620, %v4595
  %v4771 = vpack.c.b16 %v4621, %v4596
  %v4772 = vpack.c.b16 %v4622, %v4597
  %v4773 = vpack.c.b16 %v4623, %v4598
  %v4774 = vpack.c.b16 %v4624, %v4599
  %v4775 = vpack.c.b16 %v4625, %v4600
  %v4776 = vpack.c.b16 %v4626, %v4601
  %v4777 = vpack.c.b16 %v4627, %v4602
  %v4778 = vpack.c.b16 %v4628, %v4603
  %v4779 = vpack.c.b16 %v4629, %v4604
  %v4780 = vpack.c.b16 %v4630, %v4605
  %v4781 = vpack.c.b16 %v4631, %v4606
  %v4782 = vpack.c.b16 %v4632, %v4607
  %v4783 = vpack.c.b16 %v4633, %v4608
  %v4784 = vpack.c.b16 %v4634, %v4609
  %v4785 = vpack.c.b16 %v4635, %v4610
  %v4786 = vpack.c.b16 %v4636, %v4611
  %v4787 = vpack.c.b16 %v4637, %v4612
  %v4788 = vpack.c.b16 %v4638, %v4613
  %v4789 = vpack.c.b16 %v4639, %v4614
  %v4790 = vpack.c.b16 %v4640, %v4615
  %v4791 = vpack.c.b16 %v4666, %v4641
  %v4792 = vpack.c.b16 %v4667, %v4642
  %v4793 = vpack.c.b16 %v4668, %v4643
  %v4794 = vpack.c.b16 %v4669, %v4644
  %v4795 = vpack.c.b16 %v4670, %v4645
  %v4796 = vpack.c.b16 %v4671, %v4646
  %v4797 = vpack.c.b16 %v4672, %v4647
  %v4798 = vpack.c.b16 %v4673, %v4648
  %v4799 = vpack.c.b16 %v4674, %v4649
  %v4800 = vpack.c.b16 %v4675, %v4650
  %v4801 = vpack.c.b16 %v4676, %v4651
  %v4802 = vpack.c.b16 %v4677, %v4652
  %v4803 = vpack.c.b16 %v4678, %v4653
  %v4804 = vpack.c.b16 %v4679, %v4654
  %v4805 = vpack.c.b16 %v4680, %v4655
  %v4806 = vpack.c.b16 %v4681, %v4656
  %v4807 = vpack.c.b16 %v4682, %v4657
  %v4808 = vpack.c.b16 %v4683, %v4658
  %v4809 = vpack.c.b16 %v4684, %v4659
  %v4810 = vpack.c.b16 %v4685, %v4660
  %v4811 = vpack.c.b16 %v4686, %v4661
  %v4812 = vpack.c.b16 %v4687, %v4662
  %v4813 = vpack.c.b16 %v4688, %v4663
  %v4814 = vpack.c.b16 %v4689, %v4664
  %v4815 = vpack.c.b16 %v4690, %v4665
  %v4816 = vpack.c.b16 %v4716, %v4691
  %v4817 = vpack.c.b16 %v4717, %v4692
  %v4818 = vpack.c.b16 %v4718, %v4693
  %v4819 = vpack.c.b16 %v4719, %v4694
  %v4820 = vpack.c.b16 %v4720, %v4695
  %v4821 = vpack.c.b16 %v4721, %v4696
  %v4822 = vpack.c.b16 %v4722, %v4697
  %v4823 = vpack.c.b16 %v4723, %v4698
  %v4824 = vpack.c.b16 %v4724, %v4699
  %v4825 = vpack.c.b16 %v4725, %v4700
  %v4826 = vpack.c.b16 %v4726, %v4701
  %v4827 = vpack.c.b16 %v4727, %v4702
  %v4828 = vpack.c.b16 %v4728, %v4703
  %v4829 = vpack.c.b16 %v4729, %v4704
  %v4830 = vpack.c.b16 %v4730, %v4705
  %v4831 = vpack.c.b16 %v4731, %v4706
  %v4832 = vpack.c.b16 %v4732, %v4707
  %v4833 = vpack.c.b16 %v4733, %v4708
  %v4834 = vpack.c.b16 %v4734, %v4709
  %v4835 = vpack.c.b16 %v4735, %v4710
  %v4836 = vpack.c.b16 %v4736, %v4711
  %v4837 = vpack.c.b16 %v4737, %v4712
  %v4838 = vpack.c.b16 %v4738, %v4713
  %v4839 = vpack.c.b16 %v4739, %v4714
  %v4840 = vpack.c.b16 %v4740, %v4715
  %v4841 = vpack.c.b16 %v4741, %v4741
  %v4842 = vpack.c.b16 %v4742, %v4742
  %v4843 = vpack.c.b16 %v4743, %v4743
  %v4844 = vpack.c.b16 %v4744, %v4744
  %v4845 = vpack.c.b16 %v4745, %v4745
  %v4846 = vpack.c.b16 %v4746, %v4746
  %v4847 = vpack.c.b16 %v4747, %v4747
  %v4848 = vpack.c.b16 %v4748, %v4748
  %v4849 = vpack.c.b16 %v4749, %v4749
  %v4850 = vpack.c.b16 %v4750, %v4750
  %v4851 = vpack.c.b16 %v4751, %v4751
  %v4852 = vpack.c.b16 %v4752, %v4752
  %v4853 = vpack.c.b16 %v4753, %v4753
  %v4854 = vpack.c.b16 %v4754, %v4754
  %v4855 = vpack.c.b16 %v4755, %v4755
  %v4856 = vpack.c.b16 %v4756, %v4756
  %v4857 = vpack.c.b16 %v4757, %v4757
  %v4858 = vpack.c.b16 %v4758, %v4758
  %v4859 = vpack.c.b16 %v4759, %v4759
  %v4860 = vpack.c.b16 %v4760, %v4760
  %v4861 = vpack.c.b16 %v4761, %v4761
  %v4862 = vpack.c.b16 %v4762, %v4762
  %v4863 = vpack.c.b16 %v4763, %v4763
  %v4864 = vpack.c.b16 %v4764, %v4764
  %v4865 = vpack.c.b16 %v4765, %v4765
  %4966 = vmatprep.subr.bf16.mxu0 0
  %4967 = vmatpush1.bf16.msra.mxu0 %v1788
  %4968 = vmatprep.subr.bf16.mxu0 0
  %4969 = vmatpush1.bf16.msra.mxu0 %v1787
  %4970 = vmatprep.subr.bf16.mxu0 0
  %4971 = vmatpush1.bf16.msra.mxu0 %v1786
  %4972 = vmatprep.subr.bf16.mxu0 0
  %4973 = vmatpush1.bf16.msra.mxu0 %v1785
  %4974 = vmatprep.subr.bf16.mxu0 0
  %4975 = vmatpush1.bf16.msra.mxu0 %v1784
  %4976 = vmatprep.subr.bf16.mxu0 0
  %4977 = vmatpush1.bf16.msra.mxu0 %v1783
  %4978 = vmatprep.subr.bf16.mxu0 0
  %4979 = vmatpush1.bf16.msra.mxu0 %v1782
  %4980 = vmatprep.subr.bf16.mxu0 0
  %4981 = vmatpush1.bf16.msra.mxu0 %v1781
  %4982 = vmatprep.subr.bf16.mxu0 0
  %4983 = vmatpush2.bf16.msra.mxu0 %v1796
  %4984 = vmatprep.subr.bf16.mxu0 0
  %4985 = vmatpush2.bf16.msra.mxu0 %v1795
  %4986 = vmatprep.subr.bf16.mxu0 0
  %4987 = vmatpush2.bf16.msra.mxu0 %v1794
  %4988 = vmatprep.subr.bf16.mxu0 0
  %4989 = vmatpush2.bf16.msra.mxu0 %v1793
  %4990 = vmatprep.subr.bf16.mxu0 0
  %4991 = vmatpush2.bf16.msra.mxu0 %v1792
  %4992 = vmatprep.subr.bf16.mxu0 0
  %4993 = vmatpush2.bf16.msra.mxu0 %v1791
  %4994 = vmatprep.subr.bf16.mxu0 0
  %4995 = vmatpush2.bf16.msra.mxu0 %v1790
  %4996 = vmatprep.subr.bf16.mxu0 0
  %4997 = vmatpush2.bf16.msra.mxu0 %v1789
  %4998 = vmatprep.mubr.bf16.mxu0 %v4767
  %4999 = vmatmul.mubr.bf16.gmra.mxu0 %v4766
  %v5000 = vpop.f32.mrf.mxu0
  %v5001 = vadd.f32 0.0, %v5000
  %v5002 = vpop.f32.mrf.mxu0
  %v5003 = vpop.f32.mrf.mxu0
  %v5004 = vadd.f32 0.0, %v5003
  %v5005 = vpop.f32.mrf.mxu0
  %5006 = vmatprep.mubr.bf16.mxu0 %v4792
  %5007 = vmatmul.mubr.bf16.gmra.mxu0 %v4791
  %v5008 = vpop.f32.mrf.mxu0
  %v5009 = vadd.f32 0.0, %v5008
  %v5010 = vpop.f32.mrf.mxu0
  %v5011 = vpop.f32.mrf.mxu0
  %v5012 = vadd.f32 0.0, %v5011
  %v5013 = vpop.f32.mrf.mxu0
  %5014 = vmatprep.mubr.bf16.mxu0 %v4817
  %5015 = vmatmul.mubr.bf16.gmra.mxu0 %v4816
  %v5016 = vpop.f32.mrf.mxu0
  %v5017 = vadd.f32 0.0, %v5016
  %v5018 = vpop.f32.mrf.mxu0
  %v5019 = vpop.f32.mrf.mxu0
  %v5020 = vadd.f32 0.0, %v5019
  %v5021 = vpop.f32.mrf.mxu0
  %5022 = vmatprep.mubr.bf16.mxu0 %v4842
  %5023 = vmatmul.mubr.bf16.gmra.mxu0 %v4841
  %v5024 = vpop.f32.mrf.mxu0
  %v5025 = vadd.f32 0.0, %v5024
  %v5026 = vpop.f32.mrf.mxu0
  %v5027 = vpop.f32.mrf.mxu0
  %v5028 = vpop.f32.mrf.mxu0
  %5029 = vdwg.mxu0
  %5030 = vmatprep.subr.bf16.mxu0 0
  %5031 = vmatpush1.bf16.msra.mxu0 %v1804
  %5032 = vmatprep.subr.bf16.mxu0 0
  %5033 = vmatpush1.bf16.msra.mxu0 %v1803
  %5034 = vmatprep.subr.bf16.mxu0 0
  %5035 = vmatpush1.bf16.msra.mxu0 %v1802
  %5036 = vmatprep.subr.bf16.mxu0 0
  %5037 = vmatpush1.bf16.msra.mxu0 %v1801
  %5038 = vmatprep.subr.bf16.mxu0 0
  %5039 = vmatpush1.bf16.msra.mxu0 %v1800
  %5040 = vmatprep.subr.bf16.mxu0 0
  %5041 = vmatpush1.bf16.msra.mxu0 %v1799
  %5042 = vmatprep.subr.bf16.mxu0 0
  %5043 = vmatpush1.bf16.msra.mxu0 %v1798
  %5044 = vmatprep.subr.bf16.mxu0 0
  %5045 = vmatpush1.bf16.msra.mxu0 %v1797
  %5046 = vmatprep.subr.bf16.mxu0 0
  %5047 = vmatpush2.bf16.msra.mxu0 %v1812
  %5048 = vmatprep.subr.bf16.mxu0 0
  %5049 = vmatpush2.bf16.msra.mxu0 %v1811
  %5050 = vmatprep.subr.bf16.mxu0 0
  %5051 = vmatpush2.bf16.msra.mxu0 %v1810
  %5052 = vmatprep.subr.bf16.mxu0 0
  %5053 = vmatpush2.bf16.msra.mxu0 %v1809
  %5054 = vmatprep.subr.bf16.mxu0 0
  %5055 = vmatpush2.bf16.msra.mxu0 %v1808
  %5056 = vmatprep.subr.bf16.mxu0 0
  %5057 = vmatpush2.bf16.msra.mxu0 %v1807
  %5058 = vmatprep.subr.bf16.mxu0 0
  %5059 = vmatpush2.bf16.msra.mxu0 %v1806
  %5060 = vmatprep.subr.bf16.mxu0 0
  %5061 = vmatpush2.bf16.msra.mxu0 %v1805
  %5062 = vmatprep.mubr.bf16.mxu0 %v4769
  %5063 = vmatmul.mubr.bf16.gmra.mxu0 %v4768
  %v5064 = vpop.f32.mrf.mxu0
  %v5065 = vadd.f32 %v5001, %v5064
  %v5066 = vpop.f32.mrf.mxu0
  %v5067 = vpop.f32.mrf.mxu0
  %v5068 = vadd.f32 %v5004, %v5067
  %v5069 = vpop.f32.mrf.mxu0
  %5070 = vmatprep.mubr.bf16.mxu0 %v4794
  %5071 = vmatmul.mubr.bf16.gmra.mxu0 %v4793
  %v5072 = vpop.f32.mrf.mxu0
  %v5073 = vadd.f32 %v5009, %v5072
  %v5074 = vpop.f32.mrf.mxu0
  %v5075 = vpop.f32.mrf.mxu0
  %v5076 = vadd.f32 %v5012, %v5075
  %v5077 = vpop.f32.mrf.mxu0
  %5078 = vmatprep.mubr.bf16.mxu0 %v4819
  %5079 = vmatmul.mubr.bf16.gmra.mxu0 %v4818
  %v5080 = vpop.f32.mrf.mxu0
  %v5081 = vadd.f32 %v5017, %v5080
  %v5082 = vpop.f32.mrf.mxu0
  %v5083 = vpop.f32.mrf.mxu0
  %v5084 = vadd.f32 %v5020, %v5083
  %v5085 = vpop.f32.mrf.mxu0
  %5086 = vmatprep.mubr.bf16.mxu0 %v4844
  %5087 = vmatmul.mubr.bf16.gmra.mxu0 %v4843
  %v5088 = vpop.f32.mrf.mxu0
  %v5089 = vadd.f32 %v5025, %v5088
  %v5090 = vpop.f32.mrf.mxu0
  %v5091 = vpop.f32.mrf.mxu0
  %v5092 = vpop.f32.mrf.mxu0
  %5093 = vdwg.mxu0
  %5094 = vmatprep.subr.bf16.mxu0 0
  %5095 = vmatpush1.bf16.msra.mxu0 %v1820
  %5096 = vmatprep.subr.bf16.mxu0 0
  %5097 = vmatpush1.bf16.msra.mxu0 %v1819
  %5098 = vmatprep.subr.bf16.mxu0 0
  %5099 = vmatpush1.bf16.msra.mxu0 %v1818
  %5100 = vmatprep.subr.bf16.mxu0 0
  %5101 = vmatpush1.bf16.msra.mxu0 %v1817
  %5102 = vmatprep.subr.bf16.mxu0 0
  %5103 = vmatpush1.bf16.msra.mxu0 %v1816
  %5104 = vmatprep.subr.bf16.mxu0 0
  %5105 = vmatpush1.bf16.msra.mxu0 %v1815
  %5106 = vmatprep.subr.bf16.mxu0 0
  %5107 = vmatpush1.bf16.msra.mxu0 %v1814
  %5108 = vmatprep.subr.bf16.mxu0 0
  %5109 = vmatpush1.bf16.msra.mxu0 %v1813
  %5110 = vmatprep.subr.bf16.mxu0 0
  %5111 = vmatpush2.bf16.msra.mxu0 %v1828
  %5112 = vmatprep.subr.bf16.mxu0 0
  %5113 = vmatpush2.bf16.msra.mxu0 %v1827
  %5114 = vmatprep.subr.bf16.mxu0 0
  %5115 = vmatpush2.bf16.msra.mxu0 %v1826
  %5116 = vmatprep.subr.bf16.mxu0 0
  %5117 = vmatpush2.bf16.msra.mxu0 %v1825
  %5118 = vmatprep.subr.bf16.mxu0 0
  %5119 = vmatpush2.bf16.msra.mxu0 %v1824
  %5120 = vmatprep.subr.bf16.mxu0 0
  %5121 = vmatpush2.bf16.msra.mxu0 %v1823
  %5122 = vmatprep.subr.bf16.mxu0 0
  %5123 = vmatpush2.bf16.msra.mxu0 %v1822
  %5124 = vmatprep.subr.bf16.mxu0 0
  %5125 = vmatpush2.bf16.msra.mxu0 %v1821
  %5126 = vmatprep.mubr.bf16.mxu0 %v4771
  %5127 = vmatmul.mubr.bf16.gmra.mxu0 %v4770
  %v5128 = vpop.f32.mrf.mxu0
  %v5129 = vadd.f32 %v5065, %v5128
  %v5130 = vpop.f32.mrf.mxu0
  %v5131 = vpop.f32.mrf.mxu0
  %v5132 = vadd.f32 %v5068, %v5131
  %v5133 = vpop.f32.mrf.mxu0
  %5134 = vmatprep.mubr.bf16.mxu0 %v4796
  %5135 = vmatmul.mubr.bf16.gmra.mxu0 %v4795
  %v5136 = vpop.f32.mrf.mxu0
  %v5137 = vadd.f32 %v5073, %v5136
  %v5138 = vpop.f32.mrf.mxu0
  %v5139 = vpop.f32.mrf.mxu0
  %v5140 = vadd.f32 %v5076, %v5139
  %v5141 = vpop.f32.mrf.mxu0
  %5142 = vmatprep.mubr.bf16.mxu0 %v4821
  %5143 = vmatmul.mubr.bf16.gmra.mxu0 %v4820
  %v5144 = vpop.f32.mrf.mxu0
  %v5145 = vadd.f32 %v5081, %v5144
  %v5146 = vpop.f32.mrf.mxu0
  %v5147 = vpop.f32.mrf.mxu0
  %v5148 = vadd.f32 %v5084, %v5147
  %v5149 = vpop.f32.mrf.mxu0
  %5150 = vmatprep.mubr.bf16.mxu0 %v4846
  %5151 = vmatmul.mubr.bf16.gmra.mxu0 %v4845
  %v5152 = vpop.f32.mrf.mxu0
  %v5153 = vadd.f32 %v5089, %v5152
  %v5154 = vpop.f32.mrf.mxu0
  %v5155 = vpop.f32.mrf.mxu0
  %v5156 = vpop.f32.mrf.mxu0
  %5157 = vdwg.mxu0
  %5158 = vmatprep.subr.bf16.mxu0 0
  %5159 = vmatpush1.bf16.msra.mxu0 %v1836
  %5160 = vmatprep.subr.bf16.mxu0 0
  %5161 = vmatpush1.bf16.msra.mxu0 %v1835
  %5162 = vmatprep.subr.bf16.mxu0 0
  %5163 = vmatpush1.bf16.msra.mxu0 %v1834
  %5164 = vmatprep.subr.bf16.mxu0 0
  %5165 = vmatpush1.bf16.msra.mxu0 %v1833
  %5166 = vmatprep.subr.bf16.mxu0 0
  %5167 = vmatpush1.bf16.msra.mxu0 %v1832
  %5168 = vmatprep.subr.bf16.mxu0 0
  %5169 = vmatpush1.bf16.msra.mxu0 %v1831
  %5170 = vmatprep.subr.bf16.mxu0 0
  %5171 = vmatpush1.bf16.msra.mxu0 %v1830
  %5172 = vmatprep.subr.bf16.mxu0 0
  %5173 = vmatpush1.bf16.msra.mxu0 %v1829
  %5174 = vmatprep.subr.bf16.mxu0 0
  %5175 = vmatpush2.bf16.msra.mxu0 %v1844
  %5176 = vmatprep.subr.bf16.mxu0 0
  %5177 = vmatpush2.bf16.msra.mxu0 %v1843
  %5178 = vmatprep.subr.bf16.mxu0 0
  %5179 = vmatpush2.bf16.msra.mxu0 %v1842
  %5180 = vmatprep.subr.bf16.mxu0 0
  %5181 = vmatpush2.bf16.msra.mxu0 %v1841
  %5182 = vmatprep.subr.bf16.mxu0 0
  %5183 = vmatpush2.bf16.msra.mxu0 %v1840
  %5184 = vmatprep.subr.bf16.mxu0 0
  %5185 = vmatpush2.bf16.msra.mxu0 %v1839
  %5186 = vmatprep.subr.bf16.mxu0 0
  %5187 = vmatpush2.bf16.msra.mxu0 %v1838
  %5188 = vmatprep.subr.bf16.mxu0 0
  %5189 = vmatpush2.bf16.msra.mxu0 %v1837
  %5190 = vmatprep.mubr.bf16.mxu0 %v4773
  %5191 = vmatmul.mubr.bf16.gmra.mxu0 %v4772
  %v5192 = vpop.f32.mrf.mxu0
  %v5193 = vadd.f32 %v5129, %v5192
  %v5194 = vpop.f32.mrf.mxu0
  %v5195 = vpop.f32.mrf.mxu0
  %v5196 = vadd.f32 %v5132, %v5195
  %v5197 = vpop.f32.mrf.mxu0
  %5198 = vmatprep.mubr.bf16.mxu0 %v4798
  %5199 = vmatmul.mubr.bf16.gmra.mxu0 %v4797
  %v5200 = vpop.f32.mrf.mxu0
  %v5201 = vadd.f32 %v5137, %v5200
  %v5202 = vpop.f32.mrf.mxu0
  %v5203 = vpop.f32.mrf.mxu0
  %v5204 = vadd.f32 %v5140, %v5203
  %v5205 = vpop.f32.mrf.mxu0
  %5206 = vmatprep.mubr.bf16.mxu0 %v4823
  %5207 = vmatmul.mubr.bf16.gmra.mxu0 %v4822
  %v5208 = vpop.f32.mrf.mxu0
  %v5209 = vadd.f32 %v5145, %v5208
  %v5210 = vpop.f32.mrf.mxu0
  %v5211 = vpop.f32.mrf.mxu0
  %v5212 = vadd.f32 %v5148, %v5211
  %v5213 = vpop.f32.mrf.mxu0
  %5214 = vmatprep.mubr.bf16.mxu0 %v4848
  %5215 = vmatmul.mubr.bf16.gmra.mxu0 %v4847
  %v5216 = vpop.f32.mrf.mxu0
  %v5217 = vadd.f32 %v5153, %v5216
  %v5218 = vpop.f32.mrf.mxu0
  %v5219 = vpop.f32.mrf.mxu0
  %v5220 = vpop.f32.mrf.mxu0
  %5221 = vdwg.mxu0
  %5222 = vmatprep.subr.bf16.mxu0 0
  %5223 = vmatpush1.bf16.msra.mxu0 %v1852
  %5224 = vmatprep.subr.bf16.mxu0 0
  %5225 = vmatpush1.bf16.msra.mxu0 %v1851
  %5226 = vmatprep.subr.bf16.mxu0 0
  %5227 = vmatpush1.bf16.msra.mxu0 %v1850
  %5228 = vmatprep.subr.bf16.mxu0 0
  %5229 = vmatpush1.bf16.msra.mxu0 %v1849
  %5230 = vmatprep.subr.bf16.mxu0 0
  %5231 = vmatpush1.bf16.msra.mxu0 %v1848
  %5232 = vmatprep.subr.bf16.mxu0 0
  %5233 = vmatpush1.bf16.msra.mxu0 %v1847
  %5234 = vmatprep.subr.bf16.mxu0 0
  %5235 = vmatpush1.bf16.msra.mxu0 %v1846
  %5236 = vmatprep.subr.bf16.mxu0 0
  %5237 = vmatpush1.bf16.msra.mxu0 %v1845
  %5238 = vmatprep.subr.bf16.mxu0 0
  %5239 = vmatpush2.bf16.msra.mxu0 %v1860
  %5240 = vmatprep.subr.bf16.mxu0 0
  %5241 = vmatpush2.bf16.msra.mxu0 %v1859
  %5242 = vmatprep.subr.bf16.mxu0 0
  %5243 = vmatpush2.bf16.msra.mxu0 %v1858
  %5244 = vmatprep.subr.bf16.mxu0 0
  %5245 = vmatpush2.bf16.msra.mxu0 %v1857
  %5246 = vmatprep.subr.bf16.mxu0 0
  %5247 = vmatpush2.bf16.msra.mxu0 %v1856
  %5248 = vmatprep.subr.bf16.mxu0 0
  %5249 = vmatpush2.bf16.msra.mxu0 %v1855
  %5250 = vmatprep.subr.bf16.mxu0 0
  %5251 = vmatpush2.bf16.msra.mxu0 %v1854
  %5252 = vmatprep.subr.bf16.mxu0 0
  %5253 = vmatpush2.bf16.msra.mxu0 %v1853
  %5254 = vmatprep.mubr.bf16.mxu0 %v4775
  %5255 = vmatmul.mubr.bf16.gmra.mxu0 %v4774
  %v5256 = vpop.f32.mrf.mxu0
  %v5257 = vadd.f32 %v5193, %v5256
  %v5258 = vpop.f32.mrf.mxu0
  %v5259 = vpop.f32.mrf.mxu0
  %v5260 = vadd.f32 %v5196, %v5259
  %v5261 = vpop.f32.mrf.mxu0
  %5262 = vmatprep.mubr.bf16.mxu0 %v4800
  %5263 = vmatmul.mubr.bf16.gmra.mxu0 %v4799
  %v5264 = vpop.f32.mrf.mxu0
  %v5265 = vadd.f32 %v5201, %v5264
  %v5266 = vpop.f32.mrf.mxu0
  %v5267 = vpop.f32.mrf.mxu0
  %v5268 = vadd.f32 %v5204, %v5267
  %v5269 = vpop.f32.mrf.mxu0
  %5270 = vmatprep.mubr.bf16.mxu0 %v4825
  %5271 = vmatmul.mubr.bf16.gmra.mxu0 %v4824
  %v5272 = vpop.f32.mrf.mxu0
  %v5273 = vadd.f32 %v5209, %v5272
  %v5274 = vpop.f32.mrf.mxu0
  %v5275 = vpop.f32.mrf.mxu0
  %v5276 = vadd.f32 %v5212, %v5275
  %v5277 = vpop.f32.mrf.mxu0
  %5278 = vmatprep.mubr.bf16.mxu0 %v4850
  %5279 = vmatmul.mubr.bf16.gmra.mxu0 %v4849
  %v5280 = vpop.f32.mrf.mxu0
  %v5281 = vadd.f32 %v5217, %v5280
  %v5282 = vpop.f32.mrf.mxu0
  %v5283 = vpop.f32.mrf.mxu0
  %v5284 = vpop.f32.mrf.mxu0
  %5285 = vdwg.mxu0
  %5286 = vmatprep.subr.bf16.mxu0 0
  %5287 = vmatpush1.bf16.msra.mxu0 %v1868
  %5288 = vmatprep.subr.bf16.mxu0 0
  %5289 = vmatpush1.bf16.msra.mxu0 %v1867
  %5290 = vmatprep.subr.bf16.mxu0 0
  %5291 = vmatpush1.bf16.msra.mxu0 %v1866
  %5292 = vmatprep.subr.bf16.mxu0 0
  %5293 = vmatpush1.bf16.msra.mxu0 %v1865
  %5294 = vmatprep.subr.bf16.mxu0 0
  %5295 = vmatpush1.bf16.msra.mxu0 %v1864
  %5296 = vmatprep.subr.bf16.mxu0 0
  %5297 = vmatpush1.bf16.msra.mxu0 %v1863
  %5298 = vmatprep.subr.bf16.mxu0 0
  %5299 = vmatpush1.bf16.msra.mxu0 %v1862
  %5300 = vmatprep.subr.bf16.mxu0 0
  %5301 = vmatpush1.bf16.msra.mxu0 %v1861
  %5302 = vmatprep.subr.bf16.mxu0 0
  %5303 = vmatpush2.bf16.msra.mxu0 %v1876
  %5304 = vmatprep.subr.bf16.mxu0 0
  %5305 = vmatpush2.bf16.msra.mxu0 %v1875
  %5306 = vmatprep.subr.bf16.mxu0 0
  %5307 = vmatpush2.bf16.msra.mxu0 %v1874
  %5308 = vmatprep.subr.bf16.mxu0 0
  %5309 = vmatpush2.bf16.msra.mxu0 %v1873
  %5310 = vmatprep.subr.bf16.mxu0 0
  %5311 = vmatpush2.bf16.msra.mxu0 %v1872
  %5312 = vmatprep.subr.bf16.mxu0 0
  %5313 = vmatpush2.bf16.msra.mxu0 %v1871
  %5314 = vmatprep.subr.bf16.mxu0 0
  %5315 = vmatpush2.bf16.msra.mxu0 %v1870
  %5316 = vmatprep.subr.bf16.mxu0 0
  %5317 = vmatpush2.bf16.msra.mxu0 %v1869
  %5318 = vmatprep.mubr.bf16.mxu0 %v4777
  %5319 = vmatmul.mubr.bf16.gmra.mxu0 %v4776
  %v5320 = vpop.f32.mrf.mxu0
  %v5321 = vadd.f32 %v5257, %v5320
  %v5322 = vpop.f32.mrf.mxu0
  %v5323 = vpop.f32.mrf.mxu0
  %v5324 = vadd.f32 %v5260, %v5323
  %v5325 = vpop.f32.mrf.mxu0
  %5326 = vmatprep.mubr.bf16.mxu0 %v4802
  %5327 = vmatmul.mubr.bf16.gmra.mxu0 %v4801
  %v5328 = vpop.f32.mrf.mxu0
  %v5329 = vadd.f32 %v5265, %v5328
  %v5330 = vpop.f32.mrf.mxu0
  %v5331 = vpop.f32.mrf.mxu0
  %v5332 = vadd.f32 %v5268, %v5331
  %v5333 = vpop.f32.mrf.mxu0
  %5334 = vmatprep.mubr.bf16.mxu0 %v4827
  %5335 = vmatmul.mubr.bf16.gmra.mxu0 %v4826
  %v5336 = vpop.f32.mrf.mxu0
  %v5337 = vadd.f32 %v5273, %v5336
  %v5338 = vpop.f32.mrf.mxu0
  %v5339 = vpop.f32.mrf.mxu0
  %v5340 = vadd.f32 %v5276, %v5339
  %v5341 = vpop.f32.mrf.mxu0
  %5342 = vmatprep.mubr.bf16.mxu0 %v4852
  %5343 = vmatmul.mubr.bf16.gmra.mxu0 %v4851
  %v5344 = vpop.f32.mrf.mxu0
  %v5345 = vadd.f32 %v5281, %v5344
  %v5346 = vpop.f32.mrf.mxu0
  %v5347 = vpop.f32.mrf.mxu0
  %v5348 = vpop.f32.mrf.mxu0
  %5349 = vdwg.mxu0
  %5350 = vmatprep.subr.bf16.mxu0 0
  %5351 = vmatpush1.bf16.msra.mxu0 %v1884
  %5352 = vmatprep.subr.bf16.mxu0 0
  %5353 = vmatpush1.bf16.msra.mxu0 %v1883
  %5354 = vmatprep.subr.bf16.mxu0 0
  %5355 = vmatpush1.bf16.msra.mxu0 %v1882
  %5356 = vmatprep.subr.bf16.mxu0 0
  %5357 = vmatpush1.bf16.msra.mxu0 %v1881
  %5358 = vmatprep.subr.bf16.mxu0 0
  %5359 = vmatpush1.bf16.msra.mxu0 %v1880
  %5360 = vmatprep.subr.bf16.mxu0 0
  %5361 = vmatpush1.bf16.msra.mxu0 %v1879
  %5362 = vmatprep.subr.bf16.mxu0 0
  %5363 = vmatpush1.bf16.msra.mxu0 %v1878
  %5364 = vmatprep.subr.bf16.mxu0 0
  %5365 = vmatpush1.bf16.msra.mxu0 %v1877
  %5366 = vmatprep.subr.bf16.mxu0 0
  %5367 = vmatpush2.bf16.msra.mxu0 %v1892
  %5368 = vmatprep.subr.bf16.mxu0 0
  %5369 = vmatpush2.bf16.msra.mxu0 %v1891
  %5370 = vmatprep.subr.bf16.mxu0 0
  %5371 = vmatpush2.bf16.msra.mxu0 %v1890
  %5372 = vmatprep.subr.bf16.mxu0 0
  %5373 = vmatpush2.bf16.msra.mxu0 %v1889
  %5374 = vmatprep.subr.bf16.mxu0 0
  %5375 = vmatpush2.bf16.msra.mxu0 %v1888
  %5376 = vmatprep.subr.bf16.mxu0 0
  %5377 = vmatpush2.bf16.msra.mxu0 %v1887
  %5378 = vmatprep.subr.bf16.mxu0 0
  %5379 = vmatpush2.bf16.msra.mxu0 %v1886
  %5380 = vmatprep.subr.bf16.mxu0 0
  %5381 = vmatpush2.bf16.msra.mxu0 %v1885
  %5382 = vmatprep.mubr.bf16.mxu0 %v4779
  %5383 = vmatmul.mubr.bf16.gmra.mxu0 %v4778
  %v5384 = vpop.f32.mrf.mxu0
  %v5385 = vadd.f32 %v5321, %v5384
  %v5386 = vpop.f32.mrf.mxu0
  %v5387 = vpop.f32.mrf.mxu0
  %v5388 = vadd.f32 %v5324, %v5387
  %v5389 = vpop.f32.mrf.mxu0
  %5390 = vmatprep.mubr.bf16.mxu0 %v4804
  %5391 = vmatmul.mubr.bf16.gmra.mxu0 %v4803
  %v5392 = vpop.f32.mrf.mxu0
  %v5393 = vadd.f32 %v5329, %v5392
  %v5394 = vpop.f32.mrf.mxu0
  %v5395 = vpop.f32.mrf.mxu0
  %v5396 = vadd.f32 %v5332, %v5395
  %v5397 = vpop.f32.mrf.mxu0
  %5398 = vmatprep.mubr.bf16.mxu0 %v4829
  %5399 = vmatmul.mubr.bf16.gmra.mxu0 %v4828
  %v5400 = vpop.f32.mrf.mxu0
  %v5401 = vadd.f32 %v5337, %v5400
  %v5402 = vpop.f32.mrf.mxu0
  %v5403 = vpop.f32.mrf.mxu0
  %v5404 = vadd.f32 %v5340, %v5403
  %v5405 = vpop.f32.mrf.mxu0
  %5406 = vmatprep.mubr.bf16.mxu0 %v4854
  %5407 = vmatmul.mubr.bf16.gmra.mxu0 %v4853
  %v5408 = vpop.f32.mrf.mxu0
  %v5409 = vadd.f32 %v5345, %v5408
  %v5410 = vpop.f32.mrf.mxu0
  %v5411 = vpop.f32.mrf.mxu0
  %v5412 = vpop.f32.mrf.mxu0
  %5413 = vdwg.mxu0
  %5414 = vmatprep.subr.bf16.mxu0 0
  %5415 = vmatpush1.bf16.msra.mxu0 %v1900
  %5416 = vmatprep.subr.bf16.mxu0 0
  %5417 = vmatpush1.bf16.msra.mxu0 %v1899
  %5418 = vmatprep.subr.bf16.mxu0 0
  %5419 = vmatpush1.bf16.msra.mxu0 %v1898
  %5420 = vmatprep.subr.bf16.mxu0 0
  %5421 = vmatpush1.bf16.msra.mxu0 %v1897
  %5422 = vmatprep.subr.bf16.mxu0 0
  %5423 = vmatpush1.bf16.msra.mxu0 %v1896
  %5424 = vmatprep.subr.bf16.mxu0 0
  %5425 = vmatpush1.bf16.msra.mxu0 %v1895
  %5426 = vmatprep.subr.bf16.mxu0 0
  %5427 = vmatpush1.bf16.msra.mxu0 %v1894
  %5428 = vmatprep.subr.bf16.mxu0 0
  %5429 = vmatpush1.bf16.msra.mxu0 %v1893
  %5430 = vmatprep.subr.bf16.mxu0 0
  %5431 = vmatpush2.bf16.msra.mxu0 %v1908
  %5432 = vmatprep.subr.bf16.mxu0 0
  %5433 = vmatpush2.bf16.msra.mxu0 %v1907
  %5434 = vmatprep.subr.bf16.mxu0 0
  %5435 = vmatpush2.bf16.msra.mxu0 %v1906
  %5436 = vmatprep.subr.bf16.mxu0 0
  %5437 = vmatpush2.bf16.msra.mxu0 %v1905
  %5438 = vmatprep.subr.bf16.mxu0 0
  %5439 = vmatpush2.bf16.msra.mxu0 %v1904
  %5440 = vmatprep.subr.bf16.mxu0 0
  %5441 = vmatpush2.bf16.msra.mxu0 %v1903
  %5442 = vmatprep.subr.bf16.mxu0 0
  %5443 = vmatpush2.bf16.msra.mxu0 %v1902
  %5444 = vmatprep.subr.bf16.mxu0 0
  %5445 = vmatpush2.bf16.msra.mxu0 %v1901
  %5446 = vmatprep.mubr.bf16.mxu0 %v4781
  %5447 = vmatmul.mubr.bf16.gmra.mxu0 %v4780
  %v5448 = vpop.f32.mrf.mxu0
  %v5449 = vadd.f32 %v5385, %v5448
  %v5450 = vpop.f32.mrf.mxu0
  %v5451 = vpop.f32.mrf.mxu0
  %v5452 = vadd.f32 %v5388, %v5451
  %v5453 = vpop.f32.mrf.mxu0
  %5454 = vmatprep.mubr.bf16.mxu0 %v4806
  %5455 = vmatmul.mubr.bf16.gmra.mxu0 %v4805
  %v5456 = vpop.f32.mrf.mxu0
  %v5457 = vadd.f32 %v5393, %v5456
  %v5458 = vpop.f32.mrf.mxu0
  %v5459 = vpop.f32.mrf.mxu0
  %v5460 = vadd.f32 %v5396, %v5459
  %v5461 = vpop.f32.mrf.mxu0
  %5462 = vmatprep.mubr.bf16.mxu0 %v4831
  %5463 = vmatmul.mubr.bf16.gmra.mxu0 %v4830
  %v5464 = vpop.f32.mrf.mxu0
  %v5465 = vadd.f32 %v5401, %v5464
  %v5466 = vpop.f32.mrf.mxu0
  %v5467 = vpop.f32.mrf.mxu0
  %v5468 = vadd.f32 %v5404, %v5467
  %v5469 = vpop.f32.mrf.mxu0
  %5470 = vmatprep.mubr.bf16.mxu0 %v4856
  %5471 = vmatmul.mubr.bf16.gmra.mxu0 %v4855
  %v5472 = vpop.f32.mrf.mxu0
  %v5473 = vadd.f32 %v5409, %v5472
  %v5474 = vpop.f32.mrf.mxu0
  %v5475 = vpop.f32.mrf.mxu0
  %v5476 = vpop.f32.mrf.mxu0
  %5477 = vdwg.mxu0
  %5478 = vmatprep.subr.bf16.mxu0 0
  %5479 = vmatpush1.bf16.msra.mxu0 %v1916
  %5480 = vmatprep.subr.bf16.mxu0 0
  %5481 = vmatpush1.bf16.msra.mxu0 %v1915
  %5482 = vmatprep.subr.bf16.mxu0 0
  %5483 = vmatpush1.bf16.msra.mxu0 %v1914
  %5484 = vmatprep.subr.bf16.mxu0 0
  %5485 = vmatpush1.bf16.msra.mxu0 %v1913
  %5486 = vmatprep.subr.bf16.mxu0 0
  %5487 = vmatpush1.bf16.msra.mxu0 %v1912
  %5488 = vmatprep.subr.bf16.mxu0 0
  %5489 = vmatpush1.bf16.msra.mxu0 %v1911
  %5490 = vmatprep.subr.bf16.mxu0 0
  %5491 = vmatpush1.bf16.msra.mxu0 %v1910
  %5492 = vmatprep.subr.bf16.mxu0 0
  %5493 = vmatpush1.bf16.msra.mxu0 %v1909
  %5494 = vmatprep.subr.bf16.mxu0 0
  %5495 = vmatpush2.bf16.msra.mxu0 %v1924
  %5496 = vmatprep.subr.bf16.mxu0 0
  %5497 = vmatpush2.bf16.msra.mxu0 %v1923
  %5498 = vmatprep.subr.bf16.mxu0 0
  %5499 = vmatpush2.bf16.msra.mxu0 %v1922
  %5500 = vmatprep.subr.bf16.mxu0 0
  %5501 = vmatpush2.bf16.msra.mxu0 %v1921
  %5502 = vmatprep.subr.bf16.mxu0 0
  %5503 = vmatpush2.bf16.msra.mxu0 %v1920
  %5504 = vmatprep.subr.bf16.mxu0 0
  %5505 = vmatpush2.bf16.msra.mxu0 %v1919
  %5506 = vmatprep.subr.bf16.mxu0 0
  %5507 = vmatpush2.bf16.msra.mxu0 %v1918
  %5508 = vmatprep.subr.bf16.mxu0 0
  %5509 = vmatpush2.bf16.msra.mxu0 %v1917
  %5510 = vmatprep.mubr.bf16.mxu0 %v4783
  %5511 = vmatmul.mubr.bf16.gmra.mxu0 %v4782
  %v5512 = vpop.f32.mrf.mxu0
  %v5513 = vadd.f32 %v5449, %v5512
  %v5514 = vpop.f32.mrf.mxu0
  %v5515 = vpop.f32.mrf.mxu0
  %v5516 = vadd.f32 %v5452, %v5515
  %v5517 = vpop.f32.mrf.mxu0
  %5518 = vmatprep.mubr.bf16.mxu0 %v4808
  %5519 = vmatmul.mubr.bf16.gmra.mxu0 %v4807
  %v5520 = vpop.f32.mrf.mxu0
  %v5521 = vadd.f32 %v5457, %v5520
  %v5522 = vpop.f32.mrf.mxu0
  %v5523 = vpop.f32.mrf.mxu0
  %v5524 = vadd.f32 %v5460, %v5523
  %v5525 = vpop.f32.mrf.mxu0
  %5526 = vmatprep.mubr.bf16.mxu0 %v4833
  %5527 = vmatmul.mubr.bf16.gmra.mxu0 %v4832
  %v5528 = vpop.f32.mrf.mxu0
  %v5529 = vadd.f32 %v5465, %v5528
  %v5530 = vpop.f32.mrf.mxu0
  %v5531 = vpop.f32.mrf.mxu0
  %v5532 = vadd.f32 %v5468, %v5531
  %v5533 = vpop.f32.mrf.mxu0
  %5534 = vmatprep.mubr.bf16.mxu0 %v4858
  %5535 = vmatmul.mubr.bf16.gmra.mxu0 %v4857
  %v5536 = vpop.f32.mrf.mxu0
  %v5537 = vadd.f32 %v5473, %v5536
  %v5538 = vpop.f32.mrf.mxu0
  %v5539 = vpop.f32.mrf.mxu0
  %v5540 = vpop.f32.mrf.mxu0
  %5541 = vdwg.mxu0
  %5542 = vmatprep.subr.bf16.mxu0 0
  %5543 = vmatpush1.bf16.msra.mxu0 %v1932
  %5544 = vmatprep.subr.bf16.mxu0 0
  %5545 = vmatpush1.bf16.msra.mxu0 %v1931
  %5546 = vmatprep.subr.bf16.mxu0 0
  %5547 = vmatpush1.bf16.msra.mxu0 %v1930
  %5548 = vmatprep.subr.bf16.mxu0 0
  %5549 = vmatpush1.bf16.msra.mxu0 %v1929
  %5550 = vmatprep.subr.bf16.mxu0 0
  %5551 = vmatpush1.bf16.msra.mxu0 %v1928
  %5552 = vmatprep.subr.bf16.mxu0 0
  %5553 = vmatpush1.bf16.msra.mxu0 %v1927
  %5554 = vmatprep.subr.bf16.mxu0 0
  %5555 = vmatpush1.bf16.msra.mxu0 %v1926
  %5556 = vmatprep.subr.bf16.mxu0 0
  %5557 = vmatpush1.bf16.msra.mxu0 %v1925
  %5558 = vmatprep.subr.bf16.mxu0 0
  %5559 = vmatpush2.bf16.msra.mxu0 %v1940
  %5560 = vmatprep.subr.bf16.mxu0 0
  %5561 = vmatpush2.bf16.msra.mxu0 %v1939
  %5562 = vmatprep.subr.bf16.mxu0 0
  %5563 = vmatpush2.bf16.msra.mxu0 %v1938
  %5564 = vmatprep.subr.bf16.mxu0 0
  %5565 = vmatpush2.bf16.msra.mxu0 %v1937
  %5566 = vmatprep.subr.bf16.mxu0 0
  %5567 = vmatpush2.bf16.msra.mxu0 %v1936
  %5568 = vmatprep.subr.bf16.mxu0 0
  %5569 = vmatpush2.bf16.msra.mxu0 %v1935
  %5570 = vmatprep.subr.bf16.mxu0 0
  %5571 = vmatpush2.bf16.msra.mxu0 %v1934
  %5572 = vmatprep.subr.bf16.mxu0 0
  %5573 = vmatpush2.bf16.msra.mxu0 %v1933
  %5574 = vmatprep.mubr.bf16.mxu0 %v4785
  %5575 = vmatmul.mubr.bf16.gmra.mxu0 %v4784
  %v5576 = vpop.f32.mrf.mxu0
  %v5577 = vadd.f32 %v5513, %v5576
  %v5578 = vpop.f32.mrf.mxu0
  %v5579 = vpop.f32.mrf.mxu0
  %v5580 = vadd.f32 %v5516, %v5579
  %v5581 = vpop.f32.mrf.mxu0
  %5582 = vmatprep.mubr.bf16.mxu0 %v4810
  %5583 = vmatmul.mubr.bf16.gmra.mxu0 %v4809
  %v5584 = vpop.f32.mrf.mxu0
  %v5585 = vadd.f32 %v5521, %v5584
  %v5586 = vpop.f32.mrf.mxu0
  %v5587 = vpop.f32.mrf.mxu0
  %v5588 = vadd.f32 %v5524, %v5587
  %v5589 = vpop.f32.mrf.mxu0
  %5590 = vmatprep.mubr.bf16.mxu0 %v4835
  %5591 = vmatmul.mubr.bf16.gmra.mxu0 %v4834
  %v5592 = vpop.f32.mrf.mxu0
  %v5593 = vadd.f32 %v5529, %v5592
  %v5594 = vpop.f32.mrf.mxu0
  %v5595 = vpop.f32.mrf.mxu0
  %v5596 = vadd.f32 %v5532, %v5595
  %v5597 = vpop.f32.mrf.mxu0
  %5598 = vmatprep.mubr.bf16.mxu0 %v4860
  %5599 = vmatmul.mubr.bf16.gmra.mxu0 %v4859
  %v5600 = vpop.f32.mrf.mxu0
  %v5601 = vadd.f32 %v5537, %v5600
  %v5602 = vpop.f32.mrf.mxu0
  %v5603 = vpop.f32.mrf.mxu0
  %v5604 = vpop.f32.mrf.mxu0
  %5605 = vdwg.mxu0
  %5606 = vmatprep.subr.bf16.mxu0 0
  %5607 = vmatpush1.bf16.msra.mxu0 %v1948
  %5608 = vmatprep.subr.bf16.mxu0 0
  %5609 = vmatpush1.bf16.msra.mxu0 %v1947
  %5610 = vmatprep.subr.bf16.mxu0 0
  %5611 = vmatpush1.bf16.msra.mxu0 %v1946
  %5612 = vmatprep.subr.bf16.mxu0 0
  %5613 = vmatpush1.bf16.msra.mxu0 %v1945
  %5614 = vmatprep.subr.bf16.mxu0 0
  %5615 = vmatpush1.bf16.msra.mxu0 %v1944
  %5616 = vmatprep.subr.bf16.mxu0 0
  %5617 = vmatpush1.bf16.msra.mxu0 %v1943
  %5618 = vmatprep.subr.bf16.mxu0 0
  %5619 = vmatpush1.bf16.msra.mxu0 %v1942
  %5620 = vmatprep.subr.bf16.mxu0 0
  %5621 = vmatpush1.bf16.msra.mxu0 %v1941
  %5622 = vmatprep.subr.bf16.mxu0 0
  %5623 = vmatpush2.bf16.msra.mxu0 %v1956
  %5624 = vmatprep.subr.bf16.mxu0 0
  %5625 = vmatpush2.bf16.msra.mxu0 %v1955
  %5626 = vmatprep.subr.bf16.mxu0 0
  %5627 = vmatpush2.bf16.msra.mxu0 %v1954
  %5628 = vmatprep.subr.bf16.mxu0 0
  %5629 = vmatpush2.bf16.msra.mxu0 %v1953
  %5630 = vmatprep.subr.bf16.mxu0 0
  %5631 = vmatpush2.bf16.msra.mxu0 %v1952
  %5632 = vmatprep.subr.bf16.mxu0 0
  %5633 = vmatpush2.bf16.msra.mxu0 %v1951
  %5634 = vmatprep.subr.bf16.mxu0 0
  %5635 = vmatpush2.bf16.msra.mxu0 %v1950
  %5636 = vmatprep.subr.bf16.mxu0 0
  %5637 = vmatpush2.bf16.msra.mxu0 %v1949
  %5638 = vmatprep.mubr.bf16.mxu0 %v4787
  %5639 = vmatmul.mubr.bf16.gmra.mxu0 %v4786
  %v5640 = vpop.f32.mrf.mxu0
  %v5641 = vadd.f32 %v5577, %v5640
  %v5642 = vpop.f32.mrf.mxu0
  %v5643 = vpop.f32.mrf.mxu0
  %v5644 = vadd.f32 %v5580, %v5643
  %v5645 = vpop.f32.mrf.mxu0
  %5646 = vmatprep.mubr.bf16.mxu0 %v4812
  %5647 = vmatmul.mubr.bf16.gmra.mxu0 %v4811
  %v5648 = vpop.f32.mrf.mxu0
  %v5649 = vadd.f32 %v5585, %v5648
  %v5650 = vpop.f32.mrf.mxu0
  %v5651 = vpop.f32.mrf.mxu0
  %v5652 = vadd.f32 %v5588, %v5651
  %v5653 = vpop.f32.mrf.mxu0
  %5654 = vmatprep.mubr.bf16.mxu0 %v4837
  %5655 = vmatmul.mubr.bf16.gmra.mxu0 %v4836
  %v5656 = vpop.f32.mrf.mxu0
  %v5657 = vadd.f32 %v5593, %v5656
  %v5658 = vpop.f32.mrf.mxu0
  %v5659 = vpop.f32.mrf.mxu0
  %v5660 = vadd.f32 %v5596, %v5659
  %v5661 = vpop.f32.mrf.mxu0
  %5662 = vmatprep.mubr.bf16.mxu0 %v4862
  %5663 = vmatmul.mubr.bf16.gmra.mxu0 %v4861
  %v5664 = vpop.f32.mrf.mxu0
  %v5665 = vadd.f32 %v5601, %v5664
  %v5666 = vpop.f32.mrf.mxu0
  %v5667 = vpop.f32.mrf.mxu0
  %v5668 = vpop.f32.mrf.mxu0
  %5669 = vdwg.mxu0
  %5670 = vmatprep.subr.bf16.mxu0 0
  %5671 = vmatpush1.bf16.msra.mxu0 %v1964
  %5672 = vmatprep.subr.bf16.mxu0 0
  %5673 = vmatpush1.bf16.msra.mxu0 %v1963
  %5674 = vmatprep.subr.bf16.mxu0 0
  %5675 = vmatpush1.bf16.msra.mxu0 %v1962
  %5676 = vmatprep.subr.bf16.mxu0 0
  %5677 = vmatpush1.bf16.msra.mxu0 %v1961
  %5678 = vmatprep.subr.bf16.mxu0 0
  %5679 = vmatpush1.bf16.msra.mxu0 %v1960
  %5680 = vmatprep.subr.bf16.mxu0 0
  %5681 = vmatpush1.bf16.msra.mxu0 %v1959
  %5682 = vmatprep.subr.bf16.mxu0 0
  %5683 = vmatpush1.bf16.msra.mxu0 %v1958
  %5684 = vmatprep.subr.bf16.mxu0 0
  %5685 = vmatpush1.bf16.msra.mxu0 %v1957
  %5686 = vmatprep.subr.bf16.mxu0 0
  %5687 = vmatpush2.bf16.msra.mxu0 %v1972
  %5688 = vmatprep.subr.bf16.mxu0 0
  %5689 = vmatpush2.bf16.msra.mxu0 %v1971
  %5690 = vmatprep.subr.bf16.mxu0 0
  %5691 = vmatpush2.bf16.msra.mxu0 %v1970
  %5692 = vmatprep.subr.bf16.mxu0 0
  %5693 = vmatpush2.bf16.msra.mxu0 %v1969
  %5694 = vmatprep.subr.bf16.mxu0 0
  %5695 = vmatpush2.bf16.msra.mxu0 %v1968
  %5696 = vmatprep.subr.bf16.mxu0 0
  %5697 = vmatpush2.bf16.msra.mxu0 %v1967
  %5698 = vmatprep.subr.bf16.mxu0 0
  %5699 = vmatpush2.bf16.msra.mxu0 %v1966
  %5700 = vmatprep.subr.bf16.mxu0 0
  %5701 = vmatpush2.bf16.msra.mxu0 %v1965
  %5702 = vmatprep.mubr.bf16.mxu0 %v4789
  %5703 = vmatmul.mubr.bf16.gmra.mxu0 %v4788
  %v5704 = vpop.f32.mrf.mxu0
  %v5705 = vadd.f32 %v5641, %v5704
  %v5706 = vpop.f32.mrf.mxu0
  %v5707 = vpop.f32.mrf.mxu0
  %v5708 = vadd.f32 %v5644, %v5707
  %v5709 = vpop.f32.mrf.mxu0
  %5710 = vmatprep.mubr.bf16.mxu0 %v4814
  %5711 = vmatmul.mubr.bf16.gmra.mxu0 %v4813
  %v5712 = vpop.f32.mrf.mxu0
  %v5713 = vadd.f32 %v5649, %v5712
  %v5714 = vpop.f32.mrf.mxu0
  %v5715 = vpop.f32.mrf.mxu0
  %v5716 = vadd.f32 %v5652, %v5715
  %v5717 = vpop.f32.mrf.mxu0
  %5718 = vmatprep.mubr.bf16.mxu0 %v4839
  %5719 = vmatmul.mubr.bf16.gmra.mxu0 %v4838
  %v5720 = vpop.f32.mrf.mxu0
  %v5721 = vadd.f32 %v5657, %v5720
  %v5722 = vpop.f32.mrf.mxu0
  %v5723 = vpop.f32.mrf.mxu0
  %v5724 = vadd.f32 %v5660, %v5723
  %v5725 = vpop.f32.mrf.mxu0
  %5726 = vmatprep.mubr.bf16.mxu0 %v4864
  %5727 = vmatmul.mubr.bf16.gmra.mxu0 %v4863
  %v5728 = vpop.f32.mrf.mxu0
  %v5729 = vadd.f32 %v5665, %v5728
  %v5730 = vpop.f32.mrf.mxu0
  %v5731 = vpop.f32.mrf.mxu0
  %v5732 = vpop.f32.mrf.mxu0
  %5733 = vdwg.mxu0
  %5734 = vmatprep.subr.bf16.mxu0 0
  %5735 = vmatpush1.bf16.msra.mxu0 %v1980
  %5736 = vmatprep.subr.bf16.mxu0 0
  %5737 = vmatpush1.bf16.msra.mxu0 %v1979
  %5738 = vmatprep.subr.bf16.mxu0 0
  %5739 = vmatpush1.bf16.msra.mxu0 %v1978
  %5740 = vmatprep.subr.bf16.mxu0 0
  %5741 = vmatpush1.bf16.msra.mxu0 %v1977
  %5742 = vmatprep.subr.bf16.mxu0 0
  %5743 = vmatpush1.bf16.msra.mxu0 %v1976
  %5744 = vmatprep.subr.bf16.mxu0 0
  %5745 = vmatpush1.bf16.msra.mxu0 %v1975
  %5746 = vmatprep.subr.bf16.mxu0 0
  %5747 = vmatpush1.bf16.msra.mxu0 %v1974
  %5748 = vmatprep.subr.bf16.mxu0 0
  %5749 = vmatpush1.bf16.msra.mxu0 %v1973
  %5750 = vmatprep.subr.bf16.mxu0 0
  %5751 = vmatpush2.bf16.msra.mxu0 0
  %5752 = vmatprep.subr.bf16.mxu0 0
  %5753 = vmatpush2.bf16.msra.mxu0 0
  %5754 = vmatprep.subr.bf16.mxu0 0
  %5755 = vmatpush2.bf16.msra.mxu0 0
  %5756 = vmatprep.subr.bf16.mxu0 0
  %5757 = vmatpush2.bf16.msra.mxu0 0
  %5758 = vmatprep.subr.bf16.mxu0 0
  %5759 = vmatpush2.bf16.msra.mxu0 0
  %5760 = vmatprep.subr.bf16.mxu0 0
  %5761 = vmatpush2.bf16.msra.mxu0 0
  %5762 = vmatprep.subr.bf16.mxu0 0
  %5763 = vmatpush2.bf16.msra.mxu0 0
  %5764 = vmatprep.subr.bf16.mxu0 0
  %5765 = vmatpush2.bf16.msra.mxu0 0
  %5766 = vmatprep.mubr.bf16.mxu0 0
  %5767 = vmatmul.mubr.bf16.gmra.mxu0 %v4790
  %v5768 = vpop.f32.mrf.mxu0
  %v5769 = vadd.f32 %v5705, %v5768
  %v5770 = vpop.f32.mrf.mxu0
  %v5771 = vpop.f32.mrf.mxu0
  %v5772 = vadd.f32 %v5708, %v5771
  %v5773 = vpop.f32.mrf.mxu0
  %5774 = vmatprep.mubr.bf16.mxu0 0
  %5775 = vmatmul.mubr.bf16.gmra.mxu0 %v4815
  %v5776 = vpop.f32.mrf.mxu0
  %v5777 = vadd.f32 %v5713, %v5776
  %v5778 = vpop.f32.mrf.mxu0
  %v5779 = vpop.f32.mrf.mxu0
  %v5780 = vadd.f32 %v5716, %v5779
  %v5781 = vpop.f32.mrf.mxu0
  %5782 = vmatprep.mubr.bf16.mxu0 0
  %5783 = vmatmul.mubr.bf16.gmra.mxu0 %v4840
  %v5784 = vpop.f32.mrf.mxu0
  %v5785 = vadd.f32 %v5721, %v5784
  %v5786 = vpop.f32.mrf.mxu0
  %v5787 = vpop.f32.mrf.mxu0
  %v5788 = vadd.f32 %v5724, %v5787
  %v5789 = vpop.f32.mrf.mxu0
  %5790 = vmatprep.mubr.bf16.mxu0 0
  %5791 = vmatmul.mubr.bf16.gmra.mxu0 %v4865
  %v5792 = vpop.f32.mrf.mxu0
  %v5793 = vadd.f32 %v5729, %v5792
  %v5794 = vpop.f32.mrf.mxu0
  %v5795 = vpop.f32.mrf.mxu0
  %v5796 = vpop.f32.mrf.mxu0
  %5797 = vdwg.mxu0
  %v5798 = vld [vmem:[%s3] sm:$0xff]
  %v5799 = vld [vmem:[%s3 + $0x8] sm:$0xff]
  %v5800 = vld [vmem:[%s3 + $0x10] sm:$0xff]
  %v5801 = vld [vmem:[%s3 + $0x18] sm:$0xff]
  %v5802 = vld [vmem:[%s3 + $0x20] sm:$0xff]
  %v5803 = vld [vmem:[%s3 + $0x28] sm:$0xff]
  %v5804 = vld [vmem:[%s3 + $0x30] sm:$0xff]
  %v5805 = vld [vmem:[%s3 + $0x38] sm:$0xff]
  %v5806 = vld [vmem:[%s3 + $0x40] sm:$0xff]
  %v5807 = vld [vmem:[%s3 + $0x48] sm:$0xff]
  %v5808 = vld [vmem:[%s3 + $0x50] sm:$0xff]
  %v5809 = vld [vmem:[%s3 + $0x58] sm:$0xff]
  %v5810 = vld [vmem:[%s3 + $0x60] sm:$0xf]
  %v5811 = vld [vmem:[%s3 + $0x64] sm:$0xff]
  %v5812 = vld [vmem:[%s3 + $0x6c] sm:$0xff]
  %v5813 = vld [vmem:[%s3 + $0x74] sm:$0xff]
  %v5814 = vld [vmem:[%s3 + $0x7c] sm:$0xff]
  %v5815 = vld [vmem:[%s3 + $0x84] sm:$0xff]
  %v5816 = vld [vmem:[%s3 + $0x8c] sm:$0xff]
  %v5817 = vld [vmem:[%s3 + $0x94] sm:$0xff]
  %v5818 = vld [vmem:[%s3 + $0x9c] sm:$0xff]
  %v5819 = vld [vmem:[%s3 + $0xa4] sm:$0xff]
  %v5820 = vld [vmem:[%s3 + $0xac] sm:$0xff]
  %v5821 = vld [vmem:[%s3 + $0xb4] sm:$0xff]
  %v5822 = vld [vmem:[%s3 + $0xbc] sm:$0xff]
  %v5823 = vld [vmem:[%s3 + $0xc4] sm:$0xf]
  %v5824 = vld [vmem:[%s3 + $0xc8] sm:$0xff]
  %v5825 = vld [vmem:[%s3 + $0xd0] sm:$0xff]
  %v5826 = vld [vmem:[%s3 + $0xd8] sm:$0xff]
  %v5827 = vld [vmem:[%s3 + $0xe0] sm:$0xff]
  %v5828 = vld [vmem:[%s3 + $0xe8] sm:$0xff]
  %v5829 = vld [vmem:[%s3 + $0xf0] sm:$0xff]
  %v5830 = vld [vmem:[%s3 + $0xf8] sm:$0xff]
  %v5831 = vld [vmem:[%s3 + $0x100] sm:$0xff]
  %v5832 = vld [vmem:[%s3 + $0x108] sm:$0xff]
  %v5833 = vld [vmem:[%s3 + $0x110] sm:$0xff]
  %v5834 = vld [vmem:[%s3 + $0x118] sm:$0xff]
  %v5835 = vld [vmem:[%s3 + $0x120] sm:$0xff]
  %v5836 = vld [vmem:[%s3 + $0x128] sm:$0xf]
  %v5837 = vld [vmem:[%s3 + $0x12c] sm:$0xff]
  %v5838 = vld [vmem:[%s3 + $0x134] sm:$0xff]
  %v5839 = vld [vmem:[%s3 + $0x13c] sm:$0xff]
  %v5840 = vld [vmem:[%s3 + $0x144] sm:$0xff]
  %v5841 = vld [vmem:[%s3 + $0x14c] sm:$0xff]
  %v5842 = vld [vmem:[%s3 + $0x154] sm:$0xff]
  %v5843 = vld [vmem:[%s3 + $0x15c] sm:$0xff]
  %v5844 = vld [vmem:[%s3 + $0x164] sm:$0xff]
  %v5845 = vld [vmem:[%s3 + $0x16c] sm:$0xff]
  %v5846 = vld [vmem:[%s3 + $0x174] sm:$0xff]
  %v5847 = vld [vmem:[%s3 + $0x17c] sm:$0xff]
  %v5848 = vld [vmem:[%s3 + $0x184] sm:$0xff]
  %v5849 = vld [vmem:[%s3 + $0x18c] sm:$0xf]
  %v5850 = vld [vmem:[%s3 + $0x190] sm:$0xff]
  %v5851 = vld [vmem:[%s3 + $0x198] sm:$0xff]
  %v5852 = vld [vmem:[%s3 + $0x1a0] sm:$0xff]
  %v5853 = vld [vmem:[%s3 + $0x1a8] sm:$0xff]
  %v5854 = vld [vmem:[%s3 + $0x1b0] sm:$0xff]
  %v5855 = vld [vmem:[%s3 + $0x1b8] sm:$0xff]
  %v5856 = vld [vmem:[%s3 + $0x1c0] sm:$0xff]
  %v5857 = vld [vmem:[%s3 + $0x1c8] sm:$0xff]
  %v5858 = vld [vmem:[%s3 + $0x1d0] sm:$0xff]
  %v5859 = vld [vmem:[%s3 + $0x1d8] sm:$0xff]
  %v5860 = vld [vmem:[%s3 + $0x1e0] sm:$0xff]
  %v5861 = vld [vmem:[%s3 + $0x1e8] sm:$0xff]
  %v5862 = vld [vmem:[%s3 + $0x1f0] sm:$0xf]
  %v5863 = vld [vmem:[%s3 + $0x1f4] sm:$0xff]
  %v5864 = vld [vmem:[%s3 + $0x1fc] sm:$0xff]
  %v5865 = vld [vmem:[%s3 + $0x204] sm:$0xff]
  %v5866 = vld [vmem:[%s3 + $0x20c] sm:$0xff]
  %v5867 = vld [vmem:[%s3 + $0x214] sm:$0xff]
  %v5868 = vld [vmem:[%s3 + $0x21c] sm:$0xff]
  %v5869 = vld [vmem:[%s3 + $0x224] sm:$0xff]
  %v5870 = vld [vmem:[%s3 + $0x22c] sm:$0xff]
  %v5871 = vld [vmem:[%s3 + $0x234] sm:$0xff]
  %v5872 = vld [vmem:[%s3 + $0x23c] sm:$0xff]
  %v5873 = vld [vmem:[%s3 + $0x244] sm:$0xff]
  %v5874 = vld [vmem:[%s3 + $0x24c] sm:$0xff]
  %v5875 = vld [vmem:[%s3 + $0x254] sm:$0xf]
  %v5876 = vld [vmem:[%s3 + $0x258] sm:$0x11]
  %v5877 = vld [vmem:[%s3 + $0x260] sm:$0x11]
  %v5878 = vld [vmem:[%s3 + $0x268] sm:$0x11]
  %v5879 = vld [vmem:[%s3 + $0x270] sm:$0x11]
  %v5880 = vld [vmem:[%s3 + $0x278] sm:$0x11]
  %v5881 = vld [vmem:[%s3 + $0x280] sm:$0x11]
  %v5882 = vld [vmem:[%s3 + $0x288] sm:$0x11]
  %v5883 = vld [vmem:[%s3 + $0x290] sm:$0x11]
  %v5884 = vld [vmem:[%s3 + $0x298] sm:$0x11]
  %v5885 = vld [vmem:[%s3 + $0x2a0] sm:$0x11]
  %v5886 = vld [vmem:[%s3 + $0x2a8] sm:$0x11]
  %v5887 = vld [vmem:[%s3 + $0x2b0] sm:$0x11]
  %v5888 = vld [vmem:[%s3 + $0x2b8] sm:$0x1]
  %v5980 = vunpack.c.l.b16 %v5798
  %v5981 = vunpack.c.h.b16 %v5798
  %v5982 = vunpack.c.l.b16 %v5799
  %v5983 = vunpack.c.h.b16 %v5799
  %v5984 = vunpack.c.l.b16 %v5800
  %v5985 = vunpack.c.h.b16 %v5800
  %v5986 = vunpack.c.l.b16 %v5801
  %v5987 = vunpack.c.h.b16 %v5801
  %v5988 = vunpack.c.l.b16 %v5802
  %v5989 = vunpack.c.h.b16 %v5802
  %v5990 = vunpack.c.l.b16 %v5803
  %v5991 = vunpack.c.h.b16 %v5803
  %v5992 = vunpack.c.l.b16 %v5804
  %v5993 = vunpack.c.h.b16 %v5804
  %v5994 = vunpack.c.l.b16 %v5805
  %v5995 = vunpack.c.h.b16 %v5805
  %v5996 = vunpack.c.l.b16 %v5806
  %v5997 = vunpack.c.h.b16 %v5806
  %v5998 = vunpack.c.l.b16 %v5807
  %v5999 = vunpack.c.h.b16 %v5807
  %v6000 = vunpack.c.l.b16 %v5808
  %v6001 = vunpack.c.h.b16 %v5808
  %v6002 = vunpack.c.l.b16 %v5809
  %v6003 = vunpack.c.h.b16 %v5809
  %v6004 = vunpack.c.l.b16 %v5810
  %v6005 = vunpack.c.l.b16 %v5811
  %v6006 = vunpack.c.h.b16 %v5811
  %v6007 = vunpack.c.l.b16 %v5812
  %v6008 = vunpack.c.h.b16 %v5812
  %v6009 = vunpack.c.l.b16 %v5813
  %v6010 = vunpack.c.h.b16 %v5813
  %v6011 = vunpack.c.l.b16 %v5814
  %v6012 = vunpack.c.h.b16 %v5814
  %v6013 = vunpack.c.l.b16 %v5815
  %v6014 = vunpack.c.h.b16 %v5815
  %v6015 = vunpack.c.l.b16 %v5816
  %v6016 = vunpack.c.h.b16 %v5816
  %v6017 = vunpack.c.l.b16 %v5817
  %v6018 = vunpack.c.h.b16 %v5817
  %v6019 = vunpack.c.l.b16 %v5818
  %v6020 = vunpack.c.h.b16 %v5818
  %v6021 = vunpack.c.l.b16 %v5819
  %v6022 = vunpack.c.h.b16 %v5819
  %v6023 = vunpack.c.l.b16 %v5820
  %v6024 = vunpack.c.h.b16 %v5820
  %v6025 = vunpack.c.l.b16 %v5821
  %v6026 = vunpack.c.h.b16 %v5821
  %v6027 = vunpack.c.l.b16 %v5822
  %v6028 = vunpack.c.h.b16 %v5822
  %v6029 = vunpack.c.l.b16 %v5823
  %v6030 = vunpack.c.l.b16 %v5824
  %v6031 = vunpack.c.h.b16 %v5824
  %v6032 = vunpack.c.l.b16 %v5825
  %v6033 = vunpack.c.h.b16 %v5825
  %v6034 = vunpack.c.l.b16 %v5826
  %v6035 = vunpack.c.h.b16 %v5826
  %v6036 = vunpack.c.l.b16 %v5827
  %v6037 = vunpack.c.h.b16 %v5827
  %v6038 = vunpack.c.l.b16 %v5828
  %v6039 = vunpack.c.h.b16 %v5828
  %v6040 = vunpack.c.l.b16 %v5829
  %v6041 = vunpack.c.h.b16 %v5829
  %v6042 = vunpack.c.l.b16 %v5830
  %v6043 = vunpack.c.h.b16 %v5830
  %v6044 = vunpack.c.l.b16 %v5831
  %v6045 = vunpack.c.h.b16 %v5831
  %v6046 = vunpack.c.l.b16 %v5832
  %v6047 = vunpack.c.h.b16 %v5832
  %v6048 = vunpack.c.l.b16 %v5833
  %v6049 = vunpack.c.h.b16 %v5833
  %v6050 = vunpack.c.l.b16 %v5834
  %v6051 = vunpack.c.h.b16 %v5834
  %v6052 = vunpack.c.l.b16 %v5835
  %v6053 = vunpack.c.h.b16 %v5835
  %v6054 = vunpack.c.l.b16 %v5836
  %v6055 = vunpack.c.l.b16 %v5837
  %v6056 = vunpack.c.h.b16 %v5837
  %v6057 = vunpack.c.l.b16 %v5838
  %v6058 = vunpack.c.h.b16 %v5838
  %v6059 = vunpack.c.l.b16 %v5839
  %v6060 = vunpack.c.h.b16 %v5839
  %v6061 = vunpack.c.l.b16 %v5840
  %v6062 = vunpack.c.h.b16 %v5840
  %v6063 = vunpack.c.l.b16 %v5841
  %v6064 = vunpack.c.h.b16 %v5841
  %v6065 = vunpack.c.l.b16 %v5842
  %v6066 = vunpack.c.h.b16 %v5842
  %v6067 = vunpack.c.l.b16 %v5843
  %v6068 = vunpack.c.h.b16 %v5843
  %v6069 = vunpack.c.l.b16 %v5844
  %v6070 = vunpack.c.h.b16 %v5844
  %v6071 = vunpack.c.l.b16 %v5845
  %v6072 = vunpack.c.h.b16 %v5845
  %v6073 = vunpack.c.l.b16 %v5846
  %v6074 = vunpack.c.h.b16 %v5846
  %v6075 = vunpack.c.l.b16 %v5847
  %v6076 = vunpack.c.h.b16 %v5847
  %v6077 = vunpack.c.l.b16 %v5848
  %v6078 = vunpack.c.h.b16 %v5848
  %v6079 = vunpack.c.l.b16 %v5849
  %v6080 = vunpack.c.l.b16 %v5850
  %v6081 = vunpack.c.h.b16 %v5850
  %v6082 = vunpack.c.l.b16 %v5851
  %v6083 = vunpack.c.h.b16 %v5851
  %v6084 = vunpack.c.l.b16 %v5852
  %v6085 = vunpack.c.h.b16 %v5852
  %v6086 = vunpack.c.l.b16 %v5853
  %v6087 = vunpack.c.h.b16 %v5853
  %v6088 = vunpack.c.l.b16 %v5854
  %v6089 = vunpack.c.h.b16 %v5854
  %v6090 = vunpack.c.l.b16 %v5855
  %v6091 = vunpack.c.h.b16 %v5855
  %v6092 = vunpack.c.l.b16 %v5856
  %v6093 = vunpack.c.h.b16 %v5856
  %v6094 = vunpack.c.l.b16 %v5857
  %v6095 = vunpack.c.h.b16 %v5857
  %v6096 = vunpack.c.l.b16 %v5858
  %v6097 = vunpack.c.h.b16 %v5858
  %v6098 = vunpack.c.l.b16 %v5859
  %v6099 = vunpack.c.h.b16 %v5859
  %v6100 = vunpack.c.l.b16 %v5860
  %v6101 = vunpack.c.h.b16 %v5860
  %v6102 = vunpack.c.l.b16 %v5861
  %v6103 = vunpack.c.h.b16 %v5861
  %v6104 = vunpack.c.l.b16 %v5862
  %v6105 = vunpack.c.l.b16 %v5863
  %v6106 = vunpack.c.h.b16 %v5863
  %v6107 = vunpack.c.l.b16 %v5864
  %v6108 = vunpack.c.h.b16 %v5864
  %v6109 = vunpack.c.l.b16 %v5865
  %v6110 = vunpack.c.h.b16 %v5865
  %v6111 = vunpack.c.l.b16 %v5866
  %v6112 = vunpack.c.h.b16 %v5866
  %v6113 = vunpack.c.l.b16 %v5867
  %v6114 = vunpack.c.h.b16 %v5867
  %v6115 = vunpack.c.l.b16 %v5868
  %v6116 = vunpack.c.h.b16 %v5868
  %v6117 = vunpack.c.l.b16 %v5869
  %v6118 = vunpack.c.h.b16 %v5869
  %v6119 = vunpack.c.l.b16 %v5870
  %v6120 = vunpack.c.h.b16 %v5870
  %v6121 = vunpack.c.l.b16 %v5871
  %v6122 = vunpack.c.h.b16 %v5871
  %v6123 = vunpack.c.l.b16 %v5872
  %v6124 = vunpack.c.h.b16 %v5872
  %v6125 = vunpack.c.l.b16 %v5873
  %v6126 = vunpack.c.h.b16 %v5873
  %v6127 = vunpack.c.l.b16 %v5874
  %v6128 = vunpack.c.h.b16 %v5874
  %v6129 = vunpack.c.l.b16 %v5875
  %v6130 = vunpack.c.l.b16 %v5876
  %v6131 = vunpack.c.h.b16 %v5876
  %v6132 = vunpack.c.l.b16 %v5877
  %v6133 = vunpack.c.h.b16 %v5877
  %v6134 = vunpack.c.l.b16 %v5878
  %v6135 = vunpack.c.h.b16 %v5878
  %v6136 = vunpack.c.l.b16 %v5879
  %v6137 = vunpack.c.h.b16 %v5879
  %v6138 = vunpack.c.l.b16 %v5880
  %v6139 = vunpack.c.h.b16 %v5880
  %v6140 = vunpack.c.l.b16 %v5881
  %v6141 = vunpack.c.h.b16 %v5881
  %v6142 = vunpack.c.l.b16 %v5882
  %v6143 = vunpack.c.h.b16 %v5882
  %v6144 = vunpack.c.l.b16 %v5883
  %v6145 = vunpack.c.h.b16 %v5883
  %v6146 = vunpack.c.l.b16 %v5884
  %v6147 = vunpack.c.h.b16 %v5884
  %v6148 = vunpack.c.l.b16 %v5885
  %v6149 = vunpack.c.h.b16 %v5885
  %v6150 = vunpack.c.l.b16 %v5886
  %v6151 = vunpack.c.h.b16 %v5886
  %v6152 = vunpack.c.l.b16 %v5887
  %v6153 = vunpack.c.h.b16 %v5887
  %v6154 = vunpack.c.l.b16 %v5888
  %v6155 = vpack.c.b16 %v6005, %v5980
  %v6156 = vpack.c.b16 %v6006, %v5981
  %v6157 = vpack.c.b16 %v6007, %v5982
  %v6158 = vpack.c.b16 %v6008, %v5983
  %v6159 = vpack.c.b16 %v6009, %v5984
  %v6160 = vpack.c.b16 %v6010, %v5985
  %v6161 = vpack.c.b16 %v6011, %v5986
  %v6162 = vpack.c.b16 %v6012, %v5987
  %v6163 = vpack.c.b16 %v6013, %v5988
  %v6164 = vpack.c.b16 %v6014, %v5989
  %v6165 = vpack.c.b16 %v6015, %v5990
  %v6166 = vpack.c.b16 %v6016, %v5991
  %v6167 = vpack.c.b16 %v6017, %v5992
  %v6168 = vpack.c.b16 %v6018, %v5993
  %v6169 = vpack.c.b16 %v6019, %v5994
  %v6170 = vpack.c.b16 %v6020, %v5995
  %v6171 = vpack.c.b16 %v6021, %v5996
  %v6172 = vpack.c.b16 %v6022, %v5997
  %v6173 = vpack.c.b16 %v6023, %v5998
  %v6174 = vpack.c.b16 %v6024, %v5999
  %v6175 = vpack.c.b16 %v6025, %v6000
  %v6176 = vpack.c.b16 %v6026, %v6001
  %v6177 = vpack.c.b16 %v6027, %v6002
  %v6178 = vpack.c.b16 %v6028, %v6003
  %v6179 = vpack.c.b16 %v6029, %v6004
  %v6180 = vpack.c.b16 %v6055, %v6030
  %v6181 = vpack.c.b16 %v6056, %v6031
  %v6182 = vpack.c.b16 %v6057, %v6032
  %v6183 = vpack.c.b16 %v6058, %v6033
  %v6184 = vpack.c.b16 %v6059, %v6034
  %v6185 = vpack.c.b16 %v6060, %v6035
  %v6186 = vpack.c.b16 %v6061, %v6036
  %v6187 = vpack.c.b16 %v6062, %v6037
  %v6188 = vpack.c.b16 %v6063, %v6038
  %v6189 = vpack.c.b16 %v6064, %v6039
  %v6190 = vpack.c.b16 %v6065, %v6040
  %v6191 = vpack.c.b16 %v6066, %v6041
  %v6192 = vpack.c.b16 %v6067, %v6042
  %v6193 = vpack.c.b16 %v6068, %v6043
  %v6194 = vpack.c.b16 %v6069, %v6044
  %v6195 = vpack.c.b16 %v6070, %v6045
  %v6196 = vpack.c.b16 %v6071, %v6046
  %v6197 = vpack.c.b16 %v6072, %v6047
  %v6198 = vpack.c.b16 %v6073, %v6048
  %v6199 = vpack.c.b16 %v6074, %v6049
  %v6200 = vpack.c.b16 %v6075, %v6050
  %v6201 = vpack.c.b16 %v6076, %v6051
  %v6202 = vpack.c.b16 %v6077, %v6052
  %v6203 = vpack.c.b16 %v6078, %v6053
  %v6204 = vpack.c.b16 %v6079, %v6054
  %v6205 = vpack.c.b16 %v6105, %v6080
  %v6206 = vpack.c.b16 %v6106, %v6081
  %v6207 = vpack.c.b16 %v6107, %v6082
  %v6208 = vpack.c.b16 %v6108, %v6083
  %v6209 = vpack.c.b16 %v6109, %v6084
  %v6210 = vpack.c.b16 %v6110, %v6085
  %v6211 = vpack.c.b16 %v6111, %v6086
  %v6212 = vpack.c.b16 %v6112, %v6087
  %v6213 = vpack.c.b16 %v6113, %v6088
  %v6214 = vpack.c.b16 %v6114, %v6089
  %v6215 = vpack.c.b16 %v6115, %v6090
  %v6216 = vpack.c.b16 %v6116, %v6091
  %v6217 = vpack.c.b16 %v6117, %v6092
  %v6218 = vpack.c.b16 %v6118, %v6093
  %v6219 = vpack.c.b16 %v6119, %v6094
  %v6220 = vpack.c.b16 %v6120, %v6095
  %v6221 = vpack.c.b16 %v6121, %v6096
  %v6222 = vpack.c.b16 %v6122, %v6097
  %v6223 = vpack.c.b16 %v6123, %v6098
  %v6224 = vpack.c.b16 %v6124, %v6099
  %v6225 = vpack.c.b16 %v6125, %v6100
  %v6226 = vpack.c.b16 %v6126, %v6101
  %v6227 = vpack.c.b16 %v6127, %v6102
  %v6228 = vpack.c.b16 %v6128, %v6103
  %v6229 = vpack.c.b16 %v6129, %v6104
  %v6230 = vpack.c.b16 %v6130, %v6130
  %v6231 = vpack.c.b16 %v6131, %v6131
  %v6232 = vpack.c.b16 %v6132, %v6132
  %v6233 = vpack.c.b16 %v6133, %v6133
  %v6234 = vpack.c.b16 %v6134, %v6134
  %v6235 = vpack.c.b16 %v6135, %v6135
  %v6236 = vpack.c.b16 %v6136, %v6136
  %v6237 = vpack.c.b16 %v6137, %v6137
  %v6238 = vpack.c.b16 %v6138, %v6138
  %v6239 = vpack.c.b16 %v6139, %v6139
  %v6240 = vpack.c.b16 %v6140, %v6140
  %v6241 = vpack.c.b16 %v6141, %v6141
  %v6242 = vpack.c.b16 %v6142, %v6142
  %v6243 = vpack.c.b16 %v6143, %v6143
  %v6244 = vpack.c.b16 %v6144, %v6144
  %v6245 = vpack.c.b16 %v6145, %v6145
  %v6246 = vpack.c.b16 %v6146, %v6146
  %v6247 = vpack.c.b16 %v6147, %v6147
  %v6248 = vpack.c.b16 %v6148, %v6148
  %v6249 = vpack.c.b16 %v6149, %v6149
  %v6250 = vpack.c.b16 %v6150, %v6150
  %v6251 = vpack.c.b16 %v6151, %v6151
  %v6252 = vpack.c.b16 %v6152, %v6152
  %v6253 = vpack.c.b16 %v6153, %v6153
  %v6254 = vpack.c.b16 %v6154, %v6154
  %6355 = vmatprep.subr.bf16.mxu0 0
  %6356 = vmatpush1.bf16.msra.mxu0 %v1788
  %6357 = vmatprep.subr.bf16.mxu0 0
  %6358 = vmatpush1.bf16.msra.mxu0 %v1787
  %6359 = vmatprep.subr.bf16.mxu0 0
  %6360 = vmatpush1.bf16.msra.mxu0 %v1786
  %6361 = vmatprep.subr.bf16.mxu0 0
  %6362 = vmatpush1.bf16.msra.mxu0 %v1785
  %6363 = vmatprep.subr.bf16.mxu0 0
  %6364 = vmatpush1.bf16.msra.mxu0 %v1784
  %6365 = vmatprep.subr.bf16.mxu0 0
  %6366 = vmatpush1.bf16.msra.mxu0 %v1783
  %6367 = vmatprep.subr.bf16.mxu0 0
  %6368 = vmatpush1.bf16.msra.mxu0 %v1782
  %6369 = vmatprep.subr.bf16.mxu0 0
  %6370 = vmatpush1.bf16.msra.mxu0 %v1781
  %6371 = vmatprep.subr.bf16.mxu0 0
  %6372 = vmatpush2.bf16.msra.mxu0 %v1796
  %6373 = vmatprep.subr.bf16.mxu0 0
  %6374 = vmatpush2.bf16.msra.mxu0 %v1795
  %6375 = vmatprep.subr.bf16.mxu0 0
  %6376 = vmatpush2.bf16.msra.mxu0 %v1794
  %6377 = vmatprep.subr.bf16.mxu0 0
  %6378 = vmatpush2.bf16.msra.mxu0 %v1793
  %6379 = vmatprep.subr.bf16.mxu0 0
  %6380 = vmatpush2.bf16.msra.mxu0 %v1792
  %6381 = vmatprep.subr.bf16.mxu0 0
  %6382 = vmatpush2.bf16.msra.mxu0 %v1791
  %6383 = vmatprep.subr.bf16.mxu0 0
  %6384 = vmatpush2.bf16.msra.mxu0 %v1790
  %6385 = vmatprep.subr.bf16.mxu0 0
  %6386 = vmatpush2.bf16.msra.mxu0 %v1789
  %6387 = vmatprep.mubr.bf16.mxu0 %v6156
  %6388 = vmatmul.mubr.bf16.gmra.mxu0 %v6155
  %v6389 = vpop.f32.mrf.mxu0
  %v6390 = vadd.f32 0.0, %v6389
  %v6391 = vpop.f32.mrf.mxu0
  %v6392 = vpop.f32.mrf.mxu0
  %v6393 = vadd.f32 0.0, %v6392
  %v6394 = vpop.f32.mrf.mxu0
  %6395 = vmatprep.mubr.bf16.mxu0 %v6181
  %6396 = vmatmul.mubr.bf16.gmra.mxu0 %v6180
  %v6397 = vpop.f32.mrf.mxu0
  %v6398 = vadd.f32 0.0, %v6397
  %v6399 = vpop.f32.mrf.mxu0
  %v6400 = vpop.f32.mrf.mxu0
  %v6401 = vadd.f32 0.0, %v6400
  %v6402 = vpop.f32.mrf.mxu0
  %6403 = vmatprep.mubr.bf16.mxu0 %v6206
  %6404 = vmatmul.mubr.bf16.gmra.mxu0 %v6205
  %v6405 = vpop.f32.mrf.mxu0
  %v6406 = vadd.f32 0.0, %v6405
  %v6407 = vpop.f32.mrf.mxu0
  %v6408 = vpop.f32.mrf.mxu0
  %v6409 = vadd.f32 0.0, %v6408
  %v6410 = vpop.f32.mrf.mxu0
  %6411 = vmatprep.mubr.bf16.mxu0 %v6231
  %6412 = vmatmul.mubr.bf16.gmra.mxu0 %v6230
  %v6413 = vpop.f32.mrf.mxu0
  %v6414 = vadd.f32 0.0, %v6413
  %v6415 = vpop.f32.mrf.mxu0
  %v6416 = vpop.f32.mrf.mxu0
  %v6417 = vpop.f32.mrf.mxu0
  %6418 = vdwg.mxu0
  %6419 = vmatprep.subr.bf16.mxu0 0
  %6420 = vmatpush1.bf16.msra.mxu0 %v1804
  %6421 = vmatprep.subr.bf16.mxu0 0
  %6422 = vmatpush1.bf16.msra.mxu0 %v1803
  %6423 = vmatprep.subr.bf16.mxu0 0
  %6424 = vmatpush1.bf16.msra.mxu0 %v1802
  %6425 = vmatprep.subr.bf16.mxu0 0
  %6426 = vmatpush1.bf16.msra.mxu0 %v1801
  %6427 = vmatprep.subr.bf16.mxu0 0
  %6428 = vmatpush1.bf16.msra.mxu0 %v1800
  %6429 = vmatprep.subr.bf16.mxu0 0
  %6430 = vmatpush1.bf16.msra.mxu0 %v1799
  %6431 = vmatprep.subr.bf16.mxu0 0
  %6432 = vmatpush1.bf16.msra.mxu0 %v1798
  %6433 = vmatprep.subr.bf16.mxu0 0
  %6434 = vmatpush1.bf16.msra.mxu0 %v1797
  %6435 = vmatprep.subr.bf16.mxu0 0
  %6436 = vmatpush2.bf16.msra.mxu0 %v1812
  %6437 = vmatprep.subr.bf16.mxu0 0
  %6438 = vmatpush2.bf16.msra.mxu0 %v1811
  %6439 = vmatprep.subr.bf16.mxu0 0
  %6440 = vmatpush2.bf16.msra.mxu0 %v1810
  %6441 = vmatprep.subr.bf16.mxu0 0
  %6442 = vmatpush2.bf16.msra.mxu0 %v1809
  %6443 = vmatprep.subr.bf16.mxu0 0
  %6444 = vmatpush2.bf16.msra.mxu0 %v1808
  %6445 = vmatprep.subr.bf16.mxu0 0
  %6446 = vmatpush2.bf16.msra.mxu0 %v1807
  %6447 = vmatprep.subr.bf16.mxu0 0
  %6448 = vmatpush2.bf16.msra.mxu0 %v1806
  %6449 = vmatprep.subr.bf16.mxu0 0
  %6450 = vmatpush2.bf16.msra.mxu0 %v1805
  %6451 = vmatprep.mubr.bf16.mxu0 %v6158
  %6452 = vmatmul.mubr.bf16.gmra.mxu0 %v6157
  %v6453 = vpop.f32.mrf.mxu0
  %v6454 = vadd.f32 %v6390, %v6453
  %v6455 = vpop.f32.mrf.mxu0
  %v6456 = vpop.f32.mrf.mxu0
  %v6457 = vadd.f32 %v6393, %v6456
  %v6458 = vpop.f32.mrf.mxu0
  %6459 = vmatprep.mubr.bf16.mxu0 %v6183
  %6460 = vmatmul.mubr.bf16.gmra.mxu0 %v6182
  %v6461 = vpop.f32.mrf.mxu0
  %v6462 = vadd.f32 %v6398, %v6461
  %v6463 = vpop.f32.mrf.mxu0
  %v6464 = vpop.f32.mrf.mxu0
  %v6465 = vadd.f32 %v6401, %v6464
  %v6466 = vpop.f32.mrf.mxu0
  %6467 = vmatprep.mubr.bf16.mxu0 %v6208
  %6468 = vmatmul.mubr.bf16.gmra.mxu0 %v6207
  %v6469 = vpop.f32.mrf.mxu0
  %v6470 = vadd.f32 %v6406, %v6469
  %v6471 = vpop.f32.mrf.mxu0
  %v6472 = vpop.f32.mrf.mxu0
  %v6473 = vadd.f32 %v6409, %v6472
  %v6474 = vpop.f32.mrf.mxu0
  %6475 = vmatprep.mubr.bf16.mxu0 %v6233
  %6476 = vmatmul.mubr.bf16.gmra.mxu0 %v6232
  %v6477 = vpop.f32.mrf.mxu0
  %v6478 = vadd.f32 %v6414, %v6477
  %v6479 = vpop.f32.mrf.mxu0
  %v6480 = vpop.f32.mrf.mxu0
  %v6481 = vpop.f32.mrf.mxu0
  %6482 = vdwg.mxu0
  %6483 = vmatprep.subr.bf16.mxu0 0
  %6484 = vmatpush1.bf16.msra.mxu0 %v1820
  %6485 = vmatprep.subr.bf16.mxu0 0
  %6486 = vmatpush1.bf16.msra.mxu0 %v1819
  %6487 = vmatprep.subr.bf16.mxu0 0
  %6488 = vmatpush1.bf16.msra.mxu0 %v1818
  %6489 = vmatprep.subr.bf16.mxu0 0
  %6490 = vmatpush1.bf16.msra.mxu0 %v1817
  %6491 = vmatprep.subr.bf16.mxu0 0
  %6492 = vmatpush1.bf16.msra.mxu0 %v1816
  %6493 = vmatprep.subr.bf16.mxu0 0
  %6494 = vmatpush1.bf16.msra.mxu0 %v1815
  %6495 = vmatprep.subr.bf16.mxu0 0
  %6496 = vmatpush1.bf16.msra.mxu0 %v1814
  %6497 = vmatprep.subr.bf16.mxu0 0
  %6498 = vmatpush1.bf16.msra.mxu0 %v1813
  %6499 = vmatprep.subr.bf16.mxu0 0
  %6500 = vmatpush2.bf16.msra.mxu0 %v1828
  %6501 = vmatprep.subr.bf16.mxu0 0
  %6502 = vmatpush2.bf16.msra.mxu0 %v1827
  %6503 = vmatprep.subr.bf16.mxu0 0
  %6504 = vmatpush2.bf16.msra.mxu0 %v1826
  %6505 = vmatprep.subr.bf16.mxu0 0
  %6506 = vmatpush2.bf16.msra.mxu0 %v1825
  %6507 = vmatprep.subr.bf16.mxu0 0
  %6508 = vmatpush2.bf16.msra.mxu0 %v1824
  %6509 = vmatprep.subr.bf16.mxu0 0
  %6510 = vmatpush2.bf16.msra.mxu0 %v1823
  %6511 = vmatprep.subr.bf16.mxu0 0
  %6512 = vmatpush2.bf16.msra.mxu0 %v1822
  %6513 = vmatprep.subr.bf16.mxu0 0
  %6514 = vmatpush2.bf16.msra.mxu0 %v1821
  %6515 = vmatprep.mubr.bf16.mxu0 %v6160
  %6516 = vmatmul.mubr.bf16.gmra.mxu0 %v6159
  %v6517 = vpop.f32.mrf.mxu0
  %v6518 = vadd.f32 %v6454, %v6517
  %v6519 = vpop.f32.mrf.mxu0
  %v6520 = vpop.f32.mrf.mxu0
  %v6521 = vadd.f32 %v6457, %v6520
  %v6522 = vpop.f32.mrf.mxu0
  %6523 = vmatprep.mubr.bf16.mxu0 %v6185
  %6524 = vmatmul.mubr.bf16.gmra.mxu0 %v6184
  %v6525 = vpop.f32.mrf.mxu0
  %v6526 = vadd.f32 %v6462, %v6525
  %v6527 = vpop.f32.mrf.mxu0
  %v6528 = vpop.f32.mrf.mxu0
  %v6529 = vadd.f32 %v6465, %v6528
  %v6530 = vpop.f32.mrf.mxu0
  %6531 = vmatprep.mubr.bf16.mxu0 %v6210
  %6532 = vmatmul.mubr.bf16.gmra.mxu0 %v6209
  %v6533 = vpop.f32.mrf.mxu0
  %v6534 = vadd.f32 %v6470, %v6533
  %v6535 = vpop.f32.mrf.mxu0
  %v6536 = vpop.f32.mrf.mxu0
  %v6537 = vadd.f32 %v6473, %v6536
  %v6538 = vpop.f32.mrf.mxu0
  %6539 = vmatprep.mubr.bf16.mxu0 %v6235
  %6540 = vmatmul.mubr.bf16.gmra.mxu0 %v6234
  %v6541 = vpop.f32.mrf.mxu0
  %v6542 = vadd.f32 %v6478, %v6541
  %v6543 = vpop.f32.mrf.mxu0
  %v6544 = vpop.f32.mrf.mxu0
  %v6545 = vpop.f32.mrf.mxu0
  %6546 = vdwg.mxu0
  %6547 = vmatprep.subr.bf16.mxu0 0
  %6548 = vmatpush1.bf16.msra.mxu0 %v1836
  %6549 = vmatprep.subr.bf16.mxu0 0
  %6550 = vmatpush1.bf16.msra.mxu0 %v1835
  %6551 = vmatprep.subr.bf16.mxu0 0
  %6552 = vmatpush1.bf16.msra.mxu0 %v1834
  %6553 = vmatprep.subr.bf16.mxu0 0
  %6554 = vmatpush1.bf16.msra.mxu0 %v1833
  %6555 = vmatprep.subr.bf16.mxu0 0
  %6556 = vmatpush1.bf16.msra.mxu0 %v1832
  %6557 = vmatprep.subr.bf16.mxu0 0
  %6558 = vmatpush1.bf16.msra.mxu0 %v1831
  %6559 = vmatprep.subr.bf16.mxu0 0
  %6560 = vmatpush1.bf16.msra.mxu0 %v1830
  %6561 = vmatprep.subr.bf16.mxu0 0
  %6562 = vmatpush1.bf16.msra.mxu0 %v1829
  %6563 = vmatprep.subr.bf16.mxu0 0
  %6564 = vmatpush2.bf16.msra.mxu0 %v1844
  %6565 = vmatprep.subr.bf16.mxu0 0
  %6566 = vmatpush2.bf16.msra.mxu0 %v1843
  %6567 = vmatprep.subr.bf16.mxu0 0
  %6568 = vmatpush2.bf16.msra.mxu0 %v1842
  %6569 = vmatprep.subr.bf16.mxu0 0
  %6570 = vmatpush2.bf16.msra.mxu0 %v1841
  %6571 = vmatprep.subr.bf16.mxu0 0
  %6572 = vmatpush2.bf16.msra.mxu0 %v1840
  %6573 = vmatprep.subr.bf16.mxu0 0
  %6574 = vmatpush2.bf16.msra.mxu0 %v1839
  %6575 = vmatprep.subr.bf16.mxu0 0
  %6576 = vmatpush2.bf16.msra.mxu0 %v1838
  %6577 = vmatprep.subr.bf16.mxu0 0
  %6578 = vmatpush2.bf16.msra.mxu0 %v1837
  %6579 = vmatprep.mubr.bf16.mxu0 %v6162
  %6580 = vmatmul.mubr.bf16.gmra.mxu0 %v6161
  %v6581 = vpop.f32.mrf.mxu0
  %v6582 = vadd.f32 %v6518, %v6581
  %v6583 = vpop.f32.mrf.mxu0
  %v6584 = vpop.f32.mrf.mxu0
  %v6585 = vadd.f32 %v6521, %v6584
  %v6586 = vpop.f32.mrf.mxu0
  %6587 = vmatprep.mubr.bf16.mxu0 %v6187
  %6588 = vmatmul.mubr.bf16.gmra.mxu0 %v6186
  %v6589 = vpop.f32.mrf.mxu0
  %v6590 = vadd.f32 %v6526, %v6589
  %v6591 = vpop.f32.mrf.mxu0
  %v6592 = vpop.f32.mrf.mxu0
  %v6593 = vadd.f32 %v6529, %v6592
  %v6594 = vpop.f32.mrf.mxu0
  %6595 = vmatprep.mubr.bf16.mxu0 %v6212
  %6596 = vmatmul.mubr.bf16.gmra.mxu0 %v6211
  %v6597 = vpop.f32.mrf.mxu0
  %v6598 = vadd.f32 %v6534, %v6597
  %v6599 = vpop.f32.mrf.mxu0
  %v6600 = vpop.f32.mrf.mxu0
  %v6601 = vadd.f32 %v6537, %v6600
  %v6602 = vpop.f32.mrf.mxu0
  %6603 = vmatprep.mubr.bf16.mxu0 %v6237
  %6604 = vmatmul.mubr.bf16.gmra.mxu0 %v6236
  %v6605 = vpop.f32.mrf.mxu0
  %v6606 = vadd.f32 %v6542, %v6605
  %v6607 = vpop.f32.mrf.mxu0
  %v6608 = vpop.f32.mrf.mxu0
  %v6609 = vpop.f32.mrf.mxu0
  %6610 = vdwg.mxu0
  %6611 = vmatprep.subr.bf16.mxu0 0
  %6612 = vmatpush1.bf16.msra.mxu0 %v1852
  %6613 = vmatprep.subr.bf16.mxu0 0
  %6614 = vmatpush1.bf16.msra.mxu0 %v1851
  %6615 = vmatprep.subr.bf16.mxu0 0
  %6616 = vmatpush1.bf16.msra.mxu0 %v1850
  %6617 = vmatprep.subr.bf16.mxu0 0
  %6618 = vmatpush1.bf16.msra.mxu0 %v1849
  %6619 = vmatprep.subr.bf16.mxu0 0
  %6620 = vmatpush1.bf16.msra.mxu0 %v1848
  %6621 = vmatprep.subr.bf16.mxu0 0
  %6622 = vmatpush1.bf16.msra.mxu0 %v1847
  %6623 = vmatprep.subr.bf16.mxu0 0
  %6624 = vmatpush1.bf16.msra.mxu0 %v1846
  %6625 = vmatprep.subr.bf16.mxu0 0
  %6626 = vmatpush1.bf16.msra.mxu0 %v1845
  %6627 = vmatprep.subr.bf16.mxu0 0
  %6628 = vmatpush2.bf16.msra.mxu0 %v1860
  %6629 = vmatprep.subr.bf16.mxu0 0
  %6630 = vmatpush2.bf16.msra.mxu0 %v1859
  %6631 = vmatprep.subr.bf16.mxu0 0
  %6632 = vmatpush2.bf16.msra.mxu0 %v1858
  %6633 = vmatprep.subr.bf16.mxu0 0
  %6634 = vmatpush2.bf16.msra.mxu0 %v1857
  %6635 = vmatprep.subr.bf16.mxu0 0
  %6636 = vmatpush2.bf16.msra.mxu0 %v1856
  %6637 = vmatprep.subr.bf16.mxu0 0
  %6638 = vmatpush2.bf16.msra.mxu0 %v1855
  %6639 = vmatprep.subr.bf16.mxu0 0
  %6640 = vmatpush2.bf16.msra.mxu0 %v1854
  %6641 = vmatprep.subr.bf16.mxu0 0
  %6642 = vmatpush2.bf16.msra.mxu0 %v1853
  %6643 = vmatprep.mubr.bf16.mxu0 %v6164
  %6644 = vmatmul.mubr.bf16.gmra.mxu0 %v6163
  %v6645 = vpop.f32.mrf.mxu0
  %v6646 = vadd.f32 %v6582, %v6645
  %v6647 = vpop.f32.mrf.mxu0
  %v6648 = vpop.f32.mrf.mxu0
  %v6649 = vadd.f32 %v6585, %v6648
  %v6650 = vpop.f32.mrf.mxu0
  %6651 = vmatprep.mubr.bf16.mxu0 %v6189
  %6652 = vmatmul.mubr.bf16.gmra.mxu0 %v6188
  %v6653 = vpop.f32.mrf.mxu0
  %v6654 = vadd.f32 %v6590, %v6653
  %v6655 = vpop.f32.mrf.mxu0
  %v6656 = vpop.f32.mrf.mxu0
  %v6657 = vadd.f32 %v6593, %v6656
  %v6658 = vpop.f32.mrf.mxu0
  %6659 = vmatprep.mubr.bf16.mxu0 %v6214
  %6660 = vmatmul.mubr.bf16.gmra.mxu0 %v6213
  %v6661 = vpop.f32.mrf.mxu0
  %v6662 = vadd.f32 %v6598, %v6661
  %v6663 = vpop.f32.mrf.mxu0
  %v6664 = vpop.f32.mrf.mxu0
  %v6665 = vadd.f32 %v6601, %v6664
  %v6666 = vpop.f32.mrf.mxu0
  %6667 = vmatprep.mubr.bf16.mxu0 %v6239
  %6668 = vmatmul.mubr.bf16.gmra.mxu0 %v6238
  %v6669 = vpop.f32.mrf.mxu0
  %v6670 = vadd.f32 %v6606, %v6669
  %v6671 = vpop.f32.mrf.mxu0
  %v6672 = vpop.f32.mrf.mxu0
  %v6673 = vpop.f32.mrf.mxu0
  %6674 = vdwg.mxu0
  %6675 = vmatprep.subr.bf16.mxu0 0
  %6676 = vmatpush1.bf16.msra.mxu0 %v1868
  %6677 = vmatprep.subr.bf16.mxu0 0
  %6678 = vmatpush1.bf16.msra.mxu0 %v1867
  %6679 = vmatprep.subr.bf16.mxu0 0
  %6680 = vmatpush1.bf16.msra.mxu0 %v1866
  %6681 = vmatprep.subr.bf16.mxu0 0
  %6682 = vmatpush1.bf16.msra.mxu0 %v1865
  %6683 = vmatprep.subr.bf16.mxu0 0
  %6684 = vmatpush1.bf16.msra.mxu0 %v1864
  %6685 = vmatprep.subr.bf16.mxu0 0
  %6686 = vmatpush1.bf16.msra.mxu0 %v1863
  %6687 = vmatprep.subr.bf16.mxu0 0
  %6688 = vmatpush1.bf16.msra.mxu0 %v1862
  %6689 = vmatprep.subr.bf16.mxu0 0
  %6690 = vmatpush1.bf16.msra.mxu0 %v1861
  %6691 = vmatprep.subr.bf16.mxu0 0
  %6692 = vmatpush2.bf16.msra.mxu0 %v1876
  %6693 = vmatprep.subr.bf16.mxu0 0
  %6694 = vmatpush2.bf16.msra.mxu0 %v1875
  %6695 = vmatprep.subr.bf16.mxu0 0
  %6696 = vmatpush2.bf16.msra.mxu0 %v1874
  %6697 = vmatprep.subr.bf16.mxu0 0
  %6698 = vmatpush2.bf16.msra.mxu0 %v1873
  %6699 = vmatprep.subr.bf16.mxu0 0
  %6700 = vmatpush2.bf16.msra.mxu0 %v1872
  %6701 = vmatprep.subr.bf16.mxu0 0
  %6702 = vmatpush2.bf16.msra.mxu0 %v1871
  %6703 = vmatprep.subr.bf16.mxu0 0
  %6704 = vmatpush2.bf16.msra.mxu0 %v1870
  %6705 = vmatprep.subr.bf16.mxu0 0
  %6706 = vmatpush2.bf16.msra.mxu0 %v1869
  %6707 = vmatprep.mubr.bf16.mxu0 %v6166
  %6708 = vmatmul.mubr.bf16.gmra.mxu0 %v6165
  %v6709 = vpop.f32.mrf.mxu0
  %v6710 = vadd.f32 %v6646, %v6709
  %v6711 = vpop.f32.mrf.mxu0
  %v6712 = vpop.f32.mrf.mxu0
  %v6713 = vadd.f32 %v6649, %v6712
  %v6714 = vpop.f32.mrf.mxu0
  %6715 = vmatprep.mubr.bf16.mxu0 %v6191
  %6716 = vmatmul.mubr.bf16.gmra.mxu0 %v6190
  %v6717 = vpop.f32.mrf.mxu0
  %v6718 = vadd.f32 %v6654, %v6717
  %v6719 = vpop.f32.mrf.mxu0
  %v6720 = vpop.f32.mrf.mxu0
  %v6721 = vadd.f32 %v6657, %v6720
  %v6722 = vpop.f32.mrf.mxu0
  %6723 = vmatprep.mubr.bf16.mxu0 %v6216
  %6724 = vmatmul.mubr.bf16.gmra.mxu0 %v6215
  %v6725 = vpop.f32.mrf.mxu0
  %v6726 = vadd.f32 %v6662, %v6725
  %v6727 = vpop.f32.mrf.mxu0
  %v6728 = vpop.f32.mrf.mxu0
  %v6729 = vadd.f32 %v6665, %v6728
  %v6730 = vpop.f32.mrf.mxu0
  %6731 = vmatprep.mubr.bf16.mxu0 %v6241
  %6732 = vmatmul.mubr.bf16.gmra.mxu0 %v6240
  %v6733 = vpop.f32.mrf.mxu0
  %v6734 = vadd.f32 %v6670, %v6733
  %v6735 = vpop.f32.mrf.mxu0
  %v6736 = vpop.f32.mrf.mxu0
  %v6737 = vpop.f32.mrf.mxu0
  %6738 = vdwg.mxu0
  %6739 = vmatprep.subr.bf16.mxu0 0
  %6740 = vmatpush1.bf16.msra.mxu0 %v1884
  %6741 = vmatprep.subr.bf16.mxu0 0
  %6742 = vmatpush1.bf16.msra.mxu0 %v1883
  %6743 = vmatprep.subr.bf16.mxu0 0
  %6744 = vmatpush1.bf16.msra.mxu0 %v1882
  %6745 = vmatprep.subr.bf16.mxu0 0
  %6746 = vmatpush1.bf16.msra.mxu0 %v1881
  %6747 = vmatprep.subr.bf16.mxu0 0
  %6748 = vmatpush1.bf16.msra.mxu0 %v1880
  %6749 = vmatprep.subr.bf16.mxu0 0
  %6750 = vmatpush1.bf16.msra.mxu0 %v1879
  %6751 = vmatprep.subr.bf16.mxu0 0
  %6752 = vmatpush1.bf16.msra.mxu0 %v1878
  %6753 = vmatprep.subr.bf16.mxu0 0
  %6754 = vmatpush1.bf16.msra.mxu0 %v1877
  %6755 = vmatprep.subr.bf16.mxu0 0
  %6756 = vmatpush2.bf16.msra.mxu0 %v1892
  %6757 = vmatprep.subr.bf16.mxu0 0
  %6758 = vmatpush2.bf16.msra.mxu0 %v1891
  %6759 = vmatprep.subr.bf16.mxu0 0
  %6760 = vmatpush2.bf16.msra.mxu0 %v1890
  %6761 = vmatprep.subr.bf16.mxu0 0
  %6762 = vmatpush2.bf16.msra.mxu0 %v1889
  %6763 = vmatprep.subr.bf16.mxu0 0
  %6764 = vmatpush2.bf16.msra.mxu0 %v1888
  %6765 = vmatprep.subr.bf16.mxu0 0
  %6766 = vmatpush2.bf16.msra.mxu0 %v1887
  %6767 = vmatprep.subr.bf16.mxu0 0
  %6768 = vmatpush2.bf16.msra.mxu0 %v1886
  %6769 = vmatprep.subr.bf16.mxu0 0
  %6770 = vmatpush2.bf16.msra.mxu0 %v1885
  %6771 = vmatprep.mubr.bf16.mxu0 %v6168
  %6772 = vmatmul.mubr.bf16.gmra.mxu0 %v6167
  %v6773 = vpop.f32.mrf.mxu0
  %v6774 = vadd.f32 %v6710, %v6773
  %v6775 = vpop.f32.mrf.mxu0
  %v6776 = vpop.f32.mrf.mxu0
  %v6777 = vadd.f32 %v6713, %v6776
  %v6778 = vpop.f32.mrf.mxu0
  %6779 = vmatprep.mubr.bf16.mxu0 %v6193
  %6780 = vmatmul.mubr.bf16.gmra.mxu0 %v6192
  %v6781 = vpop.f32.mrf.mxu0
  %v6782 = vadd.f32 %v6718, %v6781
  %v6783 = vpop.f32.mrf.mxu0
  %v6784 = vpop.f32.mrf.mxu0
  %v6785 = vadd.f32 %v6721, %v6784
  %v6786 = vpop.f32.mrf.mxu0
  %6787 = vmatprep.mubr.bf16.mxu0 %v6218
  %6788 = vmatmul.mubr.bf16.gmra.mxu0 %v6217
  %v6789 = vpop.f32.mrf.mxu0
  %v6790 = vadd.f32 %v6726, %v6789
  %v6791 = vpop.f32.mrf.mxu0
  %v6792 = vpop.f32.mrf.mxu0
  %v6793 = vadd.f32 %v6729, %v6792
  %v6794 = vpop.f32.mrf.mxu0
  %6795 = vmatprep.mubr.bf16.mxu0 %v6243
  %6796 = vmatmul.mubr.bf16.gmra.mxu0 %v6242
  %v6797 = vpop.f32.mrf.mxu0
  %v6798 = vadd.f32 %v6734, %v6797
  %v6799 = vpop.f32.mrf.mxu0
  %v6800 = vpop.f32.mrf.mxu0
  %v6801 = vpop.f32.mrf.mxu0
  %6802 = vdwg.mxu0
  %6803 = vmatprep.subr.bf16.mxu0 0
  %6804 = vmatpush1.bf16.msra.mxu0 %v1900
  %6805 = vmatprep.subr.bf16.mxu0 0
  %6806 = vmatpush1.bf16.msra.mxu0 %v1899
  %6807 = vmatprep.subr.bf16.mxu0 0
  %6808 = vmatpush1.bf16.msra.mxu0 %v1898
  %6809 = vmatprep.subr.bf16.mxu0 0
  %6810 = vmatpush1.bf16.msra.mxu0 %v1897
  %6811 = vmatprep.subr.bf16.mxu0 0
  %6812 = vmatpush1.bf16.msra.mxu0 %v1896
  %6813 = vmatprep.subr.bf16.mxu0 0
  %6814 = vmatpush1.bf16.msra.mxu0 %v1895
  %6815 = vmatprep.subr.bf16.mxu0 0
  %6816 = vmatpush1.bf16.msra.mxu0 %v1894
  %6817 = vmatprep.subr.bf16.mxu0 0
  %6818 = vmatpush1.bf16.msra.mxu0 %v1893
  %6819 = vmatprep.subr.bf16.mxu0 0
  %6820 = vmatpush2.bf16.msra.mxu0 %v1908
  %6821 = vmatprep.subr.bf16.mxu0 0
  %6822 = vmatpush2.bf16.msra.mxu0 %v1907
  %6823 = vmatprep.subr.bf16.mxu0 0
  %6824 = vmatpush2.bf16.msra.mxu0 %v1906
  %6825 = vmatprep.subr.bf16.mxu0 0
  %6826 = vmatpush2.bf16.msra.mxu0 %v1905
  %6827 = vmatprep.subr.bf16.mxu0 0
  %6828 = vmatpush2.bf16.msra.mxu0 %v1904
  %6829 = vmatprep.subr.bf16.mxu0 0
  %6830 = vmatpush2.bf16.msra.mxu0 %v1903
  %6831 = vmatprep.subr.bf16.mxu0 0
  %6832 = vmatpush2.bf16.msra.mxu0 %v1902
  %6833 = vmatprep.subr.bf16.mxu0 0
  %6834 = vmatpush2.bf16.msra.mxu0 %v1901
  %6835 = vmatprep.mubr.bf16.mxu0 %v6170
  %6836 = vmatmul.mubr.bf16.gmra.mxu0 %v6169
  %v6837 = vpop.f32.mrf.mxu0
  %v6838 = vadd.f32 %v6774, %v6837
  %v6839 = vpop.f32.mrf.mxu0
  %v6840 = vpop.f32.mrf.mxu0
  %v6841 = vadd.f32 %v6777, %v6840
  %v6842 = vpop.f32.mrf.mxu0
  %6843 = vmatprep.mubr.bf16.mxu0 %v6195
  %6844 = vmatmul.mubr.bf16.gmra.mxu0 %v6194
  %v6845 = vpop.f32.mrf.mxu0
  %v6846 = vadd.f32 %v6782, %v6845
  %v6847 = vpop.f32.mrf.mxu0
  %v6848 = vpop.f32.mrf.mxu0
  %v6849 = vadd.f32 %v6785, %v6848
  %v6850 = vpop.f32.mrf.mxu0
  %6851 = vmatprep.mubr.bf16.mxu0 %v6220
  %6852 = vmatmul.mubr.bf16.gmra.mxu0 %v6219
  %v6853 = vpop.f32.mrf.mxu0
  %v6854 = vadd.f32 %v6790, %v6853
  %v6855 = vpop.f32.mrf.mxu0
  %v6856 = vpop.f32.mrf.mxu0
  %v6857 = vadd.f32 %v6793, %v6856
  %v6858 = vpop.f32.mrf.mxu0
  %6859 = vmatprep.mubr.bf16.mxu0 %v6245
  %6860 = vmatmul.mubr.bf16.gmra.mxu0 %v6244
  %v6861 = vpop.f32.mrf.mxu0
  %v6862 = vadd.f32 %v6798, %v6861
  %v6863 = vpop.f32.mrf.mxu0
  %v6864 = vpop.f32.mrf.mxu0
  %v6865 = vpop.f32.mrf.mxu0
  %6866 = vdwg.mxu0
  %6867 = vmatprep.subr.bf16.mxu0 0
  %6868 = vmatpush1.bf16.msra.mxu0 %v1916
  %6869 = vmatprep.subr.bf16.mxu0 0
  %6870 = vmatpush1.bf16.msra.mxu0 %v1915
  %6871 = vmatprep.subr.bf16.mxu0 0
  %6872 = vmatpush1.bf16.msra.mxu0 %v1914
  %6873 = vmatprep.subr.bf16.mxu0 0
  %6874 = vmatpush1.bf16.msra.mxu0 %v1913
  %6875 = vmatprep.subr.bf16.mxu0 0
  %6876 = vmatpush1.bf16.msra.mxu0 %v1912
  %6877 = vmatprep.subr.bf16.mxu0 0
  %6878 = vmatpush1.bf16.msra.mxu0 %v1911
  %6879 = vmatprep.subr.bf16.mxu0 0
  %6880 = vmatpush1.bf16.msra.mxu0 %v1910
  %6881 = vmatprep.subr.bf16.mxu0 0
  %6882 = vmatpush1.bf16.msra.mxu0 %v1909
  %6883 = vmatprep.subr.bf16.mxu0 0
  %6884 = vmatpush2.bf16.msra.mxu0 %v1924
  %6885 = vmatprep.subr.bf16.mxu0 0
  %6886 = vmatpush2.bf16.msra.mxu0 %v1923
  %6887 = vmatprep.subr.bf16.mxu0 0
  %6888 = vmatpush2.bf16.msra.mxu0 %v1922
  %6889 = vmatprep.subr.bf16.mxu0 0
  %6890 = vmatpush2.bf16.msra.mxu0 %v1921
  %6891 = vmatprep.subr.bf16.mxu0 0
  %6892 = vmatpush2.bf16.msra.mxu0 %v1920
  %6893 = vmatprep.subr.bf16.mxu0 0
  %6894 = vmatpush2.bf16.msra.mxu0 %v1919
  %6895 = vmatprep.subr.bf16.mxu0 0
  %6896 = vmatpush2.bf16.msra.mxu0 %v1918
  %6897 = vmatprep.subr.bf16.mxu0 0
  %6898 = vmatpush2.bf16.msra.mxu0 %v1917
  %6899 = vmatprep.mubr.bf16.mxu0 %v6172
  %6900 = vmatmul.mubr.bf16.gmra.mxu0 %v6171
  %v6901 = vpop.f32.mrf.mxu0
  %v6902 = vadd.f32 %v6838, %v6901
  %v6903 = vpop.f32.mrf.mxu0
  %v6904 = vpop.f32.mrf.mxu0
  %v6905 = vadd.f32 %v6841, %v6904
  %v6906 = vpop.f32.mrf.mxu0
  %6907 = vmatprep.mubr.bf16.mxu0 %v6197
  %6908 = vmatmul.mubr.bf16.gmra.mxu0 %v6196
  %v6909 = vpop.f32.mrf.mxu0
  %v6910 = vadd.f32 %v6846, %v6909
  %v6911 = vpop.f32.mrf.mxu0
  %v6912 = vpop.f32.mrf.mxu0
  %v6913 = vadd.f32 %v6849, %v6912
  %v6914 = vpop.f32.mrf.mxu0
  %6915 = vmatprep.mubr.bf16.mxu0 %v6222
  %6916 = vmatmul.mubr.bf16.gmra.mxu0 %v6221
  %v6917 = vpop.f32.mrf.mxu0
  %v6918 = vadd.f32 %v6854, %v6917
  %v6919 = vpop.f32.mrf.mxu0
  %v6920 = vpop.f32.mrf.mxu0
  %v6921 = vadd.f32 %v6857, %v6920
  %v6922 = vpop.f32.mrf.mxu0
  %6923 = vmatprep.mubr.bf16.mxu0 %v6247
  %6924 = vmatmul.mubr.bf16.gmra.mxu0 %v6246
  %v6925 = vpop.f32.mrf.mxu0
  %v6926 = vadd.f32 %v6862, %v6925
  %v6927 = vpop.f32.mrf.mxu0
  %v6928 = vpop.f32.mrf.mxu0
  %v6929 = vpop.f32.mrf.mxu0
  %6930 = vdwg.mxu0
  %6931 = vmatprep.subr.bf16.mxu0 0
  %6932 = vmatpush1.bf16.msra.mxu0 %v1932
  %6933 = vmatprep.subr.bf16.mxu0 0
  %6934 = vmatpush1.bf16.msra.mxu0 %v1931
  %6935 = vmatprep.subr.bf16.mxu0 0
  %6936 = vmatpush1.bf16.msra.mxu0 %v1930
  %6937 = vmatprep.subr.bf16.mxu0 0
  %6938 = vmatpush1.bf16.msra.mxu0 %v1929
  %6939 = vmatprep.subr.bf16.mxu0 0
  %6940 = vmatpush1.bf16.msra.mxu0 %v1928
  %6941 = vmatprep.subr.bf16.mxu0 0
  %6942 = vmatpush1.bf16.msra.mxu0 %v1927
  %6943 = vmatprep.subr.bf16.mxu0 0
  %6944 = vmatpush1.bf16.msra.mxu0 %v1926
  %6945 = vmatprep.subr.bf16.mxu0 0
  %6946 = vmatpush1.bf16.msra.mxu0 %v1925
  %6947 = vmatprep.subr.bf16.mxu0 0
  %6948 = vmatpush2.bf16.msra.mxu0 %v1940
  %6949 = vmatprep.subr.bf16.mxu0 0
  %6950 = vmatpush2.bf16.msra.mxu0 %v1939
  %6951 = vmatprep.subr.bf16.mxu0 0
  %6952 = vmatpush2.bf16.msra.mxu0 %v1938
  %6953 = vmatprep.subr.bf16.mxu0 0
  %6954 = vmatpush2.bf16.msra.mxu0 %v1937
  %6955 = vmatprep.subr.bf16.mxu0 0
  %6956 = vmatpush2.bf16.msra.mxu0 %v1936
  %6957 = vmatprep.subr.bf16.mxu0 0
  %6958 = vmatpush2.bf16.msra.mxu0 %v1935
  %6959 = vmatprep.subr.bf16.mxu0 0
  %6960 = vmatpush2.bf16.msra.mxu0 %v1934
  %6961 = vmatprep.subr.bf16.mxu0 0
  %6962 = vmatpush2.bf16.msra.mxu0 %v1933
  %6963 = vmatprep.mubr.bf16.mxu0 %v6174
  %6964 = vmatmul.mubr.bf16.gmra.mxu0 %v6173
  %v6965 = vpop.f32.mrf.mxu0
  %v6966 = vadd.f32 %v6902, %v6965
  %v6967 = vpop.f32.mrf.mxu0
  %v6968 = vpop.f32.mrf.mxu0
  %v6969 = vadd.f32 %v6905, %v6968
  %v6970 = vpop.f32.mrf.mxu0
  %6971 = vmatprep.mubr.bf16.mxu0 %v6199
  %6972 = vmatmul.mubr.bf16.gmra.mxu0 %v6198
  %v6973 = vpop.f32.mrf.mxu0
  %v6974 = vadd.f32 %v6910, %v6973
  %v6975 = vpop.f32.mrf.mxu0
  %v6976 = vpop.f32.mrf.mxu0
  %v6977 = vadd.f32 %v6913, %v6976
  %v6978 = vpop.f32.mrf.mxu0
  %6979 = vmatprep.mubr.bf16.mxu0 %v6224
  %6980 = vmatmul.mubr.bf16.gmra.mxu0 %v6223
  %v6981 = vpop.f32.mrf.mxu0
  %v6982 = vadd.f32 %v6918, %v6981
  %v6983 = vpop.f32.mrf.mxu0
  %v6984 = vpop.f32.mrf.mxu0
  %v6985 = vadd.f32 %v6921, %v6984
  %v6986 = vpop.f32.mrf.mxu0
  %6987 = vmatprep.mubr.bf16.mxu0 %v6249
  %6988 = vmatmul.mubr.bf16.gmra.mxu0 %v6248
  %v6989 = vpop.f32.mrf.mxu0
  %v6990 = vadd.f32 %v6926, %v6989
  %v6991 = vpop.f32.mrf.mxu0
  %v6992 = vpop.f32.mrf.mxu0
  %v6993 = vpop.f32.mrf.mxu0
  %6994 = vdwg.mxu0
  %6995 = vmatprep.subr.bf16.mxu0 0
  %6996 = vmatpush1.bf16.msra.mxu0 %v1948
  %6997 = vmatprep.subr.bf16.mxu0 0
  %6998 = vmatpush1.bf16.msra.mxu0 %v1947
  %6999 = vmatprep.subr.bf16.mxu0 0
  %7000 = vmatpush1.bf16.msra.mxu0 %v1946
  %7001 = vmatprep.subr.bf16.mxu0 0
  %7002 = vmatpush1.bf16.msra.mxu0 %v1945
  %7003 = vmatprep.subr.bf16.mxu0 0
  %7004 = vmatpush1.bf16.msra.mxu0 %v1944
  %7005 = vmatprep.subr.bf16.mxu0 0
  %7006 = vmatpush1.bf16.msra.mxu0 %v1943
  %7007 = vmatprep.subr.bf16.mxu0 0
  %7008 = vmatpush1.bf16.msra.mxu0 %v1942
  %7009 = vmatprep.subr.bf16.mxu0 0
  %7010 = vmatpush1.bf16.msra.mxu0 %v1941
  %7011 = vmatprep.subr.bf16.mxu0 0
  %7012 = vmatpush2.bf16.msra.mxu0 %v1956
  %7013 = vmatprep.subr.bf16.mxu0 0
  %7014 = vmatpush2.bf16.msra.mxu0 %v1955
  %7015 = vmatprep.subr.bf16.mxu0 0
  %7016 = vmatpush2.bf16.msra.mxu0 %v1954
  %7017 = vmatprep.subr.bf16.mxu0 0
  %7018 = vmatpush2.bf16.msra.mxu0 %v1953
  %7019 = vmatprep.subr.bf16.mxu0 0
  %7020 = vmatpush2.bf16.msra.mxu0 %v1952
  %7021 = vmatprep.subr.bf16.mxu0 0
  %7022 = vmatpush2.bf16.msra.mxu0 %v1951
  %7023 = vmatprep.subr.bf16.mxu0 0
  %7024 = vmatpush2.bf16.msra.mxu0 %v1950
  %7025 = vmatprep.subr.bf16.mxu0 0
  %7026 = vmatpush2.bf16.msra.mxu0 %v1949
  %7027 = vmatprep.mubr.bf16.mxu0 %v6176
  %7028 = vmatmul.mubr.bf16.gmra.mxu0 %v6175
  %v7029 = vpop.f32.mrf.mxu0
  %v7030 = vadd.f32 %v6966, %v7029
  %v7031 = vpop.f32.mrf.mxu0
  %v7032 = vpop.f32.mrf.mxu0
  %v7033 = vadd.f32 %v6969, %v7032
  %v7034 = vpop.f32.mrf.mxu0
  %7035 = vmatprep.mubr.bf16.mxu0 %v6201
  %7036 = vmatmul.mubr.bf16.gmra.mxu0 %v6200
  %v7037 = vpop.f32.mrf.mxu0
  %v7038 = vadd.f32 %v6974, %v7037
  %v7039 = vpop.f32.mrf.mxu0
  %v7040 = vpop.f32.mrf.mxu0
  %v7041 = vadd.f32 %v6977, %v7040
  %v7042 = vpop.f32.mrf.mxu0
  %7043 = vmatprep.mubr.bf16.mxu0 %v6226
  %7044 = vmatmul.mubr.bf16.gmra.mxu0 %v6225
  %v7045 = vpop.f32.mrf.mxu0
  %v7046 = vadd.f32 %v6982, %v7045
  %v7047 = vpop.f32.mrf.mxu0
  %v7048 = vpop.f32.mrf.mxu0
  %v7049 = vadd.f32 %v6985, %v7048
  %v7050 = vpop.f32.mrf.mxu0
  %7051 = vmatprep.mubr.bf16.mxu0 %v6251
  %7052 = vmatmul.mubr.bf16.gmra.mxu0 %v6250
  %v7053 = vpop.f32.mrf.mxu0
  %v7054 = vadd.f32 %v6990, %v7053
  %v7055 = vpop.f32.mrf.mxu0
  %v7056 = vpop.f32.mrf.mxu0
  %v7057 = vpop.f32.mrf.mxu0
  %7058 = vdwg.mxu0
  %7059 = vmatprep.subr.bf16.mxu0 0
  %7060 = vmatpush1.bf16.msra.mxu0 %v1964
  %7061 = vmatprep.subr.bf16.mxu0 0
  %7062 = vmatpush1.bf16.msra.mxu0 %v1963
  %7063 = vmatprep.subr.bf16.mxu0 0
  %7064 = vmatpush1.bf16.msra.mxu0 %v1962
  %7065 = vmatprep.subr.bf16.mxu0 0
  %7066 = vmatpush1.bf16.msra.mxu0 %v1961
  %7067 = vmatprep.subr.bf16.mxu0 0
  %7068 = vmatpush1.bf16.msra.mxu0 %v1960
  %7069 = vmatprep.subr.bf16.mxu0 0
  %7070 = vmatpush1.bf16.msra.mxu0 %v1959
  %7071 = vmatprep.subr.bf16.mxu0 0
  %7072 = vmatpush1.bf16.msra.mxu0 %v1958
  %7073 = vmatprep.subr.bf16.mxu0 0
  %7074 = vmatpush1.bf16.msra.mxu0 %v1957
  %7075 = vmatprep.subr.bf16.mxu0 0
  %7076 = vmatpush2.bf16.msra.mxu0 %v1972
  %7077 = vmatprep.subr.bf16.mxu0 0
  %7078 = vmatpush2.bf16.msra.mxu0 %v1971
  %7079 = vmatprep.subr.bf16.mxu0 0
  %7080 = vmatpush2.bf16.msra.mxu0 %v1970
  %7081 = vmatprep.subr.bf16.mxu0 0
  %7082 = vmatpush2.bf16.msra.mxu0 %v1969
  %7083 = vmatprep.subr.bf16.mxu0 0
  %7084 = vmatpush2.bf16.msra.mxu0 %v1968
  %7085 = vmatprep.subr.bf16.mxu0 0
  %7086 = vmatpush2.bf16.msra.mxu0 %v1967
  %7087 = vmatprep.subr.bf16.mxu0 0
  %7088 = vmatpush2.bf16.msra.mxu0 %v1966
  %7089 = vmatprep.subr.bf16.mxu0 0
  %7090 = vmatpush2.bf16.msra.mxu0 %v1965
  %7091 = vmatprep.mubr.bf16.mxu0 %v6178
  %7092 = vmatmul.mubr.bf16.gmra.mxu0 %v6177
  %v7093 = vpop.f32.mrf.mxu0
  %v7094 = vadd.f32 %v7030, %v7093
  %v7095 = vpop.f32.mrf.mxu0
  %v7096 = vpop.f32.mrf.mxu0
  %v7097 = vadd.f32 %v7033, %v7096
  %v7098 = vpop.f32.mrf.mxu0
  %7099 = vmatprep.mubr.bf16.mxu0 %v6203
  %7100 = vmatmul.mubr.bf16.gmra.mxu0 %v6202
  %v7101 = vpop.f32.mrf.mxu0
  %v7102 = vadd.f32 %v7038, %v7101
  %v7103 = vpop.f32.mrf.mxu0
  %v7104 = vpop.f32.mrf.mxu0
  %v7105 = vadd.f32 %v7041, %v7104
  %v7106 = vpop.f32.mrf.mxu0
  %7107 = vmatprep.mubr.bf16.mxu0 %v6228
  %7108 = vmatmul.mubr.bf16.gmra.mxu0 %v6227
  %v7109 = vpop.f32.mrf.mxu0
  %v7110 = vadd.f32 %v7046, %v7109
  %v7111 = vpop.f32.mrf.mxu0
  %v7112 = vpop.f32.mrf.mxu0
  %v7113 = vadd.f32 %v7049, %v7112
  %v7114 = vpop.f32.mrf.mxu0
  %7115 = vmatprep.mubr.bf16.mxu0 %v6253
  %7116 = vmatmul.mubr.bf16.gmra.mxu0 %v6252
  %v7117 = vpop.f32.mrf.mxu0
  %v7118 = vadd.f32 %v7054, %v7117
  %v7119 = vpop.f32.mrf.mxu0
  %v7120 = vpop.f32.mrf.mxu0
  %v7121 = vpop.f32.mrf.mxu0
  %7122 = vdwg.mxu0
  %7123 = vmatprep.subr.bf16.mxu0 0
  %7124 = vmatpush1.bf16.msra.mxu0 %v1980
  %7125 = vmatprep.subr.bf16.mxu0 0
  %7126 = vmatpush1.bf16.msra.mxu0 %v1979
  %7127 = vmatprep.subr.bf16.mxu0 0
  %7128 = vmatpush1.bf16.msra.mxu0 %v1978
  %7129 = vmatprep.subr.bf16.mxu0 0
  %7130 = vmatpush1.bf16.msra.mxu0 %v1977
  %7131 = vmatprep.subr.bf16.mxu0 0
  %7132 = vmatpush1.bf16.msra.mxu0 %v1976
  %7133 = vmatprep.subr.bf16.mxu0 0
  %7134 = vmatpush1.bf16.msra.mxu0 %v1975
  %7135 = vmatprep.subr.bf16.mxu0 0
  %7136 = vmatpush1.bf16.msra.mxu0 %v1974
  %7137 = vmatprep.subr.bf16.mxu0 0
  %7138 = vmatpush1.bf16.msra.mxu0 %v1973
  %7139 = vmatprep.subr.bf16.mxu0 0
  %7140 = vmatpush2.bf16.msra.mxu0 0
  %7141 = vmatprep.subr.bf16.mxu0 0
  %7142 = vmatpush2.bf16.msra.mxu0 0
  %7143 = vmatprep.subr.bf16.mxu0 0
  %7144 = vmatpush2.bf16.msra.mxu0 0
  %7145 = vmatprep.subr.bf16.mxu0 0
  %7146 = vmatpush2.bf16.msra.mxu0 0
  %7147 = vmatprep.subr.bf16.mxu0 0
  %7148 = vmatpush2.bf16.msra.mxu0 0
  %7149 = vmatprep.subr.bf16.mxu0 0
  %7150 = vmatpush2.bf16.msra.mxu0 0
  %7151 = vmatprep.subr.bf16.mxu0 0
  %7152 = vmatpush2.bf16.msra.mxu0 0
  %7153 = vmatprep.subr.bf16.mxu0 0
  %7154 = vmatpush2.bf16.msra.mxu0 0
  %7155 = vmatprep.mubr.bf16.mxu0 0
  %7156 = vmatmul.mubr.bf16.gmra.mxu0 %v6179
  %v7157 = vpop.f32.mrf.mxu0
  %v7158 = vadd.f32 %v7094, %v7157
  %v7159 = vpop.f32.mrf.mxu0
  %v7160 = vpop.f32.mrf.mxu0
  %v7161 = vadd.f32 %v7097, %v7160
  %v7162 = vpop.f32.mrf.mxu0
  %7163 = vmatprep.mubr.bf16.mxu0 0
  %7164 = vmatmul.mubr.bf16.gmra.mxu0 %v6204
  %v7165 = vpop.f32.mrf.mxu0
  %v7166 = vadd.f32 %v7102, %v7165
  %v7167 = vpop.f32.mrf.mxu0
  %v7168 = vpop.f32.mrf.mxu0
  %v7169 = vadd.f32 %v7105, %v7168
  %v7170 = vpop.f32.mrf.mxu0
  %7171 = vmatprep.mubr.bf16.mxu0 0
  %7172 = vmatmul.mubr.bf16.gmra.mxu0 %v6229
  %v7173 = vpop.f32.mrf.mxu0
  %v7174 = vadd.f32 %v7110, %v7173
  %v7175 = vpop.f32.mrf.mxu0
  %v7176 = vpop.f32.mrf.mxu0
  %v7177 = vadd.f32 %v7113, %v7176
  %v7178 = vpop.f32.mrf.mxu0
  %7179 = vmatprep.mubr.bf16.mxu0 0
  %7180 = vmatmul.mubr.bf16.gmra.mxu0 %v6254
  %v7181 = vpop.f32.mrf.mxu0
  %v7182 = vadd.f32 %v7118, %v7181
  %v7183 = vpop.f32.mrf.mxu0
  %v7184 = vpop.f32.mrf.mxu0
  %v7185 = vpop.f32.mrf.mxu0
  %7186 = vdwg.mxu0
  %v7187 = vmax.f32 %v5769, %v7158
  %v7188 = vmax.f32 %v5772, %v7161
  %v7189 = vmax.f32 %v5777, %v7166
  %v7190 = vmax.f32 %v5780, %v7169
  %v7191 = vmax.f32 %v5785, %v7174
  %v7192 = vmax.f32 %v5788, %v7177
  %v7193 = vmax.f32 %v5793, %v7182
  %v7194 = vmax.f32 %v4402, %v7187
  %v7195 = vmax.f32 %v4403, %v7188
  %v7196 = vmax.f32 %v4404, %v7189
  %v7197 = vmax.f32 %v4405, %v7190
  %v7198 = vmax.f32 %v4406, %v7191
  %v7199 = vmax.f32 %v4407, %v7192
  %v7200 = vmax.f32 %v4408, %v7193
  %v7201 = vld [vmem:[%s5] sm:$0x1]
  %v7203 = vlaneseq
  %v7204 = vshrl.u32 %v7203, 7
  %v7205 = vsub.s32 0, %v7204
  %v7206 = vrot.slane %v7201, %v7205
  %v7208 = vadd.f32 %v7194, %v7206
  %v7209 = vadd.f32 %v7195, %v7206
  %v7210 = vadd.f32 %v7196, %v7206
  %v7211 = vadd.f32 %v7197, %v7206
  %v7212 = vadd.f32 %v7198, %v7206
  %v7213 = vadd.f32 %v7199, %v7206
  %v7214 = vadd.f32 %v7200, %v7206
  %v7215 = vmax.f32 %v7208, 0.0
  %v7216 = vmax.f32 %v7209, 0.0
  %v7217 = vmax.f32 %v7210, 0.0
  %v7218 = vmax.f32 %v7211, 0.0
  %v7219 = vmax.f32 %v7212, 0.0
  %v7220 = vmax.f32 %v7213, 0.0
  %v7221 = vmax.f32 %v7214, 0.0
  %v7222 = vpack.c.bf16 %v7216, %v7215
  %v7223 = vpack.c.bf16 %v7218, %v7217
  %v7224 = vpack.c.bf16 %v7220, %v7219
  %v7225 = vpack.c.bf16 %v7221, %v7221
  %v7230 = vunpack.c.l.b16 %v7222
  %v7231 = vunpack.c.h.b16 %v7222
  %v7232 = vunpack.c.l.b16 %v7223
  %v7233 = vunpack.c.h.b16 %v7223
  %v7234 = vunpack.c.l.b16 %v7224
  %v7235 = vunpack.c.h.b16 %v7224
  %v7236 = vunpack.c.l.b16 %v7225
  %v7237 = vpack.c.b16 %v7230, %v7230
  %v7238 = vpack.c.b16 %v7231, %v7231
  %v7239 = vpack.c.b16 %v7232, %v7232
  %v7240 = vpack.c.b16 %v7233, %v7233
  %v7241 = vpack.c.b16 %v7234, %v7234
  %v7242 = vpack.c.b16 %v7235, %v7235
  %v7243 = vpack.c.b16 %v7236, %v7236
  %7251 = vst [vmem:[%s6] sm:$0xf] %v7237
  %7252 = vst [vmem:[%s6 + $0x4] sm:$0xf] %v7238
  %7253 = vst [vmem:[%s6 + $0x8] sm:$0xf] %v7239
  %7254 = vst [vmem:[%s6 + $0xc] sm:$0xf] %v7240
  %7255 = vst [vmem:[%s6 + $0x10] sm:$0xf] %v7241
  %7256 = vst [vmem:[%s6 + $0x14] sm:$0xf] %v7242
  %7257 = vst [vmem:[%s6 + $0x18] sm:$0x1] %v7243
  // Predicated region
  $region26: #{net_forward.4} parent=0 // pred_check
    _
  $region27: #{net_forward.4} parent=0 // pred_check_branch
    %7259 = sbr.rel (0) target = $region29
  $region28: #{net_forward.4} parent=0 // pred_region
    _
  $region29: #{net_forward.4} parent=0 // pred_fallthru
    _
  // Predicated region
  $region30: #{net_forward.4} parent=0 // pred_check
    _
  $region31: #{net_forward.4} parent=0 // pred_check_branch
    %7261 = sbr.rel (0) target = $region33
  $region32: #{net_forward.4} parent=0 // pred_region
    _
  $region33: #{net_forward.4} parent=0 // pred_fallthru
    _

</llo_original>
